<compile_context>
chip_gen: v7x
topology: tpu7x:2x2x1
jax: 0.10.0
libtpu: 0.0.40
codegen_flags: <defaults>
</compile_context>

<pallas_src>
import jax
import jax.numpy as jnp
from jax import lax
from jax.experimental import pallas as pl
from jax.experimental.pallas import tpu as pltpu

C3_OUT = 64          # real output channels of c3
C3_PAD = 128         # lane-dense padded output channels stored by the kernel


# ----------------------------------------------------------------------------
# In-kernel helpers
# ----------------------------------------------------------------------------
def _row_chunk(H):
    """Rows per chunk for the 1x1 / staging loop (H/4-row blocks when possible)."""
    return H // 4 if H % 4 == 0 else H


def _widen_kw(y, W):
    """(rows, W, C) -> (rows, W, 3C).

    Channel block kw in {0,1,2} holds the dilation-2 width tap
    ypad[:, j + 2*kw, :] (zero outside the valid range), so the later tap
    matmuls never need sublane-unaligned slices of a padded scratch.
    """
    rows, _, C = y.shape
    z2 = jnp.zeros((rows, 2, C), y.dtype)
    left = jnp.concatenate([z2, y[:, :W - 2, :]], axis=1)     # ypad[:, j + 0]
    right = jnp.concatenate([y[:, 2:, :], z2], axis=1)        # ypad[:, j + 4]
    return jnp.concatenate([left, y, right], axis=-1)


def _zero_halo_rows(wide_ref, H, W):
    """Zero the 2 top / 2 bottom halo rows with full-width (unmasked) stores."""
    C3 = wide_ref.shape[-1]
    zr = jnp.zeros((2, W, C3), wide_ref.dtype)
    wide_ref[0:2] = zr
    wide_ref[H + 2:H + 4] = zr


def _taps_matmul_store(wide_ref, w3_ref, b3_ref, o_ref, H, W):
    """out = bias + sum_kh wide[2kh:2kh+H] @ w3[kh]  (3 MXU passes, K = 3*Cin).

    Accumulation stays in vregs (repeated acc += dot, MRB-friendly on v7x);
    a single lane-dense store writes o_ref.
    """
    Cout = o_ref.shape[-1]
    K3 = wide_ref.shape[-1]
    acc = jnp.dot(wide_ref[0:H].reshape(H * W, K3), w3_ref[0],
                  preferred_element_type=jnp.float32) + b3_ref[...]
    for kh in (1, 2):
        acc = acc + jnp.dot(wide_ref[2 * kh:2 * kh + H].reshape(H * W, K3),
                            w3_ref[kh], preferred_element_type=jnp.float32)
    o_ref[...] = acc.reshape(H, W, Cout).astype(o_ref.dtype)


# ----------------------------------------------------------------------------
# Pallas kernels
# ----------------------------------------------------------------------------
def _fused_pw_d3x3_kernel(x_ref, m_ref, w0x_ref, w0m_ref, b0_ref,
                          w3_ref, b3_ref, o_ref, ywide_ref):
    """Fused 1x1 conv (mask channels via VPU FMAs) -> dilated 3x3 conv.

    x_ref:   (H, W, Cx)  bf16     m_ref:   (H, W, 2)   bf16
    w0x_ref: (Cx, Cmid)  bf16     w0m_ref: (2, Cmid)   bf16    b0_ref: (1, Cmid) f32
    w3_ref:  (3, 3*Cmid, Cout) bf16 (kh, kw*cin, cout)          b3_ref: (1, Cout) f32
    o_ref:   (H, W, Cout)         ywide_ref: (H+4, W, 3*Cmid) bf16 scratch
    """
    H, W, Cx = x_ref.shape
    Cm = m_ref.shape[-1]
    Cmid = w0x_ref.shape[-1]
    rh = _row_chunk(H)

    _zero_halo_rows(ywide_ref, H, W)

    w0m_f = w0m_ref[...].astype(jnp.float32)       # (2, Cmid), tiny, hoisted
    b0 = b0_ref[...]                               # (1, Cmid) f32, hoisted

    def chunk(c, carry):
        xs = x_ref[pl.ds(c * rh, rh)].reshape(rh * W, Cx)
        ms = m_ref[pl.ds(c * rh, rh)].reshape(rh * W, Cm).astype(jnp.float32)
        # 1x1 conv: MXU for the 256/128-wide K, bias in f32.
        y = jnp.dot(xs, w0x_ref[...], preferred_element_type=jnp.float32) + b0
        # Mask channels: K=2 contribution as VPU broadcast FMAs (no MXU pass).
        for cc in range(Cm):
            y = y + ms[:, cc:cc + 1] * w0m_f[cc:cc + 1, :]
        yb = y.astype(ywide_ref.dtype).reshape(rh, W, Cmid)
        # Store the kw-widened rows into the im2col scratch (lane-dense).
        ywide_ref[pl.ds(2 + c * rh, rh)] = _widen_kw(yb, W)
        return carry

    lax.fori_loop(0, H // rh, chunk, 0)

    _taps_matmul_store(ywide_ref, w3_ref, b3_ref, o_ref, H, W)


def _d3x3_kernel(x_ref, w3_ref, b3_ref, o_ref, xwide_ref):
    """Standalone dilated 3x3 conv (dilation 2, padding 2) via the same
    kw-widened im2col scratch + 3 K-stacked matmuls."""
    H, W, _ = x_ref.shape
    rh = _row_chunk(H)

    _zero_halo_rows(xwide_ref, H, W)

    def chunk(c, carry):
        xs = x_ref[pl.ds(c * rh, rh)]
        xwide_ref[pl.ds(2 + c * rh, rh)] = _widen_kw(xs, W)
        return carry

    lax.fori_loop(0, H // rh, chunk, 0)

    _taps_matmul_store(xwide_ref, w3_ref, b3_ref, o_ref, H, W)


# ----------------------------------------------------------------------------
# pallas_call wrappers
# ----------------------------------------------------------------------------
def _compiler_params():
    return pltpu.CompilerParams(
        dimension_semantics=("parallel",),
        vmem_limit_bytes=48 * 1024 * 1024,
    )


def fused_pointwise_dilated_conv(x, m, w0x, w0m, b0, w3r, b3, out_dtype):
    """x: (N,H,W,Cx) bf16, m: (N,H,W,2) bf16 -> (N,H,W,Cout) out_dtype."""
    N, H, W, Cx = x.shape
    Cm = m.shape[-1]
    Cmid = w0x.shape[-1]
    Cout = w3r.shape[-1]
    return pl.pallas_call(
        _fused_pw_d3x3_kernel,
        out_shape=jax.ShapeDtypeStruct((N, H, W, Cout), out_dtype),
        grid=(N,),
        in_specs=[
            pl.BlockSpec((None, H, W, Cx), lambda n: (n, 0, 0, 0)),
            pl.BlockSpec((None, H, W, Cm), lambda n: (n, 0, 0, 0)),
            pl.BlockSpec((Cx, Cmid), lambda n: (0, 0)),
            pl.BlockSpec((Cm, Cmid), lambda n: (0, 0)),
            pl.BlockSpec((1, Cmid), lambda n: (0, 0)),
            pl.BlockSpec((3, 3 * Cmid, Cout), lambda n: (0, 0, 0)),
            pl.BlockSpec((1, Cout), lambda n: (0, 0)),
        ],
        out_specs=pl.BlockSpec((None, H, W, Cout), lambda n: (n, 0, 0, 0)),
        scratch_shapes=[pltpu.VMEM((H + 4, W, 3 * Cmid), jnp.bfloat16)],
        compiler_params=_compiler_params(),
    )(x, m, w0x, w0m, b0, w3r, b3)


def dilated_conv3x3(x, w3r, b3, out_dtype):
    """x: (N,H,W,Cin) bf16 -> (N,H,W,Cout) out_dtype. 3x3, stride 1, pad 2, dil 2."""
    N, H, W, Cin = x.shape
    Cout = w3r.shape[-1]
    return pl.pallas_call(
        _d3x3_kernel,
        out_shape=jax.ShapeDtypeStruct((N, H, W, Cout), out_dtype),
        grid=(N,),
        in_specs=[
            pl.BlockSpec((None, H, W, Cin), lambda n: (n, 0, 0, 0)),
            pl.BlockSpec((3, 3 * Cin, Cout), lambda n: (0, 0, 0)),
            pl.BlockSpec((1, Cout), lambda n: (0, 0)),
        ],
        out_specs=pl.BlockSpec((None, H, W, Cout), lambda n: (n, 0, 0, 0)),
        scratch_shapes=[pltpu.VMEM((H + 4, W, 3 * Cin), jnp.bfloat16)],
        compiler_params=_compiler_params(),
    )(x, w3r, b3)


# ----------------------------------------------------------------------------
# Parameters (f32 "master" params + bf16/split/padded/reshaped kernel params)
# ----------------------------------------------------------------------------
def init_params(key, dtype=jnp.float32):
    """Deterministic init mimicking PyTorch Conv2d default U(-k, k), HWIO layout."""
    def conv_init(k, kh, kw, cin, cout):
        kw_, kb_ = jax.random.split(k)
        bound = 1.0 / float((cin * kh * kw) ** 0.5)
        w = jax.random.uniform(kw_, (kh, kw, cin, cout), dtype, -bound, bound)
        b = jax.random.uniform(kb_, (cout,), dtype, -bound, bound)
        return w, b

    k0, k1, k2, k3 = jax.random.split(key, 4)
    c0_w, c0_b = conv_init(k0, 1, 1, 256 + 2, 256)
    c1_w, c1_b = conv_init(k1, 3, 3, 256, 128)
    c2_w, c2_b = conv_init(k2, 1, 1, 128 + 2, 128)
    c3_w, c3_b = conv_init(k3, 3, 3, 128, C3_OUT)
    return dict(c0_w=c0_w, c0_b=c0_b, c1_w=c1_w, c1_b=c1_b,
                c2_w=c2_w, c2_b=c2_b, c3_w=c3_w, c3_b=c3_b)


def prepare_kernel_params(params):
    """bf16 weights: 1x1 mask rows split out; 3x3 weights reshaped to
    (kh, kw*cin, cout) for the K-stacked tap matmuls; c3 padded to 128 outs."""
    bf, f32 = jnp.bfloat16, jnp.float32
    c0_w = params["c0_w"][0, 0]                               # (258, 256)
    c2_w = params["c2_w"][0, 0]                               # (130, 128)
    c1_wr = params["c1_w"].reshape(3, 3 * 256, 128)           # (3, 768, 128)
    c3_w = jnp.pad(params["c3_w"],
                   ((0, 0), (0, 0), (0, 0), (0, C3_PAD - C3_OUT)))
    c3_wr = c3_w.reshape(3, 3 * 128, C3_PAD)                  # (3, 384, 128)
    c3_b = jnp.pad(params["c3_b"], (0, C3_PAD - C3_OUT))
    return dict(
        c0_wx=c0_w[:256].astype(bf), c0_wm=c0_w[256:].astype(bf),
        c0_b=params["c0_b"].reshape(1, -1).astype(f32),
        c1_wr=c1_wr.astype(bf),
        c1_b=params["c1_b"].reshape(1, -1).astype(f32),
        c2_wx=c2_w[:128].astype(bf), c2_wm=c2_w[128:].astype(bf),
        c2_b=params["c2_b"].reshape(1, -1).astype(f32),
        c3_wr=c3_wr.astype(bf),
        c3_b=c3_b.reshape(1, -1).astype(f32),
    )


# ----------------------------------------------------------------------------
# Forward pass (matches IntermediateConv.forward, NCHW in / NCHW out)
# ----------------------------------------------------------------------------
def intermediate_conv_forward(kp, x_nchw, attention_mask_nchw=None):
    bf = jnp.bfloat16
    x = jnp.transpose(x_nchw, (0, 2, 3, 1)).astype(bf)          # NCHW -> NHWC, bf16
    if attention_mask_nchw is None:
        y = dilated_conv3x3(x, kp["c1_wr"], kp["c1_b"], out_dtype=bf)
        y = dilated_conv3x3(y, kp["c3_wr"], kp["c3_b"], out_dtype=jnp.float32)
    else:
        m = jnp.transpose(attention_mask_nchw, (0, 2, 3, 1)).astype(bf)
        y = fused_pointwise_dilated_conv(x, m, kp["c0_wx"], kp["c0_wm"], kp["c0_b"],
                                         kp["c1_wr"], kp["c1_b"], out_dtype=bf)
        y = fused_pointwise_dilated_conv(y, m, kp["c2_wx"], kp["c2_wm"], kp["c2_b"],
                                         kp["c3_wr"], kp["c3_b"], out_dtype=jnp.float32)
    y = y[..., :C3_OUT]                                          # drop lane-padding channels
    return jnp.transpose(y, (0, 3, 1, 2)).astype(x_nchw.dtype)   # NHWC -> NCHW


# ----------------------------------------------------------------------------
# Reference (lax.conv with matching bf16 operands / f32 accumulation)
# ----------------------------------------------------------------------------
def _ref_conv(x_nhwc, w_hwio, b, dilation, padding):
    y = lax.conv_general_dilated(
        x_nhwc.astype(jnp.bfloat16), w_hwio.astype(jnp.bfloat16),
        window_strides=(1, 1),
        padding=((padding, padding), (padding, padding)),
        rhs_dilation=(dilation, dilation),
        dimension_numbers=("NHWC", "HWIO", "NHWC"),
        preferred_element_type=jnp.float32)
    return y + b.reshape(1, 1, 1, -1).astype(jnp.float32)


def reference_forward(params, x_nchw, attention_mask_nchw=None):
    bf = jnp.bfloat16
    x = jnp.transpose(x_nchw, (0, 2, 3, 1)).astype(bf)
    if attention_mask_nchw is None:
        y = _ref_conv(x, params["c1_w"], params["c1_b"], 2, 2).astype(bf)
        y = _ref_conv(y, params["c3_w"], params["c3_b"], 2, 2)
    else:
        m = jnp.transpose(attention_mask_nchw, (0, 2, 3, 1)).astype(bf)
        y = jnp.concatenate([x, m], axis=-1)
        y = _ref_conv(y, params["c0_w"], params["c0_b"], 1, 0).astype(bf)
        y = _ref_conv(y, params["c1_w"], params["c1_b"], 2, 2).astype(bf)
        y = jnp.concatenate([y, m], axis=-1)
        y = _ref_conv(y, params["c2_w"], params["c2_b"], 1, 0).astype(bf)
        y = _ref_conv(y, params["c3_w"], params["c3_b"], 2, 2)
    return jnp.transpose(y.astype(jnp.float32), (0, 3, 1, 2))


if __name__ == "__main__":
    key = jax.random.PRNGKey(0)
    kp_key, kx, km = jax.random.split(key, 3)

    params = init_params(kp_key)
    kparams = prepare_kernel_params(params)

    N, H, W = 2, 16, 16
    x = jax.random.normal(kx, (N, 256, H, W), jnp.float32)       # NCHW
    attn = jax.random.normal(km, (N, 2, H, W), jnp.float32)      # NCHW

    fwd = jax.jit(intermediate_conv_forward)

    # Path with attention mask (c0 -> c1 -> c2 -> c3, fused pairs)
    out_mask = jax.block_until_ready(fwd(kparams, x, attn))
    ref_mask = jax.block_until_ready(reference_forward(params, x, attn))

    # Path without attention mask (c1 -> c3)
    out_plain = jax.block_until_ready(fwd(kparams, x, None))
    ref_plain = jax.block_until_ready(reference_forward(params, x, None))

    assert out_mask.shape == (N, C3_OUT, H, W)
    assert out_plain.shape == (N, C3_OUT, H, W)
    assert jnp.allclose(out_mask, ref_mask, atol=1e-2, rtol=1e-2)
    assert jnp.allclose(out_plain, ref_plain, atol=1e-2, rtol=1e-2)

    print("KERNEL_OK")
</pallas_src>

<mosaic_0001>
module attributes {stable_mosaic.version = 11 : i64} {
  func.func @_fused_pw_d3x3_kernel(%arg0: i32, %arg1: memref<1x16x16x256xbf16, #tpu.memory_space<vmem>>, %arg2: memref<1x16x16x2xbf16, #tpu.memory_space<vmem>>, %arg3: memref<256x256xbf16, #tpu.memory_space<vmem>>, %arg4: memref<2x256xbf16, #tpu.memory_space<vmem>>, %arg5: memref<1x256xf32, #tpu.memory_space<vmem>>, %arg6: memref<3x768x128xbf16, #tpu.memory_space<vmem>>, %arg7: memref<1x128xf32, #tpu.memory_space<vmem>>, %arg8: memref<1x16x16x128xbf16, #tpu.memory_space<vmem>>, %arg9: memref<20x16x768xbf16, #tpu.memory_space<vmem>>) attributes {dimension_semantics = [#tpu.dimension_semantics<parallel>], iteration_bounds = array<i64: 2>, scalar_prefetch = 0 : i64, scratch_operands = 1 : i64, tpu.core_type = #tpu.core_type<tc>, window_params = [{transform_indices = @transform_0, window_bounds = array<i64: 1, 16, 16, 256>}, {transform_indices = @transform_1, window_bounds = array<i64: 1, 16, 16, 2>}, {pipeline_mode = #tpu.pipeline_mode<synchronous>, transform_indices = @transform_2, window_bounds = array<i64: 256, 256>}, {pipeline_mode = #tpu.pipeline_mode<synchronous>, transform_indices = @transform_3, window_bounds = array<i64: 2, 256>}, {pipeline_mode = #tpu.pipeline_mode<synchronous>, transform_indices = @transform_4, window_bounds = array<i64: 1, 256>}, {pipeline_mode = #tpu.pipeline_mode<synchronous>, transform_indices = @transform_5, window_bounds = array<i64: 3, 768, 128>}, {pipeline_mode = #tpu.pipeline_mode<synchronous>, transform_indices = @transform_6, window_bounds = array<i64: 1, 128>}, {transform_indices = @transform_7, window_bounds = array<i64: 1, 16, 16, 128>}]} {
    %cst = arith.constant 0.000000e+00 : bf16
    %0 = vector.broadcast %cst : bf16 to vector<2x16x768xbf16>
    %c0 = arith.constant 0 : index
    %c0_0 = arith.constant 0 : index
    %c0_1 = arith.constant 0 : index
    %1 = vector.load %arg9[%c0, %c0_0, %c0_1] : memref<20x16x768xbf16, #tpu.memory_space<vmem>>, vector<2x16x768xbf16>
    tpu.vector_store %arg9[%c0, %c0_0, %c0_1], %0 {strides = array<i32>} : memref<20x16x768xbf16, #tpu.memory_space<vmem>>, vector<2x16x768xbf16>,
    %c18 = arith.constant 18 : index
    %c0_2 = arith.constant 0 : index
    %c0_3 = arith.constant 0 : index
    %2 = vector.load %arg9[%c18, %c0_2, %c0_3] : memref<20x16x768xbf16, #tpu.memory_space<vmem>>, vector<2x16x768xbf16>
    tpu.vector_store %arg9[%c18, %c0_2, %c0_3], %0 {strides = array<i32>} : memref<20x16x768xbf16, #tpu.memory_space<vmem>>, vector<2x16x768xbf16>,
    %c0_4 = arith.constant 0 : index
    %c0_5 = arith.constant 0 : index
    %3 = vector.load %arg4[%c0_4, %c0_5] : memref<2x256xbf16, #tpu.memory_space<vmem>>, vector<2x256xbf16>
    %4 = arith.extf %3 : vector<2x256xbf16> to vector<2x256xf32>
    %c0_6 = arith.constant 0 : index
    %c0_7 = arith.constant 0 : index
    %5 = vector.load %arg5[%c0_6, %c0_7] : memref<1x256xf32, #tpu.memory_space<vmem>>, vector<1x256xf32>
    %c0_i32 = arith.constant 0 : i32
    %c4_i32 = arith.constant 4 : i32
    %6 = arith.addi %c0_i32, %c4_i32 : i32
    %c1_i32 = arith.constant 1 : i32
    scf.for %arg10 = %c0_i32 to %6 step %c1_i32  : i32 {
      %c4_i32_33 = arith.constant 4 : i32
      %32 = arith.muli %arg10, %c4_i32_33 : i32
      %c0_34 = arith.constant 0 : index
      %33 = arith.index_cast %32 : i32 to index
      %c0_35 = arith.constant 0 : index
      %c0_36 = arith.constant 0 : index
      %34 = vector.load %arg1[%c0_34, %33, %c0_35, %c0_36] : memref<1x16x16x256xbf16, #tpu.memory_space<vmem>>, vector<1x4x16x256xbf16>
      %35 = vector.shape_cast %34 : vector<1x4x16x256xbf16> to vector<4x16x256xbf16>
      %36 = vector.shape_cast %35 : vector<4x16x256xbf16> to vector<64x256xbf16>
      %c4_i32_37 = arith.constant 4 : i32
      %37 = arith.muli %arg10, %c4_i32_37 : i32
      %c0_38 = arith.constant 0 : index
      %38 = arith.index_cast %37 : i32 to index
      %c0_39 = arith.constant 0 : index
      %c0_40 = arith.constant 0 : index
      %39 = vector.load %arg2[%c0_38, %38, %c0_39, %c0_40] : memref<1x16x16x2xbf16, #tpu.memory_space<vmem>>, vector<1x4x16x2xbf16>
      %40 = vector.shape_cast %39 : vector<1x4x16x2xbf16> to vector<4x16x2xbf16>
      %41 = vector.shape_cast %40 : vector<4x16x2xbf16> to vector<64x2xbf16>
      %42 = arith.extf %41 : vector<64x2xbf16> to vector<64x2xf32>
      %c0_41 = arith.constant 0 : index
      %c0_42 = arith.constant 0 : index
      %43 = vector.load %arg3[%c0_41, %c0_42] : memref<256x256xbf16, #tpu.memory_space<vmem>>, vector<256x256xbf16>
      %cst_43 = arith.constant dense<0.000000e+00> : vector<64x256xf32>
      %44 = tpu.matmul %36, %43, %cst_43 {dimension_numbers = #tpu.dot_dimension_numbers<[1], [0], [0], [1], [0, 0, 1, 1], [], []>} : vector<64x256xbf16>, vector<256x256xbf16>, vector<64x256xf32> -> vector<64x256xf32>
      %45 = vector.broadcast %5 : vector<1x256xf32> to vector<64x256xf32>
      %46 = arith.addf %44, %45 : vector<64x256xf32>
      %47 = vector.extract_strided_slice %42 {offsets = [0, 0], sizes = [64, 1], strides = [1, 1]} : vector<64x2xf32> to vector<64x1xf32>
      %48 = vector.extract_strided_slice %4 {offsets = [0, 0], sizes = [1, 256], strides = [1, 1]} : vector<2x256xf32> to vector<1x256xf32>
      %49 = vector.broadcast %47 : vector<64x1xf32> to vector<64x256xf32>
      %50 = vector.broadcast %48 : vector<1x256xf32> to vector<64x256xf32>
      %51 = arith.mulf %49, %50 : vector<64x256xf32>
      %52 = arith.addf %46, %51 : vector<64x256xf32>
      %53 = vector.extract_strided_slice %42 {offsets = [0, 1], sizes = [64, 1], strides = [1, 1]} : vector<64x2xf32> to vector<64x1xf32>
      %54 = vector.extract_strided_slice %4 {offsets = [1, 0], sizes = [1, 256], strides = [1, 1]} : vector<2x256xf32> to vector<1x256xf32>
      %55 = vector.broadcast %53 : vector<64x1xf32> to vector<64x256xf32>
      %56 = vector.broadcast %54 : vector<1x256xf32> to vector<64x256xf32>
      %57 = arith.mulf %55, %56 : vector<64x256xf32>
      %58 = arith.addf %52, %57 : vector<64x256xf32>
      %59 = arith.truncf %58 : vector<64x256xf32> to vector<64x256xbf16>
      %60 = vector.shape_cast %59 : vector<64x256xbf16> to vector<4x16x256xbf16>
      %cst_44 = arith.constant 0.000000e+00 : bf16
      %61 = vector.broadcast %cst_44 : bf16 to vector<4x2x256xbf16>
      %62 = vector.extract_strided_slice %60 {offsets = [0, 0, 0], sizes = [4, 14, 256], strides = [1, 1, 1]} : vector<4x16x256xbf16> to vector<4x14x256xbf16>
      %63 = tpu.concatenate %61, %62 in 1 : vector<4x2x256xbf16>, vector<4x14x256xbf16> -> vector<4x16x256xbf16>
      %64 = vector.extract_strided_slice %60 {offsets = [0, 2, 0], sizes = [4, 14, 256], strides = [1, 1, 1]} : vector<4x16x256xbf16> to vector<4x14x256xbf16>
      %65 = tpu.concatenate %64, %61 in 1 : vector<4x14x256xbf16>, vector<4x2x256xbf16> -> vector<4x16x256xbf16>
      %66 = tpu.concatenate %63, %60, %65 in 2 : vector<4x16x256xbf16>, vector<4x16x256xbf16>, vector<4x16x256xbf16> -> vector<4x16x768xbf16>
      %c4_i32_45 = arith.constant 4 : i32
      %67 = arith.muli %arg10, %c4_i32_45 : i32
      %c2_i32 = arith.constant 2 : i32
      %68 = arith.addi %c2_i32, %67 : i32
      %69 = arith.index_cast %68 : i32 to index
      %c0_46 = arith.constant 0 : index
      %c0_47 = arith.constant 0 : index
      %70 = vector.load %arg9[%69, %c0_46, %c0_47] : memref<20x16x768xbf16, #tpu.memory_space<vmem>>, vector<4x16x768xbf16>
      tpu.vector_store %arg9[%69, %c0_46, %c0_47], %66 {strides = array<i32>} : memref<20x16x768xbf16, #tpu.memory_space<vmem>>, vector<4x16x768xbf16>,
    }
    %c4_i32_8 = arith.constant 4 : i32
    %c0_9 = arith.constant 0 : index
    %c0_10 = arith.constant 0 : index
    %c0_11 = arith.constant 0 : index
    %7 = vector.load %arg9[%c0_9, %c0_10, %c0_11] : memref<20x16x768xbf16, #tpu.memory_space<vmem>>, vector<16x16x768xbf16>
    %8 = vector.shape_cast %7 : vector<16x16x768xbf16> to vector<256x768xbf16>
    %c0_12 = arith.constant 0 : index
    %c0_13 = arith.constant 0 : index
    %c0_14 = arith.constant 0 : index
    %9 = vector.load %arg6[%c0_12, %c0_13, %c0_14] : memref<3x768x128xbf16, #tpu.memory_space<vmem>>, vector<1x768x128xbf16>
    %10 = vector.shape_cast %9 : vector<1x768x128xbf16> to vector<768x128xbf16>
    %cst_15 = arith.constant dense<0.000000e+00> : vector<256x128xf32>
    %11 = tpu.matmul %8, %10, %cst_15 {dimension_numbers = #tpu.dot_dimension_numbers<[1], [0], [0], [1], [0, 0, 1, 1], [], []>} : vector<256x768xbf16>, vector<768x128xbf16>, vector<256x128xf32> -> vector<256x128xf32>
    %c0_16 = arith.constant 0 : index
    %c0_17 = arith.constant 0 : index
    %12 = vector.load %arg7[%c0_16, %c0_17] : memref<1x128xf32, #tpu.memory_space<vmem>>, vector<1x128xf32>
    %13 = vector.broadcast %12 : vector<1x128xf32> to vector<256x128xf32>
    %14 = arith.addf %11, %13 : vector<256x128xf32>
    %c2 = arith.constant 2 : index
    %c0_18 = arith.constant 0 : index
    %c0_19 = arith.constant 0 : index
    %15 = vector.load %arg9[%c2, %c0_18, %c0_19] : memref<20x16x768xbf16, #tpu.memory_space<vmem>>, vector<16x16x768xbf16>
    %16 = vector.shape_cast %15 : vector<16x16x768xbf16> to vector<256x768xbf16>
    %c1 = arith.constant 1 : index
    %c0_20 = arith.constant 0 : index
    %c0_21 = arith.constant 0 : index
    %17 = vector.load %arg6[%c1, %c0_20, %c0_21] : memref<3x768x128xbf16, #tpu.memory_space<vmem>>, vector<1x768x128xbf16>
    %18 = vector.shape_cast %17 : vector<1x768x128xbf16> to vector<768x128xbf16>
    %cst_22 = arith.constant dense<0.000000e+00> : vector<256x128xf32>
    %19 = tpu.matmul %16, %18, %cst_22 {dimension_numbers = #tpu.dot_dimension_numbers<[1], [0], [0], [1], [0, 0, 1, 1], [], []>} : vector<256x768xbf16>, vector<768x128xbf16>, vector<256x128xf32> -> vector<256x128xf32>
    %20 = arith.addf %14, %19 : vector<256x128xf32>
    %c4 = arith.constant 4 : index
    %c0_23 = arith.constant 0 : index
    %c0_24 = arith.constant 0 : index
    %21 = vector.load %arg9[%c4, %c0_23, %c0_24] : memref<20x16x768xbf16, #tpu.memory_space<vmem>>, vector<16x16x768xbf16>
    %22 = vector.shape_cast %21 : vector<16x16x768xbf16> to vector<256x768xbf16>
    %c2_25 = arith.constant 2 : index
    %c0_26 = arith.constant 0 : index
    %c0_27 = arith.constant 0 : index
    %23 = vector.load %arg6[%c2_25, %c0_26, %c0_27] : memref<3x768x128xbf16, #tpu.memory_space<vmem>>, vector<1x768x128xbf16>
    %24 = vector.shape_cast %23 : vector<1x768x128xbf16> to vector<768x128xbf16>
    %cst_28 = arith.constant dense<0.000000e+00> : vector<256x128xf32>
    %25 = tpu.matmul %22, %24, %cst_28 {dimension_numbers = #tpu.dot_dimension_numbers<[1], [0], [0], [1], [0, 0, 1, 1], [], []>} : vector<256x768xbf16>, vector<768x128xbf16>, vector<256x128xf32> -> vector<256x128xf32>
    %26 = arith.addf %20, %25 : vector<256x128xf32>
    %27 = vector.shape_cast %26 : vector<256x128xf32> to vector<16x16x128xf32>
    %28 = arith.truncf %27 : vector<16x16x128xf32> to vector<16x16x128xbf16>
    %c0_29 = arith.constant 0 : index
    %c0_30 = arith.constant 0 : index
    %c0_31 = arith.constant 0 : index
    %c0_32 = arith.constant 0 : index
    %29 = vector.load %arg8[%c0_29, %c0_30, %c0_31, %c0_32] : memref<1x16x16x128xbf16, #tpu.memory_space<vmem>>, vector<1x16x16x128xbf16>
    %30 = vector.shape_cast %29 : vector<1x16x16x128xbf16> to vector<16x16x128xbf16>
    %31 = vector.shape_cast %28 : vector<16x16x128xbf16> to vector<1x16x16x128xbf16>
    tpu.vector_store %arg8[%c0_29, %c0_30, %c0_31, %c0_32], %31 {strides = array<i32>} : memref<1x16x16x128xbf16, #tpu.memory_space<vmem>>, vector<1x16x16x128xbf16>,
    return
  }
  func.func @transform_0(%arg0: i32) -> (i32, i32, i32, i32) {
    %c0_i32 = arith.constant 0 : i32
    %c0_i32_0 = arith.constant 0 : i32
    %c0_i32_1 = arith.constant 0 : i32
    %c0_i32_2 = arith.constant 0 : i32
    return %arg0, %c0_i32, %c0_i32_0, %c0_i32_1 : i32, i32, i32, i32
  }
  func.func @transform_1(%arg0: i32) -> (i32, i32, i32, i32) {
    %c0_i32 = arith.constant 0 : i32
    %c0_i32_0 = arith.constant 0 : i32
    %c0_i32_1 = arith.constant 0 : i32
    %c0_i32_2 = arith.constant 0 : i32
    return %arg0, %c0_i32, %c0_i32_0, %c0_i32_1 : i32, i32, i32, i32
  }
  func.func @transform_2(%arg0: i32) -> (i32, i32) {
    %c0_i32 = arith.constant 0 : i32
    %c0_i32_0 = arith.constant 0 : i32
    %c0_i32_1 = arith.constant 0 : i32
    return %c0_i32, %c0_i32_0 : i32, i32
  }
  func.func @transform_3(%arg0: i32) -> (i32, i32) {
    %c0_i32 = arith.constant 0 : i32
    %c0_i32_0 = arith.constant 0 : i32
    %c0_i32_1 = arith.constant 0 : i32
    return %c0_i32, %c0_i32_0 : i32, i32
  }
  func.func @transform_4(%arg0: i32) -> (i32, i32) {
    %c0_i32 = arith.constant 0 : i32
    %c0_i32_0 = arith.constant 0 : i32
    %c0_i32_1 = arith.constant 0 : i32
    return %c0_i32, %c0_i32_0 : i32, i32
  }
  func.func @transform_5(%arg0: i32) -> (i32, i32, i32) {
    %c0_i32 = arith.constant 0 : i32
    %c0_i32_0 = arith.constant 0 : i32
    %c0_i32_1 = arith.constant 0 : i32
    %c0_i32_2 = arith.constant 0 : i32
    return %c0_i32, %c0_i32_0, %c0_i32_1 : i32, i32, i32
  }
  func.func @transform_6(%arg0: i32) -> (i32, i32) {
    %c0_i32 = arith.constant 0 : i32
    %c0_i32_0 = arith.constant 0 : i32
    %c0_i32_1 = arith.constant 0 : i32
    return %c0_i32, %c0_i32_0 : i32, i32
  }
  func.func @transform_7(%arg0: i32) -> (i32, i32, i32, i32) {
    %c0_i32 = arith.constant 0 : i32
    %c0_i32_0 = arith.constant 0 : i32
    %c0_i32_1 = arith.constant 0 : i32
    %c0_i32_2 = arith.constant 0 : i32
    return %arg0, %c0_i32, %c0_i32_0, %c0_i32_1 : i32, i32, i32, i32
  }
}

module attributes {stable_mosaic.version = 11 : i64} {
  func.func @_fused_pw_d3x3_kernel(%arg0: i32, %arg1: memref<1x16x16x128xbf16, #tpu.memory_space<vmem>>, %arg2: memref<1x16x16x2xbf16, #tpu.memory_space<vmem>>, %arg3: memref<128x128xbf16, #tpu.memory_space<vmem>>, %arg4: memref<2x128xbf16, #tpu.memory_space<vmem>>, %arg5: memref<1x128xf32, #tpu.memory_space<vmem>>, %arg6: memref<3x384x128xbf16, #tpu.memory_space<vmem>>, %arg7: memref<1x128xf32, #tpu.memory_space<vmem>>, %arg8: memref<1x16x16x128xf32, #tpu.memory_space<vmem>>, %arg9: memref<20x16x384xbf16, #tpu.memory_space<vmem>>) attributes {dimension_semantics = [#tpu.dimension_semantics<parallel>], iteration_bounds = array<i64: 2>, scalar_prefetch = 0 : i64, scratch_operands = 1 : i64, tpu.core_type = #tpu.core_type<tc>, window_params = [{transform_indices = @transform_0, window_bounds = array<i64: 1, 16, 16, 128>}, {transform_indices = @transform_1, window_bounds = array<i64: 1, 16, 16, 2>}, {pipeline_mode = #tpu.pipeline_mode<synchronous>, transform_indices = @transform_2, window_bounds = array<i64: 128, 128>}, {pipeline_mode = #tpu.pipeline_mode<synchronous>, transform_indices = @transform_3, window_bounds = array<i64: 2, 128>}, {pipeline_mode = #tpu.pipeline_mode<synchronous>, transform_indices = @transform_4, window_bounds = array<i64: 1, 128>}, {pipeline_mode = #tpu.pipeline_mode<synchronous>, transform_indices = @transform_5, window_bounds = array<i64: 3, 384, 128>}, {pipeline_mode = #tpu.pipeline_mode<synchronous>, transform_indices = @transform_6, window_bounds = array<i64: 1, 128>}, {transform_indices = @transform_7, window_bounds = array<i64: 1, 16, 16, 128>}]} {
    %cst = arith.constant 0.000000e+00 : bf16
    %0 = vector.broadcast %cst : bf16 to vector<2x16x384xbf16>
    %c0 = arith.constant 0 : index
    %c0_0 = arith.constant 0 : index
    %c0_1 = arith.constant 0 : index
    %1 = vector.load %arg9[%c0, %c0_0, %c0_1] : memref<20x16x384xbf16, #tpu.memory_space<vmem>>, vector<2x16x384xbf16>
    tpu.vector_store %arg9[%c0, %c0_0, %c0_1], %0 {strides = array<i32>} : memref<20x16x384xbf16, #tpu.memory_space<vmem>>, vector<2x16x384xbf16>,
    %c18 = arith.constant 18 : index
    %c0_2 = arith.constant 0 : index
    %c0_3 = arith.constant 0 : index
    %2 = vector.load %arg9[%c18, %c0_2, %c0_3] : memref<20x16x384xbf16, #tpu.memory_space<vmem>>, vector<2x16x384xbf16>
    tpu.vector_store %arg9[%c18, %c0_2, %c0_3], %0 {strides = array<i32>} : memref<20x16x384xbf16, #tpu.memory_space<vmem>>, vector<2x16x384xbf16>,
    %c0_4 = arith.constant 0 : index
    %c0_5 = arith.constant 0 : index
    %3 = vector.load %arg4[%c0_4, %c0_5] : memref<2x128xbf16, #tpu.memory_space<vmem>>, vector<2x128xbf16>
    %4 = arith.extf %3 : vector<2x128xbf16> to vector<2x128xf32>
    %c0_6 = arith.constant 0 : index
    %c0_7 = arith.constant 0 : index
    %5 = vector.load %arg5[%c0_6, %c0_7] : memref<1x128xf32, #tpu.memory_space<vmem>>, vector<1x128xf32>
    %c0_i32 = arith.constant 0 : i32
    %c4_i32 = arith.constant 4 : i32
    %6 = arith.addi %c0_i32, %c4_i32 : i32
    %c1_i32 = arith.constant 1 : i32
    scf.for %arg10 = %c0_i32 to %6 step %c1_i32  : i32 {
      %c4_i32_33 = arith.constant 4 : i32
      %31 = arith.muli %arg10, %c4_i32_33 : i32
      %c0_34 = arith.constant 0 : index
      %32 = arith.index_cast %31 : i32 to index
      %c0_35 = arith.constant 0 : index
      %c0_36 = arith.constant 0 : index
      %33 = vector.load %arg1[%c0_34, %32, %c0_35, %c0_36] : memref<1x16x16x128xbf16, #tpu.memory_space<vmem>>, vector<1x4x16x128xbf16>
      %34 = vector.shape_cast %33 : vector<1x4x16x128xbf16> to vector<4x16x128xbf16>
      %35 = vector.shape_cast %34 : vector<4x16x128xbf16> to vector<64x128xbf16>
      %c4_i32_37 = arith.constant 4 : i32
      %36 = arith.muli %arg10, %c4_i32_37 : i32
      %c0_38 = arith.constant 0 : index
      %37 = arith.index_cast %36 : i32 to index
      %c0_39 = arith.constant 0 : index
      %c0_40 = arith.constant 0 : index
      %38 = vector.load %arg2[%c0_38, %37, %c0_39, %c0_40] : memref<1x16x16x2xbf16, #tpu.memory_space<vmem>>, vector<1x4x16x2xbf16>
      %39 = vector.shape_cast %38 : vector<1x4x16x2xbf16> to vector<4x16x2xbf16>
      %40 = vector.shape_cast %39 : vector<4x16x2xbf16> to vector<64x2xbf16>
      %41 = arith.extf %40 : vector<64x2xbf16> to vector<64x2xf32>
      %c0_41 = arith.constant 0 : index
      %c0_42 = arith.constant 0 : index
      %42 = vector.load %arg3[%c0_41, %c0_42] : memref<128x128xbf16, #tpu.memory_space<vmem>>, vector<128x128xbf16>
      %cst_43 = arith.constant dense<0.000000e+00> : vector<64x128xf32>
      %43 = tpu.matmul %35, %42, %cst_43 {dimension_numbers = #tpu.dot_dimension_numbers<[1], [0], [0], [1], [0, 0, 1, 1], [], []>} : vector<64x128xbf16>, vector<128x128xbf16>, vector<64x128xf32> -> vector<64x128xf32>
      %44 = vector.broadcast %5 : vector<1x128xf32> to vector<64x128xf32>
      %45 = arith.addf %43, %44 : vector<64x128xf32>
      %46 = vector.extract_strided_slice %41 {offsets = [0, 0], sizes = [64, 1], strides = [1, 1]} : vector<64x2xf32> to vector<64x1xf32>
      %47 = vector.extract_strided_slice %4 {offsets = [0, 0], sizes = [1, 128], strides = [1, 1]} : vector<2x128xf32> to vector<1x128xf32>
      %48 = vector.broadcast %46 : vector<64x1xf32> to vector<64x128xf32>
      %49 = vector.broadcast %47 : vector<1x128xf32> to vector<64x128xf32>
      %50 = arith.mulf %48, %49 : vector<64x128xf32>
      %51 = arith.addf %45, %50 : vector<64x128xf32>
      %52 = vector.extract_strided_slice %41 {offsets = [0, 1], sizes = [64, 1], strides = [1, 1]} : vector<64x2xf32> to vector<64x1xf32>
      %53 = vector.extract_strided_slice %4 {offsets = [1, 0], sizes = [1, 128], strides = [1, 1]} : vector<2x128xf32> to vector<1x128xf32>
      %54 = vector.broadcast %52 : vector<64x1xf32> to vector<64x128xf32>
      %55 = vector.broadcast %53 : vector<1x128xf32> to vector<64x128xf32>
      %56 = arith.mulf %54, %55 : vector<64x128xf32>
      %57 = arith.addf %51, %56 : vector<64x128xf32>
      %58 = arith.truncf %57 : vector<64x128xf32> to vector<64x128xbf16>
      %59 = vector.shape_cast %58 : vector<64x128xbf16> to vector<4x16x128xbf16>
      %cst_44 = arith.constant 0.000000e+00 : bf16
      %60 = vector.broadcast %cst_44 : bf16 to vector<4x2x128xbf16>
      %61 = vector.extract_strided_slice %59 {offsets = [0, 0, 0], sizes = [4, 14, 128], strides = [1, 1, 1]} : vector<4x16x128xbf16> to vector<4x14x128xbf16>
      %62 = tpu.concatenate %60, %61 in 1 : vector<4x2x128xbf16>, vector<4x14x128xbf16> -> vector<4x16x128xbf16>
      %63 = vector.extract_strided_slice %59 {offsets = [0, 2, 0], sizes = [4, 14, 128], strides = [1, 1, 1]} : vector<4x16x128xbf16> to vector<4x14x128xbf16>
      %64 = tpu.concatenate %63, %60 in 1 : vector<4x14x128xbf16>, vector<4x2x128xbf16> -> vector<4x16x128xbf16>
      %65 = tpu.concatenate %62, %59, %64 in 2 : vector<4x16x128xbf16>, vector<4x16x128xbf16>, vector<4x16x128xbf16> -> vector<4x16x384xbf16>
      %c4_i32_45 = arith.constant 4 : i32
      %66 = arith.muli %arg10, %c4_i32_45 : i32
      %c2_i32 = arith.constant 2 : i32
      %67 = arith.addi %c2_i32, %66 : i32
      %68 = arith.index_cast %67 : i32 to index
      %c0_46 = arith.constant 0 : index
      %c0_47 = arith.constant 0 : index
      %69 = vector.load %arg9[%68, %c0_46, %c0_47] : memref<20x16x384xbf16, #tpu.memory_space<vmem>>, vector<4x16x384xbf16>
      tpu.vector_store %arg9[%68, %c0_46, %c0_47], %65 {strides = array<i32>} : memref<20x16x384xbf16, #tpu.memory_space<vmem>>, vector<4x16x384xbf16>,
    }
    %c4_i32_8 = arith.constant 4 : i32
    %c0_9 = arith.constant 0 : index
    %c0_10 = arith.constant 0 : index
    %c0_11 = arith.constant 0 : index
    %7 = vector.load %arg9[%c0_9, %c0_10, %c0_11] : memref<20x16x384xbf16, #tpu.memory_space<vmem>>, vector<16x16x384xbf16>
    %8 = vector.shape_cast %7 : vector<16x16x384xbf16> to vector<256x384xbf16>
    %c0_12 = arith.constant 0 : index
    %c0_13 = arith.constant 0 : index
    %c0_14 = arith.constant 0 : index
    %9 = vector.load %arg6[%c0_12, %c0_13, %c0_14] : memref<3x384x128xbf16, #tpu.memory_space<vmem>>, vector<1x384x128xbf16>
    %10 = vector.shape_cast %9 : vector<1x384x128xbf16> to vector<384x128xbf16>
    %cst_15 = arith.constant dense<0.000000e+00> : vector<256x128xf32>
    %11 = tpu.matmul %8, %10, %cst_15 {dimension_numbers = #tpu.dot_dimension_numbers<[1], [0], [0], [1], [0, 0, 1, 1], [], []>} : vector<256x384xbf16>, vector<384x128xbf16>, vector<256x128xf32> -> vector<256x128xf32>
    %c0_16 = arith.constant 0 : index
    %c0_17 = arith.constant 0 : index
    %12 = vector.load %arg7[%c0_16, %c0_17] : memref<1x128xf32, #tpu.memory_space<vmem>>, vector<1x128xf32>
    %13 = vector.broadcast %12 : vector<1x128xf32> to vector<256x128xf32>
    %14 = arith.addf %11, %13 : vector<256x128xf32>
    %c2 = arith.constant 2 : index
    %c0_18 = arith.constant 0 : index
    %c0_19 = arith.constant 0 : index
    %15 = vector.load %arg9[%c2, %c0_18, %c0_19] : memref<20x16x384xbf16, #tpu.memory_space<vmem>>, vector<16x16x384xbf16>
    %16 = vector.shape_cast %15 : vector<16x16x384xbf16> to vector<256x384xbf16>
    %c1 = arith.constant 1 : index
    %c0_20 = arith.constant 0 : index
    %c0_21 = arith.constant 0 : index
    %17 = vector.load %arg6[%c1, %c0_20, %c0_21] : memref<3x384x128xbf16, #tpu.memory_space<vmem>>, vector<1x384x128xbf16>
    %18 = vector.shape_cast %17 : vector<1x384x128xbf16> to vector<384x128xbf16>
    %cst_22 = arith.constant dense<0.000000e+00> : vector<256x128xf32>
    %19 = tpu.matmul %16, %18, %cst_22 {dimension_numbers = #tpu.dot_dimension_numbers<[1], [0], [0], [1], [0, 0, 1, 1], [], []>} : vector<256x384xbf16>, vector<384x128xbf16>, vector<256x128xf32> -> vector<256x128xf32>
    %20 = arith.addf %14, %19 : vector<256x128xf32>
    %c4 = arith.constant 4 : index
    %c0_23 = arith.constant 0 : index
    %c0_24 = arith.constant 0 : index
    %21 = vector.load %arg9[%c4, %c0_23, %c0_24] : memref<20x16x384xbf16, #tpu.memory_space<vmem>>, vector<16x16x384xbf16>
    %22 = vector.shape_cast %21 : vector<16x16x384xbf16> to vector<256x384xbf16>
    %c2_25 = arith.constant 2 : index
    %c0_26 = arith.constant 0 : index
    %c0_27 = arith.constant 0 : index
    %23 = vector.load %arg6[%c2_25, %c0_26, %c0_27] : memref<3x384x128xbf16, #tpu.memory_space<vmem>>, vector<1x384x128xbf16>
    %24 = vector.shape_cast %23 : vector<1x384x128xbf16> to vector<384x128xbf16>
    %cst_28 = arith.constant dense<0.000000e+00> : vector<256x128xf32>
    %25 = tpu.matmul %22, %24, %cst_28 {dimension_numbers = #tpu.dot_dimension_numbers<[1], [0], [0], [1], [0, 0, 1, 1], [], []>} : vector<256x384xbf16>, vector<384x128xbf16>, vector<256x128xf32> -> vector<256x128xf32>
    %26 = arith.addf %20, %25 : vector<256x128xf32>
    %27 = vector.shape_cast %26 : vector<256x128xf32> to vector<16x16x128xf32>
    %c0_29 = arith.constant 0 : index
    %c0_30 = arith.constant 0 : index
    %c0_31 = arith.constant 0 : index
    %c0_32 = arith.constant 0 : index
    %28 = vector.load %arg8[%c0_29, %c0_30, %c0_31, %c0_32] : memref<1x16x16x128xf32, #tpu.memory_space<vmem>>, vector<1x16x16x128xf32>
    %29 = vector.shape_cast %28 : vector<1x16x16x128xf32> to vector<16x16x128xf32>
    %30 = vector.shape_cast %27 : vector<16x16x128xf32> to vector<1x16x16x128xf32>
    tpu.vector_store %arg8[%c0_29, %c0_30, %c0_31, %c0_32], %30 {strides = array<i32>} : memref<1x16x16x128xf32, #tpu.memory_space<vmem>>, vector<1x16x16x128xf32>,
    return
  }
  func.func @transform_0(%arg0: i32) -> (i32, i32, i32, i32) {
    %c0_i32 = arith.constant 0 : i32
    %c0_i32_0 = arith.constant 0 : i32
    %c0_i32_1 = arith.constant 0 : i32
    %c0_i32_2 = arith.constant 0 : i32
    return %arg0, %c0_i32, %c0_i32_0, %c0_i32_1 : i32, i32, i32, i32
  }
  func.func @transform_1(%arg0: i32) -> (i32, i32, i32, i32) {
    %c0_i32 = arith.constant 0 : i32
    %c0_i32_0 = arith.constant 0 : i32
    %c0_i32_1 = arith.constant 0 : i32
    %c0_i32_2 = arith.constant 0 : i32
    return %arg0, %c0_i32, %c0_i32_0, %c0_i32_1 : i32, i32, i32, i32
  }
  func.func @transform_2(%arg0: i32) -> (i32, i32) {
    %c0_i32 = arith.constant 0 : i32
    %c0_i32_0 = arith.constant 0 : i32
    %c0_i32_1 = arith.constant 0 : i32
    return %c0_i32, %c0_i32_0 : i32, i32
  }
  func.func @transform_3(%arg0: i32) -> (i32, i32) {
    %c0_i32 = arith.constant 0 : i32
    %c0_i32_0 = arith.constant 0 : i32
    %c0_i32_1 = arith.constant 0 : i32
    return %c0_i32, %c0_i32_0 : i32, i32
  }
  func.func @transform_4(%arg0: i32) -> (i32, i32) {
    %c0_i32 = arith.constant 0 : i32
    %c0_i32_0 = arith.constant 0 : i32
    %c0_i32_1 = arith.constant 0 : i32
    return %c0_i32, %c0_i32_0 : i32, i32
  }
  func.func @transform_5(%arg0: i32) -> (i32, i32, i32) {
    %c0_i32 = arith.constant 0 : i32
    %c0_i32_0 = arith.constant 0 : i32
    %c0_i32_1 = arith.constant 0 : i32
    %c0_i32_2 = arith.constant 0 : i32
    return %c0_i32, %c0_i32_0, %c0_i32_1 : i32, i32, i32
  }
  func.func @transform_6(%arg0: i32) -> (i32, i32) {
    %c0_i32 = arith.constant 0 : i32
    %c0_i32_0 = arith.constant 0 : i32
    %c0_i32_1 = arith.constant 0 : i32
    return %c0_i32, %c0_i32_0 : i32, i32
  }
  func.func @transform_7(%arg0: i32) -> (i32, i32, i32, i32) {
    %c0_i32 = arith.constant 0 : i32
    %c0_i32_0 = arith.constant 0 : i32
    %c0_i32_1 = arith.constant 0 : i32
    %c0_i32_2 = arith.constant 0 : i32
    return %arg0, %c0_i32, %c0_i32_0, %c0_i32_1 : i32, i32, i32, i32
  }
}

</mosaic_0001>

<llo_original>
// kernel: intermediate_conv_forward.3
$region0: #{intermediate_conv_forward.3}
  #allocation0 [shape = 'u32[]', space=smem, size = 0x4, offset = 0x4, fixed_abs, tag = 'smem constant byte address 0x4 - core index']
  #allocation1 [shape = 'u32[144,128]{1,0:T(1,128)}', space=vmem, size = 0x12000, scoped, tag = 'internal scratch']
  #allocation2 [shape = 'bf16[20,16,384]{2,1,0:T(16,128)(2,1)}', space=vmem, size = 0x3c000, scoped, tag = 'scratch operand']
  %s0 = inlined_call_operand.vmem [shape: bf16[2,16,16,128], index: 0, kind: input, shape index: {}]
  %s1 = inlined_call_operand.vmem [shape: bf16[2,16,16,2], index: 1, kind: input, shape index: {}]
  %s2 = inlined_call_operand.vmem [shape: bf16[128,128], index: 2, kind: input, shape index: {}]
  %s3 = inlined_call_operand.vmem [shape: bf16[2,128], index: 3, kind: input, shape index: {}]
  %s4 = inlined_call_operand.vmem [shape: f32[1,128], index: 4, kind: input, shape index: {}]
  %s5 = inlined_call_operand.vmem [shape: bf16[3,384,128], index: 5, kind: input, shape index: {}]
  %s6 = inlined_call_operand.vmem [shape: f32[1,128], index: 6, kind: input, shape index: {}]
  %s7 = inlined_call_operand.vmem [shape: f32[2,16,16,128], index: 7, kind: output, shape index: {}]
  %s8 = sld [smem:[#allocation0]]
  $region68: #{intermediate_conv_forward.3} parent=0
    _
  %s10 = ssub.s32 1, %s8
  %s11 = scalar_select 0, %s10, %s8
  loop: start=0, step=1, limit=4
  $region2: #{intermediate_conv_forward.3} parent=0 // loop_pre_header
    _
  $region3: #{intermediate_conv_forward.3} parent=0 // loop_header
    %s13 = sphi 0, %s17
    %p14 = scmp.ge.s32.totalorder %s13, 4
    %s23 = sphi 0, %s25
    %s26 = sphi 0, %s23
    %s27 = sphi 0, %s26
    %s43 = sphi 0, %s27
    %s49 = sphi 0, %s51
    %s52 = sphi 0, %s49
    %s53 = sphi 0, %s52
    %s69 = sphi 0, %s53
    %s73 = sphi 0, %s73
    %s75 = sphi 0, %s73
    %s76 = sphi 0, %s75
    %s90 = sphi 0, %s76
    %s94 = sphi 0, %s94
    %s96 = sphi 0, %s94
    %s97 = sphi 0, %s96
    %s111 = sphi 0, %s97
    %s115 = sphi 0, %s115
    %s117 = sphi 0, %s115
    %s118 = sphi 0, %s117
    %s132 = sphi 0, %s118
    %s136 = sphi 0, %s136
    %s138 = sphi 0, %s136
    %s139 = sphi 0, %s138
    %s153 = sphi 0, %s139
    %s157 = sphi 0, %s157
    %s159 = sphi 0, %s157
    %s160 = sphi 0, %s159
    %s174 = sphi 0, %s160
    %s180 = sphi 0, %s182
    %s183 = sphi 0, %s180
    %s184 = sphi 0, %s183
    %s200 = sphi 0, %s184
  $region4: #{intermediate_conv_forward.3} parent=0 // loop_header_branch
    %16 = sbr.rel (%p14) target = $region8
  $region5: #{intermediate_conv_forward.3} parent=0 // loop_body
    %s18 = ssub.s32 %s13, 1
    %s19 = ssub.s32 %s13, 2
    %s20 = sadd.s32 %s13, 1
    %s21 = ssub.s32 %s13, %s20
    %p22 = scmp.eq.s32.totalorder %s21, 0
    %s24 = sadd.s32 %s23, 1
    %s25 = scalar_select %p22, %s23, %s24
    %p28 = pneg %p22
    %p29 = scmp.eq.s32.totalorder %s13, 1
    %p30 = por %p28, %p29
    %p31 = scmp.ne.s32.totalorder %s23, %s26
    %p32 = scmp.eq.s32.totalorder %s13, 0
    %p33 = por %p31, %p32
    %p34 = scmp.ne.s32.totalorder %s23, %s26
    %p35 = scmp.eq.s32.totalorder %s18, 1
    %p36 = por %p34, %p35
    %p37 = scmp.ne.s32.totalorder %s26, %s27
    %p38 = scmp.eq.s32.totalorder %s18, 0
    %p39 = por %p37, %p38
    %p40 = scmp.ne.s32.totalorder %s26, %s27
    %p41 = scmp.eq.s32.totalorder %s19, 1
    %p42 = por %p40, %p41
    %p44 = scmp.ne.s32.totalorder %s27, %s43
    %p45 = scmp.eq.s32.totalorder %s19, 0
    %p46 = por %p44, %p45
    %s47 = ssub.s32 %s13, %s20
    %p48 = scmp.eq.s32.totalorder %s47, 0
    %s50 = sadd.s32 %s49, 1
    %s51 = scalar_select %p48, %s49, %s50
    %p54 = pneg %p48
    %p55 = scmp.eq.s32.totalorder %s13, 1
    %p56 = por %p54, %p55
    %p57 = scmp.ne.s32.totalorder %s49, %s52
    %p58 = scmp.eq.s32.totalorder %s13, 0
    %p59 = por %p57, %p58
    %p60 = scmp.ne.s32.totalorder %s49, %s52
    %p61 = scmp.eq.s32.totalorder %s18, 1
    %p62 = por %p60, %p61
    %p63 = scmp.ne.s32.totalorder %s52, %s53
    %p64 = scmp.eq.s32.totalorder %s18, 0
    %p65 = por %p63, %p64
    %p66 = scmp.ne.s32.totalorder %s52, %s53
    %p67 = scmp.eq.s32.totalorder %s19, 1
    %p68 = por %p66, %p67
    %p70 = scmp.ne.s32.totalorder %s53, %s69
    %p71 = scmp.eq.s32.totalorder %s19, 0
    %p72 = por %p70, %p71
    %s74 = sadd.s32 %s73, 1
    %p77 = scmp.eq.s32.totalorder %s13, 1
    %p78 = scmp.ne.s32.totalorder %s73, %s75
    %p79 = scmp.eq.s32.totalorder %s13, 0
    %p80 = por %p78, %p79
    %p81 = scmp.ne.s32.totalorder %s73, %s75
    %p82 = scmp.eq.s32.totalorder %s18, 1
    %p83 = por %p81, %p82
    %p84 = scmp.ne.s32.totalorder %s75, %s76
    %p85 = scmp.eq.s32.totalorder %s18, 0
    %p86 = por %p84, %p85
    %p87 = scmp.ne.s32.totalorder %s75, %s76
    %p88 = scmp.eq.s32.totalorder %s19, 1
    %p89 = por %p87, %p88
    %p91 = scmp.ne.s32.totalorder %s76, %s90
    %p92 = scmp.eq.s32.totalorder %s19, 0
    %p93 = por %p91, %p92
    %s95 = sadd.s32 %s94, 1
    %p98 = scmp.eq.s32.totalorder %s13, 1
    %p99 = scmp.ne.s32.totalorder %s94, %s96
    %p100 = scmp.eq.s32.totalorder %s13, 0
    %p101 = por %p99, %p100
    %p102 = scmp.ne.s32.totalorder %s94, %s96
    %p103 = scmp.eq.s32.totalorder %s18, 1
    %p104 = por %p102, %p103
    %p105 = scmp.ne.s32.totalorder %s96, %s97
    %p106 = scmp.eq.s32.totalorder %s18, 0
    %p107 = por %p105, %p106
    %p108 = scmp.ne.s32.totalorder %s96, %s97
    %p109 = scmp.eq.s32.totalorder %s19, 1
    %p110 = por %p108, %p109
    %p112 = scmp.ne.s32.totalorder %s97, %s111
    %p113 = scmp.eq.s32.totalorder %s19, 0
    %p114 = por %p112, %p113
    %s116 = sadd.s32 %s115, 1
    %p119 = scmp.eq.s32.totalorder %s13, 1
    %p120 = scmp.ne.s32.totalorder %s115, %s117
    %p121 = scmp.eq.s32.totalorder %s13, 0
    %p122 = por %p120, %p121
    %p123 = scmp.ne.s32.totalorder %s115, %s117
    %p124 = scmp.eq.s32.totalorder %s18, 1
    %p125 = por %p123, %p124
    %p126 = scmp.ne.s32.totalorder %s117, %s118
    %p127 = scmp.eq.s32.totalorder %s18, 0
    %p128 = por %p126, %p127
    %p129 = scmp.ne.s32.totalorder %s117, %s118
    %p130 = scmp.eq.s32.totalorder %s19, 1
    %p131 = por %p129, %p130
    %p133 = scmp.ne.s32.totalorder %s118, %s132
    %p134 = scmp.eq.s32.totalorder %s19, 0
    %p135 = por %p133, %p134
    %s137 = sadd.s32 %s136, 1
    %p140 = scmp.eq.s32.totalorder %s13, 1
    %p141 = scmp.ne.s32.totalorder %s136, %s138
    %p142 = scmp.eq.s32.totalorder %s13, 0
    %p143 = por %p141, %p142
    %p144 = scmp.ne.s32.totalorder %s136, %s138
    %p145 = scmp.eq.s32.totalorder %s18, 1
    %p146 = por %p144, %p145
    %p147 = scmp.ne.s32.totalorder %s138, %s139
    %p148 = scmp.eq.s32.totalorder %s18, 0
    %p149 = por %p147, %p148
    %p150 = scmp.ne.s32.totalorder %s138, %s139
    %p151 = scmp.eq.s32.totalorder %s19, 1
    %p152 = por %p150, %p151
    %p154 = scmp.ne.s32.totalorder %s139, %s153
    %p155 = scmp.eq.s32.totalorder %s19, 0
    %p156 = por %p154, %p155
    %s158 = sadd.s32 %s157, 1
    %p161 = scmp.eq.s32.totalorder %s13, 1
    %p162 = scmp.ne.s32.totalorder %s157, %s159
    %p163 = scmp.eq.s32.totalorder %s13, 0
    %p164 = por %p162, %p163
    %p165 = scmp.ne.s32.totalorder %s157, %s159
    %p166 = scmp.eq.s32.totalorder %s18, 1
    %p167 = por %p165, %p166
    %p168 = scmp.ne.s32.totalorder %s159, %s160
    %p169 = scmp.eq.s32.totalorder %s18, 0
    %p170 = por %p168, %p169
    %p171 = scmp.ne.s32.totalorder %s159, %s160
    %p172 = scmp.eq.s32.totalorder %s19, 1
    %p173 = por %p171, %p172
    %p175 = scmp.ne.s32.totalorder %s160, %s174
    %p176 = scmp.eq.s32.totalorder %s19, 0
    %p177 = por %p175, %p176
    %s178 = ssub.s32 %s13, %s20
    %p179 = scmp.eq.s32.totalorder %s178, 0
    %s181 = sadd.s32 %s180, 1
    %s182 = scalar_select %p179, %s180, %s181
    %p185 = pneg %p179
    %p186 = scmp.eq.s32.totalorder %s13, 1
    %p187 = por %p185, %p186
    %p188 = scmp.ne.s32.totalorder %s180, %s183
    %p189 = scmp.eq.s32.totalorder %s13, 0
    %p190 = por %p188, %p189
    %p191 = scmp.ne.s32.totalorder %s180, %s183
    %p192 = scmp.eq.s32.totalorder %s18, 1
    %p193 = por %p191, %p192
    %p194 = scmp.ne.s32.totalorder %s183, %s184
    %p195 = scmp.eq.s32.totalorder %s18, 0
    %p196 = por %p194, %p195
    %p197 = scmp.ne.s32.totalorder %s183, %s184
    %p198 = scmp.eq.s32.totalorder %s19, 1
    %p199 = por %p197, %p198
    %p201 = scmp.ne.s32.totalorder %s184, %s200
    %p202 = scmp.eq.s32.totalorder %s19, 0
    %p203 = por %p201, %p202
    %p204 = scmp.le.s32.totalorder 1, %s13
    %p205 = scmp.lt.s32.totalorder %s13, 3
    %p206 = pnand %p204, %p205
    %p207 = pneg %p206
    // Predicated region
    $region9: #{intermediate_conv_forward.3} parent=5 // pred_check
      _
    $region10: #{intermediate_conv_forward.3} parent=5 // pred_check_branch
      %209 = sbr.rel (%p206) target = $region12
    $region11: #{intermediate_conv_forward.3} parent=5 // pred_region
      %s210 = ssub.s32 %s13, 1
      // Predicated region
      $region13: #{intermediate_conv_forward.3} parent=11 // pred_check
        %p211 = pneg %p86
      $region14: #{intermediate_conv_forward.3} parent=11 // pred_check_branch
        %213 = sbr.rel (%p211) target = $region16
      $region15: #{intermediate_conv_forward.3} parent=11 // pred_region
        _
      $region16: #{intermediate_conv_forward.3} parent=11 // pred_fallthru
        _
      // Predicated region
      $region17: #{intermediate_conv_forward.3} parent=11 // pred_check
        %p214 = pneg %p107
      $region18: #{intermediate_conv_forward.3} parent=11 // pred_check_branch
        %216 = sbr.rel (%p214) target = $region20
      $region19: #{intermediate_conv_forward.3} parent=11 // pred_region
        _
      $region20: #{intermediate_conv_forward.3} parent=11 // pred_fallthru
        _
      // Predicated region
      $region21: #{intermediate_conv_forward.3} parent=11 // pred_check
        %p217 = pneg %p128
      $region22: #{intermediate_conv_forward.3} parent=11 // pred_check_branch
        %219 = sbr.rel (%p217) target = $region24
      $region23: #{intermediate_conv_forward.3} parent=11 // pred_region
        _
      $region24: #{intermediate_conv_forward.3} parent=11 // pred_fallthru
        _
      // Predicated region
      $region25: #{intermediate_conv_forward.3} parent=11 // pred_check
        %p220 = pneg %p149
      $region26: #{intermediate_conv_forward.3} parent=11 // pred_check_branch
        %222 = sbr.rel (%p220) target = $region28
      $region27: #{intermediate_conv_forward.3} parent=11 // pred_region
        _
      $region28: #{intermediate_conv_forward.3} parent=11 // pred_fallthru
        _
      // Predicated region
      $region29: #{intermediate_conv_forward.3} parent=11 // pred_check
        %p223 = pneg %p170
      $region30: #{intermediate_conv_forward.3} parent=11 // pred_check_branch
        %225 = sbr.rel (%p223) target = $region32
      $region31: #{intermediate_conv_forward.3} parent=11 // pred_region
        _
      $region32: #{intermediate_conv_forward.3} parent=11 // pred_fallthru
        _
    $region12: #{intermediate_conv_forward.3} parent=5 // pred_fallthru
      _
    %p226 = scmp.lt.s32.totalorder %s13, 2
    // Predicated region
    $region33: #{intermediate_conv_forward.3} parent=5 // pred_check
      %p227 = pneg %p226
    $region34: #{intermediate_conv_forward.3} parent=5 // pred_check_branch
      %229 = sbr.rel (%p227) target = $region36
    $region35: #{intermediate_conv_forward.3} parent=5 // pred_region
      // Predicated region
      $region37: #{intermediate_conv_forward.3} parent=35 // pred_check
        %p230 = pneg %p33
      $region38: #{intermediate_conv_forward.3} parent=35 // pred_check_branch
        %232 = sbr.rel (%p230) target = $region40
      $region39: #{intermediate_conv_forward.3} parent=35 // pred_region
        %p233 = scmp.lt.s32.totalorder %s13, 1
        %s234 = scalar_select %p233, %s13, 1
        %s235 = smul.addr %s234, 32
        %s236 = smul.addr %s235, 4
        %s237 = scalar_lea.vmem %s0, %s236
      $region40: #{intermediate_conv_forward.3} parent=35 // pred_fallthru
        _
      // Predicated region
      $region41: #{intermediate_conv_forward.3} parent=35 // pred_check
        %p238 = pneg %p59
      $region42: #{intermediate_conv_forward.3} parent=35 // pred_check_branch
        %240 = sbr.rel (%p238) target = $region44
      $region43: #{intermediate_conv_forward.3} parent=35 // pred_region
        %p241 = scmp.lt.s32.totalorder %s13, 1
        %s242 = scalar_select %p241, %s13, 1
        %s243 = smul.addr %s242, 32
        %s244 = smul.addr %s243, 4
        %s245 = scalar_lea.vmem %s1, %s244
      $region44: #{intermediate_conv_forward.3} parent=35 // pred_fallthru
        _
    $region36: #{intermediate_conv_forward.3} parent=5 // pred_fallthru
      _
    %p246 = scmp.le.s32.totalorder 1, %s13
    %p247 = scmp.lt.s32.totalorder %s13, 3
    %p248 = pnand %p246, %p247
    %p249 = pneg %p248
    // Predicated region
    $region45: #{intermediate_conv_forward.3} parent=5 // pred_check
      _
    $region46: #{intermediate_conv_forward.3} parent=5 // pred_check_branch
      %251 = sbr.rel (%p248) target = $region48
    $region47: #{intermediate_conv_forward.3} parent=5 // pred_region
      %s252 = ssub.s32 %s13, 1
      %p253 = scmp.lt.s32.totalorder %s18, 1
      %s254 = scalar_select %p253, %s18, 1
      %s255 = smul.addr %s254, 32
      %s256 = smul.addr %s255, 4
      %s257 = scalar_lea.vmem %s0, %s256
      %p258 = pneg %p39
      %p259 = pneg %p36
      %p260 = scmp.lt.s32.totalorder %s18, 1
      %s261 = scalar_select %p260, %s18, 1
      %s262 = smul.addr %s261, 32
      %s263 = smul.addr %s262, 4
      %s264 = scalar_lea.vmem %s1, %s263
      %p265 = pneg %p65
      %p266 = pneg %p62
      %p267 = pneg %p86
      %p268 = pneg %p83
      %p269 = pneg %p107
      %p270 = pneg %p104
      %p271 = pneg %p128
      %p272 = pneg %p125
      %p273 = pneg %p149
      %p274 = pneg %p146
      %p275 = pneg %p170
      %p276 = pneg %p167
      %p277 = pneg %p196
      %p278 = pneg %p193
      %p279 = scmp.lt.s32.totalorder %s18, 1
      %s280 = scalar_select %p279, %s18, 1
      %s281 = smul.addr %s280, 32
      %s282 = smul.addr %s281, 8
      %s283 = scalar_lea.vmem %s7, %s282
      %p284 = scmp.lt.s32.totalorder %s18, 1
      %s285 = scalar_select %p284, %s18, 1
      %s286 = smul.addr %s285, 32
      %s287 = smul.addr %s286, 4
      %s288 = scalar_lea.vmem %s0, %s287
      %p289 = scmp.lt.s32.totalorder %s18, 1
      %s290 = scalar_select %p289, %s18, 1
      %s291 = smul.addr %s290, 32
      %s292 = smul.addr %s291, 4
      %s293 = scalar_lea.vmem %s1, %s292
      %p294 = scmp.lt.s32.totalorder %s18, 1
      %s295 = scalar_select %p294, %s18, 1
      %s296 = smul.addr %s295, 32
      %s297 = smul.addr %s296, 8
      %s298 = scalar_lea.vmem %s7, %s297
      %300 = vst [vmem:[#allocation2] sm:$0xff] 0
      %301 = vst [vmem:[#allocation2 + $0x8] sm:$0xff] 0
      %302 = vst [vmem:[#allocation2 + $0x10] sm:$0xff] 0
      %303 = vst [vmem:[#allocation2 + $0x18] sm:$0xff] 0
      %304 = vst [vmem:[#allocation2 + $0x20] sm:$0xff] 0
      %305 = vst [vmem:[#allocation2 + $0x28] sm:$0xff] 0
      %s306 = scalar_lea.vmem [#allocation2], 432
      %307 = vst [vmem:[%s306] sm:$0xff] 0
      %308 = vst [vmem:[%s306 + $0x8] sm:$0xff] 0
      %309 = vst [vmem:[%s306 + $0x10] sm:$0xff] 0
      %310 = vst [vmem:[%s306 + $0x18] sm:$0xff] 0
      %311 = vst [vmem:[%s306 + $0x20] sm:$0xff] 0
      %312 = vst [vmem:[%s306 + $0x28] sm:$0xff] 0
      %v313 = vld [vmem:[%s3] sm:$0x1]
      %v314 = vunpack.c.l.bf16 %v313
      %v315 = vld [vmem:[%s4] sm:$0x1]
      loop: start=0, step=1, limit=4
      $region49: #{intermediate_conv_forward.3} parent=47 // loop_pre_header
        _
      $region50: #{intermediate_conv_forward.3} parent=47 // loop_header
        %s317 = sphi 0, %s321
        %p318 = scmp.ge.s32.totalorder %s317, 4
      $region51: #{intermediate_conv_forward.3} parent=47 // loop_header_branch
        %320 = sbr.rel (%p318) target = $region55
      $region52: #{intermediate_conv_forward.3} parent=47 // loop_body
        %s322 = smul.u32 %s317, 4
        %s323 = smul.u32 %s322, 2
        %s324 = smul.addr %s323, 4
        %s325 = scalar_lea.vmem %s288, %s324
        %v326 = vld [vmem:[%s325] sm:$0xf]
        %v327 = vld [vmem:[%s325 + $0x4] sm:$0xf]
        %v328 = vld [vmem:[%s325 + $0x8] sm:$0xf]
        %v329 = vld [vmem:[%s325 + $0xc] sm:$0xf]
        %v330 = vld [vmem:[%s325 + $0x10] sm:$0xf]
        %v331 = vld [vmem:[%s325 + $0x14] sm:$0xf]
        %v332 = vld [vmem:[%s325 + $0x18] sm:$0xf]
        %v333 = vld [vmem:[%s325 + $0x1c] sm:$0xf]
        %s334 = smul.addr %s323, 4
        %s335 = scalar_lea.vmem %s293, %s334
        %v336 = vld [vmem:[%s335] sm:$0xf]
        %v337 = vld [vmem:[%s335 + $0x4] sm:$0xf]
        %v338 = vld [vmem:[%s335 + $0x8] sm:$0xf]
        %v339 = vld [vmem:[%s335 + $0xc] sm:$0xf]
        %v340 = vld [vmem:[%s335 + $0x10] sm:$0xf]
        %v341 = vld [vmem:[%s335 + $0x14] sm:$0xf]
        %v342 = vld [vmem:[%s335 + $0x18] sm:$0xf]
        %v343 = vld [vmem:[%s335 + $0x1c] sm:$0xf]
        %v344 = vunpack.c.l.bf16 %v336
        %v345 = vunpack.c.l.bf16 %v337
        %v346 = vunpack.c.l.bf16 %v338
        %v347 = vunpack.c.l.bf16 %v339
        %v348 = vunpack.c.l.bf16 %v340
        %v349 = vunpack.c.l.bf16 %v341
        %v350 = vunpack.c.l.bf16 %v342
        %v351 = vunpack.c.l.bf16 %v343
        %v352 = vld [vmem:[%s2] sm:$0xf]
        %v353 = vld [vmem:[%s2 + $0x4] sm:$0xf]
        %v354 = vld [vmem:[%s2 + $0x8] sm:$0xf]
        %v355 = vld [vmem:[%s2 + $0xc] sm:$0xf]
        %v356 = vld [vmem:[%s2 + $0x10] sm:$0xf]
        %v357 = vld [vmem:[%s2 + $0x14] sm:$0xf]
        %v358 = vld [vmem:[%s2 + $0x18] sm:$0xf]
        %v359 = vld [vmem:[%s2 + $0x1c] sm:$0xf]
        %v360 = vld [vmem:[%s2 + $0x20] sm:$0xf]
        %v361 = vld [vmem:[%s2 + $0x24] sm:$0xf]
        %v362 = vld [vmem:[%s2 + $0x28] sm:$0xf]
        %v363 = vld [vmem:[%s2 + $0x2c] sm:$0xf]
        %v364 = vld [vmem:[%s2 + $0x30] sm:$0xf]
        %v365 = vld [vmem:[%s2 + $0x34] sm:$0xf]
        %v366 = vld [vmem:[%s2 + $0x38] sm:$0xf]
        %v367 = vld [vmem:[%s2 + $0x3c] sm:$0xf]
        %v369 = vlaneseq
        %v370 = vshrl.u32 %v369, 7
        %v371 = vsub.s32 0, %v370
        %v372 = vrot.slane %v315, %v371
        %v382 = vunpack.c.l.b16 %v326
        %v383 = vunpack.c.l.b16 %v327
        %v384 = vunpack.c.l.b16 %v328
        %v385 = vunpack.c.l.b16 %v329
        %v386 = vunpack.c.l.b16 %v330
        %v387 = vunpack.c.l.b16 %v331
        %v388 = vunpack.c.l.b16 %v332
        %v389 = vunpack.c.l.b16 %v333
        %v390 = vpack.c.b16 %v383, %v382
        %v391 = vpack.c.b16 %v385, %v384
        %v392 = vpack.c.b16 %v387, %v386
        %v393 = vpack.c.b16 %v389, %v388
        %v414 = vunpack.c.l.b16 %v352
        %v415 = vunpack.c.l.b16 %v353
        %v416 = vunpack.c.l.b16 %v354
        %v417 = vunpack.c.l.b16 %v355
        %v418 = vunpack.c.l.b16 %v356
        %v419 = vunpack.c.l.b16 %v357
        %v420 = vunpack.c.l.b16 %v358
        %v421 = vunpack.c.l.b16 %v359
        %v422 = vunpack.c.l.b16 %v360
        %v423 = vunpack.c.l.b16 %v361
        %v424 = vunpack.c.l.b16 %v362
        %v425 = vunpack.c.l.b16 %v363
        %v426 = vunpack.c.l.b16 %v364
        %v427 = vunpack.c.l.b16 %v365
        %v428 = vunpack.c.l.b16 %v366
        %v429 = vunpack.c.l.b16 %v367
        %v430 = vpack.c.b16 %v415, %v414
        %v431 = vpack.c.b16 %v417, %v416
        %v432 = vpack.c.b16 %v419, %v418
        %v433 = vpack.c.b16 %v421, %v420
        %v434 = vpack.c.b16 %v423, %v422
        %v435 = vpack.c.b16 %v425, %v424
        %v436 = vpack.c.b16 %v427, %v426
        %v437 = vpack.c.b16 %v429, %v428
        %446 = vmatprep.subr.bf16.mxu0 0
        %447 = vmatpush1.bf16.msra.mxu0 %v430
        %448 = vmatprep.subr.bf16.mxu0 0
        %449 = vmatpush1.bf16.msra.mxu0 %v431
        %450 = vmatprep.subr.bf16.mxu0 0
        %451 = vmatpush1.bf16.msra.mxu0 %v432
        %452 = vmatprep.subr.bf16.mxu0 0
        %453 = vmatpush1.bf16.msra.mxu0 %v433
        %454 = vmatprep.subr.bf16.mxu0 0
        %455 = vmatpush1.bf16.msra.mxu0 %v434
        %456 = vmatprep.subr.bf16.mxu0 0
        %457 = vmatpush1.bf16.msra.mxu0 %v435
        %458 = vmatprep.subr.bf16.mxu0 0
        %459 = vmatpush1.bf16.msra.mxu0 %v436
        %460 = vmatprep.subr.bf16.mxu0 0
        %461 = vmatpush1.bf16.msra.mxu0 %v437
        %462 = vmatprep.subr.bf16.mxu0 0
        %463 = vmatpush1.bf16.msra.mxu0 0
        %464 = vmatprep.subr.bf16.mxu0 0
        %465 = vmatpush1.bf16.msra.mxu0 0
        %466 = vmatprep.subr.bf16.mxu0 0
        %467 = vmatpush1.bf16.msra.mxu0 0
        %468 = vmatprep.subr.bf16.mxu0 0
        %469 = vmatpush1.bf16.msra.mxu0 0
        %470 = vmatprep.subr.bf16.mxu0 0
        %471 = vmatpush1.bf16.msra.mxu0 0
        %472 = vmatprep.subr.bf16.mxu0 0
        %473 = vmatpush1.bf16.msra.mxu0 0
        %474 = vmatprep.subr.bf16.mxu0 0
        %475 = vmatpush1.bf16.msra.mxu0 0
        %476 = vmatprep.subr.bf16.mxu0 0
        %477 = vmatpush1.bf16.msra.mxu0 0
        %478 = vmatprep.mubr.bf16.mxu0 0
        %479 = vmatmul.mubr.bf16.gmra.mrb[0].mxu0 %v390
        %v480 = vpop.f32.mrb[0].mxu0
        %v481 = vadd.f32 %v372, %v480
        %v482 = vpop.f32.mrb[0].mxu0
        %v483 = vpop.f32.mrb[0].mxu0
        %v484 = vadd.f32 %v372, %v483
        %v485 = vpop.f32.mrb[0].mxu0
        %486 = vmatprep.mubr.bf16.mxu0 0
        %487 = vmatmul.mubr.bf16.gmra.mrb[0].mxu0 %v391
        %v488 = vpop.f32.mrb[0].mxu0
        %v489 = vadd.f32 %v372, %v488
        %v490 = vpop.f32.mrb[0].mxu0
        %v491 = vpop.f32.mrb[0].mxu0
        %v492 = vadd.f32 %v372, %v491
        %v493 = vpop.f32.mrb[0].mxu0
        %494 = vmatprep.mubr.bf16.mxu0 0
        %495 = vmatmul.mubr.bf16.gmra.mrb[0].mxu0 %v392
        %v496 = vpop.f32.mrb[0].mxu0
        %v497 = vadd.f32 %v372, %v496
        %v498 = vpop.f32.mrb[0].mxu0
        %v499 = vpop.f32.mrb[0].mxu0
        %v500 = vadd.f32 %v372, %v499
        %v501 = vpop.f32.mrb[0].mxu0
        %502 = vmatprep.mubr.bf16.mxu0 0
        %503 = vmatmul.mubr.bf16.gmra.mrb[0].mxu0 %v393
        %v504 = vpop.f32.mrb[0].mxu0
        %v505 = vadd.f32 %v372, %v504
        %v506 = vpop.f32.mrb[0].mxu0
        %v507 = vpop.f32.mrb[0].mxu0
        %v508 = vadd.f32 %v372, %v507
        %v509 = vpop.f32.mrb[0].mxu0
        %510 = vdwg.mxu0
        %512 = vset.pattern.permute.xlu0 0
        %513 = vperm.xlu0 %512, %v344
        %v514 = vpop.permute.xlu0 %513
        %517 = vset.pattern.permute.xlu0 0
        %518 = vperm.xlu0 %517, %v345
        %v519 = vpop.permute.xlu0 %518
        %522 = vset.pattern.permute.xlu0 0
        %523 = vperm.xlu0 %522, %v346
        %v524 = vpop.permute.xlu0 %523
        %527 = vset.pattern.permute.xlu0 0
        %528 = vperm.xlu0 %527, %v347
        %v529 = vpop.permute.xlu0 %528
        %532 = vset.pattern.permute.xlu0 0
        %533 = vperm.xlu0 %532, %v348
        %v534 = vpop.permute.xlu0 %533
        %537 = vset.pattern.permute.xlu0 0
        %538 = vperm.xlu0 %537, %v349
        %v539 = vpop.permute.xlu0 %538
        %542 = vset.pattern.permute.xlu0 0
        %543 = vperm.xlu0 %542, %v350
        %v544 = vpop.permute.xlu0 %543
        %547 = vset.pattern.permute.xlu0 0
        %548 = vperm.xlu0 %547, %v351
        %v549 = vpop.permute.xlu0 %548
        %v551 = vlaneseq
        %v552 = vshrl.u32 %v551, 7
        %v553 = vsub.s32 0, %v552
        %v554 = vrot.slane %v314, %v553
        %v555 = vmul.f32 %v514, %v554
        %v556 = vmul.f32 %v519, %v554
        %v557 = vmul.f32 %v524, %v554
        %v558 = vmul.f32 %v529, %v554
        %v559 = vmul.f32 %v534, %v554
        %v560 = vmul.f32 %v539, %v554
        %v561 = vmul.f32 %v544, %v554
        %v562 = vmul.f32 %v549, %v554
        %v563 = vadd.f32 %v481, %v555
        %v564 = vadd.f32 %v484, %v556
        %v565 = vadd.f32 %v489, %v557
        %v566 = vadd.f32 %v492, %v558
        %v567 = vadd.f32 %v497, %v559
        %v568 = vadd.f32 %v500, %v560
        %v569 = vadd.f32 %v505, %v561
        %v570 = vadd.f32 %v508, %v562
        %571 = vset.pattern.permute.xlu0 1
        %572 = vperm.xlu0 %571, %v344
        %v573 = vpop.permute.xlu0 %572
        %575 = vset.pattern.permute.xlu0 1
        %576 = vperm.xlu0 %575, %v345
        %v577 = vpop.permute.xlu0 %576
        %579 = vset.pattern.permute.xlu0 1
        %580 = vperm.xlu0 %579, %v346
        %v581 = vpop.permute.xlu0 %580
        %583 = vset.pattern.permute.xlu0 1
        %584 = vperm.xlu0 %583, %v347
        %v585 = vpop.permute.xlu0 %584
        %587 = vset.pattern.permute.xlu0 1
        %588 = vperm.xlu0 %587, %v348
        %v589 = vpop.permute.xlu0 %588
        %591 = vset.pattern.permute.xlu0 1
        %592 = vperm.xlu0 %591, %v349
        %v593 = vpop.permute.xlu0 %592
        %595 = vset.pattern.permute.xlu0 1
        %596 = vperm.xlu0 %595, %v350
        %v597 = vpop.permute.xlu0 %596
        %599 = vset.pattern.permute.xlu0 1
        %600 = vperm.xlu0 %599, %v351
        %v601 = vpop.permute.xlu0 %600
        %v603 = vlaneseq
        %v604 = vshrl.u32 %v603, 7
        %v605 = vsub.s32 1, %v604
        %v606 = vrot.slane %v314, %v605
        %v607 = vmul.f32 %v573, %v606
        %v608 = vmul.f32 %v577, %v606
        %v609 = vmul.f32 %v581, %v606
        %v610 = vmul.f32 %v585, %v606
        %v611 = vmul.f32 %v589, %v606
        %v612 = vmul.f32 %v593, %v606
        %v613 = vmul.f32 %v597, %v606
        %v614 = vmul.f32 %v601, %v606
        %v615 = vadd.f32 %v563, %v607
        %v616 = vadd.f32 %v564, %v608
        %v617 = vadd.f32 %v565, %v609
        %v618 = vadd.f32 %v566, %v610
        %v619 = vadd.f32 %v567, %v611
        %v620 = vadd.f32 %v568, %v612
        %v621 = vadd.f32 %v569, %v613
        %v622 = vadd.f32 %v570, %v614
        %v623 = vpack.c.bf16 %v616, %v615
        %v624 = vpack.c.bf16 %v618, %v617
        %v625 = vpack.c.bf16 %v620, %v619
        %v626 = vpack.c.bf16 %v622, %v621
        %v631 = vrot.slane %v623, 7
        %v632 = vrot.slane %v624, 7
        %v633 = vrot.slane %v625, 7
        %v634 = vrot.slane %v626, 7
        %vm635 = vcmask 1040384
        %v638 = vsel %vm635, 0, %v631
        %v641 = vsel %vm635, 0, %v632
        %v644 = vsel %vm635, 0, %v633
        %v647 = vsel %vm635, 0, %v634
        %v649 = vrot.slane %v623, 1
        %v650 = vrot.slane %v624, 1
        %v651 = vrot.slane %v625, 1
        %v652 = vrot.slane %v626, 1
        %vm653 = vcmask 1046528
        %v655 = vsel %vm653, %v649, 0
        %v658 = vsel %vm653, %v650, 0
        %v661 = vsel %vm653, %v651, 0
        %v664 = vsel %vm653, %v652, 0
        %s666 = sadd.s32 %s322, 2
        %s667 = smul.u32 %s666, 3
        %s668 = smul.addr %s667, 8
        %s669 = scalar_lea.vmem [#allocation2], %s668
        %670 = vst [vmem:[%s669] sm:$0xff] %v638
        %671 = vst [vmem:[%s669 + $0x8] sm:$0xff] %v623
        %672 = vst [vmem:[%s669 + $0x10] sm:$0xff] %v655
        %673 = vst [vmem:[%s669 + $0x18] sm:$0xff] %v641
        %674 = vst [vmem:[%s669 + $0x20] sm:$0xff] %v624
        %675 = vst [vmem:[%s669 + $0x28] sm:$0xff] %v658
        %676 = vst [vmem:[%s669 + $0x30] sm:$0xff] %v644
        %677 = vst [vmem:[%s669 + $0x38] sm:$0xff] %v625
        %678 = vst [vmem:[%s669 + $0x40] sm:$0xff] %v661
        %679 = vst [vmem:[%s669 + $0x48] sm:$0xff] %v647
        %680 = vst [vmem:[%s669 + $0x50] sm:$0xff] %v626
        %681 = vst [vmem:[%s669 + $0x58] sm:$0xff] %v664
      $region53: #{intermediate_conv_forward.3} parent=47 // loop_footer
        %s321 = sadd.s32 1, %s317
      $region54: #{intermediate_conv_forward.3} parent=47 // loop_footer_branch
        %316 = sbr.rel target = $region50
      $region55: #{intermediate_conv_forward.3} parent=47 // loop_exit
        _
      %v682 = vld [vmem:[#allocation2] sm:$0xff]
      %v683 = vld [vmem:[#allocation2 + $0x8] sm:$0xff]
      %v684 = vld [vmem:[#allocation2 + $0x10] sm:$0xff]
      %v685 = vld [vmem:[#allocation2 + $0x18] sm:$0xff]
      %v686 = vld [vmem:[#allocation2 + $0x20] sm:$0xff]
      %v687 = vld [vmem:[#allocation2 + $0x28] sm:$0xff]
      %v688 = vld [vmem:[#allocation2 + $0x30] sm:$0xff]
      %v689 = vld [vmem:[#allocation2 + $0x38] sm:$0xff]
      %v690 = vld [vmem:[#allocation2 + $0x40] sm:$0xff]
      %v691 = vld [vmem:[#allocation2 + $0x48] sm:$0xff]
      %v692 = vld [vmem:[#allocation2 + $0x50] sm:$0xff]
      %v693 = vld [vmem:[#allocation2 + $0x58] sm:$0xff]
      %v694 = vld [vmem:[#allocation2 + $0x60] sm:$0xff]
      %v695 = vld [vmem:[#allocation2 + $0x68] sm:$0xff]
      %v696 = vld [vmem:[#allocation2 + $0x70] sm:$0xff]
      %v697 = vld [vmem:[#allocation2 + $0x78] sm:$0xff]
      %v698 = vld [vmem:[#allocation2 + $0x80] sm:$0xff]
      %v699 = vld [vmem:[#allocation2 + $0x88] sm:$0xff]
      %v700 = vld [vmem:[#allocation2 + $0x90] sm:$0xff]
      %v701 = vld [vmem:[#allocation2 + $0x98] sm:$0xff]
      %v702 = vld [vmem:[#allocation2 + $0xa0] sm:$0xff]
      %v703 = vld [vmem:[#allocation2 + $0xa8] sm:$0xff]
      %v704 = vld [vmem:[#allocation2 + $0xb0] sm:$0xff]
      %v705 = vld [vmem:[#allocation2 + $0xb8] sm:$0xff]
      %v706 = vld [vmem:[#allocation2 + $0xc0] sm:$0xff]
      %v707 = vld [vmem:[#allocation2 + $0xc8] sm:$0xff]
      %v708 = vld [vmem:[#allocation2 + $0xd0] sm:$0xff]
      %v709 = vld [vmem:[#allocation2 + $0xd8] sm:$0xff]
      %v710 = vld [vmem:[#allocation2 + $0xe0] sm:$0xff]
      %v711 = vld [vmem:[#allocation2 + $0xe8] sm:$0xff]
      %v712 = vld [vmem:[#allocation2 + $0xf0] sm:$0xff]
      %v713 = vld [vmem:[#allocation2 + $0xf8] sm:$0xff]
      %v714 = vld [vmem:[#allocation2 + $0x100] sm:$0xff]
      %v715 = vld [vmem:[#allocation2 + $0x108] sm:$0xff]
      %v716 = vld [vmem:[#allocation2 + $0x110] sm:$0xff]
      %v717 = vld [vmem:[#allocation2 + $0x118] sm:$0xff]
      %v718 = vld [vmem:[#allocation2 + $0x120] sm:$0xff]
      %v719 = vld [vmem:[#allocation2 + $0x128] sm:$0xff]
      %v720 = vld [vmem:[#allocation2 + $0x130] sm:$0xff]
      %v721 = vld [vmem:[#allocation2 + $0x138] sm:$0xff]
      %v722 = vld [vmem:[#allocation2 + $0x140] sm:$0xff]
      %v723 = vld [vmem:[#allocation2 + $0x148] sm:$0xff]
      %v724 = vld [vmem:[#allocation2 + $0x150] sm:$0xff]
      %v725 = vld [vmem:[#allocation2 + $0x158] sm:$0xff]
      %v726 = vld [vmem:[#allocation2 + $0x160] sm:$0xff]
      %v727 = vld [vmem:[#allocation2 + $0x168] sm:$0xff]
      %v728 = vld [vmem:[#allocation2 + $0x170] sm:$0xff]
      %v729 = vld [vmem:[#allocation2 + $0x178] sm:$0xff]
      %v730 = vld [vmem:[%s5] sm:$0xf]
      %v731 = vld [vmem:[%s5 + $0x4] sm:$0xf]
      %v732 = vld [vmem:[%s5 + $0x8] sm:$0xf]
      %v733 = vld [vmem:[%s5 + $0xc] sm:$0xf]
      %v734 = vld [vmem:[%s5 + $0x10] sm:$0xf]
      %v735 = vld [vmem:[%s5 + $0x14] sm:$0xf]
      %v736 = vld [vmem:[%s5 + $0x18] sm:$0xf]
      %v737 = vld [vmem:[%s5 + $0x1c] sm:$0xf]
      %v738 = vld [vmem:[%s5 + $0x20] sm:$0xf]
      %v739 = vld [vmem:[%s5 + $0x24] sm:$0xf]
      %v740 = vld [vmem:[%s5 + $0x28] sm:$0xf]
      %v741 = vld [vmem:[%s5 + $0x2c] sm:$0xf]
      %v742 = vld [vmem:[%s5 + $0x30] sm:$0xf]
      %v743 = vld [vmem:[%s5 + $0x34] sm:$0xf]
      %v744 = vld [vmem:[%s5 + $0x38] sm:$0xf]
      %v745 = vld [vmem:[%s5 + $0x3c] sm:$0xf]
      %v746 = vld [vmem:[%s5 + $0x40] sm:$0xf]
      %v747 = vld [vmem:[%s5 + $0x44] sm:$0xf]
      %v748 = vld [vmem:[%s5 + $0x48] sm:$0xf]
      %v749 = vld [vmem:[%s5 + $0x4c] sm:$0xf]
      %v750 = vld [vmem:[%s5 + $0x50] sm:$0xf]
      %v751 = vld [vmem:[%s5 + $0x54] sm:$0xf]
      %v752 = vld [vmem:[%s5 + $0x58] sm:$0xf]
      %v753 = vld [vmem:[%s5 + $0x5c] sm:$0xf]
      %v754 = vld [vmem:[%s5 + $0x60] sm:$0xf]
      %v755 = vld [vmem:[%s5 + $0x64] sm:$0xf]
      %v756 = vld [vmem:[%s5 + $0x68] sm:$0xf]
      %v757 = vld [vmem:[%s5 + $0x6c] sm:$0xf]
      %v758 = vld [vmem:[%s5 + $0x70] sm:$0xf]
      %v759 = vld [vmem:[%s5 + $0x74] sm:$0xf]
      %v760 = vld [vmem:[%s5 + $0x78] sm:$0xf]
      %v761 = vld [vmem:[%s5 + $0x7c] sm:$0xf]
      %v762 = vld [vmem:[%s5 + $0x80] sm:$0xf]
      %v763 = vld [vmem:[%s5 + $0x84] sm:$0xf]
      %v764 = vld [vmem:[%s5 + $0x88] sm:$0xf]
      %v765 = vld [vmem:[%s5 + $0x8c] sm:$0xf]
      %v766 = vld [vmem:[%s5 + $0x90] sm:$0xf]
      %v767 = vld [vmem:[%s5 + $0x94] sm:$0xf]
      %v768 = vld [vmem:[%s5 + $0x98] sm:$0xf]
      %v769 = vld [vmem:[%s5 + $0x9c] sm:$0xf]
      %v770 = vld [vmem:[%s5 + $0xa0] sm:$0xf]
      %v771 = vld [vmem:[%s5 + $0xa4] sm:$0xf]
      %v772 = vld [vmem:[%s5 + $0xa8] sm:$0xf]
      %v773 = vld [vmem:[%s5 + $0xac] sm:$0xf]
      %v774 = vld [vmem:[%s5 + $0xb0] sm:$0xf]
      %v775 = vld [vmem:[%s5 + $0xb4] sm:$0xf]
      %v776 = vld [vmem:[%s5 + $0xb8] sm:$0xf]
      %v777 = vld [vmem:[%s5 + $0xbc] sm:$0xf]
      %v778 = vld [vmem:[%s6] sm:$0x1]
      %v780 = vlaneseq
      %v781 = vshrl.u32 %v780, 7
      %v782 = vsub.s32 0, %v781
      %v783 = vrot.slane %v778, %v782
      %v833 = vunpack.c.l.b16 %v730
      %v834 = vunpack.c.l.b16 %v731
      %v835 = vunpack.c.l.b16 %v732
      %v836 = vunpack.c.l.b16 %v733
      %v837 = vunpack.c.l.b16 %v734
      %v838 = vunpack.c.l.b16 %v735
      %v839 = vunpack.c.l.b16 %v736
      %v840 = vunpack.c.l.b16 %v737
      %v841 = vunpack.c.l.b16 %v738
      %v842 = vunpack.c.l.b16 %v739
      %v843 = vunpack.c.l.b16 %v740
      %v844 = vunpack.c.l.b16 %v741
      %v845 = vunpack.c.l.b16 %v742
      %v846 = vunpack.c.l.b16 %v743
      %v847 = vunpack.c.l.b16 %v744
      %v848 = vunpack.c.l.b16 %v745
      %v849 = vunpack.c.l.b16 %v746
      %v850 = vunpack.c.l.b16 %v747
      %v851 = vunpack.c.l.b16 %v748
      %v852 = vunpack.c.l.b16 %v749
      %v853 = vunpack.c.l.b16 %v750
      %v854 = vunpack.c.l.b16 %v751
      %v855 = vunpack.c.l.b16 %v752
      %v856 = vunpack.c.l.b16 %v753
      %v857 = vunpack.c.l.b16 %v754
      %v858 = vunpack.c.l.b16 %v755
      %v859 = vunpack.c.l.b16 %v756
      %v860 = vunpack.c.l.b16 %v757
      %v861 = vunpack.c.l.b16 %v758
      %v862 = vunpack.c.l.b16 %v759
      %v863 = vunpack.c.l.b16 %v760
      %v864 = vunpack.c.l.b16 %v761
      %v865 = vunpack.c.l.b16 %v762
      %v866 = vunpack.c.l.b16 %v763
      %v867 = vunpack.c.l.b16 %v764
      %v868 = vunpack.c.l.b16 %v765
      %v869 = vunpack.c.l.b16 %v766
      %v870 = vunpack.c.l.b16 %v767
      %v871 = vunpack.c.l.b16 %v768
      %v872 = vunpack.c.l.b16 %v769
      %v873 = vunpack.c.l.b16 %v770
      %v874 = vunpack.c.l.b16 %v771
      %v875 = vunpack.c.l.b16 %v772
      %v876 = vunpack.c.l.b16 %v773
      %v877 = vunpack.c.l.b16 %v774
      %v878 = vunpack.c.l.b16 %v775
      %v879 = vunpack.c.l.b16 %v776
      %v880 = vunpack.c.l.b16 %v777
      %v881 = vpack.c.b16 %v834, %v833
      %v882 = vpack.c.b16 %v836, %v835
      %v883 = vpack.c.b16 %v838, %v837
      %v884 = vpack.c.b16 %v840, %v839
      %v885 = vpack.c.b16 %v842, %v841
      %v886 = vpack.c.b16 %v844, %v843
      %v887 = vpack.c.b16 %v846, %v845
      %v888 = vpack.c.b16 %v848, %v847
      %v889 = vpack.c.b16 %v850, %v849
      %v890 = vpack.c.b16 %v852, %v851
      %v891 = vpack.c.b16 %v854, %v853
      %v892 = vpack.c.b16 %v856, %v855
      %v893 = vpack.c.b16 %v858, %v857
      %v894 = vpack.c.b16 %v860, %v859
      %v895 = vpack.c.b16 %v862, %v861
      %v896 = vpack.c.b16 %v864, %v863
      %v897 = vpack.c.b16 %v866, %v865
      %v898 = vpack.c.b16 %v868, %v867
      %v899 = vpack.c.b16 %v870, %v869
      %v900 = vpack.c.b16 %v872, %v871
      %v901 = vpack.c.b16 %v874, %v873
      %v902 = vpack.c.b16 %v876, %v875
      %v903 = vpack.c.b16 %v878, %v877
      %v904 = vpack.c.b16 %v880, %v879
      %929 = vmatprep.subr.bf16.mxu0 0
      %930 = vmatpush1.bf16.msra.mxu0 %v881
      %931 = vmatprep.subr.bf16.mxu0 0
      %932 = vmatpush1.bf16.msra.mxu0 %v882
      %933 = vmatprep.subr.bf16.mxu0 0
      %934 = vmatpush1.bf16.msra.mxu0 %v883
      %935 = vmatprep.subr.bf16.mxu0 0
      %936 = vmatpush1.bf16.msra.mxu0 %v884
      %937 = vmatprep.subr.bf16.mxu0 0
      %938 = vmatpush1.bf16.msra.mxu0 %v885
      %939 = vmatprep.subr.bf16.mxu0 0
      %940 = vmatpush1.bf16.msra.mxu0 %v886
      %941 = vmatprep.subr.bf16.mxu0 0
      %942 = vmatpush1.bf16.msra.mxu0 %v887
      %943 = vmatprep.subr.bf16.mxu0 0
      %944 = vmatpush1.bf16.msra.mxu0 %v888
      %945 = vmatprep.subr.bf16.mxu0 0
      %946 = vmatpush1.bf16.msra.mxu0 %v889
      %947 = vmatprep.subr.bf16.mxu0 0
      %948 = vmatpush1.bf16.msra.mxu0 %v890
      %949 = vmatprep.subr.bf16.mxu0 0
      %950 = vmatpush1.bf16.msra.mxu0 %v891
      %951 = vmatprep.subr.bf16.mxu0 0
      %952 = vmatpush1.bf16.msra.mxu0 %v892
      %953 = vmatprep.subr.bf16.mxu0 0
      %954 = vmatpush1.bf16.msra.mxu0 %v893
      %955 = vmatprep.subr.bf16.mxu0 0
      %956 = vmatpush1.bf16.msra.mxu0 %v894
      %957 = vmatprep.subr.bf16.mxu0 0
      %958 = vmatpush1.bf16.msra.mxu0 %v895
      %959 = vmatprep.subr.bf16.mxu0 0
      %960 = vmatpush1.bf16.msra.mxu0 %v896
      %961 = vmatprep.mubr.bf16.mxu0 %v683
      %962 = vmatmul.mubr.bf16.gmra.mrb[0].mxu0 %v682
      %v963 = vpop.f32.mrb[0].mxu0
      %v964 = vadd.f32 %v783, %v963
      %v965 = vpop.f32.mrb[0].mxu0
      %v966 = vpop.f32.mrb[0].mxu0
      %v967 = vadd.f32 %v783, %v966
      %v968 = vpop.f32.mrb[0].mxu0
      %969 = vmatprep.mubr.bf16.mxu0 %v686
      %970 = vmatmul.mubr.bf16.gmra.mrb[0].mxu0 %v685
      %v971 = vpop.f32.mrb[0].mxu0
      %v972 = vadd.f32 %v783, %v971
      %v973 = vpop.f32.mrb[0].mxu0
      %v974 = vpop.f32.mrb[0].mxu0
      %v975 = vadd.f32 %v783, %v974
      %v976 = vpop.f32.mrb[0].mxu0
      %977 = vmatprep.mubr.bf16.mxu0 %v689
      %978 = vmatmul.mubr.bf16.gmra.mrb[0].mxu0 %v688
      %v979 = vpop.f32.mrb[0].mxu0
      %v980 = vadd.f32 %v783, %v979
      %v981 = vpop.f32.mrb[0].mxu0
      %v982 = vpop.f32.mrb[0].mxu0
      %v983 = vadd.f32 %v783, %v982
      %v984 = vpop.f32.mrb[0].mxu0
      %985 = vmatprep.mubr.bf16.mxu0 %v692
      %986 = vmatmul.mubr.bf16.gmra.mrb[0].mxu0 %v691
      %v987 = vpop.f32.mrb[0].mxu0
      %v988 = vadd.f32 %v783, %v987
      %v989 = vpop.f32.mrb[0].mxu0
      %v990 = vpop.f32.mrb[0].mxu0
      %v991 = vadd.f32 %v783, %v990
      %v992 = vpop.f32.mrb[0].mxu0
      %993 = vmatprep.mubr.bf16.mxu0 %v695
      %994 = vmatmul.mubr.bf16.gmra.mrb[0].mxu0 %v694
      %v995 = vpop.f32.mrb[0].mxu0
      %v996 = vadd.f32 %v783, %v995
      %v997 = vpop.f32.mrb[0].mxu0
      %v998 = vpop.f32.mrb[0].mxu0
      %v999 = vadd.f32 %v783, %v998
      %v1000 = vpop.f32.mrb[0].mxu0
      %1001 = vmatprep.mubr.bf16.mxu0 %v698
      %1002 = vmatmul.mubr.bf16.gmra.mrb[0].mxu0 %v697
      %v1003 = vpop.f32.mrb[0].mxu0
      %v1004 = vadd.f32 %v783, %v1003
      %v1005 = vpop.f32.mrb[0].mxu0
      %v1006 = vpop.f32.mrb[0].mxu0
      %v1007 = vadd.f32 %v783, %v1006
      %v1008 = vpop.f32.mrb[0].mxu0
      %1009 = vmatprep.mubr.bf16.mxu0 %v701
      %1010 = vmatmul.mubr.bf16.gmra.mrb[0].mxu0 %v700
      %v1011 = vpop.f32.mrb[0].mxu0
      %v1012 = vadd.f32 %v783, %v1011
      %v1013 = vpop.f32.mrb[0].mxu0
      %v1014 = vpop.f32.mrb[0].mxu0
      %v1015 = vadd.f32 %v783, %v1014
      %v1016 = vpop.f32.mrb[0].mxu0
      %1017 = vmatprep.mubr.bf16.mxu0 %v704
      %1018 = vmatmul.mubr.bf16.gmra.mrb[0].mxu0 %v703
      %v1019 = vpop.f32.mrb[0].mxu0
      %v1020 = vadd.f32 %v783, %v1019
      %v1021 = vpop.f32.mrb[0].mxu0
      %v1022 = vpop.f32.mrb[0].mxu0
      %v1023 = vadd.f32 %v783, %v1022
      %v1024 = vpop.f32.mrb[0].mxu0
      %1025 = vmatprep.mubr.bf16.mxu0 %v707
      %1026 = vmatmul.mubr.bf16.gmra.mrb[0].mxu0 %v706
      %v1027 = vpop.f32.mrb[0].mxu0
      %v1028 = vadd.f32 %v783, %v1027
      %v1029 = vpop.f32.mrb[0].mxu0
      %v1030 = vpop.f32.mrb[0].mxu0
      %v1031 = vadd.f32 %v783, %v1030
      %v1032 = vpop.f32.mrb[0].mxu0
      %1033 = vmatprep.mubr.bf16.mxu0 %v710
      %1034 = vmatmul.mubr.bf16.gmra.mrb[0].mxu0 %v709
      %v1035 = vpop.f32.mrb[0].mxu0
      %v1036 = vadd.f32 %v783, %v1035
      %v1037 = vpop.f32.mrb[0].mxu0
      %v1038 = vpop.f32.mrb[0].mxu0
      %v1039 = vadd.f32 %v783, %v1038
      %v1040 = vpop.f32.mrb[0].mxu0
      %1041 = vmatprep.mubr.bf16.mxu0 %v713
      %1042 = vmatmul.mubr.bf16.gmra.mrb[0].mxu0 %v712
      %v1043 = vpop.f32.mrb[0].mxu0
      %v1044 = vadd.f32 %v783, %v1043
      %v1045 = vpop.f32.mrb[0].mxu0
      %v1046 = vpop.f32.mrb[0].mxu0
      %v1047 = vadd.f32 %v783, %v1046
      %v1048 = vpop.f32.mrb[0].mxu0
      %1049 = vmatprep.mubr.bf16.mxu0 %v716
      %1050 = vmatmul.mubr.bf16.gmra.mrb[0].mxu0 %v715
      %v1051 = vpop.f32.mrb[0].mxu0
      %v1052 = vadd.f32 %v783, %v1051
      %v1053 = vpop.f32.mrb[0].mxu0
      %v1054 = vpop.f32.mrb[0].mxu0
      %v1055 = vadd.f32 %v783, %v1054
      %v1056 = vpop.f32.mrb[0].mxu0
      %1057 = vmatprep.mubr.bf16.mxu0 %v719
      %1058 = vmatmul.mubr.bf16.gmra.mrb[0].mxu0 %v718
      %v1059 = vpop.f32.mrb[0].mxu0
      %v1060 = vadd.f32 %v783, %v1059
      %v1061 = vpop.f32.mrb[0].mxu0
      %v1062 = vpop.f32.mrb[0].mxu0
      %v1063 = vadd.f32 %v783, %v1062
      %v1064 = vpop.f32.mrb[0].mxu0
      %1065 = vmatprep.mubr.bf16.mxu0 %v722
      %1066 = vmatmul.mubr.bf16.gmra.mrb[0].mxu0 %v721
      %v1067 = vpop.f32.mrb[0].mxu0
      %v1068 = vadd.f32 %v783, %v1067
      %v1069 = vpop.f32.mrb[0].mxu0
      %v1070 = vpop.f32.mrb[0].mxu0
      %v1071 = vadd.f32 %v783, %v1070
      %v1072 = vpop.f32.mrb[0].mxu0
      %1073 = vmatprep.mubr.bf16.mxu0 %v725
      %1074 = vmatmul.mubr.bf16.gmra.mrb[0].mxu0 %v724
      %v1075 = vpop.f32.mrb[0].mxu0
      %v1076 = vadd.f32 %v783, %v1075
      %v1077 = vpop.f32.mrb[0].mxu0
      %v1078 = vpop.f32.mrb[0].mxu0
      %v1079 = vadd.f32 %v783, %v1078
      %v1080 = vpop.f32.mrb[0].mxu0
      %1081 = vmatprep.mubr.bf16.mxu0 %v728
      %1082 = vmatmul.mubr.bf16.gmra.mrb[0].mxu0 %v727
      %v1083 = vpop.f32.mrb[0].mxu0
      %v1084 = vadd.f32 %v783, %v1083
      %v1085 = vpop.f32.mrb[0].mxu0
      %v1086 = vpop.f32.mrb[0].mxu0
      %v1087 = vadd.f32 %v783, %v1086
      %v1088 = vpop.f32.mrb[0].mxu0
      %1089 = vdwg.mxu0
      %1090 = vmatprep.subr.bf16.mxu0 0
      %1091 = vmatpush1.bf16.msra.mxu0 %v897
      %1092 = vmatprep.subr.bf16.mxu0 0
      %1093 = vmatpush1.bf16.msra.mxu0 %v898
      %1094 = vmatprep.subr.bf16.mxu0 0
      %1095 = vmatpush1.bf16.msra.mxu0 %v899
      %1096 = vmatprep.subr.bf16.mxu0 0
      %1097 = vmatpush1.bf16.msra.mxu0 %v900
      %1098 = vmatprep.subr.bf16.mxu0 0
      %1099 = vmatpush1.bf16.msra.mxu0 %v901
      %1100 = vmatprep.subr.bf16.mxu0 0
      %1101 = vmatpush1.bf16.msra.mxu0 %v902
      %1102 = vmatprep.subr.bf16.mxu0 0
      %1103 = vmatpush1.bf16.msra.mxu0 %v903
      %1104 = vmatprep.subr.bf16.mxu0 0
      %1105 = vmatpush1.bf16.msra.mxu0 %v904
      %1106 = vmatprep.subr.bf16.mxu0 0
      %1107 = vmatpush1.bf16.msra.mxu0 0
      %1108 = vmatprep.subr.bf16.mxu0 0
      %1109 = vmatpush1.bf16.msra.mxu0 0
      %1110 = vmatprep.subr.bf16.mxu0 0
      %1111 = vmatpush1.bf16.msra.mxu0 0
      %1112 = vmatprep.subr.bf16.mxu0 0
      %1113 = vmatpush1.bf16.msra.mxu0 0
      %1114 = vmatprep.subr.bf16.mxu0 0
      %1115 = vmatpush1.bf16.msra.mxu0 0
      %1116 = vmatprep.subr.bf16.mxu0 0
      %1117 = vmatpush1.bf16.msra.mxu0 0
      %1118 = vmatprep.subr.bf16.mxu0 0
      %1119 = vmatpush1.bf16.msra.mxu0 0
      %1120 = vmatprep.subr.bf16.mxu0 0
      %1121 = vmatpush1.bf16.msra.mxu0 0
      %1122 = vmatprep.mubr.bf16.mxu0 0
      %1123 = vmatmul.mubr.bf16.gmra.mrb[0].mxu0 %v684
      %v1124 = vpop.f32.mrb[0].mxu0
      %v1125 = vadd.f32 %v964, %v1124
      %v1126 = vpop.f32.mrb[0].mxu0
      %v1127 = vpop.f32.mrb[0].mxu0
      %v1128 = vadd.f32 %v967, %v1127
      %v1129 = vpop.f32.mrb[0].mxu0
      %1130 = vmatprep.mubr.bf16.mxu0 0
      %1131 = vmatmul.mubr.bf16.gmra.mrb[0].mxu0 %v687
      %v1132 = vpop.f32.mrb[0].mxu0
      %v1133 = vadd.f32 %v972, %v1132
      %v1134 = vpop.f32.mrb[0].mxu0
      %v1135 = vpop.f32.mrb[0].mxu0
      %v1136 = vadd.f32 %v975, %v1135
      %v1137 = vpop.f32.mrb[0].mxu0
      %1138 = vmatprep.mubr.bf16.mxu0 0
      %1139 = vmatmul.mubr.bf16.gmra.mrb[0].mxu0 %v690
      %v1140 = vpop.f32.mrb[0].mxu0
      %v1141 = vadd.f32 %v980, %v1140
      %v1142 = vpop.f32.mrb[0].mxu0
      %v1143 = vpop.f32.mrb[0].mxu0
      %v1144 = vadd.f32 %v983, %v1143
      %v1145 = vpop.f32.mrb[0].mxu0
      %1146 = vmatprep.mubr.bf16.mxu0 0
      %1147 = vmatmul.mubr.bf16.gmra.mrb[0].mxu0 %v693
      %v1148 = vpop.f32.mrb[0].mxu0
      %v1149 = vadd.f32 %v988, %v1148
      %v1150 = vpop.f32.mrb[0].mxu0
      %v1151 = vpop.f32.mrb[0].mxu0
      %v1152 = vadd.f32 %v991, %v1151
      %v1153 = vpop.f32.mrb[0].mxu0
      %1154 = vmatprep.mubr.bf16.mxu0 0
      %1155 = vmatmul.mubr.bf16.gmra.mrb[0].mxu0 %v696
      %v1156 = vpop.f32.mrb[0].mxu0
      %v1157 = vadd.f32 %v996, %v1156
      %v1158 = vpop.f32.mrb[0].mxu0
      %v1159 = vpop.f32.mrb[0].mxu0
      %v1160 = vadd.f32 %v999, %v1159
      %v1161 = vpop.f32.mrb[0].mxu0
      %1162 = vmatprep.mubr.bf16.mxu0 0
      %1163 = vmatmul.mubr.bf16.gmra.mrb[0].mxu0 %v699
      %v1164 = vpop.f32.mrb[0].mxu0
      %v1165 = vadd.f32 %v1004, %v1164
      %v1166 = vpop.f32.mrb[0].mxu0
      %v1167 = vpop.f32.mrb[0].mxu0
      %v1168 = vadd.f32 %v1007, %v1167
      %v1169 = vpop.f32.mrb[0].mxu0
      %1170 = vmatprep.mubr.bf16.mxu0 0
      %1171 = vmatmul.mubr.bf16.gmra.mrb[0].mxu0 %v702
      %v1172 = vpop.f32.mrb[0].mxu0
      %v1173 = vadd.f32 %v1012, %v1172
      %v1174 = vpop.f32.mrb[0].mxu0
      %v1175 = vpop.f32.mrb[0].mxu0
      %v1176 = vadd.f32 %v1015, %v1175
      %v1177 = vpop.f32.mrb[0].mxu0
      %1178 = vmatprep.mubr.bf16.mxu0 0
      %1179 = vmatmul.mubr.bf16.gmra.mrb[0].mxu0 %v705
      %v1180 = vpop.f32.mrb[0].mxu0
      %v1181 = vadd.f32 %v1020, %v1180
      %v1182 = vpop.f32.mrb[0].mxu0
      %v1183 = vpop.f32.mrb[0].mxu0
      %v1184 = vadd.f32 %v1023, %v1183
      %v1185 = vpop.f32.mrb[0].mxu0
      %1186 = vmatprep.mubr.bf16.mxu0 0
      %1187 = vmatmul.mubr.bf16.gmra.mrb[0].mxu0 %v708
      %v1188 = vpop.f32.mrb[0].mxu0
      %v1189 = vadd.f32 %v1028, %v1188
      %v1190 = vpop.f32.mrb[0].mxu0
      %v1191 = vpop.f32.mrb[0].mxu0
      %v1192 = vadd.f32 %v1031, %v1191
      %v1193 = vpop.f32.mrb[0].mxu0
      %1194 = vmatprep.mubr.bf16.mxu0 0
      %1195 = vmatmul.mubr.bf16.gmra.mrb[0].mxu0 %v711
      %v1196 = vpop.f32.mrb[0].mxu0
      %v1197 = vadd.f32 %v1036, %v1196
      %v1198 = vpop.f32.mrb[0].mxu0
      %v1199 = vpop.f32.mrb[0].mxu0
      %v1200 = vadd.f32 %v1039, %v1199
      %v1201 = vpop.f32.mrb[0].mxu0
      %1202 = vmatprep.mubr.bf16.mxu0 0
      %1203 = vmatmul.mubr.bf16.gmra.mrb[0].mxu0 %v714
      %v1204 = vpop.f32.mrb[0].mxu0
      %v1205 = vadd.f32 %v1044, %v1204
      %v1206 = vpop.f32.mrb[0].mxu0
      %v1207 = vpop.f32.mrb[0].mxu0
      %v1208 = vadd.f32 %v1047, %v1207
      %v1209 = vpop.f32.mrb[0].mxu0
      %1210 = vmatprep.mubr.bf16.mxu0 0
      %1211 = vmatmul.mubr.bf16.gmra.mrb[0].mxu0 %v717
      %v1212 = vpop.f32.mrb[0].mxu0
      %v1213 = vadd.f32 %v1052, %v1212
      %v1214 = vpop.f32.mrb[0].mxu0
      %v1215 = vpop.f32.mrb[0].mxu0
      %v1216 = vadd.f32 %v1055, %v1215
      %v1217 = vpop.f32.mrb[0].mxu0
      %1218 = vmatprep.mubr.bf16.mxu0 0
      %1219 = vmatmul.mubr.bf16.gmra.mrb[0].mxu0 %v720
      %v1220 = vpop.f32.mrb[0].mxu0
      %v1221 = vadd.f32 %v1060, %v1220
      %v1222 = vpop.f32.mrb[0].mxu0
      %v1223 = vpop.f32.mrb[0].mxu0
      %v1224 = vadd.f32 %v1063, %v1223
      %v1225 = vpop.f32.mrb[0].mxu0
      %1226 = vmatprep.mubr.bf16.mxu0 0
      %1227 = vmatmul.mubr.bf16.gmra.mrb[0].mxu0 %v723
      %v1228 = vpop.f32.mrb[0].mxu0
      %v1229 = vadd.f32 %v1068, %v1228
      %v1230 = vpop.f32.mrb[0].mxu0
      %v1231 = vpop.f32.mrb[0].mxu0
      %v1232 = vadd.f32 %v1071, %v1231
      %v1233 = vpop.f32.mrb[0].mxu0
      %1234 = vmatprep.mubr.bf16.mxu0 0
      %1235 = vmatmul.mubr.bf16.gmra.mrb[0].mxu0 %v726
      %v1236 = vpop.f32.mrb[0].mxu0
      %v1237 = vadd.f32 %v1076, %v1236
      %v1238 = vpop.f32.mrb[0].mxu0
      %v1239 = vpop.f32.mrb[0].mxu0
      %v1240 = vadd.f32 %v1079, %v1239
      %v1241 = vpop.f32.mrb[0].mxu0
      %1242 = vmatprep.mubr.bf16.mxu0 0
      %1243 = vmatmul.mubr.bf16.gmra.mrb[0].mxu0 %v729
      %v1244 = vpop.f32.mrb[0].mxu0
      %v1245 = vadd.f32 %v1084, %v1244
      %v1246 = vpop.f32.mrb[0].mxu0
      %v1247 = vpop.f32.mrb[0].mxu0
      %v1248 = vadd.f32 %v1087, %v1247
      %v1249 = vpop.f32.mrb[0].mxu0
      %1250 = vdwg.mxu0
      %s1251 = scalar_lea.vmem [#allocation2], 48
      %v1252 = vld [vmem:[%s1251] sm:$0xff]
      %v1253 = vld [vmem:[%s1251 + $0x8] sm:$0xff]
      %v1254 = vld [vmem:[%s1251 + $0x10] sm:$0xff]
      %v1255 = vld [vmem:[%s1251 + $0x18] sm:$0xff]
      %v1256 = vld [vmem:[%s1251 + $0x20] sm:$0xff]
      %v1257 = vld [vmem:[%s1251 + $0x28] sm:$0xff]
      %v1258 = vld [vmem:[%s1251 + $0x30] sm:$0xff]
      %v1259 = vld [vmem:[%s1251 + $0x38] sm:$0xff]
      %v1260 = vld [vmem:[%s1251 + $0x40] sm:$0xff]
      %v1261 = vld [vmem:[%s1251 + $0x48] sm:$0xff]
      %v1262 = vld [vmem:[%s1251 + $0x50] sm:$0xff]
      %v1263 = vld [vmem:[%s1251 + $0x58] sm:$0xff]
      %v1264 = vld [vmem:[%s1251 + $0x60] sm:$0xff]
      %v1265 = vld [vmem:[%s1251 + $0x68] sm:$0xff]
      %v1266 = vld [vmem:[%s1251 + $0x70] sm:$0xff]
      %v1267 = vld [vmem:[%s1251 + $0x78] sm:$0xff]
      %v1268 = vld [vmem:[%s1251 + $0x80] sm:$0xff]
      %v1269 = vld [vmem:[%s1251 + $0x88] sm:$0xff]
      %v1270 = vld [vmem:[%s1251 + $0x90] sm:$0xff]
      %v1271 = vld [vmem:[%s1251 + $0x98] sm:$0xff]
      %v1272 = vld [vmem:[%s1251 + $0xa0] sm:$0xff]
      %v1273 = vld [vmem:[%s1251 + $0xa8] sm:$0xff]
      %v1274 = vld [vmem:[%s1251 + $0xb0] sm:$0xff]
      %v1275 = vld [vmem:[%s1251 + $0xb8] sm:$0xff]
      %v1276 = vld [vmem:[%s1251 + $0xc0] sm:$0xff]
      %v1277 = vld [vmem:[%s1251 + $0xc8] sm:$0xff]
      %v1278 = vld [vmem:[%s1251 + $0xd0] sm:$0xff]
      %v1279 = vld [vmem:[%s1251 + $0xd8] sm:$0xff]
      %v1280 = vld [vmem:[%s1251 + $0xe0] sm:$0xff]
      %v1281 = vld [vmem:[%s1251 + $0xe8] sm:$0xff]
      %v1282 = vld [vmem:[%s1251 + $0xf0] sm:$0xff]
      %v1283 = vld [vmem:[%s1251 + $0xf8] sm:$0xff]
      %v1284 = vld [vmem:[%s1251 + $0x100] sm:$0xff]
      %v1285 = vld [vmem:[%s1251 + $0x108] sm:$0xff]
      %v1286 = vld [vmem:[%s1251 + $0x110] sm:$0xff]
      %v1287 = vld [vmem:[%s1251 + $0x118] sm:$0xff]
      %v1288 = vld [vmem:[%s1251 + $0x120] sm:$0xff]
      %v1289 = vld [vmem:[%s1251 + $0x128] sm:$0xff]
      %v1290 = vld [vmem:[%s1251 + $0x130] sm:$0xff]
      %v1291 = vld [vmem:[%s1251 + $0x138] sm:$0xff]
      %v1292 = vld [vmem:[%s1251 + $0x140] sm:$0xff]
      %v1293 = vld [vmem:[%s1251 + $0x148] sm:$0xff]
      %v1294 = vld [vmem:[%s1251 + $0x150] sm:$0xff]
      %v1295 = vld [vmem:[%s1251 + $0x158] sm:$0xff]
      %v1296 = vld [vmem:[%s1251 + $0x160] sm:$0xff]
      %v1297 = vld [vmem:[%s1251 + $0x168] sm:$0xff]
      %v1298 = vld [vmem:[%s1251 + $0x170] sm:$0xff]
      %v1299 = vld [vmem:[%s1251 + $0x178] sm:$0xff]
      %s1300 = scalar_lea.vmem %s5, 192
      %v1301 = vld [vmem:[%s1300] sm:$0xf]
      %v1302 = vld [vmem:[%s1300 + $0x4] sm:$0xf]
      %v1303 = vld [vmem:[%s1300 + $0x8] sm:$0xf]
      %v1304 = vld [vmem:[%s1300 + $0xc] sm:$0xf]
      %v1305 = vld [vmem:[%s1300 + $0x10] sm:$0xf]
      %v1306 = vld [vmem:[%s1300 + $0x14] sm:$0xf]
      %v1307 = vld [vmem:[%s1300 + $0x18] sm:$0xf]
      %v1308 = vld [vmem:[%s1300 + $0x1c] sm:$0xf]
      %v1309 = vld [vmem:[%s1300 + $0x20] sm:$0xf]
      %v1310 = vld [vmem:[%s1300 + $0x24] sm:$0xf]
      %v1311 = vld [vmem:[%s1300 + $0x28] sm:$0xf]
      %v1312 = vld [vmem:[%s1300 + $0x2c] sm:$0xf]
      %v1313 = vld [vmem:[%s1300 + $0x30] sm:$0xf]
      %v1314 = vld [vmem:[%s1300 + $0x34] sm:$0xf]
      %v1315 = vld [vmem:[%s1300 + $0x38] sm:$0xf]
      %v1316 = vld [vmem:[%s1300 + $0x3c] sm:$0xf]
      %v1317 = vld [vmem:[%s1300 + $0x40] sm:$0xf]
      %v1318 = vld [vmem:[%s1300 + $0x44] sm:$0xf]
      %v1319 = vld [vmem:[%s1300 + $0x48] sm:$0xf]
      %v1320 = vld [vmem:[%s1300 + $0x4c] sm:$0xf]
      %v1321 = vld [vmem:[%s1300 + $0x50] sm:$0xf]
      %v1322 = vld [vmem:[%s1300 + $0x54] sm:$0xf]
      %v1323 = vld [vmem:[%s1300 + $0x58] sm:$0xf]
      %v1324 = vld [vmem:[%s1300 + $0x5c] sm:$0xf]
      %v1325 = vld [vmem:[%s1300 + $0x60] sm:$0xf]
      %v1326 = vld [vmem:[%s1300 + $0x64] sm:$0xf]
      %v1327 = vld [vmem:[%s1300 + $0x68] sm:$0xf]
      %v1328 = vld [vmem:[%s1300 + $0x6c] sm:$0xf]
      %v1329 = vld [vmem:[%s1300 + $0x70] sm:$0xf]
      %v1330 = vld [vmem:[%s1300 + $0x74] sm:$0xf]
      %v1331 = vld [vmem:[%s1300 + $0x78] sm:$0xf]
      %v1332 = vld [vmem:[%s1300 + $0x7c] sm:$0xf]
      %v1333 = vld [vmem:[%s1300 + $0x80] sm:$0xf]
      %v1334 = vld [vmem:[%s1300 + $0x84] sm:$0xf]
      %v1335 = vld [vmem:[%s1300 + $0x88] sm:$0xf]
      %v1336 = vld [vmem:[%s1300 + $0x8c] sm:$0xf]
      %v1337 = vld [vmem:[%s1300 + $0x90] sm:$0xf]
      %v1338 = vld [vmem:[%s1300 + $0x94] sm:$0xf]
      %v1339 = vld [vmem:[%s1300 + $0x98] sm:$0xf]
      %v1340 = vld [vmem:[%s1300 + $0x9c] sm:$0xf]
      %v1341 = vld [vmem:[%s1300 + $0xa0] sm:$0xf]
      %v1342 = vld [vmem:[%s1300 + $0xa4] sm:$0xf]
      %v1343 = vld [vmem:[%s1300 + $0xa8] sm:$0xf]
      %v1344 = vld [vmem:[%s1300 + $0xac] sm:$0xf]
      %v1345 = vld [vmem:[%s1300 + $0xb0] sm:$0xf]
      %v1346 = vld [vmem:[%s1300 + $0xb4] sm:$0xf]
      %v1347 = vld [vmem:[%s1300 + $0xb8] sm:$0xf]
      %v1348 = vld [vmem:[%s1300 + $0xbc] sm:$0xf]
      %v1397 = vunpack.c.l.b16 %v1301
      %v1398 = vunpack.c.l.b16 %v1302
      %v1399 = vunpack.c.l.b16 %v1303
      %v1400 = vunpack.c.l.b16 %v1304
      %v1401 = vunpack.c.l.b16 %v1305
      %v1402 = vunpack.c.l.b16 %v1306
      %v1403 = vunpack.c.l.b16 %v1307
      %v1404 = vunpack.c.l.b16 %v1308
      %v1405 = vunpack.c.l.b16 %v1309
      %v1406 = vunpack.c.l.b16 %v1310
      %v1407 = vunpack.c.l.b16 %v1311
      %v1408 = vunpack.c.l.b16 %v1312
      %v1409 = vunpack.c.l.b16 %v1313
      %v1410 = vunpack.c.l.b16 %v1314
      %v1411 = vunpack.c.l.b16 %v1315
      %v1412 = vunpack.c.l.b16 %v1316
      %v1413 = vunpack.c.l.b16 %v1317
      %v1414 = vunpack.c.l.b16 %v1318
      %v1415 = vunpack.c.l.b16 %v1319
      %v1416 = vunpack.c.l.b16 %v1320
      %v1417 = vunpack.c.l.b16 %v1321
      %v1418 = vunpack.c.l.b16 %v1322
      %v1419 = vunpack.c.l.b16 %v1323
      %v1420 = vunpack.c.l.b16 %v1324
      %v1421 = vunpack.c.l.b16 %v1325
      %v1422 = vunpack.c.l.b16 %v1326
      %v1423 = vunpack.c.l.b16 %v1327
      %v1424 = vunpack.c.l.b16 %v1328
      %v1425 = vunpack.c.l.b16 %v1329
      %v1426 = vunpack.c.l.b16 %v1330
      %v1427 = vunpack.c.l.b16 %v1331
      %v1428 = vunpack.c.l.b16 %v1332
      %v1429 = vunpack.c.l.b16 %v1333
      %v1430 = vunpack.c.l.b16 %v1334
      %v1431 = vunpack.c.l.b16 %v1335
      %v1432 = vunpack.c.l.b16 %v1336
      %v1433 = vunpack.c.l.b16 %v1337
      %v1434 = vunpack.c.l.b16 %v1338
      %v1435 = vunpack.c.l.b16 %v1339
      %v1436 = vunpack.c.l.b16 %v1340
      %v1437 = vunpack.c.l.b16 %v1341
      %v1438 = vunpack.c.l.b16 %v1342
      %v1439 = vunpack.c.l.b16 %v1343
      %v1440 = vunpack.c.l.b16 %v1344
      %v1441 = vunpack.c.l.b16 %v1345
      %v1442 = vunpack.c.l.b16 %v1346
      %v1443 = vunpack.c.l.b16 %v1347
      %v1444 = vunpack.c.l.b16 %v1348
      %v1445 = vpack.c.b16 %v1398, %v1397
      %v1446 = vpack.c.b16 %v1400, %v1399
      %v1447 = vpack.c.b16 %v1402, %v1401
      %v1448 = vpack.c.b16 %v1404, %v1403
      %v1449 = vpack.c.b16 %v1406, %v1405
      %v1450 = vpack.c.b16 %v1408, %v1407
      %v1451 = vpack.c.b16 %v1410, %v1409
      %v1452 = vpack.c.b16 %v1412, %v1411
      %v1453 = vpack.c.b16 %v1414, %v1413
      %v1454 = vpack.c.b16 %v1416, %v1415
      %v1455 = vpack.c.b16 %v1418, %v1417
      %v1456 = vpack.c.b16 %v1420, %v1419
      %v1457 = vpack.c.b16 %v1422, %v1421
      %v1458 = vpack.c.b16 %v1424, %v1423
      %v1459 = vpack.c.b16 %v1426, %v1425
      %v1460 = vpack.c.b16 %v1428, %v1427
      %v1461 = vpack.c.b16 %v1430, %v1429
      %v1462 = vpack.c.b16 %v1432, %v1431
      %v1463 = vpack.c.b16 %v1434, %v1433
      %v1464 = vpack.c.b16 %v1436, %v1435
      %v1465 = vpack.c.b16 %v1438, %v1437
      %v1466 = vpack.c.b16 %v1440, %v1439
      %v1467 = vpack.c.b16 %v1442, %v1441
      %v1468 = vpack.c.b16 %v1444, %v1443
      %1493 = vmatprep.subr.bf16.mxu0 0
      %1494 = vmatpush1.bf16.msra.mxu0 %v1445
      %1495 = vmatprep.subr.bf16.mxu0 0
      %1496 = vmatpush1.bf16.msra.mxu0 %v1446
      %1497 = vmatprep.subr.bf16.mxu0 0
      %1498 = vmatpush1.bf16.msra.mxu0 %v1447
      %1499 = vmatprep.subr.bf16.mxu0 0
      %1500 = vmatpush1.bf16.msra.mxu0 %v1448
      %1501 = vmatprep.subr.bf16.mxu0 0
      %1502 = vmatpush1.bf16.msra.mxu0 %v1449
      %1503 = vmatprep.subr.bf16.mxu0 0
      %1504 = vmatpush1.bf16.msra.mxu0 %v1450
      %1505 = vmatprep.subr.bf16.mxu0 0
      %1506 = vmatpush1.bf16.msra.mxu0 %v1451
      %1507 = vmatprep.subr.bf16.mxu0 0
      %1508 = vmatpush1.bf16.msra.mxu0 %v1452
      %1509 = vmatprep.subr.bf16.mxu0 0
      %1510 = vmatpush1.bf16.msra.mxu0 %v1453
      %1511 = vmatprep.subr.bf16.mxu0 0
      %1512 = vmatpush1.bf16.msra.mxu0 %v1454
      %1513 = vmatprep.subr.bf16.mxu0 0
      %1514 = vmatpush1.bf16.msra.mxu0 %v1455
      %1515 = vmatprep.subr.bf16.mxu0 0
      %1516 = vmatpush1.bf16.msra.mxu0 %v1456
      %1517 = vmatprep.subr.bf16.mxu0 0
      %1518 = vmatpush1.bf16.msra.mxu0 %v1457
      %1519 = vmatprep.subr.bf16.mxu0 0
      %1520 = vmatpush1.bf16.msra.mxu0 %v1458
      %1521 = vmatprep.subr.bf16.mxu0 0
      %1522 = vmatpush1.bf16.msra.mxu0 %v1459
      %1523 = vmatprep.subr.bf16.mxu0 0
      %1524 = vmatpush1.bf16.msra.mxu0 %v1460
      %1525 = vmatprep.mubr.bf16.mxu0 %v1253
      %1526 = vmatmul.mubr.bf16.gmra.mrb[0].mxu0 %v1252
      %v1527 = vpop.f32.mrb[0].mxu0
      %v1528 = vadd.f32 0.0, %v1527
      %v1529 = vpop.f32.mrb[0].mxu0
      %v1530 = vpop.f32.mrb[0].mxu0
      %v1531 = vadd.f32 0.0, %v1530
      %v1532 = vpop.f32.mrb[0].mxu0
      %1533 = vmatprep.mubr.bf16.mxu0 %v1256
      %1534 = vmatmul.mubr.bf16.gmra.mrb[0].mxu0 %v1255
      %v1535 = vpop.f32.mrb[0].mxu0
      %v1536 = vadd.f32 0.0, %v1535
      %v1537 = vpop.f32.mrb[0].mxu0
      %v1538 = vpop.f32.mrb[0].mxu0
      %v1539 = vadd.f32 0.0, %v1538
      %v1540 = vpop.f32.mrb[0].mxu0
      %1541 = vmatprep.mubr.bf16.mxu0 %v1259
      %1542 = vmatmul.mubr.bf16.gmra.mrb[0].mxu0 %v1258
      %v1543 = vpop.f32.mrb[0].mxu0
      %v1544 = vadd.f32 0.0, %v1543
      %v1545 = vpop.f32.mrb[0].mxu0
      %v1546 = vpop.f32.mrb[0].mxu0
      %v1547 = vadd.f32 0.0, %v1546
      %v1548 = vpop.f32.mrb[0].mxu0
      %1549 = vmatprep.mubr.bf16.mxu0 %v1262
      %1550 = vmatmul.mubr.bf16.gmra.mrb[0].mxu0 %v1261
      %v1551 = vpop.f32.mrb[0].mxu0
      %v1552 = vadd.f32 0.0, %v1551
      %v1553 = vpop.f32.mrb[0].mxu0
      %v1554 = vpop.f32.mrb[0].mxu0
      %v1555 = vadd.f32 0.0, %v1554
      %v1556 = vpop.f32.mrb[0].mxu0
      %1557 = vmatprep.mubr.bf16.mxu0 %v1265
      %1558 = vmatmul.mubr.bf16.gmra.mrb[0].mxu0 %v1264
      %v1559 = vpop.f32.mrb[0].mxu0
      %v1560 = vadd.f32 0.0, %v1559
      %v1561 = vpop.f32.mrb[0].mxu0
      %v1562 = vpop.f32.mrb[0].mxu0
      %v1563 = vadd.f32 0.0, %v1562
      %v1564 = vpop.f32.mrb[0].mxu0
      %1565 = vmatprep.mubr.bf16.mxu0 %v1268
      %1566 = vmatmul.mubr.bf16.gmra.mrb[0].mxu0 %v1267
      %v1567 = vpop.f32.mrb[0].mxu0
      %v1568 = vadd.f32 0.0, %v1567
      %v1569 = vpop.f32.mrb[0].mxu0
      %v1570 = vpop.f32.mrb[0].mxu0
      %v1571 = vadd.f32 0.0, %v1570
      %v1572 = vpop.f32.mrb[0].mxu0
      %1573 = vmatprep.mubr.bf16.mxu0 %v1271
      %1574 = vmatmul.mubr.bf16.gmra.mrb[0].mxu0 %v1270
      %v1575 = vpop.f32.mrb[0].mxu0
      %v1576 = vadd.f32 0.0, %v1575
      %v1577 = vpop.f32.mrb[0].mxu0
      %v1578 = vpop.f32.mrb[0].mxu0
      %v1579 = vadd.f32 0.0, %v1578
      %v1580 = vpop.f32.mrb[0].mxu0
      %1581 = vmatprep.mubr.bf16.mxu0 %v1274
      %1582 = vmatmul.mubr.bf16.gmra.mrb[0].mxu0 %v1273
      %v1583 = vpop.f32.mrb[0].mxu0
      %v1584 = vadd.f32 0.0, %v1583
      %v1585 = vpop.f32.mrb[0].mxu0
      %v1586 = vpop.f32.mrb[0].mxu0
      %v1587 = vadd.f32 0.0, %v1586
      %v1588 = vpop.f32.mrb[0].mxu0
      %1589 = vmatprep.mubr.bf16.mxu0 %v1277
      %1590 = vmatmul.mubr.bf16.gmra.mrb[0].mxu0 %v1276
      %v1591 = vpop.f32.mrb[0].mxu0
      %v1592 = vadd.f32 0.0, %v1591
      %v1593 = vpop.f32.mrb[0].mxu0
      %v1594 = vpop.f32.mrb[0].mxu0
      %v1595 = vadd.f32 0.0, %v1594
      %v1596 = vpop.f32.mrb[0].mxu0
      %1597 = vmatprep.mubr.bf16.mxu0 %v1280
      %1598 = vmatmul.mubr.bf16.gmra.mrb[0].mxu0 %v1279
      %v1599 = vpop.f32.mrb[0].mxu0
      %v1600 = vadd.f32 0.0, %v1599
      %v1601 = vpop.f32.mrb[0].mxu0
      %v1602 = vpop.f32.mrb[0].mxu0
      %v1603 = vadd.f32 0.0, %v1602
      %v1604 = vpop.f32.mrb[0].mxu0
      %1605 = vmatprep.mubr.bf16.mxu0 %v1283
      %1606 = vmatmul.mubr.bf16.gmra.mrb[0].mxu0 %v1282
      %v1607 = vpop.f32.mrb[0].mxu0
      %v1608 = vadd.f32 0.0, %v1607
      %v1609 = vpop.f32.mrb[0].mxu0
      %v1610 = vpop.f32.mrb[0].mxu0
      %v1611 = vadd.f32 0.0, %v1610
      %v1612 = vpop.f32.mrb[0].mxu0
      %1613 = vmatprep.mubr.bf16.mxu0 %v1286
      %1614 = vmatmul.mubr.bf16.gmra.mrb[0].mxu0 %v1285
      %v1615 = vpop.f32.mrb[0].mxu0
      %v1616 = vadd.f32 0.0, %v1615
      %v1617 = vpop.f32.mrb[0].mxu0
      %v1618 = vpop.f32.mrb[0].mxu0
      %v1619 = vadd.f32 0.0, %v1618
      %v1620 = vpop.f32.mrb[0].mxu0
      %1621 = vmatprep.mubr.bf16.mxu0 %v1289
      %1622 = vmatmul.mubr.bf16.gmra.mrb[0].mxu0 %v1288
      %v1623 = vpop.f32.mrb[0].mxu0
      %v1624 = vadd.f32 0.0, %v1623
      %v1625 = vpop.f32.mrb[0].mxu0
      %v1626 = vpop.f32.mrb[0].mxu0
      %v1627 = vadd.f32 0.0, %v1626
      %v1628 = vpop.f32.mrb[0].mxu0
      %1629 = vmatprep.mubr.bf16.mxu0 %v1292
      %1630 = vmatmul.mubr.bf16.gmra.mrb[0].mxu0 %v1291
      %v1631 = vpop.f32.mrb[0].mxu0
      %v1632 = vadd.f32 0.0, %v1631
      %v1633 = vpop.f32.mrb[0].mxu0
      %v1634 = vpop.f32.mrb[0].mxu0
      %v1635 = vadd.f32 0.0, %v1634
      %v1636 = vpop.f32.mrb[0].mxu0
      %1637 = vmatprep.mubr.bf16.mxu0 %v1295
      %1638 = vmatmul.mubr.bf16.gmra.mrb[0].mxu0 %v1294
      %v1639 = vpop.f32.mrb[0].mxu0
      %v1640 = vadd.f32 0.0, %v1639
      %v1641 = vpop.f32.mrb[0].mxu0
      %v1642 = vpop.f32.mrb[0].mxu0
      %v1643 = vadd.f32 0.0, %v1642
      %v1644 = vpop.f32.mrb[0].mxu0
      %1645 = vmatprep.mubr.bf16.mxu0 %v1298
      %1646 = vmatmul.mubr.bf16.gmra.mrb[0].mxu0 %v1297
      %v1647 = vpop.f32.mrb[0].mxu0
      %v1648 = vadd.f32 0.0, %v1647
      %v1649 = vpop.f32.mrb[0].mxu0
      %v1650 = vpop.f32.mrb[0].mxu0
      %v1651 = vadd.f32 0.0, %v1650
      %v1652 = vpop.f32.mrb[0].mxu0
      %1653 = vdwg.mxu0
      %1654 = vmatprep.subr.bf16.mxu0 0
      %1655 = vmatpush1.bf16.msra.mxu0 %v1461
      %1656 = vmatprep.subr.bf16.mxu0 0
      %1657 = vmatpush1.bf16.msra.mxu0 %v1462
      %1658 = vmatprep.subr.bf16.mxu0 0
      %1659 = vmatpush1.bf16.msra.mxu0 %v1463
      %1660 = vmatprep.subr.bf16.mxu0 0
      %1661 = vmatpush1.bf16.msra.mxu0 %v1464
      %1662 = vmatprep.subr.bf16.mxu0 0
      %1663 = vmatpush1.bf16.msra.mxu0 %v1465
      %1664 = vmatprep.subr.bf16.mxu0 0
      %1665 = vmatpush1.bf16.msra.mxu0 %v1466
      %1666 = vmatprep.subr.bf16.mxu0 0
      %1667 = vmatpush1.bf16.msra.mxu0 %v1467
      %1668 = vmatprep.subr.bf16.mxu0 0
      %1669 = vmatpush1.bf16.msra.mxu0 %v1468
      %1670 = vmatprep.subr.bf16.mxu0 0
      %1671 = vmatpush1.bf16.msra.mxu0 0
      %1672 = vmatprep.subr.bf16.mxu0 0
      %1673 = vmatpush1.bf16.msra.mxu0 0
      %1674 = vmatprep.subr.bf16.mxu0 0
      %1675 = vmatpush1.bf16.msra.mxu0 0
      %1676 = vmatprep.subr.bf16.mxu0 0
      %1677 = vmatpush1.bf16.msra.mxu0 0
      %1678 = vmatprep.subr.bf16.mxu0 0
      %1679 = vmatpush1.bf16.msra.mxu0 0
      %1680 = vmatprep.subr.bf16.mxu0 0
      %1681 = vmatpush1.bf16.msra.mxu0 0
      %1682 = vmatprep.subr.bf16.mxu0 0
      %1683 = vmatpush1.bf16.msra.mxu0 0
      %1684 = vmatprep.subr.bf16.mxu0 0
      %1685 = vmatpush1.bf16.msra.mxu0 0
      %1686 = vmatprep.mubr.bf16.mxu0 0
      %1687 = vmatmul.mubr.bf16.gmra.mrb[0].mxu0 %v1254
      %v1688 = vpop.f32.mrb[0].mxu0
      %v1689 = vadd.f32 %v1528, %v1688
      %v1690 = vpop.f32.mrb[0].mxu0
      %v1691 = vpop.f32.mrb[0].mxu0
      %v1692 = vadd.f32 %v1531, %v1691
      %v1693 = vpop.f32.mrb[0].mxu0
      %1694 = vmatprep.mubr.bf16.mxu0 0
      %1695 = vmatmul.mubr.bf16.gmra.mrb[0].mxu0 %v1257
      %v1696 = vpop.f32.mrb[0].mxu0
      %v1697 = vadd.f32 %v1536, %v1696
      %v1698 = vpop.f32.mrb[0].mxu0
      %v1699 = vpop.f32.mrb[0].mxu0
      %v1700 = vadd.f32 %v1539, %v1699
      %v1701 = vpop.f32.mrb[0].mxu0
      %1702 = vmatprep.mubr.bf16.mxu0 0
      %1703 = vmatmul.mubr.bf16.gmra.mrb[0].mxu0 %v1260
      %v1704 = vpop.f32.mrb[0].mxu0
      %v1705 = vadd.f32 %v1544, %v1704
      %v1706 = vpop.f32.mrb[0].mxu0
      %v1707 = vpop.f32.mrb[0].mxu0
      %v1708 = vadd.f32 %v1547, %v1707
      %v1709 = vpop.f32.mrb[0].mxu0
      %1710 = vmatprep.mubr.bf16.mxu0 0
      %1711 = vmatmul.mubr.bf16.gmra.mrb[0].mxu0 %v1263
      %v1712 = vpop.f32.mrb[0].mxu0
      %v1713 = vadd.f32 %v1552, %v1712
      %v1714 = vpop.f32.mrb[0].mxu0
      %v1715 = vpop.f32.mrb[0].mxu0
      %v1716 = vadd.f32 %v1555, %v1715
      %v1717 = vpop.f32.mrb[0].mxu0
      %1718 = vmatprep.mubr.bf16.mxu0 0
      %1719 = vmatmul.mubr.bf16.gmra.mrb[0].mxu0 %v1266
      %v1720 = vpop.f32.mrb[0].mxu0
      %v1721 = vadd.f32 %v1560, %v1720
      %v1722 = vpop.f32.mrb[0].mxu0
      %v1723 = vpop.f32.mrb[0].mxu0
      %v1724 = vadd.f32 %v1563, %v1723
      %v1725 = vpop.f32.mrb[0].mxu0
      %1726 = vmatprep.mubr.bf16.mxu0 0
      %1727 = vmatmul.mubr.bf16.gmra.mrb[0].mxu0 %v1269
      %v1728 = vpop.f32.mrb[0].mxu0
      %v1729 = vadd.f32 %v1568, %v1728
      %v1730 = vpop.f32.mrb[0].mxu0
      %v1731 = vpop.f32.mrb[0].mxu0
      %v1732 = vadd.f32 %v1571, %v1731
      %v1733 = vpop.f32.mrb[0].mxu0
      %1734 = vmatprep.mubr.bf16.mxu0 0
      %1735 = vmatmul.mubr.bf16.gmra.mrb[0].mxu0 %v1272
      %v1736 = vpop.f32.mrb[0].mxu0
      %v1737 = vadd.f32 %v1576, %v1736
      %v1738 = vpop.f32.mrb[0].mxu0
      %v1739 = vpop.f32.mrb[0].mxu0
      %v1740 = vadd.f32 %v1579, %v1739
      %v1741 = vpop.f32.mrb[0].mxu0
      %1742 = vmatprep.mubr.bf16.mxu0 0
      %1743 = vmatmul.mubr.bf16.gmra.mrb[0].mxu0 %v1275
      %v1744 = vpop.f32.mrb[0].mxu0
      %v1745 = vadd.f32 %v1584, %v1744
      %v1746 = vpop.f32.mrb[0].mxu0
      %v1747 = vpop.f32.mrb[0].mxu0
      %v1748 = vadd.f32 %v1587, %v1747
      %v1749 = vpop.f32.mrb[0].mxu0
      %1750 = vmatprep.mubr.bf16.mxu0 0
      %1751 = vmatmul.mubr.bf16.gmra.mrb[0].mxu0 %v1278
      %v1752 = vpop.f32.mrb[0].mxu0
      %v1753 = vadd.f32 %v1592, %v1752
      %v1754 = vpop.f32.mrb[0].mxu0
      %v1755 = vpop.f32.mrb[0].mxu0
      %v1756 = vadd.f32 %v1595, %v1755
      %v1757 = vpop.f32.mrb[0].mxu0
      %1758 = vmatprep.mubr.bf16.mxu0 0
      %1759 = vmatmul.mubr.bf16.gmra.mrb[0].mxu0 %v1281
      %v1760 = vpop.f32.mrb[0].mxu0
      %v1761 = vadd.f32 %v1600, %v1760
      %v1762 = vpop.f32.mrb[0].mxu0
      %v1763 = vpop.f32.mrb[0].mxu0
      %v1764 = vadd.f32 %v1603, %v1763
      %v1765 = vpop.f32.mrb[0].mxu0
      %1766 = vmatprep.mubr.bf16.mxu0 0
      %1767 = vmatmul.mubr.bf16.gmra.mrb[0].mxu0 %v1284
      %v1768 = vpop.f32.mrb[0].mxu0
      %v1769 = vadd.f32 %v1608, %v1768
      %v1770 = vpop.f32.mrb[0].mxu0
      %v1771 = vpop.f32.mrb[0].mxu0
      %v1772 = vadd.f32 %v1611, %v1771
      %v1773 = vpop.f32.mrb[0].mxu0
      %1774 = vmatprep.mubr.bf16.mxu0 0
      %1775 = vmatmul.mubr.bf16.gmra.mrb[0].mxu0 %v1287
      %v1776 = vpop.f32.mrb[0].mxu0
      %v1777 = vadd.f32 %v1616, %v1776
      %v1778 = vpop.f32.mrb[0].mxu0
      %v1779 = vpop.f32.mrb[0].mxu0
      %v1780 = vadd.f32 %v1619, %v1779
      %v1781 = vpop.f32.mrb[0].mxu0
      %1782 = vmatprep.mubr.bf16.mxu0 0
      %1783 = vmatmul.mubr.bf16.gmra.mrb[0].mxu0 %v1290
      %v1784 = vpop.f32.mrb[0].mxu0
      %v1785 = vadd.f32 %v1624, %v1784
      %v1786 = vpop.f32.mrb[0].mxu0
      %v1787 = vpop.f32.mrb[0].mxu0
      %v1788 = vadd.f32 %v1627, %v1787
      %v1789 = vpop.f32.mrb[0].mxu0
      %1790 = vmatprep.mubr.bf16.mxu0 0
      %1791 = vmatmul.mubr.bf16.gmra.mrb[0].mxu0 %v1293
      %v1792 = vpop.f32.mrb[0].mxu0
      %v1793 = vadd.f32 %v1632, %v1792
      %v1794 = vpop.f32.mrb[0].mxu0
      %v1795 = vpop.f32.mrb[0].mxu0
      %v1796 = vadd.f32 %v1635, %v1795
      %v1797 = vpop.f32.mrb[0].mxu0
      %1798 = vmatprep.mubr.bf16.mxu0 0
      %1799 = vmatmul.mubr.bf16.gmra.mrb[0].mxu0 %v1296
      %v1800 = vpop.f32.mrb[0].mxu0
      %v1801 = vadd.f32 %v1640, %v1800
      %v1802 = vpop.f32.mrb[0].mxu0
      %v1803 = vpop.f32.mrb[0].mxu0
      %v1804 = vadd.f32 %v1643, %v1803
      %v1805 = vpop.f32.mrb[0].mxu0
      %1806 = vmatprep.mubr.bf16.mxu0 0
      %1807 = vmatmul.mubr.bf16.gmra.mrb[0].mxu0 %v1299
      %v1808 = vpop.f32.mrb[0].mxu0
      %v1809 = vadd.f32 %v1648, %v1808
      %v1810 = vpop.f32.mrb[0].mxu0
      %v1811 = vpop.f32.mrb[0].mxu0
      %v1812 = vadd.f32 %v1651, %v1811
      %v1813 = vpop.f32.mrb[0].mxu0
      %1814 = vdwg.mxu0
      %v1815 = vadd.f32 %v1125, %v1689
      %v1816 = vadd.f32 %v1128, %v1692
      %v1817 = vadd.f32 %v1133, %v1697
      %v1818 = vadd.f32 %v1136, %v1700
      %v1819 = vadd.f32 %v1141, %v1705
      %v1820 = vadd.f32 %v1144, %v1708
      %v1821 = vadd.f32 %v1149, %v1713
      %v1822 = vadd.f32 %v1152, %v1716
      %v1823 = vadd.f32 %v1157, %v1721
      %v1824 = vadd.f32 %v1160, %v1724
      %v1825 = vadd.f32 %v1165, %v1729
      %v1826 = vadd.f32 %v1168, %v1732
      %v1827 = vadd.f32 %v1173, %v1737
      %v1828 = vadd.f32 %v1176, %v1740
      %v1829 = vadd.f32 %v1181, %v1745
      %v1830 = vadd.f32 %v1184, %v1748
      %v1831 = vadd.f32 %v1189, %v1753
      %v1832 = vadd.f32 %v1192, %v1756
      %v1833 = vadd.f32 %v1197, %v1761
      %v1834 = vadd.f32 %v1200, %v1764
      %v1835 = vadd.f32 %v1205, %v1769
      %v1836 = vadd.f32 %v1208, %v1772
      %v1837 = vadd.f32 %v1213, %v1777
      %v1838 = vadd.f32 %v1216, %v1780
      %v1839 = vadd.f32 %v1221, %v1785
      %v1840 = vadd.f32 %v1224, %v1788
      %v1841 = vadd.f32 %v1229, %v1793
      %v1842 = vadd.f32 %v1232, %v1796
      %v1843 = vadd.f32 %v1237, %v1801
      %v1844 = vadd.f32 %v1240, %v1804
      %v1845 = vadd.f32 %v1245, %v1809
      %v1846 = vadd.f32 %v1248, %v1812
      %s1847 = scalar_lea.vmem [#allocation2], 96
      %v1848 = vld [vmem:[%s1847] sm:$0xff]
      %v1849 = vld [vmem:[%s1847 + $0x8] sm:$0xff]
      %v1850 = vld [vmem:[%s1847 + $0x10] sm:$0xff]
      %v1851 = vld [vmem:[%s1847 + $0x18] sm:$0xff]
      %v1852 = vld [vmem:[%s1847 + $0x20] sm:$0xff]
      %v1853 = vld [vmem:[%s1847 + $0x28] sm:$0xff]
      %v1854 = vld [vmem:[%s1847 + $0x30] sm:$0xff]
      %v1855 = vld [vmem:[%s1847 + $0x38] sm:$0xff]
      %v1856 = vld [vmem:[%s1847 + $0x40] sm:$0xff]
      %v1857 = vld [vmem:[%s1847 + $0x48] sm:$0xff]
      %v1858 = vld [vmem:[%s1847 + $0x50] sm:$0xff]
      %v1859 = vld [vmem:[%s1847 + $0x58] sm:$0xff]
      %v1860 = vld [vmem:[%s1847 + $0x60] sm:$0xff]
      %v1861 = vld [vmem:[%s1847 + $0x68] sm:$0xff]
      %v1862 = vld [vmem:[%s1847 + $0x70] sm:$0xff]
      %v1863 = vld [vmem:[%s1847 + $0x78] sm:$0xff]
      %v1864 = vld [vmem:[%s1847 + $0x80] sm:$0xff]
      %v1865 = vld [vmem:[%s1847 + $0x88] sm:$0xff]
      %v1866 = vld [vmem:[%s1847 + $0x90] sm:$0xff]
      %v1867 = vld [vmem:[%s1847 + $0x98] sm:$0xff]
      %v1868 = vld [vmem:[%s1847 + $0xa0] sm:$0xff]
      %v1869 = vld [vmem:[%s1847 + $0xa8] sm:$0xff]
      %v1870 = vld [vmem:[%s1847 + $0xb0] sm:$0xff]
      %v1871 = vld [vmem:[%s1847 + $0xb8] sm:$0xff]
      %v1872 = vld [vmem:[%s1847 + $0xc0] sm:$0xff]
      %v1873 = vld [vmem:[%s1847 + $0xc8] sm:$0xff]
      %v1874 = vld [vmem:[%s1847 + $0xd0] sm:$0xff]
      %v1875 = vld [vmem:[%s1847 + $0xd8] sm:$0xff]
      %v1876 = vld [vmem:[%s1847 + $0xe0] sm:$0xff]
      %v1877 = vld [vmem:[%s1847 + $0xe8] sm:$0xff]
      %v1878 = vld [vmem:[%s1847 + $0xf0] sm:$0xff]
      %v1879 = vld [vmem:[%s1847 + $0xf8] sm:$0xff]
      %v1880 = vld [vmem:[%s1847 + $0x100] sm:$0xff]
      %v1881 = vld [vmem:[%s1847 + $0x108] sm:$0xff]
      %v1882 = vld [vmem:[%s1847 + $0x110] sm:$0xff]
      %v1883 = vld [vmem:[%s1847 + $0x118] sm:$0xff]
      %v1884 = vld [vmem:[%s1847 + $0x120] sm:$0xff]
      %v1885 = vld [vmem:[%s1847 + $0x128] sm:$0xff]
      %v1886 = vld [vmem:[%s1847 + $0x130] sm:$0xff]
      %v1887 = vld [vmem:[%s1847 + $0x138] sm:$0xff]
      %v1888 = vld [vmem:[%s1847 + $0x140] sm:$0xff]
      %v1889 = vld [vmem:[%s1847 + $0x148] sm:$0xff]
      %v1890 = vld [vmem:[%s1847 + $0x150] sm:$0xff]
      %v1891 = vld [vmem:[%s1847 + $0x158] sm:$0xff]
      %v1892 = vld [vmem:[%s1847 + $0x160] sm:$0xff]
      %v1893 = vld [vmem:[%s1847 + $0x168] sm:$0xff]
      %v1894 = vld [vmem:[%s1847 + $0x170] sm:$0xff]
      %v1895 = vld [vmem:[%s1847 + $0x178] sm:$0xff]
      %s1896 = scalar_lea.vmem %s5, 384
      %v1897 = vld [vmem:[%s1896] sm:$0xf]
      %v1898 = vld [vmem:[%s1896 + $0x4] sm:$0xf]
      %v1899 = vld [vmem:[%s1896 + $0x8] sm:$0xf]
      %v1900 = vld [vmem:[%s1896 + $0xc] sm:$0xf]
      %v1901 = vld [vmem:[%s1896 + $0x10] sm:$0xf]
      %v1902 = vld [vmem:[%s1896 + $0x14] sm:$0xf]
      %v1903 = vld [vmem:[%s1896 + $0x18] sm:$0xf]
      %v1904 = vld [vmem:[%s1896 + $0x1c] sm:$0xf]
      %v1905 = vld [vmem:[%s1896 + $0x20] sm:$0xf]
      %v1906 = vld [vmem:[%s1896 + $0x24] sm:$0xf]
      %v1907 = vld [vmem:[%s1896 + $0x28] sm:$0xf]
      %v1908 = vld [vmem:[%s1896 + $0x2c] sm:$0xf]
      %v1909 = vld [vmem:[%s1896 + $0x30] sm:$0xf]
      %v1910 = vld [vmem:[%s1896 + $0x34] sm:$0xf]
      %v1911 = vld [vmem:[%s1896 + $0x38] sm:$0xf]
      %v1912 = vld [vmem:[%s1896 + $0x3c] sm:$0xf]
      %v1913 = vld [vmem:[%s1896 + $0x40] sm:$0xf]
      %v1914 = vld [vmem:[%s1896 + $0x44] sm:$0xf]
      %v1915 = vld [vmem:[%s1896 + $0x48] sm:$0xf]
      %v1916 = vld [vmem:[%s1896 + $0x4c] sm:$0xf]
      %v1917 = vld [vmem:[%s1896 + $0x50] sm:$0xf]
      %v1918 = vld [vmem:[%s1896 + $0x54] sm:$0xf]
      %v1919 = vld [vmem:[%s1896 + $0x58] sm:$0xf]
      %v1920 = vld [vmem:[%s1896 + $0x5c] sm:$0xf]
      %v1921 = vld [vmem:[%s1896 + $0x60] sm:$0xf]
      %v1922 = vld [vmem:[%s1896 + $0x64] sm:$0xf]
      %v1923 = vld [vmem:[%s1896 + $0x68] sm:$0xf]
      %v1924 = vld [vmem:[%s1896 + $0x6c] sm:$0xf]
      %v1925 = vld [vmem:[%s1896 + $0x70] sm:$0xf]
      %v1926 = vld [vmem:[%s1896 + $0x74] sm:$0xf]
      %v1927 = vld [vmem:[%s1896 + $0x78] sm:$0xf]
      %v1928 = vld [vmem:[%s1896 + $0x7c] sm:$0xf]
      %v1929 = vld [vmem:[%s1896 + $0x80] sm:$0xf]
      %v1930 = vld [vmem:[%s1896 + $0x84] sm:$0xf]
      %v1931 = vld [vmem:[%s1896 + $0x88] sm:$0xf]
      %v1932 = vld [vmem:[%s1896 + $0x8c] sm:$0xf]
      %v1933 = vld [vmem:[%s1896 + $0x90] sm:$0xf]
      %v1934 = vld [vmem:[%s1896 + $0x94] sm:$0xf]
      %v1935 = vld [vmem:[%s1896 + $0x98] sm:$0xf]
      %v1936 = vld [vmem:[%s1896 + $0x9c] sm:$0xf]
      %v1937 = vld [vmem:[%s1896 + $0xa0] sm:$0xf]
      %v1938 = vld [vmem:[%s1896 + $0xa4] sm:$0xf]
      %v1939 = vld [vmem:[%s1896 + $0xa8] sm:$0xf]
      %v1940 = vld [vmem:[%s1896 + $0xac] sm:$0xf]
      %v1941 = vld [vmem:[%s1896 + $0xb0] sm:$0xf]
      %v1942 = vld [vmem:[%s1896 + $0xb4] sm:$0xf]
      %v1943 = vld [vmem:[%s1896 + $0xb8] sm:$0xf]
      %v1944 = vld [vmem:[%s1896 + $0xbc] sm:$0xf]
      %v1993 = vunpack.c.l.b16 %v1897
      %v1994 = vunpack.c.l.b16 %v1898
      %v1995 = vunpack.c.l.b16 %v1899
      %v1996 = vunpack.c.l.b16 %v1900
      %v1997 = vunpack.c.l.b16 %v1901
      %v1998 = vunpack.c.l.b16 %v1902
      %v1999 = vunpack.c.l.b16 %v1903
      %v2000 = vunpack.c.l.b16 %v1904
      %v2001 = vunpack.c.l.b16 %v1905
      %v2002 = vunpack.c.l.b16 %v1906
      %v2003 = vunpack.c.l.b16 %v1907
      %v2004 = vunpack.c.l.b16 %v1908
      %v2005 = vunpack.c.l.b16 %v1909
      %v2006 = vunpack.c.l.b16 %v1910
      %v2007 = vunpack.c.l.b16 %v1911
      %v2008 = vunpack.c.l.b16 %v1912
      %v2009 = vunpack.c.l.b16 %v1913
      %v2010 = vunpack.c.l.b16 %v1914
      %v2011 = vunpack.c.l.b16 %v1915
      %v2012 = vunpack.c.l.b16 %v1916
      %v2013 = vunpack.c.l.b16 %v1917
      %v2014 = vunpack.c.l.b16 %v1918
      %v2015 = vunpack.c.l.b16 %v1919
      %v2016 = vunpack.c.l.b16 %v1920
      %v2017 = vunpack.c.l.b16 %v1921
      %v2018 = vunpack.c.l.b16 %v1922
      %v2019 = vunpack.c.l.b16 %v1923
      %v2020 = vunpack.c.l.b16 %v1924
      %v2021 = vunpack.c.l.b16 %v1925
      %v2022 = vunpack.c.l.b16 %v1926
      %v2023 = vunpack.c.l.b16 %v1927
      %v2024 = vunpack.c.l.b16 %v1928
      %v2025 = vunpack.c.l.b16 %v1929
      %v2026 = vunpack.c.l.b16 %v1930
      %v2027 = vunpack.c.l.b16 %v1931
      %v2028 = vunpack.c.l.b16 %v1932
      %v2029 = vunpack.c.l.b16 %v1933
      %v2030 = vunpack.c.l.b16 %v1934
      %v2031 = vunpack.c.l.b16 %v1935
      %v2032 = vunpack.c.l.b16 %v1936
      %v2033 = vunpack.c.l.b16 %v1937
      %v2034 = vunpack.c.l.b16 %v1938
      %v2035 = vunpack.c.l.b16 %v1939
      %v2036 = vunpack.c.l.b16 %v1940
      %v2037 = vunpack.c.l.b16 %v1941
      %v2038 = vunpack.c.l.b16 %v1942
      %v2039 = vunpack.c.l.b16 %v1943
      %v2040 = vunpack.c.l.b16 %v1944
      %v2041 = vpack.c.b16 %v1994, %v1993
      %v2042 = vpack.c.b16 %v1996, %v1995
      %v2043 = vpack.c.b16 %v1998, %v1997
      %v2044 = vpack.c.b16 %v2000, %v1999
      %v2045 = vpack.c.b16 %v2002, %v2001
      %v2046 = vpack.c.b16 %v2004, %v2003
      %v2047 = vpack.c.b16 %v2006, %v2005
      %v2048 = vpack.c.b16 %v2008, %v2007
      %v2049 = vpack.c.b16 %v2010, %v2009
      %v2050 = vpack.c.b16 %v2012, %v2011
      %v2051 = vpack.c.b16 %v2014, %v2013
      %v2052 = vpack.c.b16 %v2016, %v2015
      %v2053 = vpack.c.b16 %v2018, %v2017
      %v2054 = vpack.c.b16 %v2020, %v2019
      %v2055 = vpack.c.b16 %v2022, %v2021
      %v2056 = vpack.c.b16 %v2024, %v2023
      %v2057 = vpack.c.b16 %v2026, %v2025
      %v2058 = vpack.c.b16 %v2028, %v2027
      %v2059 = vpack.c.b16 %v2030, %v2029
      %v2060 = vpack.c.b16 %v2032, %v2031
      %v2061 = vpack.c.b16 %v2034, %v2033
      %v2062 = vpack.c.b16 %v2036, %v2035
      %v2063 = vpack.c.b16 %v2038, %v2037
      %v2064 = vpack.c.b16 %v2040, %v2039
      %2089 = vmatprep.subr.bf16.mxu0 0
      %2090 = vmatpush1.bf16.msra.mxu0 %v2041
      %2091 = vmatprep.subr.bf16.mxu0 0
      %2092 = vmatpush1.bf16.msra.mxu0 %v2042
      %2093 = vmatprep.subr.bf16.mxu0 0
      %2094 = vmatpush1.bf16.msra.mxu0 %v2043
      %2095 = vmatprep.subr.bf16.mxu0 0
      %2096 = vmatpush1.bf16.msra.mxu0 %v2044
      %2097 = vmatprep.subr.bf16.mxu0 0
      %2098 = vmatpush1.bf16.msra.mxu0 %v2045
      %2099 = vmatprep.subr.bf16.mxu0 0
      %2100 = vmatpush1.bf16.msra.mxu0 %v2046
      %2101 = vmatprep.subr.bf16.mxu0 0
      %2102 = vmatpush1.bf16.msra.mxu0 %v2047
      %2103 = vmatprep.subr.bf16.mxu0 0
      %2104 = vmatpush1.bf16.msra.mxu0 %v2048
      %2105 = vmatprep.subr.bf16.mxu0 0
      %2106 = vmatpush1.bf16.msra.mxu0 %v2049
      %2107 = vmatprep.subr.bf16.mxu0 0
      %2108 = vmatpush1.bf16.msra.mxu0 %v2050
      %2109 = vmatprep.subr.bf16.mxu0 0
      %2110 = vmatpush1.bf16.msra.mxu0 %v2051
      %2111 = vmatprep.subr.bf16.mxu0 0
      %2112 = vmatpush1.bf16.msra.mxu0 %v2052
      %2113 = vmatprep.subr.bf16.mxu0 0
      %2114 = vmatpush1.bf16.msra.mxu0 %v2053
      %2115 = vmatprep.subr.bf16.mxu0 0
      %2116 = vmatpush1.bf16.msra.mxu0 %v2054
      %2117 = vmatprep.subr.bf16.mxu0 0
      %2118 = vmatpush1.bf16.msra.mxu0 %v2055
      %2119 = vmatprep.subr.bf16.mxu0 0
      %2120 = vmatpush1.bf16.msra.mxu0 %v2056
      %2121 = vmatprep.mubr.bf16.mxu0 %v1849
      %2122 = vmatmul.mubr.bf16.gmra.mrb[0].mxu0 %v1848
      %v2123 = vpop.f32.mrb[0].mxu0
      %v2124 = vadd.f32 0.0, %v2123
      %v2125 = vpop.f32.mrb[0].mxu0
      %v2126 = vpop.f32.mrb[0].mxu0
      %v2127 = vadd.f32 0.0, %v2126
      %v2128 = vpop.f32.mrb[0].mxu0
      %2129 = vmatprep.mubr.bf16.mxu0 %v1852
      %2130 = vmatmul.mubr.bf16.gmra.mrb[0].mxu0 %v1851
      %v2131 = vpop.f32.mrb[0].mxu0
      %v2132 = vadd.f32 0.0, %v2131
      %v2133 = vpop.f32.mrb[0].mxu0
      %v2134 = vpop.f32.mrb[0].mxu0
      %v2135 = vadd.f32 0.0, %v2134
      %v2136 = vpop.f32.mrb[0].mxu0
      %2137 = vmatprep.mubr.bf16.mxu0 %v1855
      %2138 = vmatmul.mubr.bf16.gmra.mrb[0].mxu0 %v1854
      %v2139 = vpop.f32.mrb[0].mxu0
      %v2140 = vadd.f32 0.0, %v2139
      %v2141 = vpop.f32.mrb[0].mxu0
      %v2142 = vpop.f32.mrb[0].mxu0
      %v2143 = vadd.f32 0.0, %v2142
      %v2144 = vpop.f32.mrb[0].mxu0
      %2145 = vmatprep.mubr.bf16.mxu0 %v1858
      %2146 = vmatmul.mubr.bf16.gmra.mrb[0].mxu0 %v1857
      %v2147 = vpop.f32.mrb[0].mxu0
      %v2148 = vadd.f32 0.0, %v2147
      %v2149 = vpop.f32.mrb[0].mxu0
      %v2150 = vpop.f32.mrb[0].mxu0
      %v2151 = vadd.f32 0.0, %v2150
      %v2152 = vpop.f32.mrb[0].mxu0
      %2153 = vmatprep.mubr.bf16.mxu0 %v1861
      %2154 = vmatmul.mubr.bf16.gmra.mrb[0].mxu0 %v1860
      %v2155 = vpop.f32.mrb[0].mxu0
      %v2156 = vadd.f32 0.0, %v2155
      %v2157 = vpop.f32.mrb[0].mxu0
      %v2158 = vpop.f32.mrb[0].mxu0
      %v2159 = vadd.f32 0.0, %v2158
      %v2160 = vpop.f32.mrb[0].mxu0
      %2161 = vmatprep.mubr.bf16.mxu0 %v1864
      %2162 = vmatmul.mubr.bf16.gmra.mrb[0].mxu0 %v1863
      %v2163 = vpop.f32.mrb[0].mxu0
      %v2164 = vadd.f32 0.0, %v2163
      %v2165 = vpop.f32.mrb[0].mxu0
      %v2166 = vpop.f32.mrb[0].mxu0
      %v2167 = vadd.f32 0.0, %v2166
      %v2168 = vpop.f32.mrb[0].mxu0
      %2169 = vmatprep.mubr.bf16.mxu0 %v1867
      %2170 = vmatmul.mubr.bf16.gmra.mrb[0].mxu0 %v1866
      %v2171 = vpop.f32.mrb[0].mxu0
      %v2172 = vadd.f32 0.0, %v2171
      %v2173 = vpop.f32.mrb[0].mxu0
      %v2174 = vpop.f32.mrb[0].mxu0
      %v2175 = vadd.f32 0.0, %v2174
      %v2176 = vpop.f32.mrb[0].mxu0
      %2177 = vmatprep.mubr.bf16.mxu0 %v1870
      %2178 = vmatmul.mubr.bf16.gmra.mrb[0].mxu0 %v1869
      %v2179 = vpop.f32.mrb[0].mxu0
      %v2180 = vadd.f32 0.0, %v2179
      %v2181 = vpop.f32.mrb[0].mxu0
      %v2182 = vpop.f32.mrb[0].mxu0
      %v2183 = vadd.f32 0.0, %v2182
      %v2184 = vpop.f32.mrb[0].mxu0
      %2185 = vmatprep.mubr.bf16.mxu0 %v1873
      %2186 = vmatmul.mubr.bf16.gmra.mrb[0].mxu0 %v1872
      %v2187 = vpop.f32.mrb[0].mxu0
      %v2188 = vadd.f32 0.0, %v2187
      %v2189 = vpop.f32.mrb[0].mxu0
      %v2190 = vpop.f32.mrb[0].mxu0
      %v2191 = vadd.f32 0.0, %v2190
      %v2192 = vpop.f32.mrb[0].mxu0
      %2193 = vmatprep.mubr.bf16.mxu0 %v1876
      %2194 = vmatmul.mubr.bf16.gmra.mrb[0].mxu0 %v1875
      %v2195 = vpop.f32.mrb[0].mxu0
      %v2196 = vadd.f32 0.0, %v2195
      %v2197 = vpop.f32.mrb[0].mxu0
      %v2198 = vpop.f32.mrb[0].mxu0
      %v2199 = vadd.f32 0.0, %v2198
      %v2200 = vpop.f32.mrb[0].mxu0
      %2201 = vmatprep.mubr.bf16.mxu0 %v1879
      %2202 = vmatmul.mubr.bf16.gmra.mrb[0].mxu0 %v1878
      %v2203 = vpop.f32.mrb[0].mxu0
      %v2204 = vadd.f32 0.0, %v2203
      %v2205 = vpop.f32.mrb[0].mxu0
      %v2206 = vpop.f32.mrb[0].mxu0
      %v2207 = vadd.f32 0.0, %v2206
      %v2208 = vpop.f32.mrb[0].mxu0
      %2209 = vmatprep.mubr.bf16.mxu0 %v1882
      %2210 = vmatmul.mubr.bf16.gmra.mrb[0].mxu0 %v1881
      %v2211 = vpop.f32.mrb[0].mxu0
      %v2212 = vadd.f32 0.0, %v2211
      %v2213 = vpop.f32.mrb[0].mxu0
      %v2214 = vpop.f32.mrb[0].mxu0
      %v2215 = vadd.f32 0.0, %v2214
      %v2216 = vpop.f32.mrb[0].mxu0
      %2217 = vmatprep.mubr.bf16.mxu0 %v1885
      %2218 = vmatmul.mubr.bf16.gmra.mrb[0].mxu0 %v1884
      %v2219 = vpop.f32.mrb[0].mxu0
      %v2220 = vadd.f32 0.0, %v2219
      %v2221 = vpop.f32.mrb[0].mxu0
      %v2222 = vpop.f32.mrb[0].mxu0
      %v2223 = vadd.f32 0.0, %v2222
      %v2224 = vpop.f32.mrb[0].mxu0
      %2225 = vmatprep.mubr.bf16.mxu0 %v1888
      %2226 = vmatmul.mubr.bf16.gmra.mrb[0].mxu0 %v1887
      %v2227 = vpop.f32.mrb[0].mxu0
      %v2228 = vadd.f32 0.0, %v2227
      %v2229 = vpop.f32.mrb[0].mxu0
      %v2230 = vpop.f32.mrb[0].mxu0
      %v2231 = vadd.f32 0.0, %v2230
      %v2232 = vpop.f32.mrb[0].mxu0
      %2233 = vmatprep.mubr.bf16.mxu0 %v1891
      %2234 = vmatmul.mubr.bf16.gmra.mrb[0].mxu0 %v1890
      %v2235 = vpop.f32.mrb[0].mxu0
      %v2236 = vadd.f32 0.0, %v2235
      %v2237 = vpop.f32.mrb[0].mxu0
      %v2238 = vpop.f32.mrb[0].mxu0
      %v2239 = vadd.f32 0.0, %v2238
      %v2240 = vpop.f32.mrb[0].mxu0
      %2241 = vmatprep.mubr.bf16.mxu0 %v1894
      %2242 = vmatmul.mubr.bf16.gmra.mrb[0].mxu0 %v1893
      %v2243 = vpop.f32.mrb[0].mxu0
      %v2244 = vadd.f32 0.0, %v2243
      %v2245 = vpop.f32.mrb[0].mxu0
      %v2246 = vpop.f32.mrb[0].mxu0
      %v2247 = vadd.f32 0.0, %v2246
      %v2248 = vpop.f32.mrb[0].mxu0
      %2249 = vdwg.mxu0
      %2250 = vmatprep.subr.bf16.mxu0 0
      %2251 = vmatpush1.bf16.msra.mxu0 %v2057
      %2252 = vmatprep.subr.bf16.mxu0 0
      %2253 = vmatpush1.bf16.msra.mxu0 %v2058
      %2254 = vmatprep.subr.bf16.mxu0 0
      %2255 = vmatpush1.bf16.msra.mxu0 %v2059
      %2256 = vmatprep.subr.bf16.mxu0 0
      %2257 = vmatpush1.bf16.msra.mxu0 %v2060
      %2258 = vmatprep.subr.bf16.mxu0 0
      %2259 = vmatpush1.bf16.msra.mxu0 %v2061
      %2260 = vmatprep.subr.bf16.mxu0 0
      %2261 = vmatpush1.bf16.msra.mxu0 %v2062
      %2262 = vmatprep.subr.bf16.mxu0 0
      %2263 = vmatpush1.bf16.msra.mxu0 %v2063
      %2264 = vmatprep.subr.bf16.mxu0 0
      %2265 = vmatpush1.bf16.msra.mxu0 %v2064
      %2266 = vmatprep.subr.bf16.mxu0 0
      %2267 = vmatpush1.bf16.msra.mxu0 0
      %2268 = vmatprep.subr.bf16.mxu0 0
      %2269 = vmatpush1.bf16.msra.mxu0 0
      %2270 = vmatprep.subr.bf16.mxu0 0
      %2271 = vmatpush1.bf16.msra.mxu0 0
      %2272 = vmatprep.subr.bf16.mxu0 0
      %2273 = vmatpush1.bf16.msra.mxu0 0
      %2274 = vmatprep.subr.bf16.mxu0 0
      %2275 = vmatpush1.bf16.msra.mxu0 0
      %2276 = vmatprep.subr.bf16.mxu0 0
      %2277 = vmatpush1.bf16.msra.mxu0 0
      %2278 = vmatprep.subr.bf16.mxu0 0
      %2279 = vmatpush1.bf16.msra.mxu0 0
      %2280 = vmatprep.subr.bf16.mxu0 0
      %2281 = vmatpush1.bf16.msra.mxu0 0
      %2282 = vmatprep.mubr.bf16.mxu0 0
      %2283 = vmatmul.mubr.bf16.gmra.mrb[0].mxu0 %v1850
      %v2284 = vpop.f32.mrb[0].mxu0
      %v2285 = vadd.f32 %v2124, %v2284
      %v2286 = vpop.f32.mrb[0].mxu0
      %v2287 = vpop.f32.mrb[0].mxu0
      %v2288 = vadd.f32 %v2127, %v2287
      %v2289 = vpop.f32.mrb[0].mxu0
      %2290 = vmatprep.mubr.bf16.mxu0 0
      %2291 = vmatmul.mubr.bf16.gmra.mrb[0].mxu0 %v1853
      %v2292 = vpop.f32.mrb[0].mxu0
      %v2293 = vadd.f32 %v2132, %v2292
      %v2294 = vpop.f32.mrb[0].mxu0
      %v2295 = vpop.f32.mrb[0].mxu0
      %v2296 = vadd.f32 %v2135, %v2295
      %v2297 = vpop.f32.mrb[0].mxu0
      %2298 = vmatprep.mubr.bf16.mxu0 0
      %2299 = vmatmul.mubr.bf16.gmra.mrb[0].mxu0 %v1856
      %v2300 = vpop.f32.mrb[0].mxu0
      %v2301 = vadd.f32 %v2140, %v2300
      %v2302 = vpop.f32.mrb[0].mxu0
      %v2303 = vpop.f32.mrb[0].mxu0
      %v2304 = vadd.f32 %v2143, %v2303
      %v2305 = vpop.f32.mrb[0].mxu0
      %2306 = vmatprep.mubr.bf16.mxu0 0
      %2307 = vmatmul.mubr.bf16.gmra.mrb[0].mxu0 %v1859
      %v2308 = vpop.f32.mrb[0].mxu0
      %v2309 = vadd.f32 %v2148, %v2308
      %v2310 = vpop.f32.mrb[0].mxu0
      %v2311 = vpop.f32.mrb[0].mxu0
      %v2312 = vadd.f32 %v2151, %v2311
      %v2313 = vpop.f32.mrb[0].mxu0
      %2314 = vmatprep.mubr.bf16.mxu0 0
      %2315 = vmatmul.mubr.bf16.gmra.mrb[0].mxu0 %v1862
      %v2316 = vpop.f32.mrb[0].mxu0
      %v2317 = vadd.f32 %v2156, %v2316
      %v2318 = vpop.f32.mrb[0].mxu0
      %v2319 = vpop.f32.mrb[0].mxu0
      %v2320 = vadd.f32 %v2159, %v2319
      %v2321 = vpop.f32.mrb[0].mxu0
      %2322 = vmatprep.mubr.bf16.mxu0 0
      %2323 = vmatmul.mubr.bf16.gmra.mrb[0].mxu0 %v1865
      %v2324 = vpop.f32.mrb[0].mxu0
      %v2325 = vadd.f32 %v2164, %v2324
      %v2326 = vpop.f32.mrb[0].mxu0
      %v2327 = vpop.f32.mrb[0].mxu0
      %v2328 = vadd.f32 %v2167, %v2327
      %v2329 = vpop.f32.mrb[0].mxu0
      %2330 = vmatprep.mubr.bf16.mxu0 0
      %2331 = vmatmul.mubr.bf16.gmra.mrb[0].mxu0 %v1868
      %v2332 = vpop.f32.mrb[0].mxu0
      %v2333 = vadd.f32 %v2172, %v2332
      %v2334 = vpop.f32.mrb[0].mxu0
      %v2335 = vpop.f32.mrb[0].mxu0
      %v2336 = vadd.f32 %v2175, %v2335
      %v2337 = vpop.f32.mrb[0].mxu0
      %2338 = vmatprep.mubr.bf16.mxu0 0
      %2339 = vmatmul.mubr.bf16.gmra.mrb[0].mxu0 %v1871
      %v2340 = vpop.f32.mrb[0].mxu0
      %v2341 = vadd.f32 %v2180, %v2340
      %v2342 = vpop.f32.mrb[0].mxu0
      %v2343 = vpop.f32.mrb[0].mxu0
      %v2344 = vadd.f32 %v2183, %v2343
      %v2345 = vpop.f32.mrb[0].mxu0
      %2346 = vmatprep.mubr.bf16.mxu0 0
      %2347 = vmatmul.mubr.bf16.gmra.mrb[0].mxu0 %v1874
      %v2348 = vpop.f32.mrb[0].mxu0
      %v2349 = vadd.f32 %v2188, %v2348
      %v2350 = vpop.f32.mrb[0].mxu0
      %v2351 = vpop.f32.mrb[0].mxu0
      %v2352 = vadd.f32 %v2191, %v2351
      %v2353 = vpop.f32.mrb[0].mxu0
      %2354 = vmatprep.mubr.bf16.mxu0 0
      %2355 = vmatmul.mubr.bf16.gmra.mrb[0].mxu0 %v1877
      %v2356 = vpop.f32.mrb[0].mxu0
      %v2357 = vadd.f32 %v2196, %v2356
      %v2358 = vpop.f32.mrb[0].mxu0
      %v2359 = vpop.f32.mrb[0].mxu0
      %v2360 = vadd.f32 %v2199, %v2359
      %v2361 = vpop.f32.mrb[0].mxu0
      %2362 = vmatprep.mubr.bf16.mxu0 0
      %2363 = vmatmul.mubr.bf16.gmra.mrb[0].mxu0 %v1880
      %v2364 = vpop.f32.mrb[0].mxu0
      %v2365 = vadd.f32 %v2204, %v2364
      %v2366 = vpop.f32.mrb[0].mxu0
      %v2367 = vpop.f32.mrb[0].mxu0
      %v2368 = vadd.f32 %v2207, %v2367
      %v2369 = vpop.f32.mrb[0].mxu0
      %2370 = vmatprep.mubr.bf16.mxu0 0
      %2371 = vmatmul.mubr.bf16.gmra.mrb[0].mxu0 %v1883
      %v2372 = vpop.f32.mrb[0].mxu0
      %v2373 = vadd.f32 %v2212, %v2372
      %v2374 = vpop.f32.mrb[0].mxu0
      %v2375 = vpop.f32.mrb[0].mxu0
      %v2376 = vadd.f32 %v2215, %v2375
      %v2377 = vpop.f32.mrb[0].mxu0
      %2378 = vmatprep.mubr.bf16.mxu0 0
      %2379 = vmatmul.mubr.bf16.gmra.mrb[0].mxu0 %v1886
      %v2380 = vpop.f32.mrb[0].mxu0
      %v2381 = vadd.f32 %v2220, %v2380
      %v2382 = vpop.f32.mrb[0].mxu0
      %v2383 = vpop.f32.mrb[0].mxu0
      %v2384 = vadd.f32 %v2223, %v2383
      %v2385 = vpop.f32.mrb[0].mxu0
      %2386 = vmatprep.mubr.bf16.mxu0 0
      %2387 = vmatmul.mubr.bf16.gmra.mrb[0].mxu0 %v1889
      %v2388 = vpop.f32.mrb[0].mxu0
      %v2389 = vadd.f32 %v2228, %v2388
      %v2390 = vpop.f32.mrb[0].mxu0
      %v2391 = vpop.f32.mrb[0].mxu0
      %v2392 = vadd.f32 %v2231, %v2391
      %v2393 = vpop.f32.mrb[0].mxu0
      %2394 = vmatprep.mubr.bf16.mxu0 0
      %2395 = vmatmul.mubr.bf16.gmra.mrb[0].mxu0 %v1892
      %v2396 = vpop.f32.mrb[0].mxu0
      %v2397 = vadd.f32 %v2236, %v2396
      %v2398 = vpop.f32.mrb[0].mxu0
      %v2399 = vpop.f32.mrb[0].mxu0
      %v2400 = vadd.f32 %v2239, %v2399
      %v2401 = vpop.f32.mrb[0].mxu0
      %2402 = vmatprep.mubr.bf16.mxu0 0
      %2403 = vmatmul.mubr.bf16.gmra.mrb[0].mxu0 %v1895
      %v2404 = vpop.f32.mrb[0].mxu0
      %v2405 = vadd.f32 %v2244, %v2404
      %v2406 = vpop.f32.mrb[0].mxu0
      %v2407 = vpop.f32.mrb[0].mxu0
      %v2408 = vadd.f32 %v2247, %v2407
      %v2409 = vpop.f32.mrb[0].mxu0
      %2410 = vdwg.mxu0
      %v2411 = vadd.f32 %v1815, %v2285
      %v2412 = vadd.f32 %v1816, %v2288
      %v2413 = vadd.f32 %v1817, %v2293
      %v2414 = vadd.f32 %v1818, %v2296
      %v2415 = vadd.f32 %v1819, %v2301
      %v2416 = vadd.f32 %v1820, %v2304
      %v2417 = vadd.f32 %v1821, %v2309
      %v2418 = vadd.f32 %v1822, %v2312
      %v2419 = vadd.f32 %v1823, %v2317
      %v2420 = vadd.f32 %v1824, %v2320
      %v2421 = vadd.f32 %v1825, %v2325
      %v2422 = vadd.f32 %v1826, %v2328
      %v2423 = vadd.f32 %v1827, %v2333
      %v2424 = vadd.f32 %v1828, %v2336
      %v2425 = vadd.f32 %v1829, %v2341
      %v2426 = vadd.f32 %v1830, %v2344
      %v2427 = vadd.f32 %v1831, %v2349
      %v2428 = vadd.f32 %v1832, %v2352
      %v2429 = vadd.f32 %v1833, %v2357
      %v2430 = vadd.f32 %v1834, %v2360
      %v2431 = vadd.f32 %v1835, %v2365
      %v2432 = vadd.f32 %v1836, %v2368
      %v2433 = vadd.f32 %v1837, %v2373
      %v2434 = vadd.f32 %v1838, %v2376
      %v2435 = vadd.f32 %v1839, %v2381
      %v2436 = vadd.f32 %v1840, %v2384
      %v2437 = vadd.f32 %v1841, %v2389
      %v2438 = vadd.f32 %v1842, %v2392
      %v2439 = vadd.f32 %v1843, %v2397
      %v2440 = vadd.f32 %v1844, %v2400
      %v2441 = vadd.f32 %v1845, %v2405
      %v2442 = vadd.f32 %v1846, %v2408
      %2443 = vst [vmem:[%s298] sm:$0xff] %v2411
      %2444 = vst [vmem:[%s298 + $0x8] sm:$0xff] %v2412
      %2445 = vst [vmem:[%s298 + $0x10] sm:$0xff] %v2413
      %2446 = vst [vmem:[%s298 + $0x18] sm:$0xff] %v2414
      %2447 = vst [vmem:[%s298 + $0x20] sm:$0xff] %v2415
      %2448 = vst [vmem:[%s298 + $0x28] sm:$0xff] %v2416
      %2449 = vst [vmem:[%s298 + $0x30] sm:$0xff] %v2417
      %2450 = vst [vmem:[%s298 + $0x38] sm:$0xff] %v2418
      %2451 = vst [vmem:[%s298 + $0x40] sm:$0xff] %v2419
      %2452 = vst [vmem:[%s298 + $0x48] sm:$0xff] %v2420
      %2453 = vst [vmem:[%s298 + $0x50] sm:$0xff] %v2421
      %2454 = vst [vmem:[%s298 + $0x58] sm:$0xff] %v2422
      %2455 = vst [vmem:[%s298 + $0x60] sm:$0xff] %v2423
      %2456 = vst [vmem:[%s298 + $0x68] sm:$0xff] %v2424
      %2457 = vst [vmem:[%s298 + $0x70] sm:$0xff] %v2425
      %2458 = vst [vmem:[%s298 + $0x78] sm:$0xff] %v2426
      %2459 = vst [vmem:[%s298 + $0x80] sm:$0xff] %v2427
      %2460 = vst [vmem:[%s298 + $0x88] sm:$0xff] %v2428
      %2461 = vst [vmem:[%s298 + $0x90] sm:$0xff] %v2429
      %2462 = vst [vmem:[%s298 + $0x98] sm:$0xff] %v2430
      %2463 = vst [vmem:[%s298 + $0xa0] sm:$0xff] %v2431
      %2464 = vst [vmem:[%s298 + $0xa8] sm:$0xff] %v2432
      %2465 = vst [vmem:[%s298 + $0xb0] sm:$0xff] %v2433
      %2466 = vst [vmem:[%s298 + $0xb8] sm:$0xff] %v2434
      %2467 = vst [vmem:[%s298 + $0xc0] sm:$0xff] %v2435
      %2468 = vst [vmem:[%s298 + $0xc8] sm:$0xff] %v2436
      %2469 = vst [vmem:[%s298 + $0xd0] sm:$0xff] %v2437
      %2470 = vst [vmem:[%s298 + $0xd8] sm:$0xff] %v2438
      %2471 = vst [vmem:[%s298 + $0xe0] sm:$0xff] %v2439
      %2472 = vst [vmem:[%s298 + $0xe8] sm:$0xff] %v2440
      %2473 = vst [vmem:[%s298 + $0xf0] sm:$0xff] %v2441
      %2474 = vst [vmem:[%s298 + $0xf8] sm:$0xff] %v2442
      %p2475 = scmp.lt.s32.totalorder %s18, 1
      %s2476 = scalar_select %p2475, %s18, 1
      %s2477 = smul.addr %s2476, 32
      %s2478 = smul.addr %s2477, 8
      %s2479 = scalar_lea.vmem %s7, %s2478
      // Predicated region
      $region56: #{intermediate_conv_forward.3} parent=47 // pred_check
        %p2480 = pneg %p193
      $region57: #{intermediate_conv_forward.3} parent=47 // pred_check_branch
        %2482 = sbr.rel (%p2480) target = $region59
      $region58: #{intermediate_conv_forward.3} parent=47 // pred_region
        _
      $region59: #{intermediate_conv_forward.3} parent=47 // pred_fallthru
        _
    $region48: #{intermediate_conv_forward.3} parent=5 // pred_fallthru
      _
    %p2483 = scmp.le.s32.totalorder 2, %s13
    // Predicated region
    $region60: #{intermediate_conv_forward.3} parent=5 // pred_check
      %p2484 = pneg %p2483
    $region61: #{intermediate_conv_forward.3} parent=5 // pred_check_branch
      %2486 = sbr.rel (%p2484) target = $region63
    $region62: #{intermediate_conv_forward.3} parent=5 // pred_region
      %s2487 = ssub.s32 %s13, 2
      // Predicated region
      $region64: #{intermediate_conv_forward.3} parent=62 // pred_check
        %p2488 = pneg %p199
      $region65: #{intermediate_conv_forward.3} parent=62 // pred_check_branch
        %2490 = sbr.rel (%p2488) target = $region67
      $region66: #{intermediate_conv_forward.3} parent=62 // pred_region
        %p2491 = scmp.lt.s32.totalorder %s19, 1
        %s2492 = scalar_select %p2491, %s19, 1
        %s2493 = smul.addr %s2492, 32
        %s2494 = smul.addr %s2493, 8
        %s2495 = scalar_lea.vmem %s7, %s2494
      $region67: #{intermediate_conv_forward.3} parent=62 // pred_fallthru
        _
    $region63: #{intermediate_conv_forward.3} parent=5 // pred_fallthru
      _
  $region6: #{intermediate_conv_forward.3} parent=0 // loop_footer
    %s17 = sadd.s32 1, %s13
  $region7: #{intermediate_conv_forward.3} parent=0 // loop_footer_branch
    %12 = sbr.rel target = $region3
  $region8: #{intermediate_conv_forward.3} parent=0 // loop_exit
    _

// kernel: intermediate_conv_forward.2
$region0: #{intermediate_conv_forward.2}
  #allocation0 [shape = 'u32[]', space=smem, size = 0x4, offset = 0x4, fixed_abs, tag = 'smem constant byte address 0x4 - core index']
  #allocation1 [shape = 'u32[144,128]{1,0:T(1,128)}', space=vmem, size = 0x12000, scoped, tag = 'internal scratch']
  #allocation2 [shape = 'bf16[20,16,768]{2,1,0:T(16,128)(2,1)}', space=vmem, size = 0x78000, scoped, tag = 'scratch operand']
  %s0 = inlined_call_operand.vmem [shape: bf16[2,16,16,256], index: 0, kind: input, shape index: {}]
  %s1 = inlined_call_operand.vmem [shape: bf16[2,16,16,2], index: 1, kind: input, shape index: {}]
  %s2 = inlined_call_operand.vmem [shape: bf16[256,256], index: 2, kind: input, shape index: {}]
  %s3 = inlined_call_operand.vmem [shape: bf16[2,256], index: 3, kind: input, shape index: {}]
  %s4 = inlined_call_operand.vmem [shape: f32[1,256], index: 4, kind: input, shape index: {}]
  %s5 = inlined_call_operand.vmem [shape: bf16[3,768,128], index: 5, kind: input, shape index: {}]
  %s6 = inlined_call_operand.vmem [shape: f32[1,128], index: 6, kind: input, shape index: {}]
  %s7 = inlined_call_operand.vmem [shape: bf16[2,16,16,128], index: 7, kind: output, shape index: {}]
  %s8 = sld [smem:[#allocation0]]
  $region68: #{intermediate_conv_forward.2} parent=0
    _
  %s10 = ssub.s32 1, %s8
  %s11 = scalar_select 0, %s10, %s8
  loop: start=0, step=1, limit=4
  $region2: #{intermediate_conv_forward.2} parent=0 // loop_pre_header
    _
  $region3: #{intermediate_conv_forward.2} parent=0 // loop_header
    %s13 = sphi 0, %s17
    %p14 = scmp.ge.s32.totalorder %s13, 4
    %s23 = sphi 0, %s25
    %s26 = sphi 0, %s23
    %s27 = sphi 0, %s26
    %s43 = sphi 0, %s27
    %s49 = sphi 0, %s51
    %s52 = sphi 0, %s49
    %s53 = sphi 0, %s52
    %s69 = sphi 0, %s53
    %s73 = sphi 0, %s73
    %s75 = sphi 0, %s73
    %s76 = sphi 0, %s75
    %s90 = sphi 0, %s76
    %s94 = sphi 0, %s94
    %s96 = sphi 0, %s94
    %s97 = sphi 0, %s96
    %s111 = sphi 0, %s97
    %s115 = sphi 0, %s115
    %s117 = sphi 0, %s115
    %s118 = sphi 0, %s117
    %s132 = sphi 0, %s118
    %s136 = sphi 0, %s136
    %s138 = sphi 0, %s136
    %s139 = sphi 0, %s138
    %s153 = sphi 0, %s139
    %s157 = sphi 0, %s157
    %s159 = sphi 0, %s157
    %s160 = sphi 0, %s159
    %s174 = sphi 0, %s160
    %s180 = sphi 0, %s182
    %s183 = sphi 0, %s180
    %s184 = sphi 0, %s183
    %s200 = sphi 0, %s184
  $region4: #{intermediate_conv_forward.2} parent=0 // loop_header_branch
    %16 = sbr.rel (%p14) target = $region8
  $region5: #{intermediate_conv_forward.2} parent=0 // loop_body
    %s18 = ssub.s32 %s13, 1
    %s19 = ssub.s32 %s13, 2
    %s20 = sadd.s32 %s13, 1
    %s21 = ssub.s32 %s13, %s20
    %p22 = scmp.eq.s32.totalorder %s21, 0
    %s24 = sadd.s32 %s23, 1
    %s25 = scalar_select %p22, %s23, %s24
    %p28 = pneg %p22
    %p29 = scmp.eq.s32.totalorder %s13, 1
    %p30 = por %p28, %p29
    %p31 = scmp.ne.s32.totalorder %s23, %s26
    %p32 = scmp.eq.s32.totalorder %s13, 0
    %p33 = por %p31, %p32
    %p34 = scmp.ne.s32.totalorder %s23, %s26
    %p35 = scmp.eq.s32.totalorder %s18, 1
    %p36 = por %p34, %p35
    %p37 = scmp.ne.s32.totalorder %s26, %s27
    %p38 = scmp.eq.s32.totalorder %s18, 0
    %p39 = por %p37, %p38
    %p40 = scmp.ne.s32.totalorder %s26, %s27
    %p41 = scmp.eq.s32.totalorder %s19, 1
    %p42 = por %p40, %p41
    %p44 = scmp.ne.s32.totalorder %s27, %s43
    %p45 = scmp.eq.s32.totalorder %s19, 0
    %p46 = por %p44, %p45
    %s47 = ssub.s32 %s13, %s20
    %p48 = scmp.eq.s32.totalorder %s47, 0
    %s50 = sadd.s32 %s49, 1
    %s51 = scalar_select %p48, %s49, %s50
    %p54 = pneg %p48
    %p55 = scmp.eq.s32.totalorder %s13, 1
    %p56 = por %p54, %p55
    %p57 = scmp.ne.s32.totalorder %s49, %s52
    %p58 = scmp.eq.s32.totalorder %s13, 0
    %p59 = por %p57, %p58
    %p60 = scmp.ne.s32.totalorder %s49, %s52
    %p61 = scmp.eq.s32.totalorder %s18, 1
    %p62 = por %p60, %p61
    %p63 = scmp.ne.s32.totalorder %s52, %s53
    %p64 = scmp.eq.s32.totalorder %s18, 0
    %p65 = por %p63, %p64
    %p66 = scmp.ne.s32.totalorder %s52, %s53
    %p67 = scmp.eq.s32.totalorder %s19, 1
    %p68 = por %p66, %p67
    %p70 = scmp.ne.s32.totalorder %s53, %s69
    %p71 = scmp.eq.s32.totalorder %s19, 0
    %p72 = por %p70, %p71
    %s74 = sadd.s32 %s73, 1
    %p77 = scmp.eq.s32.totalorder %s13, 1
    %p78 = scmp.ne.s32.totalorder %s73, %s75
    %p79 = scmp.eq.s32.totalorder %s13, 0
    %p80 = por %p78, %p79
    %p81 = scmp.ne.s32.totalorder %s73, %s75
    %p82 = scmp.eq.s32.totalorder %s18, 1
    %p83 = por %p81, %p82
    %p84 = scmp.ne.s32.totalorder %s75, %s76
    %p85 = scmp.eq.s32.totalorder %s18, 0
    %p86 = por %p84, %p85
    %p87 = scmp.ne.s32.totalorder %s75, %s76
    %p88 = scmp.eq.s32.totalorder %s19, 1
    %p89 = por %p87, %p88
    %p91 = scmp.ne.s32.totalorder %s76, %s90
    %p92 = scmp.eq.s32.totalorder %s19, 0
    %p93 = por %p91, %p92
    %s95 = sadd.s32 %s94, 1
    %p98 = scmp.eq.s32.totalorder %s13, 1
    %p99 = scmp.ne.s32.totalorder %s94, %s96
    %p100 = scmp.eq.s32.totalorder %s13, 0
    %p101 = por %p99, %p100
    %p102 = scmp.ne.s32.totalorder %s94, %s96
    %p103 = scmp.eq.s32.totalorder %s18, 1
    %p104 = por %p102, %p103
    %p105 = scmp.ne.s32.totalorder %s96, %s97
    %p106 = scmp.eq.s32.totalorder %s18, 0
    %p107 = por %p105, %p106
    %p108 = scmp.ne.s32.totalorder %s96, %s97
    %p109 = scmp.eq.s32.totalorder %s19, 1
    %p110 = por %p108, %p109
    %p112 = scmp.ne.s32.totalorder %s97, %s111
    %p113 = scmp.eq.s32.totalorder %s19, 0
    %p114 = por %p112, %p113
    %s116 = sadd.s32 %s115, 1
    %p119 = scmp.eq.s32.totalorder %s13, 1
    %p120 = scmp.ne.s32.totalorder %s115, %s117
    %p121 = scmp.eq.s32.totalorder %s13, 0
    %p122 = por %p120, %p121
    %p123 = scmp.ne.s32.totalorder %s115, %s117
    %p124 = scmp.eq.s32.totalorder %s18, 1
    %p125 = por %p123, %p124
    %p126 = scmp.ne.s32.totalorder %s117, %s118
    %p127 = scmp.eq.s32.totalorder %s18, 0
    %p128 = por %p126, %p127
    %p129 = scmp.ne.s32.totalorder %s117, %s118
    %p130 = scmp.eq.s32.totalorder %s19, 1
    %p131 = por %p129, %p130
    %p133 = scmp.ne.s32.totalorder %s118, %s132
    %p134 = scmp.eq.s32.totalorder %s19, 0
    %p135 = por %p133, %p134
    %s137 = sadd.s32 %s136, 1
    %p140 = scmp.eq.s32.totalorder %s13, 1
    %p141 = scmp.ne.s32.totalorder %s136, %s138
    %p142 = scmp.eq.s32.totalorder %s13, 0
    %p143 = por %p141, %p142
    %p144 = scmp.ne.s32.totalorder %s136, %s138
    %p145 = scmp.eq.s32.totalorder %s18, 1
    %p146 = por %p144, %p145
    %p147 = scmp.ne.s32.totalorder %s138, %s139
    %p148 = scmp.eq.s32.totalorder %s18, 0
    %p149 = por %p147, %p148
    %p150 = scmp.ne.s32.totalorder %s138, %s139
    %p151 = scmp.eq.s32.totalorder %s19, 1
    %p152 = por %p150, %p151
    %p154 = scmp.ne.s32.totalorder %s139, %s153
    %p155 = scmp.eq.s32.totalorder %s19, 0
    %p156 = por %p154, %p155
    %s158 = sadd.s32 %s157, 1
    %p161 = scmp.eq.s32.totalorder %s13, 1
    %p162 = scmp.ne.s32.totalorder %s157, %s159
    %p163 = scmp.eq.s32.totalorder %s13, 0
    %p164 = por %p162, %p163
    %p165 = scmp.ne.s32.totalorder %s157, %s159
    %p166 = scmp.eq.s32.totalorder %s18, 1
    %p167 = por %p165, %p166
    %p168 = scmp.ne.s32.totalorder %s159, %s160
    %p169 = scmp.eq.s32.totalorder %s18, 0
    %p170 = por %p168, %p169
    %p171 = scmp.ne.s32.totalorder %s159, %s160
    %p172 = scmp.eq.s32.totalorder %s19, 1
    %p173 = por %p171, %p172
    %p175 = scmp.ne.s32.totalorder %s160, %s174
    %p176 = scmp.eq.s32.totalorder %s19, 0
    %p177 = por %p175, %p176
    %s178 = ssub.s32 %s13, %s20
    %p179 = scmp.eq.s32.totalorder %s178, 0
    %s181 = sadd.s32 %s180, 1
    %s182 = scalar_select %p179, %s180, %s181
    %p185 = pneg %p179
    %p186 = scmp.eq.s32.totalorder %s13, 1
    %p187 = por %p185, %p186
    %p188 = scmp.ne.s32.totalorder %s180, %s183
    %p189 = scmp.eq.s32.totalorder %s13, 0
    %p190 = por %p188, %p189
    %p191 = scmp.ne.s32.totalorder %s180, %s183
    %p192 = scmp.eq.s32.totalorder %s18, 1
    %p193 = por %p191, %p192
    %p194 = scmp.ne.s32.totalorder %s183, %s184
    %p195 = scmp.eq.s32.totalorder %s18, 0
    %p196 = por %p194, %p195
    %p197 = scmp.ne.s32.totalorder %s183, %s184
    %p198 = scmp.eq.s32.totalorder %s19, 1
    %p199 = por %p197, %p198
    %p201 = scmp.ne.s32.totalorder %s184, %s200
    %p202 = scmp.eq.s32.totalorder %s19, 0
    %p203 = por %p201, %p202
    %p204 = scmp.le.s32.totalorder 1, %s13
    %p205 = scmp.lt.s32.totalorder %s13, 3
    %p206 = pnand %p204, %p205
    %p207 = pneg %p206
    // Predicated region
    $region9: #{intermediate_conv_forward.2} parent=5 // pred_check
      _
    $region10: #{intermediate_conv_forward.2} parent=5 // pred_check_branch
      %209 = sbr.rel (%p206) target = $region12
    $region11: #{intermediate_conv_forward.2} parent=5 // pred_region
      %s210 = ssub.s32 %s13, 1
      // Predicated region
      $region13: #{intermediate_conv_forward.2} parent=11 // pred_check
        %p211 = pneg %p86
      $region14: #{intermediate_conv_forward.2} parent=11 // pred_check_branch
        %213 = sbr.rel (%p211) target = $region16
      $region15: #{intermediate_conv_forward.2} parent=11 // pred_region
        _
      $region16: #{intermediate_conv_forward.2} parent=11 // pred_fallthru
        _
      // Predicated region
      $region17: #{intermediate_conv_forward.2} parent=11 // pred_check
        %p214 = pneg %p107
      $region18: #{intermediate_conv_forward.2} parent=11 // pred_check_branch
        %216 = sbr.rel (%p214) target = $region20
      $region19: #{intermediate_conv_forward.2} parent=11 // pred_region
        _
      $region20: #{intermediate_conv_forward.2} parent=11 // pred_fallthru
        _
      // Predicated region
      $region21: #{intermediate_conv_forward.2} parent=11 // pred_check
        %p217 = pneg %p128
      $region22: #{intermediate_conv_forward.2} parent=11 // pred_check_branch
        %219 = sbr.rel (%p217) target = $region24
      $region23: #{intermediate_conv_forward.2} parent=11 // pred_region
        _
      $region24: #{intermediate_conv_forward.2} parent=11 // pred_fallthru
        _
      // Predicated region
      $region25: #{intermediate_conv_forward.2} parent=11 // pred_check
        %p220 = pneg %p149
      $region26: #{intermediate_conv_forward.2} parent=11 // pred_check_branch
        %222 = sbr.rel (%p220) target = $region28
      $region27: #{intermediate_conv_forward.2} parent=11 // pred_region
        _
      $region28: #{intermediate_conv_forward.2} parent=11 // pred_fallthru
        _
      // Predicated region
      $region29: #{intermediate_conv_forward.2} parent=11 // pred_check
        %p223 = pneg %p170
      $region30: #{intermediate_conv_forward.2} parent=11 // pred_check_branch
        %225 = sbr.rel (%p223) target = $region32
      $region31: #{intermediate_conv_forward.2} parent=11 // pred_region
        _
      $region32: #{intermediate_conv_forward.2} parent=11 // pred_fallthru
        _
    $region12: #{intermediate_conv_forward.2} parent=5 // pred_fallthru
      _
    %p226 = scmp.lt.s32.totalorder %s13, 2
    // Predicated region
    $region33: #{intermediate_conv_forward.2} parent=5 // pred_check
      %p227 = pneg %p226
    $region34: #{intermediate_conv_forward.2} parent=5 // pred_check_branch
      %229 = sbr.rel (%p227) target = $region36
    $region35: #{intermediate_conv_forward.2} parent=5 // pred_region
      // Predicated region
      $region37: #{intermediate_conv_forward.2} parent=35 // pred_check
        %p230 = pneg %p33
      $region38: #{intermediate_conv_forward.2} parent=35 // pred_check_branch
        %232 = sbr.rel (%p230) target = $region40
      $region39: #{intermediate_conv_forward.2} parent=35 // pred_region
        %p233 = scmp.lt.s32.totalorder %s13, 1
        %s234 = scalar_select %p233, %s13, 1
        %s235 = smul.addr %s234, 64
        %s236 = smul.addr %s235, 4
        %s237 = scalar_lea.vmem %s0, %s236
      $region40: #{intermediate_conv_forward.2} parent=35 // pred_fallthru
        _
      // Predicated region
      $region41: #{intermediate_conv_forward.2} parent=35 // pred_check
        %p238 = pneg %p59
      $region42: #{intermediate_conv_forward.2} parent=35 // pred_check_branch
        %240 = sbr.rel (%p238) target = $region44
      $region43: #{intermediate_conv_forward.2} parent=35 // pred_region
        %p241 = scmp.lt.s32.totalorder %s13, 1
        %s242 = scalar_select %p241, %s13, 1
        %s243 = smul.addr %s242, 32
        %s244 = smul.addr %s243, 4
        %s245 = scalar_lea.vmem %s1, %s244
      $region44: #{intermediate_conv_forward.2} parent=35 // pred_fallthru
        _
    $region36: #{intermediate_conv_forward.2} parent=5 // pred_fallthru
      _
    %p246 = scmp.le.s32.totalorder 1, %s13
    %p247 = scmp.lt.s32.totalorder %s13, 3
    %p248 = pnand %p246, %p247
    %p249 = pneg %p248
    // Predicated region
    $region45: #{intermediate_conv_forward.2} parent=5 // pred_check
      _
    $region46: #{intermediate_conv_forward.2} parent=5 // pred_check_branch
      %251 = sbr.rel (%p248) target = $region48
    $region47: #{intermediate_conv_forward.2} parent=5 // pred_region
      %s252 = ssub.s32 %s13, 1
      %p253 = scmp.lt.s32.totalorder %s18, 1
      %s254 = scalar_select %p253, %s18, 1
      %s255 = smul.addr %s254, 64
      %s256 = smul.addr %s255, 4
      %s257 = scalar_lea.vmem %s0, %s256
      %p258 = pneg %p39
      %p259 = pneg %p36
      %p260 = scmp.lt.s32.totalorder %s18, 1
      %s261 = scalar_select %p260, %s18, 1
      %s262 = smul.addr %s261, 32
      %s263 = smul.addr %s262, 4
      %s264 = scalar_lea.vmem %s1, %s263
      %p265 = pneg %p65
      %p266 = pneg %p62
      %p267 = pneg %p86
      %p268 = pneg %p83
      %p269 = pneg %p107
      %p270 = pneg %p104
      %p271 = pneg %p128
      %p272 = pneg %p125
      %p273 = pneg %p149
      %p274 = pneg %p146
      %p275 = pneg %p170
      %p276 = pneg %p167
      %p277 = pneg %p196
      %p278 = pneg %p193
      %p279 = scmp.lt.s32.totalorder %s18, 1
      %s280 = scalar_select %p279, %s18, 1
      %s281 = smul.addr %s280, 32
      %s282 = smul.addr %s281, 4
      %s283 = scalar_lea.vmem %s7, %s282
      %p284 = scmp.lt.s32.totalorder %s18, 1
      %s285 = scalar_select %p284, %s18, 1
      %s286 = smul.addr %s285, 64
      %s287 = smul.addr %s286, 4
      %s288 = scalar_lea.vmem %s0, %s287
      %p289 = scmp.lt.s32.totalorder %s18, 1
      %s290 = scalar_select %p289, %s18, 1
      %s291 = smul.addr %s290, 32
      %s292 = smul.addr %s291, 4
      %s293 = scalar_lea.vmem %s1, %s292
      %p294 = scmp.lt.s32.totalorder %s18, 1
      %s295 = scalar_select %p294, %s18, 1
      %s296 = smul.addr %s295, 32
      %s297 = smul.addr %s296, 4
      %s298 = scalar_lea.vmem %s7, %s297
      %300 = vst [vmem:[#allocation2] sm:$0xff] 0
      %301 = vst [vmem:[#allocation2 + $0x8] sm:$0xff] 0
      %302 = vst [vmem:[#allocation2 + $0x10] sm:$0xff] 0
      %303 = vst [vmem:[#allocation2 + $0x18] sm:$0xff] 0
      %304 = vst [vmem:[#allocation2 + $0x20] sm:$0xff] 0
      %305 = vst [vmem:[#allocation2 + $0x28] sm:$0xff] 0
      %306 = vst [vmem:[#allocation2 + $0x30] sm:$0xff] 0
      %307 = vst [vmem:[#allocation2 + $0x38] sm:$0xff] 0
      %308 = vst [vmem:[#allocation2 + $0x40] sm:$0xff] 0
      %309 = vst [vmem:[#allocation2 + $0x48] sm:$0xff] 0
      %310 = vst [vmem:[#allocation2 + $0x50] sm:$0xff] 0
      %311 = vst [vmem:[#allocation2 + $0x58] sm:$0xff] 0
      %s312 = scalar_lea.vmem [#allocation2], 864
      %313 = vst [vmem:[%s312] sm:$0xff] 0
      %314 = vst [vmem:[%s312 + $0x8] sm:$0xff] 0
      %315 = vst [vmem:[%s312 + $0x10] sm:$0xff] 0
      %316 = vst [vmem:[%s312 + $0x18] sm:$0xff] 0
      %317 = vst [vmem:[%s312 + $0x20] sm:$0xff] 0
      %318 = vst [vmem:[%s312 + $0x28] sm:$0xff] 0
      %319 = vst [vmem:[%s312 + $0x30] sm:$0xff] 0
      %320 = vst [vmem:[%s312 + $0x38] sm:$0xff] 0
      %321 = vst [vmem:[%s312 + $0x40] sm:$0xff] 0
      %322 = vst [vmem:[%s312 + $0x48] sm:$0xff] 0
      %323 = vst [vmem:[%s312 + $0x50] sm:$0xff] 0
      %324 = vst [vmem:[%s312 + $0x58] sm:$0xff] 0
      %v325 = vld [vmem:[%s3] sm:$0x3]
      %v326 = vunpack.c.l.bf16 %v325
      %v327 = vld [vmem:[%s4] sm:$0x3]
      loop: start=0, step=1, limit=4
      $region49: #{intermediate_conv_forward.2} parent=47 // loop_pre_header
        _
      $region50: #{intermediate_conv_forward.2} parent=47 // loop_header
        %s329 = sphi 0, %s333
        %p330 = scmp.ge.s32.totalorder %s329, 4
      $region51: #{intermediate_conv_forward.2} parent=47 // loop_header_branch
        %332 = sbr.rel (%p330) target = $region55
      $region52: #{intermediate_conv_forward.2} parent=47 // loop_body
        %s334 = smul.u32 %s329, 4
        %s335 = smul.u32 %s334, 4
        %s336 = smul.addr %s335, 4
        %s337 = scalar_lea.vmem %s288, %s336
        %v338 = vld [vmem:[%s337] sm:$0xff]
        %v339 = vld [vmem:[%s337 + $0x8] sm:$0xff]
        %v340 = vld [vmem:[%s337 + $0x10] sm:$0xff]
        %v341 = vld [vmem:[%s337 + $0x18] sm:$0xff]
        %v342 = vld [vmem:[%s337 + $0x20] sm:$0xff]
        %v343 = vld [vmem:[%s337 + $0x28] sm:$0xff]
        %v344 = vld [vmem:[%s337 + $0x30] sm:$0xff]
        %v345 = vld [vmem:[%s337 + $0x38] sm:$0xff]
        %s346 = smul.u32 %s334, 2
        %s347 = smul.addr %s346, 4
        %s348 = scalar_lea.vmem %s293, %s347
        %v349 = vld [vmem:[%s348] sm:$0xf]
        %v350 = vld [vmem:[%s348 + $0x4] sm:$0xf]
        %v351 = vld [vmem:[%s348 + $0x8] sm:$0xf]
        %v352 = vld [vmem:[%s348 + $0xc] sm:$0xf]
        %v353 = vld [vmem:[%s348 + $0x10] sm:$0xf]
        %v354 = vld [vmem:[%s348 + $0x14] sm:$0xf]
        %v355 = vld [vmem:[%s348 + $0x18] sm:$0xf]
        %v356 = vld [vmem:[%s348 + $0x1c] sm:$0xf]
        %v357 = vunpack.c.l.bf16 %v349
        %v358 = vunpack.c.l.bf16 %v350
        %v359 = vunpack.c.l.bf16 %v351
        %v360 = vunpack.c.l.bf16 %v352
        %v361 = vunpack.c.l.bf16 %v353
        %v362 = vunpack.c.l.bf16 %v354
        %v363 = vunpack.c.l.bf16 %v355
        %v364 = vunpack.c.l.bf16 %v356
        %v365 = vld [vmem:[%s2] sm:$0xff]
        %v366 = vld [vmem:[%s2 + $0x8] sm:$0xff]
        %v367 = vld [vmem:[%s2 + $0x10] sm:$0xff]
        %v368 = vld [vmem:[%s2 + $0x18] sm:$0xff]
        %v369 = vld [vmem:[%s2 + $0x20] sm:$0xff]
        %v370 = vld [vmem:[%s2 + $0x28] sm:$0xff]
        %v371 = vld [vmem:[%s2 + $0x30] sm:$0xff]
        %v372 = vld [vmem:[%s2 + $0x38] sm:$0xff]
        %v373 = vld [vmem:[%s2 + $0x40] sm:$0xff]
        %v374 = vld [vmem:[%s2 + $0x48] sm:$0xff]
        %v375 = vld [vmem:[%s2 + $0x50] sm:$0xff]
        %v376 = vld [vmem:[%s2 + $0x58] sm:$0xff]
        %v377 = vld [vmem:[%s2 + $0x60] sm:$0xff]
        %v378 = vld [vmem:[%s2 + $0x68] sm:$0xff]
        %v379 = vld [vmem:[%s2 + $0x70] sm:$0xff]
        %v380 = vld [vmem:[%s2 + $0x78] sm:$0xff]
        %v381 = vld [vmem:[%s2 + $0x80] sm:$0xff]
        %v382 = vld [vmem:[%s2 + $0x88] sm:$0xff]
        %v383 = vld [vmem:[%s2 + $0x90] sm:$0xff]
        %v384 = vld [vmem:[%s2 + $0x98] sm:$0xff]
        %v385 = vld [vmem:[%s2 + $0xa0] sm:$0xff]
        %v386 = vld [vmem:[%s2 + $0xa8] sm:$0xff]
        %v387 = vld [vmem:[%s2 + $0xb0] sm:$0xff]
        %v388 = vld [vmem:[%s2 + $0xb8] sm:$0xff]
        %v389 = vld [vmem:[%s2 + $0xc0] sm:$0xff]
        %v390 = vld [vmem:[%s2 + $0xc8] sm:$0xff]
        %v391 = vld [vmem:[%s2 + $0xd0] sm:$0xff]
        %v392 = vld [vmem:[%s2 + $0xd8] sm:$0xff]
        %v393 = vld [vmem:[%s2 + $0xe0] sm:$0xff]
        %v394 = vld [vmem:[%s2 + $0xe8] sm:$0xff]
        %v395 = vld [vmem:[%s2 + $0xf0] sm:$0xff]
        %v396 = vld [vmem:[%s2 + $0xf8] sm:$0xff]
        %v398 = vlaneseq
        %v399 = vshrl.u32 %v398, 7
        %v400 = vsub.s32 0, %v399
        %v401 = vrot.slane %v327, %v400
        %v402 = vlaneseq
        %v403 = vshrl.u32 %v402, 7
        %v404 = vsub.s32 1, %v403
        %v405 = vrot.slane %v327, %v404
        %v416 = vunpack.c.l.b16 %v338
        %v417 = vunpack.c.h.b16 %v338
        %v418 = vunpack.c.l.b16 %v339
        %v419 = vunpack.c.h.b16 %v339
        %v420 = vunpack.c.l.b16 %v340
        %v421 = vunpack.c.h.b16 %v340
        %v422 = vunpack.c.l.b16 %v341
        %v423 = vunpack.c.h.b16 %v341
        %v424 = vunpack.c.l.b16 %v342
        %v425 = vunpack.c.h.b16 %v342
        %v426 = vunpack.c.l.b16 %v343
        %v427 = vunpack.c.h.b16 %v343
        %v428 = vunpack.c.l.b16 %v344
        %v429 = vunpack.c.h.b16 %v344
        %v430 = vunpack.c.l.b16 %v345
        %v431 = vunpack.c.h.b16 %v345
        %v432 = vpack.c.b16 %v418, %v416
        %v433 = vpack.c.b16 %v419, %v417
        %v434 = vpack.c.b16 %v422, %v420
        %v435 = vpack.c.b16 %v423, %v421
        %v436 = vpack.c.b16 %v426, %v424
        %v437 = vpack.c.b16 %v427, %v425
        %v438 = vpack.c.b16 %v430, %v428
        %v439 = vpack.c.b16 %v431, %v429
        %v480 = vunpack.c.l.b16 %v365
        %v481 = vunpack.c.h.b16 %v365
        %v482 = vunpack.c.l.b16 %v366
        %v483 = vunpack.c.h.b16 %v366
        %v484 = vunpack.c.l.b16 %v367
        %v485 = vunpack.c.h.b16 %v367
        %v486 = vunpack.c.l.b16 %v368
        %v487 = vunpack.c.h.b16 %v368
        %v488 = vunpack.c.l.b16 %v369
        %v489 = vunpack.c.h.b16 %v369
        %v490 = vunpack.c.l.b16 %v370
        %v491 = vunpack.c.h.b16 %v370
        %v492 = vunpack.c.l.b16 %v371
        %v493 = vunpack.c.h.b16 %v371
        %v494 = vunpack.c.l.b16 %v372
        %v495 = vunpack.c.h.b16 %v372
        %v496 = vunpack.c.l.b16 %v373
        %v497 = vunpack.c.h.b16 %v373
        %v498 = vunpack.c.l.b16 %v374
        %v499 = vunpack.c.h.b16 %v374
        %v500 = vunpack.c.l.b16 %v375
        %v501 = vunpack.c.h.b16 %v375
        %v502 = vunpack.c.l.b16 %v376
        %v503 = vunpack.c.h.b16 %v376
        %v504 = vunpack.c.l.b16 %v377
        %v505 = vunpack.c.h.b16 %v377
        %v506 = vunpack.c.l.b16 %v378
        %v507 = vunpack.c.h.b16 %v378
        %v508 = vunpack.c.l.b16 %v379
        %v509 = vunpack.c.h.b16 %v379
        %v510 = vunpack.c.l.b16 %v380
        %v511 = vunpack.c.h.b16 %v380
        %v512 = vunpack.c.l.b16 %v381
        %v513 = vunpack.c.h.b16 %v381
        %v514 = vunpack.c.l.b16 %v382
        %v515 = vunpack.c.h.b16 %v382
        %v516 = vunpack.c.l.b16 %v383
        %v517 = vunpack.c.h.b16 %v383
        %v518 = vunpack.c.l.b16 %v384
        %v519 = vunpack.c.h.b16 %v384
        %v520 = vunpack.c.l.b16 %v385
        %v521 = vunpack.c.h.b16 %v385
        %v522 = vunpack.c.l.b16 %v386
        %v523 = vunpack.c.h.b16 %v386
        %v524 = vunpack.c.l.b16 %v387
        %v525 = vunpack.c.h.b16 %v387
        %v526 = vunpack.c.l.b16 %v388
        %v527 = vunpack.c.h.b16 %v388
        %v528 = vunpack.c.l.b16 %v389
        %v529 = vunpack.c.h.b16 %v389
        %v530 = vunpack.c.l.b16 %v390
        %v531 = vunpack.c.h.b16 %v390
        %v532 = vunpack.c.l.b16 %v391
        %v533 = vunpack.c.h.b16 %v391
        %v534 = vunpack.c.l.b16 %v392
        %v535 = vunpack.c.h.b16 %v392
        %v536 = vunpack.c.l.b16 %v393
        %v537 = vunpack.c.h.b16 %v393
        %v538 = vunpack.c.l.b16 %v394
        %v539 = vunpack.c.h.b16 %v394
        %v540 = vunpack.c.l.b16 %v395
        %v541 = vunpack.c.h.b16 %v395
        %v542 = vunpack.c.l.b16 %v396
        %v543 = vunpack.c.h.b16 %v396
        %v544 = vpack.c.b16 %v482, %v480
        %v545 = vpack.c.b16 %v483, %v481
        %v546 = vpack.c.b16 %v486, %v484
        %v547 = vpack.c.b16 %v487, %v485
        %v548 = vpack.c.b16 %v490, %v488
        %v549 = vpack.c.b16 %v491, %v489
        %v550 = vpack.c.b16 %v494, %v492
        %v551 = vpack.c.b16 %v495, %v493
        %v552 = vpack.c.b16 %v498, %v496
        %v553 = vpack.c.b16 %v499, %v497
        %v554 = vpack.c.b16 %v502, %v500
        %v555 = vpack.c.b16 %v503, %v501
        %v556 = vpack.c.b16 %v506, %v504
        %v557 = vpack.c.b16 %v507, %v505
        %v558 = vpack.c.b16 %v510, %v508
        %v559 = vpack.c.b16 %v511, %v509
        %v560 = vpack.c.b16 %v514, %v512
        %v561 = vpack.c.b16 %v515, %v513
        %v562 = vpack.c.b16 %v518, %v516
        %v563 = vpack.c.b16 %v519, %v517
        %v564 = vpack.c.b16 %v522, %v520
        %v565 = vpack.c.b16 %v523, %v521
        %v566 = vpack.c.b16 %v526, %v524
        %v567 = vpack.c.b16 %v527, %v525
        %v568 = vpack.c.b16 %v530, %v528
        %v569 = vpack.c.b16 %v531, %v529
        %v570 = vpack.c.b16 %v534, %v532
        %v571 = vpack.c.b16 %v535, %v533
        %v572 = vpack.c.b16 %v538, %v536
        %v573 = vpack.c.b16 %v539, %v537
        %v574 = vpack.c.b16 %v542, %v540
        %v575 = vpack.c.b16 %v543, %v541
        %608 = vmatprep.subr.bf16.mxu0 %v545
        %609 = vmatpush1.bf16.msra.mxu0 %v544
        %610 = vmatprep.subr.bf16.mxu0 %v547
        %611 = vmatpush1.bf16.msra.mxu0 %v546
        %612 = vmatprep.subr.bf16.mxu0 %v549
        %613 = vmatpush1.bf16.msra.mxu0 %v548
        %614 = vmatprep.subr.bf16.mxu0 %v551
        %615 = vmatpush1.bf16.msra.mxu0 %v550
        %616 = vmatprep.subr.bf16.mxu0 %v553
        %617 = vmatpush1.bf16.msra.mxu0 %v552
        %618 = vmatprep.subr.bf16.mxu0 %v555
        %619 = vmatpush1.bf16.msra.mxu0 %v554
        %620 = vmatprep.subr.bf16.mxu0 %v557
        %621 = vmatpush1.bf16.msra.mxu0 %v556
        %622 = vmatprep.subr.bf16.mxu0 %v559
        %623 = vmatpush1.bf16.msra.mxu0 %v558
        %624 = vmatprep.subr.bf16.mxu0 %v561
        %625 = vmatpush1.bf16.msra.mxu0 %v560
        %626 = vmatprep.subr.bf16.mxu0 %v563
        %627 = vmatpush1.bf16.msra.mxu0 %v562
        %628 = vmatprep.subr.bf16.mxu0 %v565
        %629 = vmatpush1.bf16.msra.mxu0 %v564
        %630 = vmatprep.subr.bf16.mxu0 %v567
        %631 = vmatpush1.bf16.msra.mxu0 %v566
        %632 = vmatprep.subr.bf16.mxu0 %v569
        %633 = vmatpush1.bf16.msra.mxu0 %v568
        %634 = vmatprep.subr.bf16.mxu0 %v571
        %635 = vmatpush1.bf16.msra.mxu0 %v570
        %636 = vmatprep.subr.bf16.mxu0 %v573
        %637 = vmatpush1.bf16.msra.mxu0 %v572
        %638 = vmatprep.subr.bf16.mxu0 %v575
        %639 = vmatpush1.bf16.msra.mxu0 %v574
        %640 = vmatprep.mubr.bf16.mxu0 %v433
        %641 = vmatmul.mubr.bf16.gmra.mrb[0].mxu0 %v432
        %v642 = vpop.f32.mrb[0].mxu0
        %v643 = vadd.f32 %v401, %v642
        %v644 = vpop.f32.mrb[0].mxu0
        %v645 = vadd.f32 %v405, %v644
        %v646 = vpop.f32.mrb[0].mxu0
        %v647 = vadd.f32 %v401, %v646
        %v648 = vpop.f32.mrb[0].mxu0
        %v649 = vadd.f32 %v405, %v648
        %650 = vmatprep.mubr.bf16.mxu0 %v435
        %651 = vmatmul.mubr.bf16.gmra.mrb[0].mxu0 %v434
        %v652 = vpop.f32.mrb[0].mxu0
        %v653 = vadd.f32 %v401, %v652
        %v654 = vpop.f32.mrb[0].mxu0
        %v655 = vadd.f32 %v405, %v654
        %v656 = vpop.f32.mrb[0].mxu0
        %v657 = vadd.f32 %v401, %v656
        %v658 = vpop.f32.mrb[0].mxu0
        %v659 = vadd.f32 %v405, %v658
        %660 = vmatprep.mubr.bf16.mxu0 %v437
        %661 = vmatmul.mubr.bf16.gmra.mrb[0].mxu0 %v436
        %v662 = vpop.f32.mrb[0].mxu0
        %v663 = vadd.f32 %v401, %v662
        %v664 = vpop.f32.mrb[0].mxu0
        %v665 = vadd.f32 %v405, %v664
        %v666 = vpop.f32.mrb[0].mxu0
        %v667 = vadd.f32 %v401, %v666
        %v668 = vpop.f32.mrb[0].mxu0
        %v669 = vadd.f32 %v405, %v668
        %670 = vmatprep.mubr.bf16.mxu0 %v439
        %671 = vmatmul.mubr.bf16.gmra.mrb[0].mxu0 %v438
        %v672 = vpop.f32.mrb[0].mxu0
        %v673 = vadd.f32 %v401, %v672
        %v674 = vpop.f32.mrb[0].mxu0
        %v675 = vadd.f32 %v405, %v674
        %v676 = vpop.f32.mrb[0].mxu0
        %v677 = vadd.f32 %v401, %v676
        %v678 = vpop.f32.mrb[0].mxu0
        %v679 = vadd.f32 %v405, %v678
        %680 = vdwg.mxu0
        %682 = vset.pattern.permute.xlu0 0
        %683 = vperm.xlu0 %682, %v357
        %v684 = vpop.permute.xlu0 %683
        %687 = vset.pattern.permute.xlu0 0
        %688 = vperm.xlu0 %687, %v358
        %v689 = vpop.permute.xlu0 %688
        %692 = vset.pattern.permute.xlu0 0
        %693 = vperm.xlu0 %692, %v359
        %v694 = vpop.permute.xlu0 %693
        %697 = vset.pattern.permute.xlu0 0
        %698 = vperm.xlu0 %697, %v360
        %v699 = vpop.permute.xlu0 %698
        %702 = vset.pattern.permute.xlu0 0
        %703 = vperm.xlu0 %702, %v361
        %v704 = vpop.permute.xlu0 %703
        %707 = vset.pattern.permute.xlu0 0
        %708 = vperm.xlu0 %707, %v362
        %v709 = vpop.permute.xlu0 %708
        %712 = vset.pattern.permute.xlu0 0
        %713 = vperm.xlu0 %712, %v363
        %v714 = vpop.permute.xlu0 %713
        %717 = vset.pattern.permute.xlu0 0
        %718 = vperm.xlu0 %717, %v364
        %v719 = vpop.permute.xlu0 %718
        %v722 = vlaneseq
        %v723 = vshrl.u32 %v722, 7
        %v724 = vsub.s32 0, %v723
        %v725 = vrot.slane %v326, %v724
        %v726 = vlaneseq
        %v727 = vshrl.u32 %v726, 7
        %v728 = vsub.s32 2, %v727
        %v729 = vrot.slane %v326, %v728
        %v732 = vlaneseq
        %v733 = vshrl.u32 %v732, 7
        %v734 = vsub.s32 0, %v733
        %v735 = vrot.slane %v725, %v734
        %v736 = vlaneseq
        %v737 = vshrl.u32 %v736, 7
        %v738 = vsub.s32 0, %v737
        %v739 = vrot.slane %v729, %v738
        %v740 = vmul.f32 %v684, %v735
        %v741 = vmul.f32 %v684, %v739
        %v742 = vmul.f32 %v689, %v735
        %v743 = vmul.f32 %v689, %v739
        %v744 = vmul.f32 %v694, %v735
        %v745 = vmul.f32 %v694, %v739
        %v746 = vmul.f32 %v699, %v735
        %v747 = vmul.f32 %v699, %v739
        %v748 = vmul.f32 %v704, %v735
        %v749 = vmul.f32 %v704, %v739
        %v750 = vmul.f32 %v709, %v735
        %v751 = vmul.f32 %v709, %v739
        %v752 = vmul.f32 %v714, %v735
        %v753 = vmul.f32 %v714, %v739
        %v754 = vmul.f32 %v719, %v735
        %v755 = vmul.f32 %v719, %v739
        %v756 = vadd.f32 %v643, %v740
        %v757 = vadd.f32 %v645, %v741
        %v758 = vadd.f32 %v647, %v742
        %v759 = vadd.f32 %v649, %v743
        %v760 = vadd.f32 %v653, %v744
        %v761 = vadd.f32 %v655, %v745
        %v762 = vadd.f32 %v657, %v746
        %v763 = vadd.f32 %v659, %v747
        %v764 = vadd.f32 %v663, %v748
        %v765 = vadd.f32 %v665, %v749
        %v766 = vadd.f32 %v667, %v750
        %v767 = vadd.f32 %v669, %v751
        %v768 = vadd.f32 %v673, %v752
        %v769 = vadd.f32 %v675, %v753
        %v770 = vadd.f32 %v677, %v754
        %v771 = vadd.f32 %v679, %v755
        %772 = vset.pattern.permute.xlu0 1
        %773 = vperm.xlu0 %772, %v357
        %v774 = vpop.permute.xlu0 %773
        %776 = vset.pattern.permute.xlu0 1
        %777 = vperm.xlu0 %776, %v358
        %v778 = vpop.permute.xlu0 %777
        %780 = vset.pattern.permute.xlu0 1
        %781 = vperm.xlu0 %780, %v359
        %v782 = vpop.permute.xlu0 %781
        %784 = vset.pattern.permute.xlu0 1
        %785 = vperm.xlu0 %784, %v360
        %v786 = vpop.permute.xlu0 %785
        %788 = vset.pattern.permute.xlu0 1
        %789 = vperm.xlu0 %788, %v361
        %v790 = vpop.permute.xlu0 %789
        %792 = vset.pattern.permute.xlu0 1
        %793 = vperm.xlu0 %792, %v362
        %v794 = vpop.permute.xlu0 %793
        %796 = vset.pattern.permute.xlu0 1
        %797 = vperm.xlu0 %796, %v363
        %v798 = vpop.permute.xlu0 %797
        %800 = vset.pattern.permute.xlu0 1
        %801 = vperm.xlu0 %800, %v364
        %v802 = vpop.permute.xlu0 %801
        %v804 = vlaneseq
        %v805 = vshrl.u32 %v804, 7
        %v806 = vsub.s32 1, %v805
        %v807 = vrot.slane %v326, %v806
        %v808 = vlaneseq
        %v809 = vshrl.u32 %v808, 7
        %v810 = vsub.s32 3, %v809
        %v811 = vrot.slane %v326, %v810
        %v814 = vlaneseq
        %v815 = vshrl.u32 %v814, 7
        %v816 = vsub.s32 1, %v815
        %v817 = vrot.slane %v807, %v816
        %v818 = vlaneseq
        %v819 = vshrl.u32 %v818, 7
        %v820 = vsub.s32 1, %v819
        %v821 = vrot.slane %v811, %v820
        %v822 = vmul.f32 %v774, %v817
        %v823 = vmul.f32 %v774, %v821
        %v824 = vmul.f32 %v778, %v817
        %v825 = vmul.f32 %v778, %v821
        %v826 = vmul.f32 %v782, %v817
        %v827 = vmul.f32 %v782, %v821
        %v828 = vmul.f32 %v786, %v817
        %v829 = vmul.f32 %v786, %v821
        %v830 = vmul.f32 %v790, %v817
        %v831 = vmul.f32 %v790, %v821
        %v832 = vmul.f32 %v794, %v817
        %v833 = vmul.f32 %v794, %v821
        %v834 = vmul.f32 %v798, %v817
        %v835 = vmul.f32 %v798, %v821
        %v836 = vmul.f32 %v802, %v817
        %v837 = vmul.f32 %v802, %v821
        %v838 = vadd.f32 %v756, %v822
        %v839 = vadd.f32 %v757, %v823
        %v840 = vadd.f32 %v758, %v824
        %v841 = vadd.f32 %v759, %v825
        %v842 = vadd.f32 %v760, %v826
        %v843 = vadd.f32 %v761, %v827
        %v844 = vadd.f32 %v762, %v828
        %v845 = vadd.f32 %v763, %v829
        %v846 = vadd.f32 %v764, %v830
        %v847 = vadd.f32 %v765, %v831
        %v848 = vadd.f32 %v766, %v832
        %v849 = vadd.f32 %v767, %v833
        %v850 = vadd.f32 %v768, %v834
        %v851 = vadd.f32 %v769, %v835
        %v852 = vadd.f32 %v770, %v836
        %v853 = vadd.f32 %v771, %v837
        %v854 = vpack.c.bf16 %v840, %v838
        %v855 = vpack.c.bf16 %v841, %v839
        %v856 = vpack.c.bf16 %v844, %v842
        %v857 = vpack.c.bf16 %v845, %v843
        %v858 = vpack.c.bf16 %v848, %v846
        %v859 = vpack.c.bf16 %v849, %v847
        %v860 = vpack.c.bf16 %v852, %v850
        %v861 = vpack.c.bf16 %v853, %v851
        %v870 = vrot.slane %v854, 7
        %v871 = vrot.slane %v855, 7
        %v872 = vrot.slane %v856, 7
        %v873 = vrot.slane %v857, 7
        %v874 = vrot.slane %v858, 7
        %v875 = vrot.slane %v859, 7
        %v876 = vrot.slane %v860, 7
        %v877 = vrot.slane %v861, 7
        %vm878 = vcmask 1040384
        %v881 = vsel %vm878, 0, %v870
        %v884 = vsel %vm878, 0, %v871
        %v887 = vsel %vm878, 0, %v872
        %v890 = vsel %vm878, 0, %v873
        %v893 = vsel %vm878, 0, %v874
        %v896 = vsel %vm878, 0, %v875
        %v899 = vsel %vm878, 0, %v876
        %v902 = vsel %vm878, 0, %v877
        %v904 = vrot.slane %v854, 1
        %v905 = vrot.slane %v855, 1
        %v906 = vrot.slane %v856, 1
        %v907 = vrot.slane %v857, 1
        %v908 = vrot.slane %v858, 1
        %v909 = vrot.slane %v859, 1
        %v910 = vrot.slane %v860, 1
        %v911 = vrot.slane %v861, 1
        %vm912 = vcmask 1046528
        %v914 = vsel %vm912, %v904, 0
        %v917 = vsel %vm912, %v905, 0
        %v920 = vsel %vm912, %v906, 0
        %v923 = vsel %vm912, %v907, 0
        %v926 = vsel %vm912, %v908, 0
        %v929 = vsel %vm912, %v909, 0
        %v932 = vsel %vm912, %v910, 0
        %v935 = vsel %vm912, %v911, 0
        %s937 = sadd.s32 %s334, 2
        %s938 = smul.u32 %s937, 6
        %s939 = smul.addr %s938, 8
        %s940 = scalar_lea.vmem [#allocation2], %s939
        %941 = vst [vmem:[%s940] sm:$0xff] %v881
        %942 = vst [vmem:[%s940 + $0x8] sm:$0xff] %v884
        %943 = vst [vmem:[%s940 + $0x10] sm:$0xff] %v854
        %944 = vst [vmem:[%s940 + $0x18] sm:$0xff] %v855
        %945 = vst [vmem:[%s940 + $0x20] sm:$0xff] %v914
        %946 = vst [vmem:[%s940 + $0x28] sm:$0xff] %v917
        %947 = vst [vmem:[%s940 + $0x30] sm:$0xff] %v887
        %948 = vst [vmem:[%s940 + $0x38] sm:$0xff] %v890
        %949 = vst [vmem:[%s940 + $0x40] sm:$0xff] %v856
        %950 = vst [vmem:[%s940 + $0x48] sm:$0xff] %v857
        %951 = vst [vmem:[%s940 + $0x50] sm:$0xff] %v920
        %952 = vst [vmem:[%s940 + $0x58] sm:$0xff] %v923
        %953 = vst [vmem:[%s940 + $0x60] sm:$0xff] %v893
        %954 = vst [vmem:[%s940 + $0x68] sm:$0xff] %v896
        %955 = vst [vmem:[%s940 + $0x70] sm:$0xff] %v858
        %956 = vst [vmem:[%s940 + $0x78] sm:$0xff] %v859
        %957 = vst [vmem:[%s940 + $0x80] sm:$0xff] %v926
        %958 = vst [vmem:[%s940 + $0x88] sm:$0xff] %v929
        %959 = vst [vmem:[%s940 + $0x90] sm:$0xff] %v899
        %960 = vst [vmem:[%s940 + $0x98] sm:$0xff] %v902
        %961 = vst [vmem:[%s940 + $0xa0] sm:$0xff] %v860
        %962 = vst [vmem:[%s940 + $0xa8] sm:$0xff] %v861
        %963 = vst [vmem:[%s940 + $0xb0] sm:$0xff] %v932
        %964 = vst [vmem:[%s940 + $0xb8] sm:$0xff] %v935
      $region53: #{intermediate_conv_forward.2} parent=47 // loop_footer
        %s333 = sadd.s32 1, %s329
      $region54: #{intermediate_conv_forward.2} parent=47 // loop_footer_branch
        %328 = sbr.rel target = $region50
      $region55: #{intermediate_conv_forward.2} parent=47 // loop_exit
        _
      %v965 = vld [vmem:[#allocation2] sm:$0xff]
      %v966 = vld [vmem:[#allocation2 + $0x8] sm:$0xff]
      %v967 = vld [vmem:[#allocation2 + $0x10] sm:$0xff]
      %v968 = vld [vmem:[#allocation2 + $0x18] sm:$0xff]
      %v969 = vld [vmem:[#allocation2 + $0x20] sm:$0xff]
      %v970 = vld [vmem:[#allocation2 + $0x28] sm:$0xff]
      %v971 = vld [vmem:[#allocation2 + $0x30] sm:$0xff]
      %v972 = vld [vmem:[#allocation2 + $0x38] sm:$0xff]
      %v973 = vld [vmem:[#allocation2 + $0x40] sm:$0xff]
      %v974 = vld [vmem:[#allocation2 + $0x48] sm:$0xff]
      %v975 = vld [vmem:[#allocation2 + $0x50] sm:$0xff]
      %v976 = vld [vmem:[#allocation2 + $0x58] sm:$0xff]
      %v977 = vld [vmem:[#allocation2 + $0x60] sm:$0xff]
      %v978 = vld [vmem:[#allocation2 + $0x68] sm:$0xff]
      %v979 = vld [vmem:[#allocation2 + $0x70] sm:$0xff]
      %v980 = vld [vmem:[#allocation2 + $0x78] sm:$0xff]
      %v981 = vld [vmem:[#allocation2 + $0x80] sm:$0xff]
      %v982 = vld [vmem:[#allocation2 + $0x88] sm:$0xff]
      %v983 = vld [vmem:[#allocation2 + $0x90] sm:$0xff]
      %v984 = vld [vmem:[#allocation2 + $0x98] sm:$0xff]
      %v985 = vld [vmem:[#allocation2 + $0xa0] sm:$0xff]
      %v986 = vld [vmem:[#allocation2 + $0xa8] sm:$0xff]
      %v987 = vld [vmem:[#allocation2 + $0xb0] sm:$0xff]
      %v988 = vld [vmem:[#allocation2 + $0xb8] sm:$0xff]
      %v989 = vld [vmem:[#allocation2 + $0xc0] sm:$0xff]
      %v990 = vld [vmem:[#allocation2 + $0xc8] sm:$0xff]
      %v991 = vld [vmem:[#allocation2 + $0xd0] sm:$0xff]
      %v992 = vld [vmem:[#allocation2 + $0xd8] sm:$0xff]
      %v993 = vld [vmem:[#allocation2 + $0xe0] sm:$0xff]
      %v994 = vld [vmem:[#allocation2 + $0xe8] sm:$0xff]
      %v995 = vld [vmem:[#allocation2 + $0xf0] sm:$0xff]
      %v996 = vld [vmem:[#allocation2 + $0xf8] sm:$0xff]
      %v997 = vld [vmem:[#allocation2 + $0x100] sm:$0xff]
      %v998 = vld [vmem:[#allocation2 + $0x108] sm:$0xff]
      %v999 = vld [vmem:[#allocation2 + $0x110] sm:$0xff]
      %v1000 = vld [vmem:[#allocation2 + $0x118] sm:$0xff]
      %v1001 = vld [vmem:[#allocation2 + $0x120] sm:$0xff]
      %v1002 = vld [vmem:[#allocation2 + $0x128] sm:$0xff]
      %v1003 = vld [vmem:[#allocation2 + $0x130] sm:$0xff]
      %v1004 = vld [vmem:[#allocation2 + $0x138] sm:$0xff]
      %v1005 = vld [vmem:[#allocation2 + $0x140] sm:$0xff]
      %v1006 = vld [vmem:[#allocation2 + $0x148] sm:$0xff]
      %v1007 = vld [vmem:[#allocation2 + $0x150] sm:$0xff]
      %v1008 = vld [vmem:[#allocation2 + $0x158] sm:$0xff]
      %v1009 = vld [vmem:[#allocation2 + $0x160] sm:$0xff]
      %v1010 = vld [vmem:[#allocation2 + $0x168] sm:$0xff]
      %v1011 = vld [vmem:[#allocation2 + $0x170] sm:$0xff]
      %v1012 = vld [vmem:[#allocation2 + $0x178] sm:$0xff]
      %v1013 = vld [vmem:[#allocation2 + $0x180] sm:$0xff]
      %v1014 = vld [vmem:[#allocation2 + $0x188] sm:$0xff]
      %v1015 = vld [vmem:[#allocation2 + $0x190] sm:$0xff]
      %v1016 = vld [vmem:[#allocation2 + $0x198] sm:$0xff]
      %v1017 = vld [vmem:[#allocation2 + $0x1a0] sm:$0xff]
      %v1018 = vld [vmem:[#allocation2 + $0x1a8] sm:$0xff]
      %v1019 = vld [vmem:[#allocation2 + $0x1b0] sm:$0xff]
      %v1020 = vld [vmem:[#allocation2 + $0x1b8] sm:$0xff]
      %v1021 = vld [vmem:[#allocation2 + $0x1c0] sm:$0xff]
      %v1022 = vld [vmem:[#allocation2 + $0x1c8] sm:$0xff]
      %v1023 = vld [vmem:[#allocation2 + $0x1d0] sm:$0xff]
      %v1024 = vld [vmem:[#allocation2 + $0x1d8] sm:$0xff]
      %v1025 = vld [vmem:[#allocation2 + $0x1e0] sm:$0xff]
      %v1026 = vld [vmem:[#allocation2 + $0x1e8] sm:$0xff]
      %v1027 = vld [vmem:[#allocation2 + $0x1f0] sm:$0xff]
      %v1028 = vld [vmem:[#allocation2 + $0x1f8] sm:$0xff]
      %v1029 = vld [vmem:[#allocation2 + $0x200] sm:$0xff]
      %v1030 = vld [vmem:[#allocation2 + $0x208] sm:$0xff]
      %v1031 = vld [vmem:[#allocation2 + $0x210] sm:$0xff]
      %v1032 = vld [vmem:[#allocation2 + $0x218] sm:$0xff]
      %v1033 = vld [vmem:[#allocation2 + $0x220] sm:$0xff]
      %v1034 = vld [vmem:[#allocation2 + $0x228] sm:$0xff]
      %v1035 = vld [vmem:[#allocation2 + $0x230] sm:$0xff]
      %v1036 = vld [vmem:[#allocation2 + $0x238] sm:$0xff]
      %v1037 = vld [vmem:[#allocation2 + $0x240] sm:$0xff]
      %v1038 = vld [vmem:[#allocation2 + $0x248] sm:$0xff]
      %v1039 = vld [vmem:[#allocation2 + $0x250] sm:$0xff]
      %v1040 = vld [vmem:[#allocation2 + $0x258] sm:$0xff]
      %v1041 = vld [vmem:[#allocation2 + $0x260] sm:$0xff]
      %v1042 = vld [vmem:[#allocation2 + $0x268] sm:$0xff]
      %v1043 = vld [vmem:[#allocation2 + $0x270] sm:$0xff]
      %v1044 = vld [vmem:[#allocation2 + $0x278] sm:$0xff]
      %v1045 = vld [vmem:[#allocation2 + $0x280] sm:$0xff]
      %v1046 = vld [vmem:[#allocation2 + $0x288] sm:$0xff]
      %v1047 = vld [vmem:[#allocation2 + $0x290] sm:$0xff]
      %v1048 = vld [vmem:[#allocation2 + $0x298] sm:$0xff]
      %v1049 = vld [vmem:[#allocation2 + $0x2a0] sm:$0xff]
      %v1050 = vld [vmem:[#allocation2 + $0x2a8] sm:$0xff]
      %v1051 = vld [vmem:[#allocation2 + $0x2b0] sm:$0xff]
      %v1052 = vld [vmem:[#allocation2 + $0x2b8] sm:$0xff]
      %v1053 = vld [vmem:[#allocation2 + $0x2c0] sm:$0xff]
      %v1054 = vld [vmem:[#allocation2 + $0x2c8] sm:$0xff]
      %v1055 = vld [vmem:[#allocation2 + $0x2d0] sm:$0xff]
      %v1056 = vld [vmem:[#allocation2 + $0x2d8] sm:$0xff]
      %v1057 = vld [vmem:[#allocation2 + $0x2e0] sm:$0xff]
      %v1058 = vld [vmem:[#allocation2 + $0x2e8] sm:$0xff]
      %v1059 = vld [vmem:[#allocation2 + $0x2f0] sm:$0xff]
      %v1060 = vld [vmem:[#allocation2 + $0x2f8] sm:$0xff]
      %v1061 = vld [vmem:[%s5] sm:$0xf]
      %v1062 = vld [vmem:[%s5 + $0x4] sm:$0xf]
      %v1063 = vld [vmem:[%s5 + $0x8] sm:$0xf]
      %v1064 = vld [vmem:[%s5 + $0xc] sm:$0xf]
      %v1065 = vld [vmem:[%s5 + $0x10] sm:$0xf]
      %v1066 = vld [vmem:[%s5 + $0x14] sm:$0xf]
      %v1067 = vld [vmem:[%s5 + $0x18] sm:$0xf]
      %v1068 = vld [vmem:[%s5 + $0x1c] sm:$0xf]
      %v1069 = vld [vmem:[%s5 + $0x20] sm:$0xf]
      %v1070 = vld [vmem:[%s5 + $0x24] sm:$0xf]
      %v1071 = vld [vmem:[%s5 + $0x28] sm:$0xf]
      %v1072 = vld [vmem:[%s5 + $0x2c] sm:$0xf]
      %v1073 = vld [vmem:[%s5 + $0x30] sm:$0xf]
      %v1074 = vld [vmem:[%s5 + $0x34] sm:$0xf]
      %v1075 = vld [vmem:[%s5 + $0x38] sm:$0xf]
      %v1076 = vld [vmem:[%s5 + $0x3c] sm:$0xf]
      %v1077 = vld [vmem:[%s5 + $0x40] sm:$0xf]
      %v1078 = vld [vmem:[%s5 + $0x44] sm:$0xf]
      %v1079 = vld [vmem:[%s5 + $0x48] sm:$0xf]
      %v1080 = vld [vmem:[%s5 + $0x4c] sm:$0xf]
      %v1081 = vld [vmem:[%s5 + $0x50] sm:$0xf]
      %v1082 = vld [vmem:[%s5 + $0x54] sm:$0xf]
      %v1083 = vld [vmem:[%s5 + $0x58] sm:$0xf]
      %v1084 = vld [vmem:[%s5 + $0x5c] sm:$0xf]
      %v1085 = vld [vmem:[%s5 + $0x60] sm:$0xf]
      %v1086 = vld [vmem:[%s5 + $0x64] sm:$0xf]
      %v1087 = vld [vmem:[%s5 + $0x68] sm:$0xf]
      %v1088 = vld [vmem:[%s5 + $0x6c] sm:$0xf]
      %v1089 = vld [vmem:[%s5 + $0x70] sm:$0xf]
      %v1090 = vld [vmem:[%s5 + $0x74] sm:$0xf]
      %v1091 = vld [vmem:[%s5 + $0x78] sm:$0xf]
      %v1092 = vld [vmem:[%s5 + $0x7c] sm:$0xf]
      %v1093 = vld [vmem:[%s5 + $0x80] sm:$0xf]
      %v1094 = vld [vmem:[%s5 + $0x84] sm:$0xf]
      %v1095 = vld [vmem:[%s5 + $0x88] sm:$0xf]
      %v1096 = vld [vmem:[%s5 + $0x8c] sm:$0xf]
      %v1097 = vld [vmem:[%s5 + $0x90] sm:$0xf]
      %v1098 = vld [vmem:[%s5 + $0x94] sm:$0xf]
      %v1099 = vld [vmem:[%s5 + $0x98] sm:$0xf]
      %v1100 = vld [vmem:[%s5 + $0x9c] sm:$0xf]
      %v1101 = vld [vmem:[%s5 + $0xa0] sm:$0xf]
      %v1102 = vld [vmem:[%s5 + $0xa4] sm:$0xf]
      %v1103 = vld [vmem:[%s5 + $0xa8] sm:$0xf]
      %v1104 = vld [vmem:[%s5 + $0xac] sm:$0xf]
      %v1105 = vld [vmem:[%s5 + $0xb0] sm:$0xf]
      %v1106 = vld [vmem:[%s5 + $0xb4] sm:$0xf]
      %v1107 = vld [vmem:[%s5 + $0xb8] sm:$0xf]
      %v1108 = vld [vmem:[%s5 + $0xbc] sm:$0xf]
      %v1109 = vld [vmem:[%s5 + $0xc0] sm:$0xf]
      %v1110 = vld [vmem:[%s5 + $0xc4] sm:$0xf]
      %v1111 = vld [vmem:[%s5 + $0xc8] sm:$0xf]
      %v1112 = vld [vmem:[%s5 + $0xcc] sm:$0xf]
      %v1113 = vld [vmem:[%s5 + $0xd0] sm:$0xf]
      %v1114 = vld [vmem:[%s5 + $0xd4] sm:$0xf]
      %v1115 = vld [vmem:[%s5 + $0xd8] sm:$0xf]
      %v1116 = vld [vmem:[%s5 + $0xdc] sm:$0xf]
      %v1117 = vld [vmem:[%s5 + $0xe0] sm:$0xf]
      %v1118 = vld [vmem:[%s5 + $0xe4] sm:$0xf]
      %v1119 = vld [vmem:[%s5 + $0xe8] sm:$0xf]
      %v1120 = vld [vmem:[%s5 + $0xec] sm:$0xf]
      %v1121 = vld [vmem:[%s5 + $0xf0] sm:$0xf]
      %v1122 = vld [vmem:[%s5 + $0xf4] sm:$0xf]
      %v1123 = vld [vmem:[%s5 + $0xf8] sm:$0xf]
      %v1124 = vld [vmem:[%s5 + $0xfc] sm:$0xf]
      %v1125 = vld [vmem:[%s5 + $0x100] sm:$0xf]
      %v1126 = vld [vmem:[%s5 + $0x104] sm:$0xf]
      %v1127 = vld [vmem:[%s5 + $0x108] sm:$0xf]
      %v1128 = vld [vmem:[%s5 + $0x10c] sm:$0xf]
      %v1129 = vld [vmem:[%s5 + $0x110] sm:$0xf]
      %v1130 = vld [vmem:[%s5 + $0x114] sm:$0xf]
      %v1131 = vld [vmem:[%s5 + $0x118] sm:$0xf]
      %v1132 = vld [vmem:[%s5 + $0x11c] sm:$0xf]
      %v1133 = vld [vmem:[%s5 + $0x120] sm:$0xf]
      %v1134 = vld [vmem:[%s5 + $0x124] sm:$0xf]
      %v1135 = vld [vmem:[%s5 + $0x128] sm:$0xf]
      %v1136 = vld [vmem:[%s5 + $0x12c] sm:$0xf]
      %v1137 = vld [vmem:[%s5 + $0x130] sm:$0xf]
      %v1138 = vld [vmem:[%s5 + $0x134] sm:$0xf]
      %v1139 = vld [vmem:[%s5 + $0x138] sm:$0xf]
      %v1140 = vld [vmem:[%s5 + $0x13c] sm:$0xf]
      %v1141 = vld [vmem:[%s5 + $0x140] sm:$0xf]
      %v1142 = vld [vmem:[%s5 + $0x144] sm:$0xf]
      %v1143 = vld [vmem:[%s5 + $0x148] sm:$0xf]
      %v1144 = vld [vmem:[%s5 + $0x14c] sm:$0xf]
      %v1145 = vld [vmem:[%s5 + $0x150] sm:$0xf]
      %v1146 = vld [vmem:[%s5 + $0x154] sm:$0xf]
      %v1147 = vld [vmem:[%s5 + $0x158] sm:$0xf]
      %v1148 = vld [vmem:[%s5 + $0x15c] sm:$0xf]
      %v1149 = vld [vmem:[%s5 + $0x160] sm:$0xf]
      %v1150 = vld [vmem:[%s5 + $0x164] sm:$0xf]
      %v1151 = vld [vmem:[%s5 + $0x168] sm:$0xf]
      %v1152 = vld [vmem:[%s5 + $0x16c] sm:$0xf]
      %v1153 = vld [vmem:[%s5 + $0x170] sm:$0xf]
      %v1154 = vld [vmem:[%s5 + $0x174] sm:$0xf]
      %v1155 = vld [vmem:[%s5 + $0x178] sm:$0xf]
      %v1156 = vld [vmem:[%s5 + $0x17c] sm:$0xf]
      %v1157 = vld [vmem:[%s6] sm:$0x1]
      %v1159 = vlaneseq
      %v1160 = vshrl.u32 %v1159, 7
      %v1161 = vsub.s32 0, %v1160
      %v1162 = vrot.slane %v1157, %v1161
      %v1260 = vunpack.c.l.b16 %v1061
      %v1261 = vunpack.c.l.b16 %v1062
      %v1262 = vunpack.c.l.b16 %v1063
      %v1263 = vunpack.c.l.b16 %v1064
      %v1264 = vunpack.c.l.b16 %v1065
      %v1265 = vunpack.c.l.b16 %v1066
      %v1266 = vunpack.c.l.b16 %v1067
      %v1267 = vunpack.c.l.b16 %v1068
      %v1268 = vunpack.c.l.b16 %v1069
      %v1269 = vunpack.c.l.b16 %v1070
      %v1270 = vunpack.c.l.b16 %v1071
      %v1271 = vunpack.c.l.b16 %v1072
      %v1272 = vunpack.c.l.b16 %v1073
      %v1273 = vunpack.c.l.b16 %v1074
      %v1274 = vunpack.c.l.b16 %v1075
      %v1275 = vunpack.c.l.b16 %v1076
      %v1276 = vunpack.c.l.b16 %v1077
      %v1277 = vunpack.c.l.b16 %v1078
      %v1278 = vunpack.c.l.b16 %v1079
      %v1279 = vunpack.c.l.b16 %v1080
      %v1280 = vunpack.c.l.b16 %v1081
      %v1281 = vunpack.c.l.b16 %v1082
      %v1282 = vunpack.c.l.b16 %v1083
      %v1283 = vunpack.c.l.b16 %v1084
      %v1284 = vunpack.c.l.b16 %v1085
      %v1285 = vunpack.c.l.b16 %v1086
      %v1286 = vunpack.c.l.b16 %v1087
      %v1287 = vunpack.c.l.b16 %v1088
      %v1288 = vunpack.c.l.b16 %v1089
      %v1289 = vunpack.c.l.b16 %v1090
      %v1290 = vunpack.c.l.b16 %v1091
      %v1291 = vunpack.c.l.b16 %v1092
      %v1292 = vunpack.c.l.b16 %v1093
      %v1293 = vunpack.c.l.b16 %v1094
      %v1294 = vunpack.c.l.b16 %v1095
      %v1295 = vunpack.c.l.b16 %v1096
      %v1296 = vunpack.c.l.b16 %v1097
      %v1297 = vunpack.c.l.b16 %v1098
      %v1298 = vunpack.c.l.b16 %v1099
      %v1299 = vunpack.c.l.b16 %v1100
      %v1300 = vunpack.c.l.b16 %v1101
      %v1301 = vunpack.c.l.b16 %v1102
      %v1302 = vunpack.c.l.b16 %v1103
      %v1303 = vunpack.c.l.b16 %v1104
      %v1304 = vunpack.c.l.b16 %v1105
      %v1305 = vunpack.c.l.b16 %v1106
      %v1306 = vunpack.c.l.b16 %v1107
      %v1307 = vunpack.c.l.b16 %v1108
      %v1308 = vunpack.c.l.b16 %v1109
      %v1309 = vunpack.c.l.b16 %v1110
      %v1310 = vunpack.c.l.b16 %v1111
      %v1311 = vunpack.c.l.b16 %v1112
      %v1312 = vunpack.c.l.b16 %v1113
      %v1313 = vunpack.c.l.b16 %v1114
      %v1314 = vunpack.c.l.b16 %v1115
      %v1315 = vunpack.c.l.b16 %v1116
      %v1316 = vunpack.c.l.b16 %v1117
      %v1317 = vunpack.c.l.b16 %v1118
      %v1318 = vunpack.c.l.b16 %v1119
      %v1319 = vunpack.c.l.b16 %v1120
      %v1320 = vunpack.c.l.b16 %v1121
      %v1321 = vunpack.c.l.b16 %v1122
      %v1322 = vunpack.c.l.b16 %v1123
      %v1323 = vunpack.c.l.b16 %v1124
      %v1324 = vunpack.c.l.b16 %v1125
      %v1325 = vunpack.c.l.b16 %v1126
      %v1326 = vunpack.c.l.b16 %v1127
      %v1327 = vunpack.c.l.b16 %v1128
      %v1328 = vunpack.c.l.b16 %v1129
      %v1329 = vunpack.c.l.b16 %v1130
      %v1330 = vunpack.c.l.b16 %v1131
      %v1331 = vunpack.c.l.b16 %v1132
      %v1332 = vunpack.c.l.b16 %v1133
      %v1333 = vunpack.c.l.b16 %v1134
      %v1334 = vunpack.c.l.b16 %v1135
      %v1335 = vunpack.c.l.b16 %v1136
      %v1336 = vunpack.c.l.b16 %v1137
      %v1337 = vunpack.c.l.b16 %v1138
      %v1338 = vunpack.c.l.b16 %v1139
      %v1339 = vunpack.c.l.b16 %v1140
      %v1340 = vunpack.c.l.b16 %v1141
      %v1341 = vunpack.c.l.b16 %v1142
      %v1342 = vunpack.c.l.b16 %v1143
      %v1343 = vunpack.c.l.b16 %v1144
      %v1344 = vunpack.c.l.b16 %v1145
      %v1345 = vunpack.c.l.b16 %v1146
      %v1346 = vunpack.c.l.b16 %v1147
      %v1347 = vunpack.c.l.b16 %v1148
      %v1348 = vunpack.c.l.b16 %v1149
      %v1349 = vunpack.c.l.b16 %v1150
      %v1350 = vunpack.c.l.b16 %v1151
      %v1351 = vunpack.c.l.b16 %v1152
      %v1352 = vunpack.c.l.b16 %v1153
      %v1353 = vunpack.c.l.b16 %v1154
      %v1354 = vunpack.c.l.b16 %v1155
      %v1355 = vunpack.c.l.b16 %v1156
      %v1356 = vpack.c.b16 %v1261, %v1260
      %v1357 = vpack.c.b16 %v1263, %v1262
      %v1358 = vpack.c.b16 %v1265, %v1264
      %v1359 = vpack.c.b16 %v1267, %v1266
      %v1360 = vpack.c.b16 %v1269, %v1268
      %v1361 = vpack.c.b16 %v1271, %v1270
      %v1362 = vpack.c.b16 %v1273, %v1272
      %v1363 = vpack.c.b16 %v1275, %v1274
      %v1364 = vpack.c.b16 %v1277, %v1276
      %v1365 = vpack.c.b16 %v1279, %v1278
      %v1366 = vpack.c.b16 %v1281, %v1280
      %v1367 = vpack.c.b16 %v1283, %v1282
      %v1368 = vpack.c.b16 %v1285, %v1284
      %v1369 = vpack.c.b16 %v1287, %v1286
      %v1370 = vpack.c.b16 %v1289, %v1288
      %v1371 = vpack.c.b16 %v1291, %v1290
      %v1372 = vpack.c.b16 %v1293, %v1292
      %v1373 = vpack.c.b16 %v1295, %v1294
      %v1374 = vpack.c.b16 %v1297, %v1296
      %v1375 = vpack.c.b16 %v1299, %v1298
      %v1376 = vpack.c.b16 %v1301, %v1300
      %v1377 = vpack.c.b16 %v1303, %v1302
      %v1378 = vpack.c.b16 %v1305, %v1304
      %v1379 = vpack.c.b16 %v1307, %v1306
      %v1380 = vpack.c.b16 %v1309, %v1308
      %v1381 = vpack.c.b16 %v1311, %v1310
      %v1382 = vpack.c.b16 %v1313, %v1312
      %v1383 = vpack.c.b16 %v1315, %v1314
      %v1384 = vpack.c.b16 %v1317, %v1316
      %v1385 = vpack.c.b16 %v1319, %v1318
      %v1386 = vpack.c.b16 %v1321, %v1320
      %v1387 = vpack.c.b16 %v1323, %v1322
      %v1388 = vpack.c.b16 %v1325, %v1324
      %v1389 = vpack.c.b16 %v1327, %v1326
      %v1390 = vpack.c.b16 %v1329, %v1328
      %v1391 = vpack.c.b16 %v1331, %v1330
      %v1392 = vpack.c.b16 %v1333, %v1332
      %v1393 = vpack.c.b16 %v1335, %v1334
      %v1394 = vpack.c.b16 %v1337, %v1336
      %v1395 = vpack.c.b16 %v1339, %v1338
      %v1396 = vpack.c.b16 %v1341, %v1340
      %v1397 = vpack.c.b16 %v1343, %v1342
      %v1398 = vpack.c.b16 %v1345, %v1344
      %v1399 = vpack.c.b16 %v1347, %v1346
      %v1400 = vpack.c.b16 %v1349, %v1348
      %v1401 = vpack.c.b16 %v1351, %v1350
      %v1402 = vpack.c.b16 %v1353, %v1352
      %v1403 = vpack.c.b16 %v1355, %v1354
      %1452 = vmatprep.subr.bf16.mxu0 0
      %1453 = vmatpush1.bf16.msra.mxu0 %v1356
      %1454 = vmatprep.subr.bf16.mxu0 0
      %1455 = vmatpush1.bf16.msra.mxu0 %v1357
      %1456 = vmatprep.subr.bf16.mxu0 0
      %1457 = vmatpush1.bf16.msra.mxu0 %v1358
      %1458 = vmatprep.subr.bf16.mxu0 0
      %1459 = vmatpush1.bf16.msra.mxu0 %v1359
      %1460 = vmatprep.subr.bf16.mxu0 0
      %1461 = vmatpush1.bf16.msra.mxu0 %v1360
      %1462 = vmatprep.subr.bf16.mxu0 0
      %1463 = vmatpush1.bf16.msra.mxu0 %v1361
      %1464 = vmatprep.subr.bf16.mxu0 0
      %1465 = vmatpush1.bf16.msra.mxu0 %v1362
      %1466 = vmatprep.subr.bf16.mxu0 0
      %1467 = vmatpush1.bf16.msra.mxu0 %v1363
      %1468 = vmatprep.subr.bf16.mxu0 0
      %1469 = vmatpush1.bf16.msra.mxu0 %v1364
      %1470 = vmatprep.subr.bf16.mxu0 0
      %1471 = vmatpush1.bf16.msra.mxu0 %v1365
      %1472 = vmatprep.subr.bf16.mxu0 0
      %1473 = vmatpush1.bf16.msra.mxu0 %v1366
      %1474 = vmatprep.subr.bf16.mxu0 0
      %1475 = vmatpush1.bf16.msra.mxu0 %v1367
      %1476 = vmatprep.subr.bf16.mxu0 0
      %1477 = vmatpush1.bf16.msra.mxu0 %v1368
      %1478 = vmatprep.subr.bf16.mxu0 0
      %1479 = vmatpush1.bf16.msra.mxu0 %v1369
      %1480 = vmatprep.subr.bf16.mxu0 0
      %1481 = vmatpush1.bf16.msra.mxu0 %v1370
      %1482 = vmatprep.subr.bf16.mxu0 0
      %1483 = vmatpush1.bf16.msra.mxu0 %v1371
      %1484 = vmatprep.mubr.bf16.mxu0 %v966
      %1485 = vmatmul.mubr.bf16.gmra.mrb[0].mxu0 %v965
      %v1486 = vpop.f32.mrb[0].mxu0
      %v1487 = vadd.f32 %v1162, %v1486
      %v1488 = vpop.f32.mrb[0].mxu0
      %v1489 = vpop.f32.mrb[0].mxu0
      %v1490 = vadd.f32 %v1162, %v1489
      %v1491 = vpop.f32.mrb[0].mxu0
      %1492 = vmatprep.mubr.bf16.mxu0 %v972
      %1493 = vmatmul.mubr.bf16.gmra.mrb[0].mxu0 %v971
      %v1494 = vpop.f32.mrb[0].mxu0
      %v1495 = vadd.f32 %v1162, %v1494
      %v1496 = vpop.f32.mrb[0].mxu0
      %v1497 = vpop.f32.mrb[0].mxu0
      %v1498 = vadd.f32 %v1162, %v1497
      %v1499 = vpop.f32.mrb[0].mxu0
      %1500 = vmatprep.mubr.bf16.mxu0 %v978
      %1501 = vmatmul.mubr.bf16.gmra.mrb[0].mxu0 %v977
      %v1502 = vpop.f32.mrb[0].mxu0
      %v1503 = vadd.f32 %v1162, %v1502
      %v1504 = vpop.f32.mrb[0].mxu0
      %v1505 = vpop.f32.mrb[0].mxu0
      %v1506 = vadd.f32 %v1162, %v1505
      %v1507 = vpop.f32.mrb[0].mxu0
      %1508 = vmatprep.mubr.bf16.mxu0 %v984
      %1509 = vmatmul.mubr.bf16.gmra.mrb[0].mxu0 %v983
      %v1510 = vpop.f32.mrb[0].mxu0
      %v1511 = vadd.f32 %v1162, %v1510
      %v1512 = vpop.f32.mrb[0].mxu0
      %v1513 = vpop.f32.mrb[0].mxu0
      %v1514 = vadd.f32 %v1162, %v1513
      %v1515 = vpop.f32.mrb[0].mxu0
      %1516 = vmatprep.mubr.bf16.mxu0 %v990
      %1517 = vmatmul.mubr.bf16.gmra.mrb[0].mxu0 %v989
      %v1518 = vpop.f32.mrb[0].mxu0
      %v1519 = vadd.f32 %v1162, %v1518
      %v1520 = vpop.f32.mrb[0].mxu0
      %v1521 = vpop.f32.mrb[0].mxu0
      %v1522 = vadd.f32 %v1162, %v1521
      %v1523 = vpop.f32.mrb[0].mxu0
      %1524 = vmatprep.mubr.bf16.mxu0 %v996
      %1525 = vmatmul.mubr.bf16.gmra.mrb[0].mxu0 %v995
      %v1526 = vpop.f32.mrb[0].mxu0
      %v1527 = vadd.f32 %v1162, %v1526
      %v1528 = vpop.f32.mrb[0].mxu0
      %v1529 = vpop.f32.mrb[0].mxu0
      %v1530 = vadd.f32 %v1162, %v1529
      %v1531 = vpop.f32.mrb[0].mxu0
      %1532 = vmatprep.mubr.bf16.mxu0 %v1002
      %1533 = vmatmul.mubr.bf16.gmra.mrb[0].mxu0 %v1001
      %v1534 = vpop.f32.mrb[0].mxu0
      %v1535 = vadd.f32 %v1162, %v1534
      %v1536 = vpop.f32.mrb[0].mxu0
      %v1537 = vpop.f32.mrb[0].mxu0
      %v1538 = vadd.f32 %v1162, %v1537
      %v1539 = vpop.f32.mrb[0].mxu0
      %1540 = vmatprep.mubr.bf16.mxu0 %v1008
      %1541 = vmatmul.mubr.bf16.gmra.mrb[0].mxu0 %v1007
      %v1542 = vpop.f32.mrb[0].mxu0
      %v1543 = vadd.f32 %v1162, %v1542
      %v1544 = vpop.f32.mrb[0].mxu0
      %v1545 = vpop.f32.mrb[0].mxu0
      %v1546 = vadd.f32 %v1162, %v1545
      %v1547 = vpop.f32.mrb[0].mxu0
      %1548 = vmatprep.mubr.bf16.mxu0 %v1014
      %1549 = vmatmul.mubr.bf16.gmra.mrb[0].mxu0 %v1013
      %v1550 = vpop.f32.mrb[0].mxu0
      %v1551 = vadd.f32 %v1162, %v1550
      %v1552 = vpop.f32.mrb[0].mxu0
      %v1553 = vpop.f32.mrb[0].mxu0
      %v1554 = vadd.f32 %v1162, %v1553
      %v1555 = vpop.f32.mrb[0].mxu0
      %1556 = vmatprep.mubr.bf16.mxu0 %v1020
      %1557 = vmatmul.mubr.bf16.gmra.mrb[0].mxu0 %v1019
      %v1558 = vpop.f32.mrb[0].mxu0
      %v1559 = vadd.f32 %v1162, %v1558
      %v1560 = vpop.f32.mrb[0].mxu0
      %v1561 = vpop.f32.mrb[0].mxu0
      %v1562 = vadd.f32 %v1162, %v1561
      %v1563 = vpop.f32.mrb[0].mxu0
      %1564 = vmatprep.mubr.bf16.mxu0 %v1026
      %1565 = vmatmul.mubr.bf16.gmra.mrb[0].mxu0 %v1025
      %v1566 = vpop.f32.mrb[0].mxu0
      %v1567 = vadd.f32 %v1162, %v1566
      %v1568 = vpop.f32.mrb[0].mxu0
      %v1569 = vpop.f32.mrb[0].mxu0
      %v1570 = vadd.f32 %v1162, %v1569
      %v1571 = vpop.f32.mrb[0].mxu0
      %1572 = vmatprep.mubr.bf16.mxu0 %v1032
      %1573 = vmatmul.mubr.bf16.gmra.mrb[0].mxu0 %v1031
      %v1574 = vpop.f32.mrb[0].mxu0
      %v1575 = vadd.f32 %v1162, %v1574
      %v1576 = vpop.f32.mrb[0].mxu0
      %v1577 = vpop.f32.mrb[0].mxu0
      %v1578 = vadd.f32 %v1162, %v1577
      %v1579 = vpop.f32.mrb[0].mxu0
      %1580 = vmatprep.mubr.bf16.mxu0 %v1038
      %1581 = vmatmul.mubr.bf16.gmra.mrb[0].mxu0 %v1037
      %v1582 = vpop.f32.mrb[0].mxu0
      %v1583 = vadd.f32 %v1162, %v1582
      %v1584 = vpop.f32.mrb[0].mxu0
      %v1585 = vpop.f32.mrb[0].mxu0
      %v1586 = vadd.f32 %v1162, %v1585
      %v1587 = vpop.f32.mrb[0].mxu0
      %1588 = vmatprep.mubr.bf16.mxu0 %v1044
      %1589 = vmatmul.mubr.bf16.gmra.mrb[0].mxu0 %v1043
      %v1590 = vpop.f32.mrb[0].mxu0
      %v1591 = vadd.f32 %v1162, %v1590
      %v1592 = vpop.f32.mrb[0].mxu0
      %v1593 = vpop.f32.mrb[0].mxu0
      %v1594 = vadd.f32 %v1162, %v1593
      %v1595 = vpop.f32.mrb[0].mxu0
      %1596 = vmatprep.mubr.bf16.mxu0 %v1050
      %1597 = vmatmul.mubr.bf16.gmra.mrb[0].mxu0 %v1049
      %v1598 = vpop.f32.mrb[0].mxu0
      %v1599 = vadd.f32 %v1162, %v1598
      %v1600 = vpop.f32.mrb[0].mxu0
      %v1601 = vpop.f32.mrb[0].mxu0
      %v1602 = vadd.f32 %v1162, %v1601
      %v1603 = vpop.f32.mrb[0].mxu0
      %1604 = vmatprep.mubr.bf16.mxu0 %v1056
      %1605 = vmatmul.mubr.bf16.gmra.mrb[0].mxu0 %v1055
      %v1606 = vpop.f32.mrb[0].mxu0
      %v1607 = vadd.f32 %v1162, %v1606
      %v1608 = vpop.f32.mrb[0].mxu0
      %v1609 = vpop.f32.mrb[0].mxu0
      %v1610 = vadd.f32 %v1162, %v1609
      %v1611 = vpop.f32.mrb[0].mxu0
      %1612 = vdwg.mxu0
      %1613 = vmatprep.subr.bf16.mxu0 0
      %1614 = vmatpush1.bf16.msra.mxu0 %v1372
      %1615 = vmatprep.subr.bf16.mxu0 0
      %1616 = vmatpush1.bf16.msra.mxu0 %v1373
      %1617 = vmatprep.subr.bf16.mxu0 0
      %1618 = vmatpush1.bf16.msra.mxu0 %v1374
      %1619 = vmatprep.subr.bf16.mxu0 0
      %1620 = vmatpush1.bf16.msra.mxu0 %v1375
      %1621 = vmatprep.subr.bf16.mxu0 0
      %1622 = vmatpush1.bf16.msra.mxu0 %v1376
      %1623 = vmatprep.subr.bf16.mxu0 0
      %1624 = vmatpush1.bf16.msra.mxu0 %v1377
      %1625 = vmatprep.subr.bf16.mxu0 0
      %1626 = vmatpush1.bf16.msra.mxu0 %v1378
      %1627 = vmatprep.subr.bf16.mxu0 0
      %1628 = vmatpush1.bf16.msra.mxu0 %v1379
      %1629 = vmatprep.subr.bf16.mxu0 0
      %1630 = vmatpush1.bf16.msra.mxu0 %v1380
      %1631 = vmatprep.subr.bf16.mxu0 0
      %1632 = vmatpush1.bf16.msra.mxu0 %v1381
      %1633 = vmatprep.subr.bf16.mxu0 0
      %1634 = vmatpush1.bf16.msra.mxu0 %v1382
      %1635 = vmatprep.subr.bf16.mxu0 0
      %1636 = vmatpush1.bf16.msra.mxu0 %v1383
      %1637 = vmatprep.subr.bf16.mxu0 0
      %1638 = vmatpush1.bf16.msra.mxu0 %v1384
      %1639 = vmatprep.subr.bf16.mxu0 0
      %1640 = vmatpush1.bf16.msra.mxu0 %v1385
      %1641 = vmatprep.subr.bf16.mxu0 0
      %1642 = vmatpush1.bf16.msra.mxu0 %v1386
      %1643 = vmatprep.subr.bf16.mxu0 0
      %1644 = vmatpush1.bf16.msra.mxu0 %v1387
      %1645 = vmatprep.mubr.bf16.mxu0 %v968
      %1646 = vmatmul.mubr.bf16.gmra.mrb[0].mxu0 %v967
      %v1647 = vpop.f32.mrb[0].mxu0
      %v1648 = vadd.f32 %v1487, %v1647
      %v1649 = vpop.f32.mrb[0].mxu0
      %v1650 = vpop.f32.mrb[0].mxu0
      %v1651 = vadd.f32 %v1490, %v1650
      %v1652 = vpop.f32.mrb[0].mxu0
      %1653 = vmatprep.mubr.bf16.mxu0 %v974
      %1654 = vmatmul.mubr.bf16.gmra.mrb[0].mxu0 %v973
      %v1655 = vpop.f32.mrb[0].mxu0
      %v1656 = vadd.f32 %v1495, %v1655
      %v1657 = vpop.f32.mrb[0].mxu0
      %v1658 = vpop.f32.mrb[0].mxu0
      %v1659 = vadd.f32 %v1498, %v1658
      %v1660 = vpop.f32.mrb[0].mxu0
      %1661 = vmatprep.mubr.bf16.mxu0 %v980
      %1662 = vmatmul.mubr.bf16.gmra.mrb[0].mxu0 %v979
      %v1663 = vpop.f32.mrb[0].mxu0
      %v1664 = vadd.f32 %v1503, %v1663
      %v1665 = vpop.f32.mrb[0].mxu0
      %v1666 = vpop.f32.mrb[0].mxu0
      %v1667 = vadd.f32 %v1506, %v1666
      %v1668 = vpop.f32.mrb[0].mxu0
      %1669 = vmatprep.mubr.bf16.mxu0 %v986
      %1670 = vmatmul.mubr.bf16.gmra.mrb[0].mxu0 %v985
      %v1671 = vpop.f32.mrb[0].mxu0
      %v1672 = vadd.f32 %v1511, %v1671
      %v1673 = vpop.f32.mrb[0].mxu0
      %v1674 = vpop.f32.mrb[0].mxu0
      %v1675 = vadd.f32 %v1514, %v1674
      %v1676 = vpop.f32.mrb[0].mxu0
      %1677 = vmatprep.mubr.bf16.mxu0 %v992
      %1678 = vmatmul.mubr.bf16.gmra.mrb[0].mxu0 %v991
      %v1679 = vpop.f32.mrb[0].mxu0
      %v1680 = vadd.f32 %v1519, %v1679
      %v1681 = vpop.f32.mrb[0].mxu0
      %v1682 = vpop.f32.mrb[0].mxu0
      %v1683 = vadd.f32 %v1522, %v1682
      %v1684 = vpop.f32.mrb[0].mxu0
      %1685 = vmatprep.mubr.bf16.mxu0 %v998
      %1686 = vmatmul.mubr.bf16.gmra.mrb[0].mxu0 %v997
      %v1687 = vpop.f32.mrb[0].mxu0
      %v1688 = vadd.f32 %v1527, %v1687
      %v1689 = vpop.f32.mrb[0].mxu0
      %v1690 = vpop.f32.mrb[0].mxu0
      %v1691 = vadd.f32 %v1530, %v1690
      %v1692 = vpop.f32.mrb[0].mxu0
      %1693 = vmatprep.mubr.bf16.mxu0 %v1004
      %1694 = vmatmul.mubr.bf16.gmra.mrb[0].mxu0 %v1003
      %v1695 = vpop.f32.mrb[0].mxu0
      %v1696 = vadd.f32 %v1535, %v1695
      %v1697 = vpop.f32.mrb[0].mxu0
      %v1698 = vpop.f32.mrb[0].mxu0
      %v1699 = vadd.f32 %v1538, %v1698
      %v1700 = vpop.f32.mrb[0].mxu0
      %1701 = vmatprep.mubr.bf16.mxu0 %v1010
      %1702 = vmatmul.mubr.bf16.gmra.mrb[0].mxu0 %v1009
      %v1703 = vpop.f32.mrb[0].mxu0
      %v1704 = vadd.f32 %v1543, %v1703
      %v1705 = vpop.f32.mrb[0].mxu0
      %v1706 = vpop.f32.mrb[0].mxu0
      %v1707 = vadd.f32 %v1546, %v1706
      %v1708 = vpop.f32.mrb[0].mxu0
      %1709 = vmatprep.mubr.bf16.mxu0 %v1016
      %1710 = vmatmul.mubr.bf16.gmra.mrb[0].mxu0 %v1015
      %v1711 = vpop.f32.mrb[0].mxu0
      %v1712 = vadd.f32 %v1551, %v1711
      %v1713 = vpop.f32.mrb[0].mxu0
      %v1714 = vpop.f32.mrb[0].mxu0
      %v1715 = vadd.f32 %v1554, %v1714
      %v1716 = vpop.f32.mrb[0].mxu0
      %1717 = vmatprep.mubr.bf16.mxu0 %v1022
      %1718 = vmatmul.mubr.bf16.gmra.mrb[0].mxu0 %v1021
      %v1719 = vpop.f32.mrb[0].mxu0
      %v1720 = vadd.f32 %v1559, %v1719
      %v1721 = vpop.f32.mrb[0].mxu0
      %v1722 = vpop.f32.mrb[0].mxu0
      %v1723 = vadd.f32 %v1562, %v1722
      %v1724 = vpop.f32.mrb[0].mxu0
      %1725 = vmatprep.mubr.bf16.mxu0 %v1028
      %1726 = vmatmul.mubr.bf16.gmra.mrb[0].mxu0 %v1027
      %v1727 = vpop.f32.mrb[0].mxu0
      %v1728 = vadd.f32 %v1567, %v1727
      %v1729 = vpop.f32.mrb[0].mxu0
      %v1730 = vpop.f32.mrb[0].mxu0
      %v1731 = vadd.f32 %v1570, %v1730
      %v1732 = vpop.f32.mrb[0].mxu0
      %1733 = vmatprep.mubr.bf16.mxu0 %v1034
      %1734 = vmatmul.mubr.bf16.gmra.mrb[0].mxu0 %v1033
      %v1735 = vpop.f32.mrb[0].mxu0
      %v1736 = vadd.f32 %v1575, %v1735
      %v1737 = vpop.f32.mrb[0].mxu0
      %v1738 = vpop.f32.mrb[0].mxu0
      %v1739 = vadd.f32 %v1578, %v1738
      %v1740 = vpop.f32.mrb[0].mxu0
      %1741 = vmatprep.mubr.bf16.mxu0 %v1040
      %1742 = vmatmul.mubr.bf16.gmra.mrb[0].mxu0 %v1039
      %v1743 = vpop.f32.mrb[0].mxu0
      %v1744 = vadd.f32 %v1583, %v1743
      %v1745 = vpop.f32.mrb[0].mxu0
      %v1746 = vpop.f32.mrb[0].mxu0
      %v1747 = vadd.f32 %v1586, %v1746
      %v1748 = vpop.f32.mrb[0].mxu0
      %1749 = vmatprep.mubr.bf16.mxu0 %v1046
      %1750 = vmatmul.mubr.bf16.gmra.mrb[0].mxu0 %v1045
      %v1751 = vpop.f32.mrb[0].mxu0
      %v1752 = vadd.f32 %v1591, %v1751
      %v1753 = vpop.f32.mrb[0].mxu0
      %v1754 = vpop.f32.mrb[0].mxu0
      %v1755 = vadd.f32 %v1594, %v1754
      %v1756 = vpop.f32.mrb[0].mxu0
      %1757 = vmatprep.mubr.bf16.mxu0 %v1052
      %1758 = vmatmul.mubr.bf16.gmra.mrb[0].mxu0 %v1051
      %v1759 = vpop.f32.mrb[0].mxu0
      %v1760 = vadd.f32 %v1599, %v1759
      %v1761 = vpop.f32.mrb[0].mxu0
      %v1762 = vpop.f32.mrb[0].mxu0
      %v1763 = vadd.f32 %v1602, %v1762
      %v1764 = vpop.f32.mrb[0].mxu0
      %1765 = vmatprep.mubr.bf16.mxu0 %v1058
      %1766 = vmatmul.mubr.bf16.gmra.mrb[0].mxu0 %v1057
      %v1767 = vpop.f32.mrb[0].mxu0
      %v1768 = vadd.f32 %v1607, %v1767
      %v1769 = vpop.f32.mrb[0].mxu0
      %v1770 = vpop.f32.mrb[0].mxu0
      %v1771 = vadd.f32 %v1610, %v1770
      %v1772 = vpop.f32.mrb[0].mxu0
      %1773 = vdwg.mxu0
      %1774 = vmatprep.subr.bf16.mxu0 0
      %1775 = vmatpush1.bf16.msra.mxu0 %v1388
      %1776 = vmatprep.subr.bf16.mxu0 0
      %1777 = vmatpush1.bf16.msra.mxu0 %v1389
      %1778 = vmatprep.subr.bf16.mxu0 0
      %1779 = vmatpush1.bf16.msra.mxu0 %v1390
      %1780 = vmatprep.subr.bf16.mxu0 0
      %1781 = vmatpush1.bf16.msra.mxu0 %v1391
      %1782 = vmatprep.subr.bf16.mxu0 0
      %1783 = vmatpush1.bf16.msra.mxu0 %v1392
      %1784 = vmatprep.subr.bf16.mxu0 0
      %1785 = vmatpush1.bf16.msra.mxu0 %v1393
      %1786 = vmatprep.subr.bf16.mxu0 0
      %1787 = vmatpush1.bf16.msra.mxu0 %v1394
      %1788 = vmatprep.subr.bf16.mxu0 0
      %1789 = vmatpush1.bf16.msra.mxu0 %v1395
      %1790 = vmatprep.subr.bf16.mxu0 0
      %1791 = vmatpush1.bf16.msra.mxu0 %v1396
      %1792 = vmatprep.subr.bf16.mxu0 0
      %1793 = vmatpush1.bf16.msra.mxu0 %v1397
      %1794 = vmatprep.subr.bf16.mxu0 0
      %1795 = vmatpush1.bf16.msra.mxu0 %v1398
      %1796 = vmatprep.subr.bf16.mxu0 0
      %1797 = vmatpush1.bf16.msra.mxu0 %v1399
      %1798 = vmatprep.subr.bf16.mxu0 0
      %1799 = vmatpush1.bf16.msra.mxu0 %v1400
      %1800 = vmatprep.subr.bf16.mxu0 0
      %1801 = vmatpush1.bf16.msra.mxu0 %v1401
      %1802 = vmatprep.subr.bf16.mxu0 0
      %1803 = vmatpush1.bf16.msra.mxu0 %v1402
      %1804 = vmatprep.subr.bf16.mxu0 0
      %1805 = vmatpush1.bf16.msra.mxu0 %v1403
      %1806 = vmatprep.mubr.bf16.mxu0 %v970
      %1807 = vmatmul.mubr.bf16.gmra.mrb[0].mxu0 %v969
      %v1808 = vpop.f32.mrb[0].mxu0
      %v1809 = vadd.f32 %v1648, %v1808
      %v1810 = vpop.f32.mrb[0].mxu0
      %v1811 = vpop.f32.mrb[0].mxu0
      %v1812 = vadd.f32 %v1651, %v1811
      %v1813 = vpop.f32.mrb[0].mxu0
      %1814 = vmatprep.mubr.bf16.mxu0 %v976
      %1815 = vmatmul.mubr.bf16.gmra.mrb[0].mxu0 %v975
      %v1816 = vpop.f32.mrb[0].mxu0
      %v1817 = vadd.f32 %v1656, %v1816
      %v1818 = vpop.f32.mrb[0].mxu0
      %v1819 = vpop.f32.mrb[0].mxu0
      %v1820 = vadd.f32 %v1659, %v1819
      %v1821 = vpop.f32.mrb[0].mxu0
      %1822 = vmatprep.mubr.bf16.mxu0 %v982
      %1823 = vmatmul.mubr.bf16.gmra.mrb[0].mxu0 %v981
      %v1824 = vpop.f32.mrb[0].mxu0
      %v1825 = vadd.f32 %v1664, %v1824
      %v1826 = vpop.f32.mrb[0].mxu0
      %v1827 = vpop.f32.mrb[0].mxu0
      %v1828 = vadd.f32 %v1667, %v1827
      %v1829 = vpop.f32.mrb[0].mxu0
      %1830 = vmatprep.mubr.bf16.mxu0 %v988
      %1831 = vmatmul.mubr.bf16.gmra.mrb[0].mxu0 %v987
      %v1832 = vpop.f32.mrb[0].mxu0
      %v1833 = vadd.f32 %v1672, %v1832
      %v1834 = vpop.f32.mrb[0].mxu0
      %v1835 = vpop.f32.mrb[0].mxu0
      %v1836 = vadd.f32 %v1675, %v1835
      %v1837 = vpop.f32.mrb[0].mxu0
      %1838 = vmatprep.mubr.bf16.mxu0 %v994
      %1839 = vmatmul.mubr.bf16.gmra.mrb[0].mxu0 %v993
      %v1840 = vpop.f32.mrb[0].mxu0
      %v1841 = vadd.f32 %v1680, %v1840
      %v1842 = vpop.f32.mrb[0].mxu0
      %v1843 = vpop.f32.mrb[0].mxu0
      %v1844 = vadd.f32 %v1683, %v1843
      %v1845 = vpop.f32.mrb[0].mxu0
      %1846 = vmatprep.mubr.bf16.mxu0 %v1000
      %1847 = vmatmul.mubr.bf16.gmra.mrb[0].mxu0 %v999
      %v1848 = vpop.f32.mrb[0].mxu0
      %v1849 = vadd.f32 %v1688, %v1848
      %v1850 = vpop.f32.mrb[0].mxu0
      %v1851 = vpop.f32.mrb[0].mxu0
      %v1852 = vadd.f32 %v1691, %v1851
      %v1853 = vpop.f32.mrb[0].mxu0
      %1854 = vmatprep.mubr.bf16.mxu0 %v1006
      %1855 = vmatmul.mubr.bf16.gmra.mrb[0].mxu0 %v1005
      %v1856 = vpop.f32.mrb[0].mxu0
      %v1857 = vadd.f32 %v1696, %v1856
      %v1858 = vpop.f32.mrb[0].mxu0
      %v1859 = vpop.f32.mrb[0].mxu0
      %v1860 = vadd.f32 %v1699, %v1859
      %v1861 = vpop.f32.mrb[0].mxu0
      %1862 = vmatprep.mubr.bf16.mxu0 %v1012
      %1863 = vmatmul.mubr.bf16.gmra.mrb[0].mxu0 %v1011
      %v1864 = vpop.f32.mrb[0].mxu0
      %v1865 = vadd.f32 %v1704, %v1864
      %v1866 = vpop.f32.mrb[0].mxu0
      %v1867 = vpop.f32.mrb[0].mxu0
      %v1868 = vadd.f32 %v1707, %v1867
      %v1869 = vpop.f32.mrb[0].mxu0
      %1870 = vmatprep.mubr.bf16.mxu0 %v1018
      %1871 = vmatmul.mubr.bf16.gmra.mrb[0].mxu0 %v1017
      %v1872 = vpop.f32.mrb[0].mxu0
      %v1873 = vadd.f32 %v1712, %v1872
      %v1874 = vpop.f32.mrb[0].mxu0
      %v1875 = vpop.f32.mrb[0].mxu0
      %v1876 = vadd.f32 %v1715, %v1875
      %v1877 = vpop.f32.mrb[0].mxu0
      %1878 = vmatprep.mubr.bf16.mxu0 %v1024
      %1879 = vmatmul.mubr.bf16.gmra.mrb[0].mxu0 %v1023
      %v1880 = vpop.f32.mrb[0].mxu0
      %v1881 = vadd.f32 %v1720, %v1880
      %v1882 = vpop.f32.mrb[0].mxu0
      %v1883 = vpop.f32.mrb[0].mxu0
      %v1884 = vadd.f32 %v1723, %v1883
      %v1885 = vpop.f32.mrb[0].mxu0
      %1886 = vmatprep.mubr.bf16.mxu0 %v1030
      %1887 = vmatmul.mubr.bf16.gmra.mrb[0].mxu0 %v1029
      %v1888 = vpop.f32.mrb[0].mxu0
      %v1889 = vadd.f32 %v1728, %v1888
      %v1890 = vpop.f32.mrb[0].mxu0
      %v1891 = vpop.f32.mrb[0].mxu0
      %v1892 = vadd.f32 %v1731, %v1891
      %v1893 = vpop.f32.mrb[0].mxu0
      %1894 = vmatprep.mubr.bf16.mxu0 %v1036
      %1895 = vmatmul.mubr.bf16.gmra.mrb[0].mxu0 %v1035
      %v1896 = vpop.f32.mrb[0].mxu0
      %v1897 = vadd.f32 %v1736, %v1896
      %v1898 = vpop.f32.mrb[0].mxu0
      %v1899 = vpop.f32.mrb[0].mxu0
      %v1900 = vadd.f32 %v1739, %v1899
      %v1901 = vpop.f32.mrb[0].mxu0
      %1902 = vmatprep.mubr.bf16.mxu0 %v1042
      %1903 = vmatmul.mubr.bf16.gmra.mrb[0].mxu0 %v1041
      %v1904 = vpop.f32.mrb[0].mxu0
      %v1905 = vadd.f32 %v1744, %v1904
      %v1906 = vpop.f32.mrb[0].mxu0
      %v1907 = vpop.f32.mrb[0].mxu0
      %v1908 = vadd.f32 %v1747, %v1907
      %v1909 = vpop.f32.mrb[0].mxu0
      %1910 = vmatprep.mubr.bf16.mxu0 %v1048
      %1911 = vmatmul.mubr.bf16.gmra.mrb[0].mxu0 %v1047
      %v1912 = vpop.f32.mrb[0].mxu0
      %v1913 = vadd.f32 %v1752, %v1912
      %v1914 = vpop.f32.mrb[0].mxu0
      %v1915 = vpop.f32.mrb[0].mxu0
      %v1916 = vadd.f32 %v1755, %v1915
      %v1917 = vpop.f32.mrb[0].mxu0
      %1918 = vmatprep.mubr.bf16.mxu0 %v1054
      %1919 = vmatmul.mubr.bf16.gmra.mrb[0].mxu0 %v1053
      %v1920 = vpop.f32.mrb[0].mxu0
      %v1921 = vadd.f32 %v1760, %v1920
      %v1922 = vpop.f32.mrb[0].mxu0
      %v1923 = vpop.f32.mrb[0].mxu0
      %v1924 = vadd.f32 %v1763, %v1923
      %v1925 = vpop.f32.mrb[0].mxu0
      %1926 = vmatprep.mubr.bf16.mxu0 %v1060
      %1927 = vmatmul.mubr.bf16.gmra.mrb[0].mxu0 %v1059
      %v1928 = vpop.f32.mrb[0].mxu0
      %v1929 = vadd.f32 %v1768, %v1928
      %v1930 = vpop.f32.mrb[0].mxu0
      %v1931 = vpop.f32.mrb[0].mxu0
      %v1932 = vadd.f32 %v1771, %v1931
      %v1933 = vpop.f32.mrb[0].mxu0
      %1934 = vdwg.mxu0
      %s1935 = scalar_lea.vmem [#allocation2], 96
      %v1936 = vld [vmem:[%s1935] sm:$0xff]
      %v1937 = vld [vmem:[%s1935 + $0x8] sm:$0xff]
      %v1938 = vld [vmem:[%s1935 + $0x10] sm:$0xff]
      %v1939 = vld [vmem:[%s1935 + $0x18] sm:$0xff]
      %v1940 = vld [vmem:[%s1935 + $0x20] sm:$0xff]
      %v1941 = vld [vmem:[%s1935 + $0x28] sm:$0xff]
      %v1942 = vld [vmem:[%s1935 + $0x30] sm:$0xff]
      %v1943 = vld [vmem:[%s1935 + $0x38] sm:$0xff]
      %v1944 = vld [vmem:[%s1935 + $0x40] sm:$0xff]
      %v1945 = vld [vmem:[%s1935 + $0x48] sm:$0xff]
      %v1946 = vld [vmem:[%s1935 + $0x50] sm:$0xff]
      %v1947 = vld [vmem:[%s1935 + $0x58] sm:$0xff]
      %v1948 = vld [vmem:[%s1935 + $0x60] sm:$0xff]
      %v1949 = vld [vmem:[%s1935 + $0x68] sm:$0xff]
      %v1950 = vld [vmem:[%s1935 + $0x70] sm:$0xff]
      %v1951 = vld [vmem:[%s1935 + $0x78] sm:$0xff]
      %v1952 = vld [vmem:[%s1935 + $0x80] sm:$0xff]
      %v1953 = vld [vmem:[%s1935 + $0x88] sm:$0xff]
      %v1954 = vld [vmem:[%s1935 + $0x90] sm:$0xff]
      %v1955 = vld [vmem:[%s1935 + $0x98] sm:$0xff]
      %v1956 = vld [vmem:[%s1935 + $0xa0] sm:$0xff]
      %v1957 = vld [vmem:[%s1935 + $0xa8] sm:$0xff]
      %v1958 = vld [vmem:[%s1935 + $0xb0] sm:$0xff]
      %v1959 = vld [vmem:[%s1935 + $0xb8] sm:$0xff]
      %v1960 = vld [vmem:[%s1935 + $0xc0] sm:$0xff]
      %v1961 = vld [vmem:[%s1935 + $0xc8] sm:$0xff]
      %v1962 = vld [vmem:[%s1935 + $0xd0] sm:$0xff]
      %v1963 = vld [vmem:[%s1935 + $0xd8] sm:$0xff]
      %v1964 = vld [vmem:[%s1935 + $0xe0] sm:$0xff]
      %v1965 = vld [vmem:[%s1935 + $0xe8] sm:$0xff]
      %v1966 = vld [vmem:[%s1935 + $0xf0] sm:$0xff]
      %v1967 = vld [vmem:[%s1935 + $0xf8] sm:$0xff]
      %v1968 = vld [vmem:[%s1935 + $0x100] sm:$0xff]
      %v1969 = vld [vmem:[%s1935 + $0x108] sm:$0xff]
      %v1970 = vld [vmem:[%s1935 + $0x110] sm:$0xff]
      %v1971 = vld [vmem:[%s1935 + $0x118] sm:$0xff]
      %v1972 = vld [vmem:[%s1935 + $0x120] sm:$0xff]
      %v1973 = vld [vmem:[%s1935 + $0x128] sm:$0xff]
      %v1974 = vld [vmem:[%s1935 + $0x130] sm:$0xff]
      %v1975 = vld [vmem:[%s1935 + $0x138] sm:$0xff]
      %v1976 = vld [vmem:[%s1935 + $0x140] sm:$0xff]
      %v1977 = vld [vmem:[%s1935 + $0x148] sm:$0xff]
      %v1978 = vld [vmem:[%s1935 + $0x150] sm:$0xff]
      %v1979 = vld [vmem:[%s1935 + $0x158] sm:$0xff]
      %v1980 = vld [vmem:[%s1935 + $0x160] sm:$0xff]
      %v1981 = vld [vmem:[%s1935 + $0x168] sm:$0xff]
      %v1982 = vld [vmem:[%s1935 + $0x170] sm:$0xff]
      %v1983 = vld [vmem:[%s1935 + $0x178] sm:$0xff]
      %v1984 = vld [vmem:[%s1935 + $0x180] sm:$0xff]
      %v1985 = vld [vmem:[%s1935 + $0x188] sm:$0xff]
      %v1986 = vld [vmem:[%s1935 + $0x190] sm:$0xff]
      %v1987 = vld [vmem:[%s1935 + $0x198] sm:$0xff]
      %v1988 = vld [vmem:[%s1935 + $0x1a0] sm:$0xff]
      %v1989 = vld [vmem:[%s1935 + $0x1a8] sm:$0xff]
      %v1990 = vld [vmem:[%s1935 + $0x1b0] sm:$0xff]
      %v1991 = vld [vmem:[%s1935 + $0x1b8] sm:$0xff]
      %v1992 = vld [vmem:[%s1935 + $0x1c0] sm:$0xff]
      %v1993 = vld [vmem:[%s1935 + $0x1c8] sm:$0xff]
      %v1994 = vld [vmem:[%s1935 + $0x1d0] sm:$0xff]
      %v1995 = vld [vmem:[%s1935 + $0x1d8] sm:$0xff]
      %v1996 = vld [vmem:[%s1935 + $0x1e0] sm:$0xff]
      %v1997 = vld [vmem:[%s1935 + $0x1e8] sm:$0xff]
      %v1998 = vld [vmem:[%s1935 + $0x1f0] sm:$0xff]
      %v1999 = vld [vmem:[%s1935 + $0x1f8] sm:$0xff]
      %v2000 = vld [vmem:[%s1935 + $0x200] sm:$0xff]
      %v2001 = vld [vmem:[%s1935 + $0x208] sm:$0xff]
      %v2002 = vld [vmem:[%s1935 + $0x210] sm:$0xff]
      %v2003 = vld [vmem:[%s1935 + $0x218] sm:$0xff]
      %v2004 = vld [vmem:[%s1935 + $0x220] sm:$0xff]
      %v2005 = vld [vmem:[%s1935 + $0x228] sm:$0xff]
      %v2006 = vld [vmem:[%s1935 + $0x230] sm:$0xff]
      %v2007 = vld [vmem:[%s1935 + $0x238] sm:$0xff]
      %v2008 = vld [vmem:[%s1935 + $0x240] sm:$0xff]
      %v2009 = vld [vmem:[%s1935 + $0x248] sm:$0xff]
      %v2010 = vld [vmem:[%s1935 + $0x250] sm:$0xff]
      %v2011 = vld [vmem:[%s1935 + $0x258] sm:$0xff]
      %v2012 = vld [vmem:[%s1935 + $0x260] sm:$0xff]
      %v2013 = vld [vmem:[%s1935 + $0x268] sm:$0xff]
      %v2014 = vld [vmem:[%s1935 + $0x270] sm:$0xff]
      %v2015 = vld [vmem:[%s1935 + $0x278] sm:$0xff]
      %v2016 = vld [vmem:[%s1935 + $0x280] sm:$0xff]
      %v2017 = vld [vmem:[%s1935 + $0x288] sm:$0xff]
      %v2018 = vld [vmem:[%s1935 + $0x290] sm:$0xff]
      %v2019 = vld [vmem:[%s1935 + $0x298] sm:$0xff]
      %v2020 = vld [vmem:[%s1935 + $0x2a0] sm:$0xff]
      %v2021 = vld [vmem:[%s1935 + $0x2a8] sm:$0xff]
      %v2022 = vld [vmem:[%s1935 + $0x2b0] sm:$0xff]
      %v2023 = vld [vmem:[%s1935 + $0x2b8] sm:$0xff]
      %v2024 = vld [vmem:[%s1935 + $0x2c0] sm:$0xff]
      %v2025 = vld [vmem:[%s1935 + $0x2c8] sm:$0xff]
      %v2026 = vld [vmem:[%s1935 + $0x2d0] sm:$0xff]
      %v2027 = vld [vmem:[%s1935 + $0x2d8] sm:$0xff]
      %v2028 = vld [vmem:[%s1935 + $0x2e0] sm:$0xff]
      %v2029 = vld [vmem:[%s1935 + $0x2e8] sm:$0xff]
      %v2030 = vld [vmem:[%s1935 + $0x2f0] sm:$0xff]
      %v2031 = vld [vmem:[%s1935 + $0x2f8] sm:$0xff]
      %s2032 = scalar_lea.vmem %s5, 384
      %v2033 = vld [vmem:[%s2032] sm:$0xf]
      %v2034 = vld [vmem:[%s2032 + $0x4] sm:$0xf]
      %v2035 = vld [vmem:[%s2032 + $0x8] sm:$0xf]
      %v2036 = vld [vmem:[%s2032 + $0xc] sm:$0xf]
      %v2037 = vld [vmem:[%s2032 + $0x10] sm:$0xf]
      %v2038 = vld [vmem:[%s2032 + $0x14] sm:$0xf]
      %v2039 = vld [vmem:[%s2032 + $0x18] sm:$0xf]
      %v2040 = vld [vmem:[%s2032 + $0x1c] sm:$0xf]
      %v2041 = vld [vmem:[%s2032 + $0x20] sm:$0xf]
      %v2042 = vld [vmem:[%s2032 + $0x24] sm:$0xf]
      %v2043 = vld [vmem:[%s2032 + $0x28] sm:$0xf]
      %v2044 = vld [vmem:[%s2032 + $0x2c] sm:$0xf]
      %v2045 = vld [vmem:[%s2032 + $0x30] sm:$0xf]
      %v2046 = vld [vmem:[%s2032 + $0x34] sm:$0xf]
      %v2047 = vld [vmem:[%s2032 + $0x38] sm:$0xf]
      %v2048 = vld [vmem:[%s2032 + $0x3c] sm:$0xf]
      %v2049 = vld [vmem:[%s2032 + $0x40] sm:$0xf]
      %v2050 = vld [vmem:[%s2032 + $0x44] sm:$0xf]
      %v2051 = vld [vmem:[%s2032 + $0x48] sm:$0xf]
      %v2052 = vld [vmem:[%s2032 + $0x4c] sm:$0xf]
      %v2053 = vld [vmem:[%s2032 + $0x50] sm:$0xf]
      %v2054 = vld [vmem:[%s2032 + $0x54] sm:$0xf]
      %v2055 = vld [vmem:[%s2032 + $0x58] sm:$0xf]
      %v2056 = vld [vmem:[%s2032 + $0x5c] sm:$0xf]
      %v2057 = vld [vmem:[%s2032 + $0x60] sm:$0xf]
      %v2058 = vld [vmem:[%s2032 + $0x64] sm:$0xf]
      %v2059 = vld [vmem:[%s2032 + $0x68] sm:$0xf]
      %v2060 = vld [vmem:[%s2032 + $0x6c] sm:$0xf]
      %v2061 = vld [vmem:[%s2032 + $0x70] sm:$0xf]
      %v2062 = vld [vmem:[%s2032 + $0x74] sm:$0xf]
      %v2063 = vld [vmem:[%s2032 + $0x78] sm:$0xf]
      %v2064 = vld [vmem:[%s2032 + $0x7c] sm:$0xf]
      %v2065 = vld [vmem:[%s2032 + $0x80] sm:$0xf]
      %v2066 = vld [vmem:[%s2032 + $0x84] sm:$0xf]
      %v2067 = vld [vmem:[%s2032 + $0x88] sm:$0xf]
      %v2068 = vld [vmem:[%s2032 + $0x8c] sm:$0xf]
      %v2069 = vld [vmem:[%s2032 + $0x90] sm:$0xf]
      %v2070 = vld [vmem:[%s2032 + $0x94] sm:$0xf]
      %v2071 = vld [vmem:[%s2032 + $0x98] sm:$0xf]
      %v2072 = vld [vmem:[%s2032 + $0x9c] sm:$0xf]
      %v2073 = vld [vmem:[%s2032 + $0xa0] sm:$0xf]
      %v2074 = vld [vmem:[%s2032 + $0xa4] sm:$0xf]
      %v2075 = vld [vmem:[%s2032 + $0xa8] sm:$0xf]
      %v2076 = vld [vmem:[%s2032 + $0xac] sm:$0xf]
      %v2077 = vld [vmem:[%s2032 + $0xb0] sm:$0xf]
      %v2078 = vld [vmem:[%s2032 + $0xb4] sm:$0xf]
      %v2079 = vld [vmem:[%s2032 + $0xb8] sm:$0xf]
      %v2080 = vld [vmem:[%s2032 + $0xbc] sm:$0xf]
      %v2081 = vld [vmem:[%s2032 + $0xc0] sm:$0xf]
      %v2082 = vld [vmem:[%s2032 + $0xc4] sm:$0xf]
      %v2083 = vld [vmem:[%s2032 + $0xc8] sm:$0xf]
      %v2084 = vld [vmem:[%s2032 + $0xcc] sm:$0xf]
      %v2085 = vld [vmem:[%s2032 + $0xd0] sm:$0xf]
      %v2086 = vld [vmem:[%s2032 + $0xd4] sm:$0xf]
      %v2087 = vld [vmem:[%s2032 + $0xd8] sm:$0xf]
      %v2088 = vld [vmem:[%s2032 + $0xdc] sm:$0xf]
      %v2089 = vld [vmem:[%s2032 + $0xe0] sm:$0xf]
      %v2090 = vld [vmem:[%s2032 + $0xe4] sm:$0xf]
      %v2091 = vld [vmem:[%s2032 + $0xe8] sm:$0xf]
      %v2092 = vld [vmem:[%s2032 + $0xec] sm:$0xf]
      %v2093 = vld [vmem:[%s2032 + $0xf0] sm:$0xf]
      %v2094 = vld [vmem:[%s2032 + $0xf4] sm:$0xf]
      %v2095 = vld [vmem:[%s2032 + $0xf8] sm:$0xf]
      %v2096 = vld [vmem:[%s2032 + $0xfc] sm:$0xf]
      %v2097 = vld [vmem:[%s2032 + $0x100] sm:$0xf]
      %v2098 = vld [vmem:[%s2032 + $0x104] sm:$0xf]
      %v2099 = vld [vmem:[%s2032 + $0x108] sm:$0xf]
      %v2100 = vld [vmem:[%s2032 + $0x10c] sm:$0xf]
      %v2101 = vld [vmem:[%s2032 + $0x110] sm:$0xf]
      %v2102 = vld [vmem:[%s2032 + $0x114] sm:$0xf]
      %v2103 = vld [vmem:[%s2032 + $0x118] sm:$0xf]
      %v2104 = vld [vmem:[%s2032 + $0x11c] sm:$0xf]
      %v2105 = vld [vmem:[%s2032 + $0x120] sm:$0xf]
      %v2106 = vld [vmem:[%s2032 + $0x124] sm:$0xf]
      %v2107 = vld [vmem:[%s2032 + $0x128] sm:$0xf]
      %v2108 = vld [vmem:[%s2032 + $0x12c] sm:$0xf]
      %v2109 = vld [vmem:[%s2032 + $0x130] sm:$0xf]
      %v2110 = vld [vmem:[%s2032 + $0x134] sm:$0xf]
      %v2111 = vld [vmem:[%s2032 + $0x138] sm:$0xf]
      %v2112 = vld [vmem:[%s2032 + $0x13c] sm:$0xf]
      %v2113 = vld [vmem:[%s2032 + $0x140] sm:$0xf]
      %v2114 = vld [vmem:[%s2032 + $0x144] sm:$0xf]
      %v2115 = vld [vmem:[%s2032 + $0x148] sm:$0xf]
      %v2116 = vld [vmem:[%s2032 + $0x14c] sm:$0xf]
      %v2117 = vld [vmem:[%s2032 + $0x150] sm:$0xf]
      %v2118 = vld [vmem:[%s2032 + $0x154] sm:$0xf]
      %v2119 = vld [vmem:[%s2032 + $0x158] sm:$0xf]
      %v2120 = vld [vmem:[%s2032 + $0x15c] sm:$0xf]
      %v2121 = vld [vmem:[%s2032 + $0x160] sm:$0xf]
      %v2122 = vld [vmem:[%s2032 + $0x164] sm:$0xf]
      %v2123 = vld [vmem:[%s2032 + $0x168] sm:$0xf]
      %v2124 = vld [vmem:[%s2032 + $0x16c] sm:$0xf]
      %v2125 = vld [vmem:[%s2032 + $0x170] sm:$0xf]
      %v2126 = vld [vmem:[%s2032 + $0x174] sm:$0xf]
      %v2127 = vld [vmem:[%s2032 + $0x178] sm:$0xf]
      %v2128 = vld [vmem:[%s2032 + $0x17c] sm:$0xf]
      %v2225 = vunpack.c.l.b16 %v2033
      %v2226 = vunpack.c.l.b16 %v2034
      %v2227 = vunpack.c.l.b16 %v2035
      %v2228 = vunpack.c.l.b16 %v2036
      %v2229 = vunpack.c.l.b16 %v2037
      %v2230 = vunpack.c.l.b16 %v2038
      %v2231 = vunpack.c.l.b16 %v2039
      %v2232 = vunpack.c.l.b16 %v2040
      %v2233 = vunpack.c.l.b16 %v2041
      %v2234 = vunpack.c.l.b16 %v2042
      %v2235 = vunpack.c.l.b16 %v2043
      %v2236 = vunpack.c.l.b16 %v2044
      %v2237 = vunpack.c.l.b16 %v2045
      %v2238 = vunpack.c.l.b16 %v2046
      %v2239 = vunpack.c.l.b16 %v2047
      %v2240 = vunpack.c.l.b16 %v2048
      %v2241 = vunpack.c.l.b16 %v2049
      %v2242 = vunpack.c.l.b16 %v2050
      %v2243 = vunpack.c.l.b16 %v2051
      %v2244 = vunpack.c.l.b16 %v2052
      %v2245 = vunpack.c.l.b16 %v2053
      %v2246 = vunpack.c.l.b16 %v2054
      %v2247 = vunpack.c.l.b16 %v2055
      %v2248 = vunpack.c.l.b16 %v2056
      %v2249 = vunpack.c.l.b16 %v2057
      %v2250 = vunpack.c.l.b16 %v2058
      %v2251 = vunpack.c.l.b16 %v2059
      %v2252 = vunpack.c.l.b16 %v2060
      %v2253 = vunpack.c.l.b16 %v2061
      %v2254 = vunpack.c.l.b16 %v2062
      %v2255 = vunpack.c.l.b16 %v2063
      %v2256 = vunpack.c.l.b16 %v2064
      %v2257 = vunpack.c.l.b16 %v2065
      %v2258 = vunpack.c.l.b16 %v2066
      %v2259 = vunpack.c.l.b16 %v2067
      %v2260 = vunpack.c.l.b16 %v2068
      %v2261 = vunpack.c.l.b16 %v2069
      %v2262 = vunpack.c.l.b16 %v2070
      %v2263 = vunpack.c.l.b16 %v2071
      %v2264 = vunpack.c.l.b16 %v2072
      %v2265 = vunpack.c.l.b16 %v2073
      %v2266 = vunpack.c.l.b16 %v2074
      %v2267 = vunpack.c.l.b16 %v2075
      %v2268 = vunpack.c.l.b16 %v2076
      %v2269 = vunpack.c.l.b16 %v2077
      %v2270 = vunpack.c.l.b16 %v2078
      %v2271 = vunpack.c.l.b16 %v2079
      %v2272 = vunpack.c.l.b16 %v2080
      %v2273 = vunpack.c.l.b16 %v2081
      %v2274 = vunpack.c.l.b16 %v2082
      %v2275 = vunpack.c.l.b16 %v2083
      %v2276 = vunpack.c.l.b16 %v2084
      %v2277 = vunpack.c.l.b16 %v2085
      %v2278 = vunpack.c.l.b16 %v2086
      %v2279 = vunpack.c.l.b16 %v2087
      %v2280 = vunpack.c.l.b16 %v2088
      %v2281 = vunpack.c.l.b16 %v2089
      %v2282 = vunpack.c.l.b16 %v2090
      %v2283 = vunpack.c.l.b16 %v2091
      %v2284 = vunpack.c.l.b16 %v2092
      %v2285 = vunpack.c.l.b16 %v2093
      %v2286 = vunpack.c.l.b16 %v2094
      %v2287 = vunpack.c.l.b16 %v2095
      %v2288 = vunpack.c.l.b16 %v2096
      %v2289 = vunpack.c.l.b16 %v2097
      %v2290 = vunpack.c.l.b16 %v2098
      %v2291 = vunpack.c.l.b16 %v2099
      %v2292 = vunpack.c.l.b16 %v2100
      %v2293 = vunpack.c.l.b16 %v2101
      %v2294 = vunpack.c.l.b16 %v2102
      %v2295 = vunpack.c.l.b16 %v2103
      %v2296 = vunpack.c.l.b16 %v2104
      %v2297 = vunpack.c.l.b16 %v2105
      %v2298 = vunpack.c.l.b16 %v2106
      %v2299 = vunpack.c.l.b16 %v2107
      %v2300 = vunpack.c.l.b16 %v2108
      %v2301 = vunpack.c.l.b16 %v2109
      %v2302 = vunpack.c.l.b16 %v2110
      %v2303 = vunpack.c.l.b16 %v2111
      %v2304 = vunpack.c.l.b16 %v2112
      %v2305 = vunpack.c.l.b16 %v2113
      %v2306 = vunpack.c.l.b16 %v2114
      %v2307 = vunpack.c.l.b16 %v2115
      %v2308 = vunpack.c.l.b16 %v2116
      %v2309 = vunpack.c.l.b16 %v2117
      %v2310 = vunpack.c.l.b16 %v2118
      %v2311 = vunpack.c.l.b16 %v2119
      %v2312 = vunpack.c.l.b16 %v2120
      %v2313 = vunpack.c.l.b16 %v2121
      %v2314 = vunpack.c.l.b16 %v2122
      %v2315 = vunpack.c.l.b16 %v2123
      %v2316 = vunpack.c.l.b16 %v2124
      %v2317 = vunpack.c.l.b16 %v2125
      %v2318 = vunpack.c.l.b16 %v2126
      %v2319 = vunpack.c.l.b16 %v2127
      %v2320 = vunpack.c.l.b16 %v2128
      %v2321 = vpack.c.b16 %v2226, %v2225
      %v2322 = vpack.c.b16 %v2228, %v2227
      %v2323 = vpack.c.b16 %v2230, %v2229
      %v2324 = vpack.c.b16 %v2232, %v2231
      %v2325 = vpack.c.b16 %v2234, %v2233
      %v2326 = vpack.c.b16 %v2236, %v2235
      %v2327 = vpack.c.b16 %v2238, %v2237
      %v2328 = vpack.c.b16 %v2240, %v2239
      %v2329 = vpack.c.b16 %v2242, %v2241
      %v2330 = vpack.c.b16 %v2244, %v2243
      %v2331 = vpack.c.b16 %v2246, %v2245
      %v2332 = vpack.c.b16 %v2248, %v2247
      %v2333 = vpack.c.b16 %v2250, %v2249
      %v2334 = vpack.c.b16 %v2252, %v2251
      %v2335 = vpack.c.b16 %v2254, %v2253
      %v2336 = vpack.c.b16 %v2256, %v2255
      %v2337 = vpack.c.b16 %v2258, %v2257
      %v2338 = vpack.c.b16 %v2260, %v2259
      %v2339 = vpack.c.b16 %v2262, %v2261
      %v2340 = vpack.c.b16 %v2264, %v2263
      %v2341 = vpack.c.b16 %v2266, %v2265
      %v2342 = vpack.c.b16 %v2268, %v2267
      %v2343 = vpack.c.b16 %v2270, %v2269
      %v2344 = vpack.c.b16 %v2272, %v2271
      %v2345 = vpack.c.b16 %v2274, %v2273
      %v2346 = vpack.c.b16 %v2276, %v2275
      %v2347 = vpack.c.b16 %v2278, %v2277
      %v2348 = vpack.c.b16 %v2280, %v2279
      %v2349 = vpack.c.b16 %v2282, %v2281
      %v2350 = vpack.c.b16 %v2284, %v2283
      %v2351 = vpack.c.b16 %v2286, %v2285
      %v2352 = vpack.c.b16 %v2288, %v2287
      %v2353 = vpack.c.b16 %v2290, %v2289
      %v2354 = vpack.c.b16 %v2292, %v2291
      %v2355 = vpack.c.b16 %v2294, %v2293
      %v2356 = vpack.c.b16 %v2296, %v2295
      %v2357 = vpack.c.b16 %v2298, %v2297
      %v2358 = vpack.c.b16 %v2300, %v2299
      %v2359 = vpack.c.b16 %v2302, %v2301
      %v2360 = vpack.c.b16 %v2304, %v2303
      %v2361 = vpack.c.b16 %v2306, %v2305
      %v2362 = vpack.c.b16 %v2308, %v2307
      %v2363 = vpack.c.b16 %v2310, %v2309
      %v2364 = vpack.c.b16 %v2312, %v2311
      %v2365 = vpack.c.b16 %v2314, %v2313
      %v2366 = vpack.c.b16 %v2316, %v2315
      %v2367 = vpack.c.b16 %v2318, %v2317
      %v2368 = vpack.c.b16 %v2320, %v2319
      %2417 = vmatprep.subr.bf16.mxu0 0
      %2418 = vmatpush1.bf16.msra.mxu0 %v2321
      %2419 = vmatprep.subr.bf16.mxu0 0
      %2420 = vmatpush1.bf16.msra.mxu0 %v2322
      %2421 = vmatprep.subr.bf16.mxu0 0
      %2422 = vmatpush1.bf16.msra.mxu0 %v2323
      %2423 = vmatprep.subr.bf16.mxu0 0
      %2424 = vmatpush1.bf16.msra.mxu0 %v2324
      %2425 = vmatprep.subr.bf16.mxu0 0
      %2426 = vmatpush1.bf16.msra.mxu0 %v2325
      %2427 = vmatprep.subr.bf16.mxu0 0
      %2428 = vmatpush1.bf16.msra.mxu0 %v2326
      %2429 = vmatprep.subr.bf16.mxu0 0
      %2430 = vmatpush1.bf16.msra.mxu0 %v2327
      %2431 = vmatprep.subr.bf16.mxu0 0
      %2432 = vmatpush1.bf16.msra.mxu0 %v2328
      %2433 = vmatprep.subr.bf16.mxu0 0
      %2434 = vmatpush1.bf16.msra.mxu0 %v2329
      %2435 = vmatprep.subr.bf16.mxu0 0
      %2436 = vmatpush1.bf16.msra.mxu0 %v2330
      %2437 = vmatprep.subr.bf16.mxu0 0
      %2438 = vmatpush1.bf16.msra.mxu0 %v2331
      %2439 = vmatprep.subr.bf16.mxu0 0
      %2440 = vmatpush1.bf16.msra.mxu0 %v2332
      %2441 = vmatprep.subr.bf16.mxu0 0
      %2442 = vmatpush1.bf16.msra.mxu0 %v2333
      %2443 = vmatprep.subr.bf16.mxu0 0
      %2444 = vmatpush1.bf16.msra.mxu0 %v2334
      %2445 = vmatprep.subr.bf16.mxu0 0
      %2446 = vmatpush1.bf16.msra.mxu0 %v2335
      %2447 = vmatprep.subr.bf16.mxu0 0
      %2448 = vmatpush1.bf16.msra.mxu0 %v2336
      %2449 = vmatprep.mubr.bf16.mxu0 %v1937
      %2450 = vmatmul.mubr.bf16.gmra.mrb[0].mxu0 %v1936
      %v2451 = vpop.f32.mrb[0].mxu0
      %v2452 = vadd.f32 0.0, %v2451
      %v2453 = vpop.f32.mrb[0].mxu0
      %v2454 = vpop.f32.mrb[0].mxu0
      %v2455 = vadd.f32 0.0, %v2454
      %v2456 = vpop.f32.mrb[0].mxu0
      %2457 = vmatprep.mubr.bf16.mxu0 %v1943
      %2458 = vmatmul.mubr.bf16.gmra.mrb[0].mxu0 %v1942
      %v2459 = vpop.f32.mrb[0].mxu0
      %v2460 = vadd.f32 0.0, %v2459
      %v2461 = vpop.f32.mrb[0].mxu0
      %v2462 = vpop.f32.mrb[0].mxu0
      %v2463 = vadd.f32 0.0, %v2462
      %v2464 = vpop.f32.mrb[0].mxu0
      %2465 = vmatprep.mubr.bf16.mxu0 %v1949
      %2466 = vmatmul.mubr.bf16.gmra.mrb[0].mxu0 %v1948
      %v2467 = vpop.f32.mrb[0].mxu0
      %v2468 = vadd.f32 0.0, %v2467
      %v2469 = vpop.f32.mrb[0].mxu0
      %v2470 = vpop.f32.mrb[0].mxu0
      %v2471 = vadd.f32 0.0, %v2470
      %v2472 = vpop.f32.mrb[0].mxu0
      %2473 = vmatprep.mubr.bf16.mxu0 %v1955
      %2474 = vmatmul.mubr.bf16.gmra.mrb[0].mxu0 %v1954
      %v2475 = vpop.f32.mrb[0].mxu0
      %v2476 = vadd.f32 0.0, %v2475
      %v2477 = vpop.f32.mrb[0].mxu0
      %v2478 = vpop.f32.mrb[0].mxu0
      %v2479 = vadd.f32 0.0, %v2478
      %v2480 = vpop.f32.mrb[0].mxu0
      %2481 = vmatprep.mubr.bf16.mxu0 %v1961
      %2482 = vmatmul.mubr.bf16.gmra.mrb[0].mxu0 %v1960
      %v2483 = vpop.f32.mrb[0].mxu0
      %v2484 = vadd.f32 0.0, %v2483
      %v2485 = vpop.f32.mrb[0].mxu0
      %v2486 = vpop.f32.mrb[0].mxu0
      %v2487 = vadd.f32 0.0, %v2486
      %v2488 = vpop.f32.mrb[0].mxu0
      %2489 = vmatprep.mubr.bf16.mxu0 %v1967
      %2490 = vmatmul.mubr.bf16.gmra.mrb[0].mxu0 %v1966
      %v2491 = vpop.f32.mrb[0].mxu0
      %v2492 = vadd.f32 0.0, %v2491
      %v2493 = vpop.f32.mrb[0].mxu0
      %v2494 = vpop.f32.mrb[0].mxu0
      %v2495 = vadd.f32 0.0, %v2494
      %v2496 = vpop.f32.mrb[0].mxu0
      %2497 = vmatprep.mubr.bf16.mxu0 %v1973
      %2498 = vmatmul.mubr.bf16.gmra.mrb[0].mxu0 %v1972
      %v2499 = vpop.f32.mrb[0].mxu0
      %v2500 = vadd.f32 0.0, %v2499
      %v2501 = vpop.f32.mrb[0].mxu0
      %v2502 = vpop.f32.mrb[0].mxu0
      %v2503 = vadd.f32 0.0, %v2502
      %v2504 = vpop.f32.mrb[0].mxu0
      %2505 = vmatprep.mubr.bf16.mxu0 %v1979
      %2506 = vmatmul.mubr.bf16.gmra.mrb[0].mxu0 %v1978
      %v2507 = vpop.f32.mrb[0].mxu0
      %v2508 = vadd.f32 0.0, %v2507
      %v2509 = vpop.f32.mrb[0].mxu0
      %v2510 = vpop.f32.mrb[0].mxu0
      %v2511 = vadd.f32 0.0, %v2510
      %v2512 = vpop.f32.mrb[0].mxu0
      %2513 = vmatprep.mubr.bf16.mxu0 %v1985
      %2514 = vmatmul.mubr.bf16.gmra.mrb[0].mxu0 %v1984
      %v2515 = vpop.f32.mrb[0].mxu0
      %v2516 = vadd.f32 0.0, %v2515
      %v2517 = vpop.f32.mrb[0].mxu0
      %v2518 = vpop.f32.mrb[0].mxu0
      %v2519 = vadd.f32 0.0, %v2518
      %v2520 = vpop.f32.mrb[0].mxu0
      %2521 = vmatprep.mubr.bf16.mxu0 %v1991
      %2522 = vmatmul.mubr.bf16.gmra.mrb[0].mxu0 %v1990
      %v2523 = vpop.f32.mrb[0].mxu0
      %v2524 = vadd.f32 0.0, %v2523
      %v2525 = vpop.f32.mrb[0].mxu0
      %v2526 = vpop.f32.mrb[0].mxu0
      %v2527 = vadd.f32 0.0, %v2526
      %v2528 = vpop.f32.mrb[0].mxu0
      %2529 = vmatprep.mubr.bf16.mxu0 %v1997
      %2530 = vmatmul.mubr.bf16.gmra.mrb[0].mxu0 %v1996
      %v2531 = vpop.f32.mrb[0].mxu0
      %v2532 = vadd.f32 0.0, %v2531
      %v2533 = vpop.f32.mrb[0].mxu0
      %v2534 = vpop.f32.mrb[0].mxu0
      %v2535 = vadd.f32 0.0, %v2534
      %v2536 = vpop.f32.mrb[0].mxu0
      %2537 = vmatprep.mubr.bf16.mxu0 %v2003
      %2538 = vmatmul.mubr.bf16.gmra.mrb[0].mxu0 %v2002
      %v2539 = vpop.f32.mrb[0].mxu0
      %v2540 = vadd.f32 0.0, %v2539
      %v2541 = vpop.f32.mrb[0].mxu0
      %v2542 = vpop.f32.mrb[0].mxu0
      %v2543 = vadd.f32 0.0, %v2542
      %v2544 = vpop.f32.mrb[0].mxu0
      %2545 = vmatprep.mubr.bf16.mxu0 %v2009
      %2546 = vmatmul.mubr.bf16.gmra.mrb[0].mxu0 %v2008
      %v2547 = vpop.f32.mrb[0].mxu0
      %v2548 = vadd.f32 0.0, %v2547
      %v2549 = vpop.f32.mrb[0].mxu0
      %v2550 = vpop.f32.mrb[0].mxu0
      %v2551 = vadd.f32 0.0, %v2550
      %v2552 = vpop.f32.mrb[0].mxu0
      %2553 = vmatprep.mubr.bf16.mxu0 %v2015
      %2554 = vmatmul.mubr.bf16.gmra.mrb[0].mxu0 %v2014
      %v2555 = vpop.f32.mrb[0].mxu0
      %v2556 = vadd.f32 0.0, %v2555
      %v2557 = vpop.f32.mrb[0].mxu0
      %v2558 = vpop.f32.mrb[0].mxu0
      %v2559 = vadd.f32 0.0, %v2558
      %v2560 = vpop.f32.mrb[0].mxu0
      %2561 = vmatprep.mubr.bf16.mxu0 %v2021
      %2562 = vmatmul.mubr.bf16.gmra.mrb[0].mxu0 %v2020
      %v2563 = vpop.f32.mrb[0].mxu0
      %v2564 = vadd.f32 0.0, %v2563
      %v2565 = vpop.f32.mrb[0].mxu0
      %v2566 = vpop.f32.mrb[0].mxu0
      %v2567 = vadd.f32 0.0, %v2566
      %v2568 = vpop.f32.mrb[0].mxu0
      %2569 = vmatprep.mubr.bf16.mxu0 %v2027
      %2570 = vmatmul.mubr.bf16.gmra.mrb[0].mxu0 %v2026
      %v2571 = vpop.f32.mrb[0].mxu0
      %v2572 = vadd.f32 0.0, %v2571
      %v2573 = vpop.f32.mrb[0].mxu0
      %v2574 = vpop.f32.mrb[0].mxu0
      %v2575 = vadd.f32 0.0, %v2574
      %v2576 = vpop.f32.mrb[0].mxu0
      %2577 = vdwg.mxu0
      %2578 = vmatprep.subr.bf16.mxu0 0
      %2579 = vmatpush1.bf16.msra.mxu0 %v2337
      %2580 = vmatprep.subr.bf16.mxu0 0
      %2581 = vmatpush1.bf16.msra.mxu0 %v2338
      %2582 = vmatprep.subr.bf16.mxu0 0
      %2583 = vmatpush1.bf16.msra.mxu0 %v2339
      %2584 = vmatprep.subr.bf16.mxu0 0
      %2585 = vmatpush1.bf16.msra.mxu0 %v2340
      %2586 = vmatprep.subr.bf16.mxu0 0
      %2587 = vmatpush1.bf16.msra.mxu0 %v2341
      %2588 = vmatprep.subr.bf16.mxu0 0
      %2589 = vmatpush1.bf16.msra.mxu0 %v2342
      %2590 = vmatprep.subr.bf16.mxu0 0
      %2591 = vmatpush1.bf16.msra.mxu0 %v2343
      %2592 = vmatprep.subr.bf16.mxu0 0
      %2593 = vmatpush1.bf16.msra.mxu0 %v2344
      %2594 = vmatprep.subr.bf16.mxu0 0
      %2595 = vmatpush1.bf16.msra.mxu0 %v2345
      %2596 = vmatprep.subr.bf16.mxu0 0
      %2597 = vmatpush1.bf16.msra.mxu0 %v2346
      %2598 = vmatprep.subr.bf16.mxu0 0
      %2599 = vmatpush1.bf16.msra.mxu0 %v2347
      %2600 = vmatprep.subr.bf16.mxu0 0
      %2601 = vmatpush1.bf16.msra.mxu0 %v2348
      %2602 = vmatprep.subr.bf16.mxu0 0
      %2603 = vmatpush1.bf16.msra.mxu0 %v2349
      %2604 = vmatprep.subr.bf16.mxu0 0
      %2605 = vmatpush1.bf16.msra.mxu0 %v2350
      %2606 = vmatprep.subr.bf16.mxu0 0
      %2607 = vmatpush1.bf16.msra.mxu0 %v2351
      %2608 = vmatprep.subr.bf16.mxu0 0
      %2609 = vmatpush1.bf16.msra.mxu0 %v2352
      %2610 = vmatprep.mubr.bf16.mxu0 %v1939
      %2611 = vmatmul.mubr.bf16.gmra.mrb[0].mxu0 %v1938
      %v2612 = vpop.f32.mrb[0].mxu0
      %v2613 = vadd.f32 %v2452, %v2612
      %v2614 = vpop.f32.mrb[0].mxu0
      %v2615 = vpop.f32.mrb[0].mxu0
      %v2616 = vadd.f32 %v2455, %v2615
      %v2617 = vpop.f32.mrb[0].mxu0
      %2618 = vmatprep.mubr.bf16.mxu0 %v1945
      %2619 = vmatmul.mubr.bf16.gmra.mrb[0].mxu0 %v1944
      %v2620 = vpop.f32.mrb[0].mxu0
      %v2621 = vadd.f32 %v2460, %v2620
      %v2622 = vpop.f32.mrb[0].mxu0
      %v2623 = vpop.f32.mrb[0].mxu0
      %v2624 = vadd.f32 %v2463, %v2623
      %v2625 = vpop.f32.mrb[0].mxu0
      %2626 = vmatprep.mubr.bf16.mxu0 %v1951
      %2627 = vmatmul.mubr.bf16.gmra.mrb[0].mxu0 %v1950
      %v2628 = vpop.f32.mrb[0].mxu0
      %v2629 = vadd.f32 %v2468, %v2628
      %v2630 = vpop.f32.mrb[0].mxu0
      %v2631 = vpop.f32.mrb[0].mxu0
      %v2632 = vadd.f32 %v2471, %v2631
      %v2633 = vpop.f32.mrb[0].mxu0
      %2634 = vmatprep.mubr.bf16.mxu0 %v1957
      %2635 = vmatmul.mubr.bf16.gmra.mrb[0].mxu0 %v1956
      %v2636 = vpop.f32.mrb[0].mxu0
      %v2637 = vadd.f32 %v2476, %v2636
      %v2638 = vpop.f32.mrb[0].mxu0
      %v2639 = vpop.f32.mrb[0].mxu0
      %v2640 = vadd.f32 %v2479, %v2639
      %v2641 = vpop.f32.mrb[0].mxu0
      %2642 = vmatprep.mubr.bf16.mxu0 %v1963
      %2643 = vmatmul.mubr.bf16.gmra.mrb[0].mxu0 %v1962
      %v2644 = vpop.f32.mrb[0].mxu0
      %v2645 = vadd.f32 %v2484, %v2644
      %v2646 = vpop.f32.mrb[0].mxu0
      %v2647 = vpop.f32.mrb[0].mxu0
      %v2648 = vadd.f32 %v2487, %v2647
      %v2649 = vpop.f32.mrb[0].mxu0
      %2650 = vmatprep.mubr.bf16.mxu0 %v1969
      %2651 = vmatmul.mubr.bf16.gmra.mrb[0].mxu0 %v1968
      %v2652 = vpop.f32.mrb[0].mxu0
      %v2653 = vadd.f32 %v2492, %v2652
      %v2654 = vpop.f32.mrb[0].mxu0
      %v2655 = vpop.f32.mrb[0].mxu0
      %v2656 = vadd.f32 %v2495, %v2655
      %v2657 = vpop.f32.mrb[0].mxu0
      %2658 = vmatprep.mubr.bf16.mxu0 %v1975
      %2659 = vmatmul.mubr.bf16.gmra.mrb[0].mxu0 %v1974
      %v2660 = vpop.f32.mrb[0].mxu0
      %v2661 = vadd.f32 %v2500, %v2660
      %v2662 = vpop.f32.mrb[0].mxu0
      %v2663 = vpop.f32.mrb[0].mxu0
      %v2664 = vadd.f32 %v2503, %v2663
      %v2665 = vpop.f32.mrb[0].mxu0
      %2666 = vmatprep.mubr.bf16.mxu0 %v1981
      %2667 = vmatmul.mubr.bf16.gmra.mrb[0].mxu0 %v1980
      %v2668 = vpop.f32.mrb[0].mxu0
      %v2669 = vadd.f32 %v2508, %v2668
      %v2670 = vpop.f32.mrb[0].mxu0
      %v2671 = vpop.f32.mrb[0].mxu0
      %v2672 = vadd.f32 %v2511, %v2671
      %v2673 = vpop.f32.mrb[0].mxu0
      %2674 = vmatprep.mubr.bf16.mxu0 %v1987
      %2675 = vmatmul.mubr.bf16.gmra.mrb[0].mxu0 %v1986
      %v2676 = vpop.f32.mrb[0].mxu0
      %v2677 = vadd.f32 %v2516, %v2676
      %v2678 = vpop.f32.mrb[0].mxu0
      %v2679 = vpop.f32.mrb[0].mxu0
      %v2680 = vadd.f32 %v2519, %v2679
      %v2681 = vpop.f32.mrb[0].mxu0
      %2682 = vmatprep.mubr.bf16.mxu0 %v1993
      %2683 = vmatmul.mubr.bf16.gmra.mrb[0].mxu0 %v1992
      %v2684 = vpop.f32.mrb[0].mxu0
      %v2685 = vadd.f32 %v2524, %v2684
      %v2686 = vpop.f32.mrb[0].mxu0
      %v2687 = vpop.f32.mrb[0].mxu0
      %v2688 = vadd.f32 %v2527, %v2687
      %v2689 = vpop.f32.mrb[0].mxu0
      %2690 = vmatprep.mubr.bf16.mxu0 %v1999
      %2691 = vmatmul.mubr.bf16.gmra.mrb[0].mxu0 %v1998
      %v2692 = vpop.f32.mrb[0].mxu0
      %v2693 = vadd.f32 %v2532, %v2692
      %v2694 = vpop.f32.mrb[0].mxu0
      %v2695 = vpop.f32.mrb[0].mxu0
      %v2696 = vadd.f32 %v2535, %v2695
      %v2697 = vpop.f32.mrb[0].mxu0
      %2698 = vmatprep.mubr.bf16.mxu0 %v2005
      %2699 = vmatmul.mubr.bf16.gmra.mrb[0].mxu0 %v2004
      %v2700 = vpop.f32.mrb[0].mxu0
      %v2701 = vadd.f32 %v2540, %v2700
      %v2702 = vpop.f32.mrb[0].mxu0
      %v2703 = vpop.f32.mrb[0].mxu0
      %v2704 = vadd.f32 %v2543, %v2703
      %v2705 = vpop.f32.mrb[0].mxu0
      %2706 = vmatprep.mubr.bf16.mxu0 %v2011
      %2707 = vmatmul.mubr.bf16.gmra.mrb[0].mxu0 %v2010
      %v2708 = vpop.f32.mrb[0].mxu0
      %v2709 = vadd.f32 %v2548, %v2708
      %v2710 = vpop.f32.mrb[0].mxu0
      %v2711 = vpop.f32.mrb[0].mxu0
      %v2712 = vadd.f32 %v2551, %v2711
      %v2713 = vpop.f32.mrb[0].mxu0
      %2714 = vmatprep.mubr.bf16.mxu0 %v2017
      %2715 = vmatmul.mubr.bf16.gmra.mrb[0].mxu0 %v2016
      %v2716 = vpop.f32.mrb[0].mxu0
      %v2717 = vadd.f32 %v2556, %v2716
      %v2718 = vpop.f32.mrb[0].mxu0
      %v2719 = vpop.f32.mrb[0].mxu0
      %v2720 = vadd.f32 %v2559, %v2719
      %v2721 = vpop.f32.mrb[0].mxu0
      %2722 = vmatprep.mubr.bf16.mxu0 %v2023
      %2723 = vmatmul.mubr.bf16.gmra.mrb[0].mxu0 %v2022
      %v2724 = vpop.f32.mrb[0].mxu0
      %v2725 = vadd.f32 %v2564, %v2724
      %v2726 = vpop.f32.mrb[0].mxu0
      %v2727 = vpop.f32.mrb[0].mxu0
      %v2728 = vadd.f32 %v2567, %v2727
      %v2729 = vpop.f32.mrb[0].mxu0
      %2730 = vmatprep.mubr.bf16.mxu0 %v2029
      %2731 = vmatmul.mubr.bf16.gmra.mrb[0].mxu0 %v2028
      %v2732 = vpop.f32.mrb[0].mxu0
      %v2733 = vadd.f32 %v2572, %v2732
      %v2734 = vpop.f32.mrb[0].mxu0
      %v2735 = vpop.f32.mrb[0].mxu0
      %v2736 = vadd.f32 %v2575, %v2735
      %v2737 = vpop.f32.mrb[0].mxu0
      %2738 = vdwg.mxu0
      %2739 = vmatprep.subr.bf16.mxu0 0
      %2740 = vmatpush1.bf16.msra.mxu0 %v2353
      %2741 = vmatprep.subr.bf16.mxu0 0
      %2742 = vmatpush1.bf16.msra.mxu0 %v2354
      %2743 = vmatprep.subr.bf16.mxu0 0
      %2744 = vmatpush1.bf16.msra.mxu0 %v2355
      %2745 = vmatprep.subr.bf16.mxu0 0
      %2746 = vmatpush1.bf16.msra.mxu0 %v2356
      %2747 = vmatprep.subr.bf16.mxu0 0
      %2748 = vmatpush1.bf16.msra.mxu0 %v2357
      %2749 = vmatprep.subr.bf16.mxu0 0
      %2750 = vmatpush1.bf16.msra.mxu0 %v2358
      %2751 = vmatprep.subr.bf16.mxu0 0
      %2752 = vmatpush1.bf16.msra.mxu0 %v2359
      %2753 = vmatprep.subr.bf16.mxu0 0
      %2754 = vmatpush1.bf16.msra.mxu0 %v2360
      %2755 = vmatprep.subr.bf16.mxu0 0
      %2756 = vmatpush1.bf16.msra.mxu0 %v2361
      %2757 = vmatprep.subr.bf16.mxu0 0
      %2758 = vmatpush1.bf16.msra.mxu0 %v2362
      %2759 = vmatprep.subr.bf16.mxu0 0
      %2760 = vmatpush1.bf16.msra.mxu0 %v2363
      %2761 = vmatprep.subr.bf16.mxu0 0
      %2762 = vmatpush1.bf16.msra.mxu0 %v2364
      %2763 = vmatprep.subr.bf16.mxu0 0
      %2764 = vmatpush1.bf16.msra.mxu0 %v2365
      %2765 = vmatprep.subr.bf16.mxu0 0
      %2766 = vmatpush1.bf16.msra.mxu0 %v2366
      %2767 = vmatprep.subr.bf16.mxu0 0
      %2768 = vmatpush1.bf16.msra.mxu0 %v2367
      %2769 = vmatprep.subr.bf16.mxu0 0
      %2770 = vmatpush1.bf16.msra.mxu0 %v2368
      %2771 = vmatprep.mubr.bf16.mxu0 %v1941
      %2772 = vmatmul.mubr.bf16.gmra.mrb[0].mxu0 %v1940
      %v2773 = vpop.f32.mrb[0].mxu0
      %v2774 = vadd.f32 %v2613, %v2773
      %v2775 = vpop.f32.mrb[0].mxu0
      %v2776 = vpop.f32.mrb[0].mxu0
      %v2777 = vadd.f32 %v2616, %v2776
      %v2778 = vpop.f32.mrb[0].mxu0
      %2779 = vmatprep.mubr.bf16.mxu0 %v1947
      %2780 = vmatmul.mubr.bf16.gmra.mrb[0].mxu0 %v1946
      %v2781 = vpop.f32.mrb[0].mxu0
      %v2782 = vadd.f32 %v2621, %v2781
      %v2783 = vpop.f32.mrb[0].mxu0
      %v2784 = vpop.f32.mrb[0].mxu0
      %v2785 = vadd.f32 %v2624, %v2784
      %v2786 = vpop.f32.mrb[0].mxu0
      %2787 = vmatprep.mubr.bf16.mxu0 %v1953
      %2788 = vmatmul.mubr.bf16.gmra.mrb[0].mxu0 %v1952
      %v2789 = vpop.f32.mrb[0].mxu0
      %v2790 = vadd.f32 %v2629, %v2789
      %v2791 = vpop.f32.mrb[0].mxu0
      %v2792 = vpop.f32.mrb[0].mxu0
      %v2793 = vadd.f32 %v2632, %v2792
      %v2794 = vpop.f32.mrb[0].mxu0
      %2795 = vmatprep.mubr.bf16.mxu0 %v1959
      %2796 = vmatmul.mubr.bf16.gmra.mrb[0].mxu0 %v1958
      %v2797 = vpop.f32.mrb[0].mxu0
      %v2798 = vadd.f32 %v2637, %v2797
      %v2799 = vpop.f32.mrb[0].mxu0
      %v2800 = vpop.f32.mrb[0].mxu0
      %v2801 = vadd.f32 %v2640, %v2800
      %v2802 = vpop.f32.mrb[0].mxu0
      %2803 = vmatprep.mubr.bf16.mxu0 %v1965
      %2804 = vmatmul.mubr.bf16.gmra.mrb[0].mxu0 %v1964
      %v2805 = vpop.f32.mrb[0].mxu0
      %v2806 = vadd.f32 %v2645, %v2805
      %v2807 = vpop.f32.mrb[0].mxu0
      %v2808 = vpop.f32.mrb[0].mxu0
      %v2809 = vadd.f32 %v2648, %v2808
      %v2810 = vpop.f32.mrb[0].mxu0
      %2811 = vmatprep.mubr.bf16.mxu0 %v1971
      %2812 = vmatmul.mubr.bf16.gmra.mrb[0].mxu0 %v1970
      %v2813 = vpop.f32.mrb[0].mxu0
      %v2814 = vadd.f32 %v2653, %v2813
      %v2815 = vpop.f32.mrb[0].mxu0
      %v2816 = vpop.f32.mrb[0].mxu0
      %v2817 = vadd.f32 %v2656, %v2816
      %v2818 = vpop.f32.mrb[0].mxu0
      %2819 = vmatprep.mubr.bf16.mxu0 %v1977
      %2820 = vmatmul.mubr.bf16.gmra.mrb[0].mxu0 %v1976
      %v2821 = vpop.f32.mrb[0].mxu0
      %v2822 = vadd.f32 %v2661, %v2821
      %v2823 = vpop.f32.mrb[0].mxu0
      %v2824 = vpop.f32.mrb[0].mxu0
      %v2825 = vadd.f32 %v2664, %v2824
      %v2826 = vpop.f32.mrb[0].mxu0
      %2827 = vmatprep.mubr.bf16.mxu0 %v1983
      %2828 = vmatmul.mubr.bf16.gmra.mrb[0].mxu0 %v1982
      %v2829 = vpop.f32.mrb[0].mxu0
      %v2830 = vadd.f32 %v2669, %v2829
      %v2831 = vpop.f32.mrb[0].mxu0
      %v2832 = vpop.f32.mrb[0].mxu0
      %v2833 = vadd.f32 %v2672, %v2832
      %v2834 = vpop.f32.mrb[0].mxu0
      %2835 = vmatprep.mubr.bf16.mxu0 %v1989
      %2836 = vmatmul.mubr.bf16.gmra.mrb[0].mxu0 %v1988
      %v2837 = vpop.f32.mrb[0].mxu0
      %v2838 = vadd.f32 %v2677, %v2837
      %v2839 = vpop.f32.mrb[0].mxu0
      %v2840 = vpop.f32.mrb[0].mxu0
      %v2841 = vadd.f32 %v2680, %v2840
      %v2842 = vpop.f32.mrb[0].mxu0
      %2843 = vmatprep.mubr.bf16.mxu0 %v1995
      %2844 = vmatmul.mubr.bf16.gmra.mrb[0].mxu0 %v1994
      %v2845 = vpop.f32.mrb[0].mxu0
      %v2846 = vadd.f32 %v2685, %v2845
      %v2847 = vpop.f32.mrb[0].mxu0
      %v2848 = vpop.f32.mrb[0].mxu0
      %v2849 = vadd.f32 %v2688, %v2848
      %v2850 = vpop.f32.mrb[0].mxu0
      %2851 = vmatprep.mubr.bf16.mxu0 %v2001
      %2852 = vmatmul.mubr.bf16.gmra.mrb[0].mxu0 %v2000
      %v2853 = vpop.f32.mrb[0].mxu0
      %v2854 = vadd.f32 %v2693, %v2853
      %v2855 = vpop.f32.mrb[0].mxu0
      %v2856 = vpop.f32.mrb[0].mxu0
      %v2857 = vadd.f32 %v2696, %v2856
      %v2858 = vpop.f32.mrb[0].mxu0
      %2859 = vmatprep.mubr.bf16.mxu0 %v2007
      %2860 = vmatmul.mubr.bf16.gmra.mrb[0].mxu0 %v2006
      %v2861 = vpop.f32.mrb[0].mxu0
      %v2862 = vadd.f32 %v2701, %v2861
      %v2863 = vpop.f32.mrb[0].mxu0
      %v2864 = vpop.f32.mrb[0].mxu0
      %v2865 = vadd.f32 %v2704, %v2864
      %v2866 = vpop.f32.mrb[0].mxu0
      %2867 = vmatprep.mubr.bf16.mxu0 %v2013
      %2868 = vmatmul.mubr.bf16.gmra.mrb[0].mxu0 %v2012
      %v2869 = vpop.f32.mrb[0].mxu0
      %v2870 = vadd.f32 %v2709, %v2869
      %v2871 = vpop.f32.mrb[0].mxu0
      %v2872 = vpop.f32.mrb[0].mxu0
      %v2873 = vadd.f32 %v2712, %v2872
      %v2874 = vpop.f32.mrb[0].mxu0
      %2875 = vmatprep.mubr.bf16.mxu0 %v2019
      %2876 = vmatmul.mubr.bf16.gmra.mrb[0].mxu0 %v2018
      %v2877 = vpop.f32.mrb[0].mxu0
      %v2878 = vadd.f32 %v2717, %v2877
      %v2879 = vpop.f32.mrb[0].mxu0
      %v2880 = vpop.f32.mrb[0].mxu0
      %v2881 = vadd.f32 %v2720, %v2880
      %v2882 = vpop.f32.mrb[0].mxu0
      %2883 = vmatprep.mubr.bf16.mxu0 %v2025
      %2884 = vmatmul.mubr.bf16.gmra.mrb[0].mxu0 %v2024
      %v2885 = vpop.f32.mrb[0].mxu0
      %v2886 = vadd.f32 %v2725, %v2885
      %v2887 = vpop.f32.mrb[0].mxu0
      %v2888 = vpop.f32.mrb[0].mxu0
      %v2889 = vadd.f32 %v2728, %v2888
      %v2890 = vpop.f32.mrb[0].mxu0
      %2891 = vmatprep.mubr.bf16.mxu0 %v2031
      %2892 = vmatmul.mubr.bf16.gmra.mrb[0].mxu0 %v2030
      %v2893 = vpop.f32.mrb[0].mxu0
      %v2894 = vadd.f32 %v2733, %v2893
      %v2895 = vpop.f32.mrb[0].mxu0
      %v2896 = vpop.f32.mrb[0].mxu0
      %v2897 = vadd.f32 %v2736, %v2896
      %v2898 = vpop.f32.mrb[0].mxu0
      %2899 = vdwg.mxu0
      %v2900 = vadd.f32 %v1809, %v2774
      %v2901 = vadd.f32 %v1812, %v2777
      %v2902 = vadd.f32 %v1817, %v2782
      %v2903 = vadd.f32 %v1820, %v2785
      %v2904 = vadd.f32 %v1825, %v2790
      %v2905 = vadd.f32 %v1828, %v2793
      %v2906 = vadd.f32 %v1833, %v2798
      %v2907 = vadd.f32 %v1836, %v2801
      %v2908 = vadd.f32 %v1841, %v2806
      %v2909 = vadd.f32 %v1844, %v2809
      %v2910 = vadd.f32 %v1849, %v2814
      %v2911 = vadd.f32 %v1852, %v2817
      %v2912 = vadd.f32 %v1857, %v2822
      %v2913 = vadd.f32 %v1860, %v2825
      %v2914 = vadd.f32 %v1865, %v2830
      %v2915 = vadd.f32 %v1868, %v2833
      %v2916 = vadd.f32 %v1873, %v2838
      %v2917 = vadd.f32 %v1876, %v2841
      %v2918 = vadd.f32 %v1881, %v2846
      %v2919 = vadd.f32 %v1884, %v2849
      %v2920 = vadd.f32 %v1889, %v2854
      %v2921 = vadd.f32 %v1892, %v2857
      %v2922 = vadd.f32 %v1897, %v2862
      %v2923 = vadd.f32 %v1900, %v2865
      %v2924 = vadd.f32 %v1905, %v2870
      %v2925 = vadd.f32 %v1908, %v2873
      %v2926 = vadd.f32 %v1913, %v2878
      %v2927 = vadd.f32 %v1916, %v2881
      %v2928 = vadd.f32 %v1921, %v2886
      %v2929 = vadd.f32 %v1924, %v2889
      %v2930 = vadd.f32 %v1929, %v2894
      %v2931 = vadd.f32 %v1932, %v2897
      %s2932 = scalar_lea.vmem [#allocation2], 192
      %v2933 = vld [vmem:[%s2932] sm:$0xff]
      %v2934 = vld [vmem:[%s2932 + $0x8] sm:$0xff]
      %v2935 = vld [vmem:[%s2932 + $0x10] sm:$0xff]
      %v2936 = vld [vmem:[%s2932 + $0x18] sm:$0xff]
      %v2937 = vld [vmem:[%s2932 + $0x20] sm:$0xff]
      %v2938 = vld [vmem:[%s2932 + $0x28] sm:$0xff]
      %v2939 = vld [vmem:[%s2932 + $0x30] sm:$0xff]
      %v2940 = vld [vmem:[%s2932 + $0x38] sm:$0xff]
      %v2941 = vld [vmem:[%s2932 + $0x40] sm:$0xff]
      %v2942 = vld [vmem:[%s2932 + $0x48] sm:$0xff]
      %v2943 = vld [vmem:[%s2932 + $0x50] sm:$0xff]
      %v2944 = vld [vmem:[%s2932 + $0x58] sm:$0xff]
      %v2945 = vld [vmem:[%s2932 + $0x60] sm:$0xff]
      %v2946 = vld [vmem:[%s2932 + $0x68] sm:$0xff]
      %v2947 = vld [vmem:[%s2932 + $0x70] sm:$0xff]
      %v2948 = vld [vmem:[%s2932 + $0x78] sm:$0xff]
      %v2949 = vld [vmem:[%s2932 + $0x80] sm:$0xff]
      %v2950 = vld [vmem:[%s2932 + $0x88] sm:$0xff]
      %v2951 = vld [vmem:[%s2932 + $0x90] sm:$0xff]
      %v2952 = vld [vmem:[%s2932 + $0x98] sm:$0xff]
      %v2953 = vld [vmem:[%s2932 + $0xa0] sm:$0xff]
      %v2954 = vld [vmem:[%s2932 + $0xa8] sm:$0xff]
      %v2955 = vld [vmem:[%s2932 + $0xb0] sm:$0xff]
      %v2956 = vld [vmem:[%s2932 + $0xb8] sm:$0xff]
      %v2957 = vld [vmem:[%s2932 + $0xc0] sm:$0xff]
      %v2958 = vld [vmem:[%s2932 + $0xc8] sm:$0xff]
      %v2959 = vld [vmem:[%s2932 + $0xd0] sm:$0xff]
      %v2960 = vld [vmem:[%s2932 + $0xd8] sm:$0xff]
      %v2961 = vld [vmem:[%s2932 + $0xe0] sm:$0xff]
      %v2962 = vld [vmem:[%s2932 + $0xe8] sm:$0xff]
      %v2963 = vld [vmem:[%s2932 + $0xf0] sm:$0xff]
      %v2964 = vld [vmem:[%s2932 + $0xf8] sm:$0xff]
      %v2965 = vld [vmem:[%s2932 + $0x100] sm:$0xff]
      %v2966 = vld [vmem:[%s2932 + $0x108] sm:$0xff]
      %v2967 = vld [vmem:[%s2932 + $0x110] sm:$0xff]
      %v2968 = vld [vmem:[%s2932 + $0x118] sm:$0xff]
      %v2969 = vld [vmem:[%s2932 + $0x120] sm:$0xff]
      %v2970 = vld [vmem:[%s2932 + $0x128] sm:$0xff]
      %v2971 = vld [vmem:[%s2932 + $0x130] sm:$0xff]
      %v2972 = vld [vmem:[%s2932 + $0x138] sm:$0xff]
      %v2973 = vld [vmem:[%s2932 + $0x140] sm:$0xff]
      %v2974 = vld [vmem:[%s2932 + $0x148] sm:$0xff]
      %v2975 = vld [vmem:[%s2932 + $0x150] sm:$0xff]
      %v2976 = vld [vmem:[%s2932 + $0x158] sm:$0xff]
      %v2977 = vld [vmem:[%s2932 + $0x160] sm:$0xff]
      %v2978 = vld [vmem:[%s2932 + $0x168] sm:$0xff]
      %v2979 = vld [vmem:[%s2932 + $0x170] sm:$0xff]
      %v2980 = vld [vmem:[%s2932 + $0x178] sm:$0xff]
      %v2981 = vld [vmem:[%s2932 + $0x180] sm:$0xff]
      %v2982 = vld [vmem:[%s2932 + $0x188] sm:$0xff]
      %v2983 = vld [vmem:[%s2932 + $0x190] sm:$0xff]
      %v2984 = vld [vmem:[%s2932 + $0x198] sm:$0xff]
      %v2985 = vld [vmem:[%s2932 + $0x1a0] sm:$0xff]
      %v2986 = vld [vmem:[%s2932 + $0x1a8] sm:$0xff]
      %v2987 = vld [vmem:[%s2932 + $0x1b0] sm:$0xff]
      %v2988 = vld [vmem:[%s2932 + $0x1b8] sm:$0xff]
      %v2989 = vld [vmem:[%s2932 + $0x1c0] sm:$0xff]
      %v2990 = vld [vmem:[%s2932 + $0x1c8] sm:$0xff]
      %v2991 = vld [vmem:[%s2932 + $0x1d0] sm:$0xff]
      %v2992 = vld [vmem:[%s2932 + $0x1d8] sm:$0xff]
      %v2993 = vld [vmem:[%s2932 + $0x1e0] sm:$0xff]
      %v2994 = vld [vmem:[%s2932 + $0x1e8] sm:$0xff]
      %v2995 = vld [vmem:[%s2932 + $0x1f0] sm:$0xff]
      %v2996 = vld [vmem:[%s2932 + $0x1f8] sm:$0xff]
      %v2997 = vld [vmem:[%s2932 + $0x200] sm:$0xff]
      %v2998 = vld [vmem:[%s2932 + $0x208] sm:$0xff]
      %v2999 = vld [vmem:[%s2932 + $0x210] sm:$0xff]
      %v3000 = vld [vmem:[%s2932 + $0x218] sm:$0xff]
      %v3001 = vld [vmem:[%s2932 + $0x220] sm:$0xff]
      %v3002 = vld [vmem:[%s2932 + $0x228] sm:$0xff]
      %v3003 = vld [vmem:[%s2932 + $0x230] sm:$0xff]
      %v3004 = vld [vmem:[%s2932 + $0x238] sm:$0xff]
      %v3005 = vld [vmem:[%s2932 + $0x240] sm:$0xff]
      %v3006 = vld [vmem:[%s2932 + $0x248] sm:$0xff]
      %v3007 = vld [vmem:[%s2932 + $0x250] sm:$0xff]
      %v3008 = vld [vmem:[%s2932 + $0x258] sm:$0xff]
      %v3009 = vld [vmem:[%s2932 + $0x260] sm:$0xff]
      %v3010 = vld [vmem:[%s2932 + $0x268] sm:$0xff]
      %v3011 = vld [vmem:[%s2932 + $0x270] sm:$0xff]
      %v3012 = vld [vmem:[%s2932 + $0x278] sm:$0xff]
      %v3013 = vld [vmem:[%s2932 + $0x280] sm:$0xff]
      %v3014 = vld [vmem:[%s2932 + $0x288] sm:$0xff]
      %v3015 = vld [vmem:[%s2932 + $0x290] sm:$0xff]
      %v3016 = vld [vmem:[%s2932 + $0x298] sm:$0xff]
      %v3017 = vld [vmem:[%s2932 + $0x2a0] sm:$0xff]
      %v3018 = vld [vmem:[%s2932 + $0x2a8] sm:$0xff]
      %v3019 = vld [vmem:[%s2932 + $0x2b0] sm:$0xff]
      %v3020 = vld [vmem:[%s2932 + $0x2b8] sm:$0xff]
      %v3021 = vld [vmem:[%s2932 + $0x2c0] sm:$0xff]
      %v3022 = vld [vmem:[%s2932 + $0x2c8] sm:$0xff]
      %v3023 = vld [vmem:[%s2932 + $0x2d0] sm:$0xff]
      %v3024 = vld [vmem:[%s2932 + $0x2d8] sm:$0xff]
      %v3025 = vld [vmem:[%s2932 + $0x2e0] sm:$0xff]
      %v3026 = vld [vmem:[%s2932 + $0x2e8] sm:$0xff]
      %v3027 = vld [vmem:[%s2932 + $0x2f0] sm:$0xff]
      %v3028 = vld [vmem:[%s2932 + $0x2f8] sm:$0xff]
      %s3029 = scalar_lea.vmem %s5, 768
      %v3030 = vld [vmem:[%s3029] sm:$0xf]
      %v3031 = vld [vmem:[%s3029 + $0x4] sm:$0xf]
      %v3032 = vld [vmem:[%s3029 + $0x8] sm:$0xf]
      %v3033 = vld [vmem:[%s3029 + $0xc] sm:$0xf]
      %v3034 = vld [vmem:[%s3029 + $0x10] sm:$0xf]
      %v3035 = vld [vmem:[%s3029 + $0x14] sm:$0xf]
      %v3036 = vld [vmem:[%s3029 + $0x18] sm:$0xf]
      %v3037 = vld [vmem:[%s3029 + $0x1c] sm:$0xf]
      %v3038 = vld [vmem:[%s3029 + $0x20] sm:$0xf]
      %v3039 = vld [vmem:[%s3029 + $0x24] sm:$0xf]
      %v3040 = vld [vmem:[%s3029 + $0x28] sm:$0xf]
      %v3041 = vld [vmem:[%s3029 + $0x2c] sm:$0xf]
      %v3042 = vld [vmem:[%s3029 + $0x30] sm:$0xf]
      %v3043 = vld [vmem:[%s3029 + $0x34] sm:$0xf]
      %v3044 = vld [vmem:[%s3029 + $0x38] sm:$0xf]
      %v3045 = vld [vmem:[%s3029 + $0x3c] sm:$0xf]
      %v3046 = vld [vmem:[%s3029 + $0x40] sm:$0xf]
      %v3047 = vld [vmem:[%s3029 + $0x44] sm:$0xf]
      %v3048 = vld [vmem:[%s3029 + $0x48] sm:$0xf]
      %v3049 = vld [vmem:[%s3029 + $0x4c] sm:$0xf]
      %v3050 = vld [vmem:[%s3029 + $0x50] sm:$0xf]
      %v3051 = vld [vmem:[%s3029 + $0x54] sm:$0xf]
      %v3052 = vld [vmem:[%s3029 + $0x58] sm:$0xf]
      %v3053 = vld [vmem:[%s3029 + $0x5c] sm:$0xf]
      %v3054 = vld [vmem:[%s3029 + $0x60] sm:$0xf]
      %v3055 = vld [vmem:[%s3029 + $0x64] sm:$0xf]
      %v3056 = vld [vmem:[%s3029 + $0x68] sm:$0xf]
      %v3057 = vld [vmem:[%s3029 + $0x6c] sm:$0xf]
      %v3058 = vld [vmem:[%s3029 + $0x70] sm:$0xf]
      %v3059 = vld [vmem:[%s3029 + $0x74] sm:$0xf]
      %v3060 = vld [vmem:[%s3029 + $0x78] sm:$0xf]
      %v3061 = vld [vmem:[%s3029 + $0x7c] sm:$0xf]
      %v3062 = vld [vmem:[%s3029 + $0x80] sm:$0xf]
      %v3063 = vld [vmem:[%s3029 + $0x84] sm:$0xf]
      %v3064 = vld [vmem:[%s3029 + $0x88] sm:$0xf]
      %v3065 = vld [vmem:[%s3029 + $0x8c] sm:$0xf]
      %v3066 = vld [vmem:[%s3029 + $0x90] sm:$0xf]
      %v3067 = vld [vmem:[%s3029 + $0x94] sm:$0xf]
      %v3068 = vld [vmem:[%s3029 + $0x98] sm:$0xf]
      %v3069 = vld [vmem:[%s3029 + $0x9c] sm:$0xf]
      %v3070 = vld [vmem:[%s3029 + $0xa0] sm:$0xf]
      %v3071 = vld [vmem:[%s3029 + $0xa4] sm:$0xf]
      %v3072 = vld [vmem:[%s3029 + $0xa8] sm:$0xf]
      %v3073 = vld [vmem:[%s3029 + $0xac] sm:$0xf]
      %v3074 = vld [vmem:[%s3029 + $0xb0] sm:$0xf]
      %v3075 = vld [vmem:[%s3029 + $0xb4] sm:$0xf]
      %v3076 = vld [vmem:[%s3029 + $0xb8] sm:$0xf]
      %v3077 = vld [vmem:[%s3029 + $0xbc] sm:$0xf]
      %v3078 = vld [vmem:[%s3029 + $0xc0] sm:$0xf]
      %v3079 = vld [vmem:[%s3029 + $0xc4] sm:$0xf]
      %v3080 = vld [vmem:[%s3029 + $0xc8] sm:$0xf]
      %v3081 = vld [vmem:[%s3029 + $0xcc] sm:$0xf]
      %v3082 = vld [vmem:[%s3029 + $0xd0] sm:$0xf]
      %v3083 = vld [vmem:[%s3029 + $0xd4] sm:$0xf]
      %v3084 = vld [vmem:[%s3029 + $0xd8] sm:$0xf]
      %v3085 = vld [vmem:[%s3029 + $0xdc] sm:$0xf]
      %v3086 = vld [vmem:[%s3029 + $0xe0] sm:$0xf]
      %v3087 = vld [vmem:[%s3029 + $0xe4] sm:$0xf]
      %v3088 = vld [vmem:[%s3029 + $0xe8] sm:$0xf]
      %v3089 = vld [vmem:[%s3029 + $0xec] sm:$0xf]
      %v3090 = vld [vmem:[%s3029 + $0xf0] sm:$0xf]
      %v3091 = vld [vmem:[%s3029 + $0xf4] sm:$0xf]
      %v3092 = vld [vmem:[%s3029 + $0xf8] sm:$0xf]
      %v3093 = vld [vmem:[%s3029 + $0xfc] sm:$0xf]
      %v3094 = vld [vmem:[%s3029 + $0x100] sm:$0xf]
      %v3095 = vld [vmem:[%s3029 + $0x104] sm:$0xf]
      %v3096 = vld [vmem:[%s3029 + $0x108] sm:$0xf]
      %v3097 = vld [vmem:[%s3029 + $0x10c] sm:$0xf]
      %v3098 = vld [vmem:[%s3029 + $0x110] sm:$0xf]
      %v3099 = vld [vmem:[%s3029 + $0x114] sm:$0xf]
      %v3100 = vld [vmem:[%s3029 + $0x118] sm:$0xf]
      %v3101 = vld [vmem:[%s3029 + $0x11c] sm:$0xf]
      %v3102 = vld [vmem:[%s3029 + $0x120] sm:$0xf]
      %v3103 = vld [vmem:[%s3029 + $0x124] sm:$0xf]
      %v3104 = vld [vmem:[%s3029 + $0x128] sm:$0xf]
      %v3105 = vld [vmem:[%s3029 + $0x12c] sm:$0xf]
      %v3106 = vld [vmem:[%s3029 + $0x130] sm:$0xf]
      %v3107 = vld [vmem:[%s3029 + $0x134] sm:$0xf]
      %v3108 = vld [vmem:[%s3029 + $0x138] sm:$0xf]
      %v3109 = vld [vmem:[%s3029 + $0x13c] sm:$0xf]
      %v3110 = vld [vmem:[%s3029 + $0x140] sm:$0xf]
      %v3111 = vld [vmem:[%s3029 + $0x144] sm:$0xf]
      %v3112 = vld [vmem:[%s3029 + $0x148] sm:$0xf]
      %v3113 = vld [vmem:[%s3029 + $0x14c] sm:$0xf]
      %v3114 = vld [vmem:[%s3029 + $0x150] sm:$0xf]
      %v3115 = vld [vmem:[%s3029 + $0x154] sm:$0xf]
      %v3116 = vld [vmem:[%s3029 + $0x158] sm:$0xf]
      %v3117 = vld [vmem:[%s3029 + $0x15c] sm:$0xf]
      %v3118 = vld [vmem:[%s3029 + $0x160] sm:$0xf]
      %v3119 = vld [vmem:[%s3029 + $0x164] sm:$0xf]
      %v3120 = vld [vmem:[%s3029 + $0x168] sm:$0xf]
      %v3121 = vld [vmem:[%s3029 + $0x16c] sm:$0xf]
      %v3122 = vld [vmem:[%s3029 + $0x170] sm:$0xf]
      %v3123 = vld [vmem:[%s3029 + $0x174] sm:$0xf]
      %v3124 = vld [vmem:[%s3029 + $0x178] sm:$0xf]
      %v3125 = vld [vmem:[%s3029 + $0x17c] sm:$0xf]
      %v3222 = vunpack.c.l.b16 %v3030
      %v3223 = vunpack.c.l.b16 %v3031
      %v3224 = vunpack.c.l.b16 %v3032
      %v3225 = vunpack.c.l.b16 %v3033
      %v3226 = vunpack.c.l.b16 %v3034
      %v3227 = vunpack.c.l.b16 %v3035
      %v3228 = vunpack.c.l.b16 %v3036
      %v3229 = vunpack.c.l.b16 %v3037
      %v3230 = vunpack.c.l.b16 %v3038
      %v3231 = vunpack.c.l.b16 %v3039
      %v3232 = vunpack.c.l.b16 %v3040
      %v3233 = vunpack.c.l.b16 %v3041
      %v3234 = vunpack.c.l.b16 %v3042
      %v3235 = vunpack.c.l.b16 %v3043
      %v3236 = vunpack.c.l.b16 %v3044
      %v3237 = vunpack.c.l.b16 %v3045
      %v3238 = vunpack.c.l.b16 %v3046
      %v3239 = vunpack.c.l.b16 %v3047
      %v3240 = vunpack.c.l.b16 %v3048
      %v3241 = vunpack.c.l.b16 %v3049
      %v3242 = vunpack.c.l.b16 %v3050
      %v3243 = vunpack.c.l.b16 %v3051
      %v3244 = vunpack.c.l.b16 %v3052
      %v3245 = vunpack.c.l.b16 %v3053
      %v3246 = vunpack.c.l.b16 %v3054
      %v3247 = vunpack.c.l.b16 %v3055
      %v3248 = vunpack.c.l.b16 %v3056
      %v3249 = vunpack.c.l.b16 %v3057
      %v3250 = vunpack.c.l.b16 %v3058
      %v3251 = vunpack.c.l.b16 %v3059
      %v3252 = vunpack.c.l.b16 %v3060
      %v3253 = vunpack.c.l.b16 %v3061
      %v3254 = vunpack.c.l.b16 %v3062
      %v3255 = vunpack.c.l.b16 %v3063
      %v3256 = vunpack.c.l.b16 %v3064
      %v3257 = vunpack.c.l.b16 %v3065
      %v3258 = vunpack.c.l.b16 %v3066
      %v3259 = vunpack.c.l.b16 %v3067
      %v3260 = vunpack.c.l.b16 %v3068
      %v3261 = vunpack.c.l.b16 %v3069
      %v3262 = vunpack.c.l.b16 %v3070
      %v3263 = vunpack.c.l.b16 %v3071
      %v3264 = vunpack.c.l.b16 %v3072
      %v3265 = vunpack.c.l.b16 %v3073
      %v3266 = vunpack.c.l.b16 %v3074
      %v3267 = vunpack.c.l.b16 %v3075
      %v3268 = vunpack.c.l.b16 %v3076
      %v3269 = vunpack.c.l.b16 %v3077
      %v3270 = vunpack.c.l.b16 %v3078
      %v3271 = vunpack.c.l.b16 %v3079
      %v3272 = vunpack.c.l.b16 %v3080
      %v3273 = vunpack.c.l.b16 %v3081
      %v3274 = vunpack.c.l.b16 %v3082
      %v3275 = vunpack.c.l.b16 %v3083
      %v3276 = vunpack.c.l.b16 %v3084
      %v3277 = vunpack.c.l.b16 %v3085
      %v3278 = vunpack.c.l.b16 %v3086
      %v3279 = vunpack.c.l.b16 %v3087
      %v3280 = vunpack.c.l.b16 %v3088
      %v3281 = vunpack.c.l.b16 %v3089
      %v3282 = vunpack.c.l.b16 %v3090
      %v3283 = vunpack.c.l.b16 %v3091
      %v3284 = vunpack.c.l.b16 %v3092
      %v3285 = vunpack.c.l.b16 %v3093
      %v3286 = vunpack.c.l.b16 %v3094
      %v3287 = vunpack.c.l.b16 %v3095
      %v3288 = vunpack.c.l.b16 %v3096
      %v3289 = vunpack.c.l.b16 %v3097
      %v3290 = vunpack.c.l.b16 %v3098
      %v3291 = vunpack.c.l.b16 %v3099
      %v3292 = vunpack.c.l.b16 %v3100
      %v3293 = vunpack.c.l.b16 %v3101
      %v3294 = vunpack.c.l.b16 %v3102
      %v3295 = vunpack.c.l.b16 %v3103
      %v3296 = vunpack.c.l.b16 %v3104
      %v3297 = vunpack.c.l.b16 %v3105
      %v3298 = vunpack.c.l.b16 %v3106
      %v3299 = vunpack.c.l.b16 %v3107
      %v3300 = vunpack.c.l.b16 %v3108
      %v3301 = vunpack.c.l.b16 %v3109
      %v3302 = vunpack.c.l.b16 %v3110
      %v3303 = vunpack.c.l.b16 %v3111
      %v3304 = vunpack.c.l.b16 %v3112
      %v3305 = vunpack.c.l.b16 %v3113
      %v3306 = vunpack.c.l.b16 %v3114
      %v3307 = vunpack.c.l.b16 %v3115
      %v3308 = vunpack.c.l.b16 %v3116
      %v3309 = vunpack.c.l.b16 %v3117
      %v3310 = vunpack.c.l.b16 %v3118
      %v3311 = vunpack.c.l.b16 %v3119
      %v3312 = vunpack.c.l.b16 %v3120
      %v3313 = vunpack.c.l.b16 %v3121
      %v3314 = vunpack.c.l.b16 %v3122
      %v3315 = vunpack.c.l.b16 %v3123
      %v3316 = vunpack.c.l.b16 %v3124
      %v3317 = vunpack.c.l.b16 %v3125
      %v3318 = vpack.c.b16 %v3223, %v3222
      %v3319 = vpack.c.b16 %v3225, %v3224
      %v3320 = vpack.c.b16 %v3227, %v3226
      %v3321 = vpack.c.b16 %v3229, %v3228
      %v3322 = vpack.c.b16 %v3231, %v3230
      %v3323 = vpack.c.b16 %v3233, %v3232
      %v3324 = vpack.c.b16 %v3235, %v3234
      %v3325 = vpack.c.b16 %v3237, %v3236
      %v3326 = vpack.c.b16 %v3239, %v3238
      %v3327 = vpack.c.b16 %v3241, %v3240
      %v3328 = vpack.c.b16 %v3243, %v3242
      %v3329 = vpack.c.b16 %v3245, %v3244
      %v3330 = vpack.c.b16 %v3247, %v3246
      %v3331 = vpack.c.b16 %v3249, %v3248
      %v3332 = vpack.c.b16 %v3251, %v3250
      %v3333 = vpack.c.b16 %v3253, %v3252
      %v3334 = vpack.c.b16 %v3255, %v3254
      %v3335 = vpack.c.b16 %v3257, %v3256
      %v3336 = vpack.c.b16 %v3259, %v3258
      %v3337 = vpack.c.b16 %v3261, %v3260
      %v3338 = vpack.c.b16 %v3263, %v3262
      %v3339 = vpack.c.b16 %v3265, %v3264
      %v3340 = vpack.c.b16 %v3267, %v3266
      %v3341 = vpack.c.b16 %v3269, %v3268
      %v3342 = vpack.c.b16 %v3271, %v3270
      %v3343 = vpack.c.b16 %v3273, %v3272
      %v3344 = vpack.c.b16 %v3275, %v3274
      %v3345 = vpack.c.b16 %v3277, %v3276
      %v3346 = vpack.c.b16 %v3279, %v3278
      %v3347 = vpack.c.b16 %v3281, %v3280
      %v3348 = vpack.c.b16 %v3283, %v3282
      %v3349 = vpack.c.b16 %v3285, %v3284
      %v3350 = vpack.c.b16 %v3287, %v3286
      %v3351 = vpack.c.b16 %v3289, %v3288
      %v3352 = vpack.c.b16 %v3291, %v3290
      %v3353 = vpack.c.b16 %v3293, %v3292
      %v3354 = vpack.c.b16 %v3295, %v3294
      %v3355 = vpack.c.b16 %v3297, %v3296
      %v3356 = vpack.c.b16 %v3299, %v3298
      %v3357 = vpack.c.b16 %v3301, %v3300
      %v3358 = vpack.c.b16 %v3303, %v3302
      %v3359 = vpack.c.b16 %v3305, %v3304
      %v3360 = vpack.c.b16 %v3307, %v3306
      %v3361 = vpack.c.b16 %v3309, %v3308
      %v3362 = vpack.c.b16 %v3311, %v3310
      %v3363 = vpack.c.b16 %v3313, %v3312
      %v3364 = vpack.c.b16 %v3315, %v3314
      %v3365 = vpack.c.b16 %v3317, %v3316
      %3414 = vmatprep.subr.bf16.mxu0 0
      %3415 = vmatpush1.bf16.msra.mxu0 %v3318
      %3416 = vmatprep.subr.bf16.mxu0 0
      %3417 = vmatpush1.bf16.msra.mxu0 %v3319
      %3418 = vmatprep.subr.bf16.mxu0 0
      %3419 = vmatpush1.bf16.msra.mxu0 %v3320
      %3420 = vmatprep.subr.bf16.mxu0 0
      %3421 = vmatpush1.bf16.msra.mxu0 %v3321
      %3422 = vmatprep.subr.bf16.mxu0 0
      %3423 = vmatpush1.bf16.msra.mxu0 %v3322
      %3424 = vmatprep.subr.bf16.mxu0 0
      %3425 = vmatpush1.bf16.msra.mxu0 %v3323
      %3426 = vmatprep.subr.bf16.mxu0 0
      %3427 = vmatpush1.bf16.msra.mxu0 %v3324
      %3428 = vmatprep.subr.bf16.mxu0 0
      %3429 = vmatpush1.bf16.msra.mxu0 %v3325
      %3430 = vmatprep.subr.bf16.mxu0 0
      %3431 = vmatpush1.bf16.msra.mxu0 %v3326
      %3432 = vmatprep.subr.bf16.mxu0 0
      %3433 = vmatpush1.bf16.msra.mxu0 %v3327
      %3434 = vmatprep.subr.bf16.mxu0 0
      %3435 = vmatpush1.bf16.msra.mxu0 %v3328
      %3436 = vmatprep.subr.bf16.mxu0 0
      %3437 = vmatpush1.bf16.msra.mxu0 %v3329
      %3438 = vmatprep.subr.bf16.mxu0 0
      %3439 = vmatpush1.bf16.msra.mxu0 %v3330
      %3440 = vmatprep.subr.bf16.mxu0 0
      %3441 = vmatpush1.bf16.msra.mxu0 %v3331
      %3442 = vmatprep.subr.bf16.mxu0 0
      %3443 = vmatpush1.bf16.msra.mxu0 %v3332
      %3444 = vmatprep.subr.bf16.mxu0 0
      %3445 = vmatpush1.bf16.msra.mxu0 %v3333
      %3446 = vmatprep.mubr.bf16.mxu0 %v2934
      %3447 = vmatmul.mubr.bf16.gmra.mrb[0].mxu0 %v2933
      %v3448 = vpop.f32.mrb[0].mxu0
      %v3449 = vadd.f32 0.0, %v3448
      %v3450 = vpop.f32.mrb[0].mxu0
      %v3451 = vpop.f32.mrb[0].mxu0
      %v3452 = vadd.f32 0.0, %v3451
      %v3453 = vpop.f32.mrb[0].mxu0
      %3454 = vmatprep.mubr.bf16.mxu0 %v2940
      %3455 = vmatmul.mubr.bf16.gmra.mrb[0].mxu0 %v2939
      %v3456 = vpop.f32.mrb[0].mxu0
      %v3457 = vadd.f32 0.0, %v3456
      %v3458 = vpop.f32.mrb[0].mxu0
      %v3459 = vpop.f32.mrb[0].mxu0
      %v3460 = vadd.f32 0.0, %v3459
      %v3461 = vpop.f32.mrb[0].mxu0
      %3462 = vmatprep.mubr.bf16.mxu0 %v2946
      %3463 = vmatmul.mubr.bf16.gmra.mrb[0].mxu0 %v2945
      %v3464 = vpop.f32.mrb[0].mxu0
      %v3465 = vadd.f32 0.0, %v3464
      %v3466 = vpop.f32.mrb[0].mxu0
      %v3467 = vpop.f32.mrb[0].mxu0
      %v3468 = vadd.f32 0.0, %v3467
      %v3469 = vpop.f32.mrb[0].mxu0
      %3470 = vmatprep.mubr.bf16.mxu0 %v2952
      %3471 = vmatmul.mubr.bf16.gmra.mrb[0].mxu0 %v2951
      %v3472 = vpop.f32.mrb[0].mxu0
      %v3473 = vadd.f32 0.0, %v3472
      %v3474 = vpop.f32.mrb[0].mxu0
      %v3475 = vpop.f32.mrb[0].mxu0
      %v3476 = vadd.f32 0.0, %v3475
      %v3477 = vpop.f32.mrb[0].mxu0
      %3478 = vmatprep.mubr.bf16.mxu0 %v2958
      %3479 = vmatmul.mubr.bf16.gmra.mrb[0].mxu0 %v2957
      %v3480 = vpop.f32.mrb[0].mxu0
      %v3481 = vadd.f32 0.0, %v3480
      %v3482 = vpop.f32.mrb[0].mxu0
      %v3483 = vpop.f32.mrb[0].mxu0
      %v3484 = vadd.f32 0.0, %v3483
      %v3485 = vpop.f32.mrb[0].mxu0
      %3486 = vmatprep.mubr.bf16.mxu0 %v2964
      %3487 = vmatmul.mubr.bf16.gmra.mrb[0].mxu0 %v2963
      %v3488 = vpop.f32.mrb[0].mxu0
      %v3489 = vadd.f32 0.0, %v3488
      %v3490 = vpop.f32.mrb[0].mxu0
      %v3491 = vpop.f32.mrb[0].mxu0
      %v3492 = vadd.f32 0.0, %v3491
      %v3493 = vpop.f32.mrb[0].mxu0
      %3494 = vmatprep.mubr.bf16.mxu0 %v2970
      %3495 = vmatmul.mubr.bf16.gmra.mrb[0].mxu0 %v2969
      %v3496 = vpop.f32.mrb[0].mxu0
      %v3497 = vadd.f32 0.0, %v3496
      %v3498 = vpop.f32.mrb[0].mxu0
      %v3499 = vpop.f32.mrb[0].mxu0
      %v3500 = vadd.f32 0.0, %v3499
      %v3501 = vpop.f32.mrb[0].mxu0
      %3502 = vmatprep.mubr.bf16.mxu0 %v2976
      %3503 = vmatmul.mubr.bf16.gmra.mrb[0].mxu0 %v2975
      %v3504 = vpop.f32.mrb[0].mxu0
      %v3505 = vadd.f32 0.0, %v3504
      %v3506 = vpop.f32.mrb[0].mxu0
      %v3507 = vpop.f32.mrb[0].mxu0
      %v3508 = vadd.f32 0.0, %v3507
      %v3509 = vpop.f32.mrb[0].mxu0
      %3510 = vmatprep.mubr.bf16.mxu0 %v2982
      %3511 = vmatmul.mubr.bf16.gmra.mrb[0].mxu0 %v2981
      %v3512 = vpop.f32.mrb[0].mxu0
      %v3513 = vadd.f32 0.0, %v3512
      %v3514 = vpop.f32.mrb[0].mxu0
      %v3515 = vpop.f32.mrb[0].mxu0
      %v3516 = vadd.f32 0.0, %v3515
      %v3517 = vpop.f32.mrb[0].mxu0
      %3518 = vmatprep.mubr.bf16.mxu0 %v2988
      %3519 = vmatmul.mubr.bf16.gmra.mrb[0].mxu0 %v2987
      %v3520 = vpop.f32.mrb[0].mxu0
      %v3521 = vadd.f32 0.0, %v3520
      %v3522 = vpop.f32.mrb[0].mxu0
      %v3523 = vpop.f32.mrb[0].mxu0
      %v3524 = vadd.f32 0.0, %v3523
      %v3525 = vpop.f32.mrb[0].mxu0
      %3526 = vmatprep.mubr.bf16.mxu0 %v2994
      %3527 = vmatmul.mubr.bf16.gmra.mrb[0].mxu0 %v2993
      %v3528 = vpop.f32.mrb[0].mxu0
      %v3529 = vadd.f32 0.0, %v3528
      %v3530 = vpop.f32.mrb[0].mxu0
      %v3531 = vpop.f32.mrb[0].mxu0
      %v3532 = vadd.f32 0.0, %v3531
      %v3533 = vpop.f32.mrb[0].mxu0
      %3534 = vmatprep.mubr.bf16.mxu0 %v3000
      %3535 = vmatmul.mubr.bf16.gmra.mrb[0].mxu0 %v2999
      %v3536 = vpop.f32.mrb[0].mxu0
      %v3537 = vadd.f32 0.0, %v3536
      %v3538 = vpop.f32.mrb[0].mxu0
      %v3539 = vpop.f32.mrb[0].mxu0
      %v3540 = vadd.f32 0.0, %v3539
      %v3541 = vpop.f32.mrb[0].mxu0
      %3542 = vmatprep.mubr.bf16.mxu0 %v3006
      %3543 = vmatmul.mubr.bf16.gmra.mrb[0].mxu0 %v3005
      %v3544 = vpop.f32.mrb[0].mxu0
      %v3545 = vadd.f32 0.0, %v3544
      %v3546 = vpop.f32.mrb[0].mxu0
      %v3547 = vpop.f32.mrb[0].mxu0
      %v3548 = vadd.f32 0.0, %v3547
      %v3549 = vpop.f32.mrb[0].mxu0
      %3550 = vmatprep.mubr.bf16.mxu0 %v3012
      %3551 = vmatmul.mubr.bf16.gmra.mrb[0].mxu0 %v3011
      %v3552 = vpop.f32.mrb[0].mxu0
      %v3553 = vadd.f32 0.0, %v3552
      %v3554 = vpop.f32.mrb[0].mxu0
      %v3555 = vpop.f32.mrb[0].mxu0
      %v3556 = vadd.f32 0.0, %v3555
      %v3557 = vpop.f32.mrb[0].mxu0
      %3558 = vmatprep.mubr.bf16.mxu0 %v3018
      %3559 = vmatmul.mubr.bf16.gmra.mrb[0].mxu0 %v3017
      %v3560 = vpop.f32.mrb[0].mxu0
      %v3561 = vadd.f32 0.0, %v3560
      %v3562 = vpop.f32.mrb[0].mxu0
      %v3563 = vpop.f32.mrb[0].mxu0
      %v3564 = vadd.f32 0.0, %v3563
      %v3565 = vpop.f32.mrb[0].mxu0
      %3566 = vmatprep.mubr.bf16.mxu0 %v3024
      %3567 = vmatmul.mubr.bf16.gmra.mrb[0].mxu0 %v3023
      %v3568 = vpop.f32.mrb[0].mxu0
      %v3569 = vadd.f32 0.0, %v3568
      %v3570 = vpop.f32.mrb[0].mxu0
      %v3571 = vpop.f32.mrb[0].mxu0
      %v3572 = vadd.f32 0.0, %v3571
      %v3573 = vpop.f32.mrb[0].mxu0
      %3574 = vdwg.mxu0
      %3575 = vmatprep.subr.bf16.mxu0 0
      %3576 = vmatpush1.bf16.msra.mxu0 %v3334
      %3577 = vmatprep.subr.bf16.mxu0 0
      %3578 = vmatpush1.bf16.msra.mxu0 %v3335
      %3579 = vmatprep.subr.bf16.mxu0 0
      %3580 = vmatpush1.bf16.msra.mxu0 %v3336
      %3581 = vmatprep.subr.bf16.mxu0 0
      %3582 = vmatpush1.bf16.msra.mxu0 %v3337
      %3583 = vmatprep.subr.bf16.mxu0 0
      %3584 = vmatpush1.bf16.msra.mxu0 %v3338
      %3585 = vmatprep.subr.bf16.mxu0 0
      %3586 = vmatpush1.bf16.msra.mxu0 %v3339
      %3587 = vmatprep.subr.bf16.mxu0 0
      %3588 = vmatpush1.bf16.msra.mxu0 %v3340
      %3589 = vmatprep.subr.bf16.mxu0 0
      %3590 = vmatpush1.bf16.msra.mxu0 %v3341
      %3591 = vmatprep.subr.bf16.mxu0 0
      %3592 = vmatpush1.bf16.msra.mxu0 %v3342
      %3593 = vmatprep.subr.bf16.mxu0 0
      %3594 = vmatpush1.bf16.msra.mxu0 %v3343
      %3595 = vmatprep.subr.bf16.mxu0 0
      %3596 = vmatpush1.bf16.msra.mxu0 %v3344
      %3597 = vmatprep.subr.bf16.mxu0 0
      %3598 = vmatpush1.bf16.msra.mxu0 %v3345
      %3599 = vmatprep.subr.bf16.mxu0 0
      %3600 = vmatpush1.bf16.msra.mxu0 %v3346
      %3601 = vmatprep.subr.bf16.mxu0 0
      %3602 = vmatpush1.bf16.msra.mxu0 %v3347
      %3603 = vmatprep.subr.bf16.mxu0 0
      %3604 = vmatpush1.bf16.msra.mxu0 %v3348
      %3605 = vmatprep.subr.bf16.mxu0 0
      %3606 = vmatpush1.bf16.msra.mxu0 %v3349
      %3607 = vmatprep.mubr.bf16.mxu0 %v2936
      %3608 = vmatmul.mubr.bf16.gmra.mrb[0].mxu0 %v2935
      %v3609 = vpop.f32.mrb[0].mxu0
      %v3610 = vadd.f32 %v3449, %v3609
      %v3611 = vpop.f32.mrb[0].mxu0
      %v3612 = vpop.f32.mrb[0].mxu0
      %v3613 = vadd.f32 %v3452, %v3612
      %v3614 = vpop.f32.mrb[0].mxu0
      %3615 = vmatprep.mubr.bf16.mxu0 %v2942
      %3616 = vmatmul.mubr.bf16.gmra.mrb[0].mxu0 %v2941
      %v3617 = vpop.f32.mrb[0].mxu0
      %v3618 = vadd.f32 %v3457, %v3617
      %v3619 = vpop.f32.mrb[0].mxu0
      %v3620 = vpop.f32.mrb[0].mxu0
      %v3621 = vadd.f32 %v3460, %v3620
      %v3622 = vpop.f32.mrb[0].mxu0
      %3623 = vmatprep.mubr.bf16.mxu0 %v2948
      %3624 = vmatmul.mubr.bf16.gmra.mrb[0].mxu0 %v2947
      %v3625 = vpop.f32.mrb[0].mxu0
      %v3626 = vadd.f32 %v3465, %v3625
      %v3627 = vpop.f32.mrb[0].mxu0
      %v3628 = vpop.f32.mrb[0].mxu0
      %v3629 = vadd.f32 %v3468, %v3628
      %v3630 = vpop.f32.mrb[0].mxu0
      %3631 = vmatprep.mubr.bf16.mxu0 %v2954
      %3632 = vmatmul.mubr.bf16.gmra.mrb[0].mxu0 %v2953
      %v3633 = vpop.f32.mrb[0].mxu0
      %v3634 = vadd.f32 %v3473, %v3633
      %v3635 = vpop.f32.mrb[0].mxu0
      %v3636 = vpop.f32.mrb[0].mxu0
      %v3637 = vadd.f32 %v3476, %v3636
      %v3638 = vpop.f32.mrb[0].mxu0
      %3639 = vmatprep.mubr.bf16.mxu0 %v2960
      %3640 = vmatmul.mubr.bf16.gmra.mrb[0].mxu0 %v2959
      %v3641 = vpop.f32.mrb[0].mxu0
      %v3642 = vadd.f32 %v3481, %v3641
      %v3643 = vpop.f32.mrb[0].mxu0
      %v3644 = vpop.f32.mrb[0].mxu0
      %v3645 = vadd.f32 %v3484, %v3644
      %v3646 = vpop.f32.mrb[0].mxu0
      %3647 = vmatprep.mubr.bf16.mxu0 %v2966
      %3648 = vmatmul.mubr.bf16.gmra.mrb[0].mxu0 %v2965
      %v3649 = vpop.f32.mrb[0].mxu0
      %v3650 = vadd.f32 %v3489, %v3649
      %v3651 = vpop.f32.mrb[0].mxu0
      %v3652 = vpop.f32.mrb[0].mxu0
      %v3653 = vadd.f32 %v3492, %v3652
      %v3654 = vpop.f32.mrb[0].mxu0
      %3655 = vmatprep.mubr.bf16.mxu0 %v2972
      %3656 = vmatmul.mubr.bf16.gmra.mrb[0].mxu0 %v2971
      %v3657 = vpop.f32.mrb[0].mxu0
      %v3658 = vadd.f32 %v3497, %v3657
      %v3659 = vpop.f32.mrb[0].mxu0
      %v3660 = vpop.f32.mrb[0].mxu0
      %v3661 = vadd.f32 %v3500, %v3660
      %v3662 = vpop.f32.mrb[0].mxu0
      %3663 = vmatprep.mubr.bf16.mxu0 %v2978
      %3664 = vmatmul.mubr.bf16.gmra.mrb[0].mxu0 %v2977
      %v3665 = vpop.f32.mrb[0].mxu0
      %v3666 = vadd.f32 %v3505, %v3665
      %v3667 = vpop.f32.mrb[0].mxu0
      %v3668 = vpop.f32.mrb[0].mxu0
      %v3669 = vadd.f32 %v3508, %v3668
      %v3670 = vpop.f32.mrb[0].mxu0
      %3671 = vmatprep.mubr.bf16.mxu0 %v2984
      %3672 = vmatmul.mubr.bf16.gmra.mrb[0].mxu0 %v2983
      %v3673 = vpop.f32.mrb[0].mxu0
      %v3674 = vadd.f32 %v3513, %v3673
      %v3675 = vpop.f32.mrb[0].mxu0
      %v3676 = vpop.f32.mrb[0].mxu0
      %v3677 = vadd.f32 %v3516, %v3676
      %v3678 = vpop.f32.mrb[0].mxu0
      %3679 = vmatprep.mubr.bf16.mxu0 %v2990
      %3680 = vmatmul.mubr.bf16.gmra.mrb[0].mxu0 %v2989
      %v3681 = vpop.f32.mrb[0].mxu0
      %v3682 = vadd.f32 %v3521, %v3681
      %v3683 = vpop.f32.mrb[0].mxu0
      %v3684 = vpop.f32.mrb[0].mxu0
      %v3685 = vadd.f32 %v3524, %v3684
      %v3686 = vpop.f32.mrb[0].mxu0
      %3687 = vmatprep.mubr.bf16.mxu0 %v2996
      %3688 = vmatmul.mubr.bf16.gmra.mrb[0].mxu0 %v2995
      %v3689 = vpop.f32.mrb[0].mxu0
      %v3690 = vadd.f32 %v3529, %v3689
      %v3691 = vpop.f32.mrb[0].mxu0
      %v3692 = vpop.f32.mrb[0].mxu0
      %v3693 = vadd.f32 %v3532, %v3692
      %v3694 = vpop.f32.mrb[0].mxu0
      %3695 = vmatprep.mubr.bf16.mxu0 %v3002
      %3696 = vmatmul.mubr.bf16.gmra.mrb[0].mxu0 %v3001
      %v3697 = vpop.f32.mrb[0].mxu0
      %v3698 = vadd.f32 %v3537, %v3697
      %v3699 = vpop.f32.mrb[0].mxu0
      %v3700 = vpop.f32.mrb[0].mxu0
      %v3701 = vadd.f32 %v3540, %v3700
      %v3702 = vpop.f32.mrb[0].mxu0
      %3703 = vmatprep.mubr.bf16.mxu0 %v3008
      %3704 = vmatmul.mubr.bf16.gmra.mrb[0].mxu0 %v3007
      %v3705 = vpop.f32.mrb[0].mxu0
      %v3706 = vadd.f32 %v3545, %v3705
      %v3707 = vpop.f32.mrb[0].mxu0
      %v3708 = vpop.f32.mrb[0].mxu0
      %v3709 = vadd.f32 %v3548, %v3708
      %v3710 = vpop.f32.mrb[0].mxu0
      %3711 = vmatprep.mubr.bf16.mxu0 %v3014
      %3712 = vmatmul.mubr.bf16.gmra.mrb[0].mxu0 %v3013
      %v3713 = vpop.f32.mrb[0].mxu0
      %v3714 = vadd.f32 %v3553, %v3713
      %v3715 = vpop.f32.mrb[0].mxu0
      %v3716 = vpop.f32.mrb[0].mxu0
      %v3717 = vadd.f32 %v3556, %v3716
      %v3718 = vpop.f32.mrb[0].mxu0
      %3719 = vmatprep.mubr.bf16.mxu0 %v3020
      %3720 = vmatmul.mubr.bf16.gmra.mrb[0].mxu0 %v3019
      %v3721 = vpop.f32.mrb[0].mxu0
      %v3722 = vadd.f32 %v3561, %v3721
      %v3723 = vpop.f32.mrb[0].mxu0
      %v3724 = vpop.f32.mrb[0].mxu0
      %v3725 = vadd.f32 %v3564, %v3724
      %v3726 = vpop.f32.mrb[0].mxu0
      %3727 = vmatprep.mubr.bf16.mxu0 %v3026
      %3728 = vmatmul.mubr.bf16.gmra.mrb[0].mxu0 %v3025
      %v3729 = vpop.f32.mrb[0].mxu0
      %v3730 = vadd.f32 %v3569, %v3729
      %v3731 = vpop.f32.mrb[0].mxu0
      %v3732 = vpop.f32.mrb[0].mxu0
      %v3733 = vadd.f32 %v3572, %v3732
      %v3734 = vpop.f32.mrb[0].mxu0
      %3735 = vdwg.mxu0
      %3736 = vmatprep.subr.bf16.mxu0 0
      %3737 = vmatpush1.bf16.msra.mxu0 %v3350
      %3738 = vmatprep.subr.bf16.mxu0 0
      %3739 = vmatpush1.bf16.msra.mxu0 %v3351
      %3740 = vmatprep.subr.bf16.mxu0 0
      %3741 = vmatpush1.bf16.msra.mxu0 %v3352
      %3742 = vmatprep.subr.bf16.mxu0 0
      %3743 = vmatpush1.bf16.msra.mxu0 %v3353
      %3744 = vmatprep.subr.bf16.mxu0 0
      %3745 = vmatpush1.bf16.msra.mxu0 %v3354
      %3746 = vmatprep.subr.bf16.mxu0 0
      %3747 = vmatpush1.bf16.msra.mxu0 %v3355
      %3748 = vmatprep.subr.bf16.mxu0 0
      %3749 = vmatpush1.bf16.msra.mxu0 %v3356
      %3750 = vmatprep.subr.bf16.mxu0 0
      %3751 = vmatpush1.bf16.msra.mxu0 %v3357
      %3752 = vmatprep.subr.bf16.mxu0 0
      %3753 = vmatpush1.bf16.msra.mxu0 %v3358
      %3754 = vmatprep.subr.bf16.mxu0 0
      %3755 = vmatpush1.bf16.msra.mxu0 %v3359
      %3756 = vmatprep.subr.bf16.mxu0 0
      %3757 = vmatpush1.bf16.msra.mxu0 %v3360
      %3758 = vmatprep.subr.bf16.mxu0 0
      %3759 = vmatpush1.bf16.msra.mxu0 %v3361
      %3760 = vmatprep.subr.bf16.mxu0 0
      %3761 = vmatpush1.bf16.msra.mxu0 %v3362
      %3762 = vmatprep.subr.bf16.mxu0 0
      %3763 = vmatpush1.bf16.msra.mxu0 %v3363
      %3764 = vmatprep.subr.bf16.mxu0 0
      %3765 = vmatpush1.bf16.msra.mxu0 %v3364
      %3766 = vmatprep.subr.bf16.mxu0 0
      %3767 = vmatpush1.bf16.msra.mxu0 %v3365
      %3768 = vmatprep.mubr.bf16.mxu0 %v2938
      %3769 = vmatmul.mubr.bf16.gmra.mrb[0].mxu0 %v2937
      %v3770 = vpop.f32.mrb[0].mxu0
      %v3771 = vadd.f32 %v3610, %v3770
      %v3772 = vpop.f32.mrb[0].mxu0
      %v3773 = vpop.f32.mrb[0].mxu0
      %v3774 = vadd.f32 %v3613, %v3773
      %v3775 = vpop.f32.mrb[0].mxu0
      %3776 = vmatprep.mubr.bf16.mxu0 %v2944
      %3777 = vmatmul.mubr.bf16.gmra.mrb[0].mxu0 %v2943
      %v3778 = vpop.f32.mrb[0].mxu0
      %v3779 = vadd.f32 %v3618, %v3778
      %v3780 = vpop.f32.mrb[0].mxu0
      %v3781 = vpop.f32.mrb[0].mxu0
      %v3782 = vadd.f32 %v3621, %v3781
      %v3783 = vpop.f32.mrb[0].mxu0
      %3784 = vmatprep.mubr.bf16.mxu0 %v2950
      %3785 = vmatmul.mubr.bf16.gmra.mrb[0].mxu0 %v2949
      %v3786 = vpop.f32.mrb[0].mxu0
      %v3787 = vadd.f32 %v3626, %v3786
      %v3788 = vpop.f32.mrb[0].mxu0
      %v3789 = vpop.f32.mrb[0].mxu0
      %v3790 = vadd.f32 %v3629, %v3789
      %v3791 = vpop.f32.mrb[0].mxu0
      %3792 = vmatprep.mubr.bf16.mxu0 %v2956
      %3793 = vmatmul.mubr.bf16.gmra.mrb[0].mxu0 %v2955
      %v3794 = vpop.f32.mrb[0].mxu0
      %v3795 = vadd.f32 %v3634, %v3794
      %v3796 = vpop.f32.mrb[0].mxu0
      %v3797 = vpop.f32.mrb[0].mxu0
      %v3798 = vadd.f32 %v3637, %v3797
      %v3799 = vpop.f32.mrb[0].mxu0
      %3800 = vmatprep.mubr.bf16.mxu0 %v2962
      %3801 = vmatmul.mubr.bf16.gmra.mrb[0].mxu0 %v2961
      %v3802 = vpop.f32.mrb[0].mxu0
      %v3803 = vadd.f32 %v3642, %v3802
      %v3804 = vpop.f32.mrb[0].mxu0
      %v3805 = vpop.f32.mrb[0].mxu0
      %v3806 = vadd.f32 %v3645, %v3805
      %v3807 = vpop.f32.mrb[0].mxu0
      %3808 = vmatprep.mubr.bf16.mxu0 %v2968
      %3809 = vmatmul.mubr.bf16.gmra.mrb[0].mxu0 %v2967
      %v3810 = vpop.f32.mrb[0].mxu0
      %v3811 = vadd.f32 %v3650, %v3810
      %v3812 = vpop.f32.mrb[0].mxu0
      %v3813 = vpop.f32.mrb[0].mxu0
      %v3814 = vadd.f32 %v3653, %v3813
      %v3815 = vpop.f32.mrb[0].mxu0
      %3816 = vmatprep.mubr.bf16.mxu0 %v2974
      %3817 = vmatmul.mubr.bf16.gmra.mrb[0].mxu0 %v2973
      %v3818 = vpop.f32.mrb[0].mxu0
      %v3819 = vadd.f32 %v3658, %v3818
      %v3820 = vpop.f32.mrb[0].mxu0
      %v3821 = vpop.f32.mrb[0].mxu0
      %v3822 = vadd.f32 %v3661, %v3821
      %v3823 = vpop.f32.mrb[0].mxu0
      %3824 = vmatprep.mubr.bf16.mxu0 %v2980
      %3825 = vmatmul.mubr.bf16.gmra.mrb[0].mxu0 %v2979
      %v3826 = vpop.f32.mrb[0].mxu0
      %v3827 = vadd.f32 %v3666, %v3826
      %v3828 = vpop.f32.mrb[0].mxu0
      %v3829 = vpop.f32.mrb[0].mxu0
      %v3830 = vadd.f32 %v3669, %v3829
      %v3831 = vpop.f32.mrb[0].mxu0
      %3832 = vmatprep.mubr.bf16.mxu0 %v2986
      %3833 = vmatmul.mubr.bf16.gmra.mrb[0].mxu0 %v2985
      %v3834 = vpop.f32.mrb[0].mxu0
      %v3835 = vadd.f32 %v3674, %v3834
      %v3836 = vpop.f32.mrb[0].mxu0
      %v3837 = vpop.f32.mrb[0].mxu0
      %v3838 = vadd.f32 %v3677, %v3837
      %v3839 = vpop.f32.mrb[0].mxu0
      %3840 = vmatprep.mubr.bf16.mxu0 %v2992
      %3841 = vmatmul.mubr.bf16.gmra.mrb[0].mxu0 %v2991
      %v3842 = vpop.f32.mrb[0].mxu0
      %v3843 = vadd.f32 %v3682, %v3842
      %v3844 = vpop.f32.mrb[0].mxu0
      %v3845 = vpop.f32.mrb[0].mxu0
      %v3846 = vadd.f32 %v3685, %v3845
      %v3847 = vpop.f32.mrb[0].mxu0
      %3848 = vmatprep.mubr.bf16.mxu0 %v2998
      %3849 = vmatmul.mubr.bf16.gmra.mrb[0].mxu0 %v2997
      %v3850 = vpop.f32.mrb[0].mxu0
      %v3851 = vadd.f32 %v3690, %v3850
      %v3852 = vpop.f32.mrb[0].mxu0
      %v3853 = vpop.f32.mrb[0].mxu0
      %v3854 = vadd.f32 %v3693, %v3853
      %v3855 = vpop.f32.mrb[0].mxu0
      %3856 = vmatprep.mubr.bf16.mxu0 %v3004
      %3857 = vmatmul.mubr.bf16.gmra.mrb[0].mxu0 %v3003
      %v3858 = vpop.f32.mrb[0].mxu0
      %v3859 = vadd.f32 %v3698, %v3858
      %v3860 = vpop.f32.mrb[0].mxu0
      %v3861 = vpop.f32.mrb[0].mxu0
      %v3862 = vadd.f32 %v3701, %v3861
      %v3863 = vpop.f32.mrb[0].mxu0
      %3864 = vmatprep.mubr.bf16.mxu0 %v3010
      %3865 = vmatmul.mubr.bf16.gmra.mrb[0].mxu0 %v3009
      %v3866 = vpop.f32.mrb[0].mxu0
      %v3867 = vadd.f32 %v3706, %v3866
      %v3868 = vpop.f32.mrb[0].mxu0
      %v3869 = vpop.f32.mrb[0].mxu0
      %v3870 = vadd.f32 %v3709, %v3869
      %v3871 = vpop.f32.mrb[0].mxu0
      %3872 = vmatprep.mubr.bf16.mxu0 %v3016
      %3873 = vmatmul.mubr.bf16.gmra.mrb[0].mxu0 %v3015
      %v3874 = vpop.f32.mrb[0].mxu0
      %v3875 = vadd.f32 %v3714, %v3874
      %v3876 = vpop.f32.mrb[0].mxu0
      %v3877 = vpop.f32.mrb[0].mxu0
      %v3878 = vadd.f32 %v3717, %v3877
      %v3879 = vpop.f32.mrb[0].mxu0
      %3880 = vmatprep.mubr.bf16.mxu0 %v3022
      %3881 = vmatmul.mubr.bf16.gmra.mrb[0].mxu0 %v3021
      %v3882 = vpop.f32.mrb[0].mxu0
      %v3883 = vadd.f32 %v3722, %v3882
      %v3884 = vpop.f32.mrb[0].mxu0
      %v3885 = vpop.f32.mrb[0].mxu0
      %v3886 = vadd.f32 %v3725, %v3885
      %v3887 = vpop.f32.mrb[0].mxu0
      %3888 = vmatprep.mubr.bf16.mxu0 %v3028
      %3889 = vmatmul.mubr.bf16.gmra.mrb[0].mxu0 %v3027
      %v3890 = vpop.f32.mrb[0].mxu0
      %v3891 = vadd.f32 %v3730, %v3890
      %v3892 = vpop.f32.mrb[0].mxu0
      %v3893 = vpop.f32.mrb[0].mxu0
      %v3894 = vadd.f32 %v3733, %v3893
      %v3895 = vpop.f32.mrb[0].mxu0
      %3896 = vdwg.mxu0
      %v3897 = vadd.f32 %v2900, %v3771
      %v3898 = vadd.f32 %v2901, %v3774
      %v3899 = vadd.f32 %v2902, %v3779
      %v3900 = vadd.f32 %v2903, %v3782
      %v3901 = vadd.f32 %v2904, %v3787
      %v3902 = vadd.f32 %v2905, %v3790
      %v3903 = vadd.f32 %v2906, %v3795
      %v3904 = vadd.f32 %v2907, %v3798
      %v3905 = vadd.f32 %v2908, %v3803
      %v3906 = vadd.f32 %v2909, %v3806
      %v3907 = vadd.f32 %v2910, %v3811
      %v3908 = vadd.f32 %v2911, %v3814
      %v3909 = vadd.f32 %v2912, %v3819
      %v3910 = vadd.f32 %v2913, %v3822
      %v3911 = vadd.f32 %v2914, %v3827
      %v3912 = vadd.f32 %v2915, %v3830
      %v3913 = vadd.f32 %v2916, %v3835
      %v3914 = vadd.f32 %v2917, %v3838
      %v3915 = vadd.f32 %v2918, %v3843
      %v3916 = vadd.f32 %v2919, %v3846
      %v3917 = vadd.f32 %v2920, %v3851
      %v3918 = vadd.f32 %v2921, %v3854
      %v3919 = vadd.f32 %v2922, %v3859
      %v3920 = vadd.f32 %v2923, %v3862
      %v3921 = vadd.f32 %v2924, %v3867
      %v3922 = vadd.f32 %v2925, %v3870
      %v3923 = vadd.f32 %v2926, %v3875
      %v3924 = vadd.f32 %v2927, %v3878
      %v3925 = vadd.f32 %v2928, %v3883
      %v3926 = vadd.f32 %v2929, %v3886
      %v3927 = vadd.f32 %v2930, %v3891
      %v3928 = vadd.f32 %v2931, %v3894
      %v3929 = vpack.c.bf16 %v3898, %v3897
      %v3930 = vpack.c.bf16 %v3900, %v3899
      %v3931 = vpack.c.bf16 %v3902, %v3901
      %v3932 = vpack.c.bf16 %v3904, %v3903
      %v3933 = vpack.c.bf16 %v3906, %v3905
      %v3934 = vpack.c.bf16 %v3908, %v3907
      %v3935 = vpack.c.bf16 %v3910, %v3909
      %v3936 = vpack.c.bf16 %v3912, %v3911
      %v3937 = vpack.c.bf16 %v3914, %v3913
      %v3938 = vpack.c.bf16 %v3916, %v3915
      %v3939 = vpack.c.bf16 %v3918, %v3917
      %v3940 = vpack.c.bf16 %v3920, %v3919
      %v3941 = vpack.c.bf16 %v3922, %v3921
      %v3942 = vpack.c.bf16 %v3924, %v3923
      %v3943 = vpack.c.bf16 %v3926, %v3925
      %v3944 = vpack.c.bf16 %v3928, %v3927
      %v3961 = vunpack.c.l.b16 %v3929
      %v3962 = vunpack.c.h.b16 %v3929
      %v3963 = vunpack.c.l.b16 %v3930
      %v3964 = vunpack.c.h.b16 %v3930
      %v3965 = vunpack.c.l.b16 %v3931
      %v3966 = vunpack.c.h.b16 %v3931
      %v3967 = vunpack.c.l.b16 %v3932
      %v3968 = vunpack.c.h.b16 %v3932
      %v3969 = vunpack.c.l.b16 %v3933
      %v3970 = vunpack.c.h.b16 %v3933
      %v3971 = vunpack.c.l.b16 %v3934
      %v3972 = vunpack.c.h.b16 %v3934
      %v3973 = vunpack.c.l.b16 %v3935
      %v3974 = vunpack.c.h.b16 %v3935
      %v3975 = vunpack.c.l.b16 %v3936
      %v3976 = vunpack.c.h.b16 %v3936
      %v3977 = vunpack.c.l.b16 %v3937
      %v3978 = vunpack.c.h.b16 %v3937
      %v3979 = vunpack.c.l.b16 %v3938
      %v3980 = vunpack.c.h.b16 %v3938
      %v3981 = vunpack.c.l.b16 %v3939
      %v3982 = vunpack.c.h.b16 %v3939
      %v3983 = vunpack.c.l.b16 %v3940
      %v3984 = vunpack.c.h.b16 %v3940
      %v3985 = vunpack.c.l.b16 %v3941
      %v3986 = vunpack.c.h.b16 %v3941
      %v3987 = vunpack.c.l.b16 %v3942
      %v3988 = vunpack.c.h.b16 %v3942
      %v3989 = vunpack.c.l.b16 %v3943
      %v3990 = vunpack.c.h.b16 %v3943
      %v3991 = vunpack.c.l.b16 %v3944
      %v3992 = vunpack.c.h.b16 %v3944
      %v3993 = vpack.c.b16 %v3961, %v3961
      %v3994 = vpack.c.b16 %v3962, %v3962
      %v3995 = vpack.c.b16 %v3963, %v3963
      %v3996 = vpack.c.b16 %v3964, %v3964
      %v3997 = vpack.c.b16 %v3965, %v3965
      %v3998 = vpack.c.b16 %v3966, %v3966
      %v3999 = vpack.c.b16 %v3967, %v3967
      %v4000 = vpack.c.b16 %v3968, %v3968
      %v4001 = vpack.c.b16 %v3969, %v3969
      %v4002 = vpack.c.b16 %v3970, %v3970
      %v4003 = vpack.c.b16 %v3971, %v3971
      %v4004 = vpack.c.b16 %v3972, %v3972
      %v4005 = vpack.c.b16 %v3973, %v3973
      %v4006 = vpack.c.b16 %v3974, %v3974
      %v4007 = vpack.c.b16 %v3975, %v3975
      %v4008 = vpack.c.b16 %v3976, %v3976
      %v4009 = vpack.c.b16 %v3977, %v3977
      %v4010 = vpack.c.b16 %v3978, %v3978
      %v4011 = vpack.c.b16 %v3979, %v3979
      %v4012 = vpack.c.b16 %v3980, %v3980
      %v4013 = vpack.c.b16 %v3981, %v3981
      %v4014 = vpack.c.b16 %v3982, %v3982
      %v4015 = vpack.c.b16 %v3983, %v3983
      %v4016 = vpack.c.b16 %v3984, %v3984
      %v4017 = vpack.c.b16 %v3985, %v3985
      %v4018 = vpack.c.b16 %v3986, %v3986
      %v4019 = vpack.c.b16 %v3987, %v3987
      %v4020 = vpack.c.b16 %v3988, %v3988
      %v4021 = vpack.c.b16 %v3989, %v3989
      %v4022 = vpack.c.b16 %v3990, %v3990
      %v4023 = vpack.c.b16 %v3991, %v3991
      %v4024 = vpack.c.b16 %v3992, %v3992
      %4057 = vst [vmem:[%s298] sm:$0xf] %v3993
      %4058 = vst [vmem:[%s298 + $0x4] sm:$0xf] %v3994
      %4059 = vst [vmem:[%s298 + $0x8] sm:$0xf] %v3995
      %4060 = vst [vmem:[%s298 + $0xc] sm:$0xf] %v3996
      %4061 = vst [vmem:[%s298 + $0x10] sm:$0xf] %v3997
      %4062 = vst [vmem:[%s298 + $0x14] sm:$0xf] %v3998
      %4063 = vst [vmem:[%s298 + $0x18] sm:$0xf] %v3999
      %4064 = vst [vmem:[%s298 + $0x1c] sm:$0xf] %v4000
      %4065 = vst [vmem:[%s298 + $0x20] sm:$0xf] %v4001
      %4066 = vst [vmem:[%s298 + $0x24] sm:$0xf] %v4002
      %4067 = vst [vmem:[%s298 + $0x28] sm:$0xf] %v4003
      %4068 = vst [vmem:[%s298 + $0x2c] sm:$0xf] %v4004
      %4069 = vst [vmem:[%s298 + $0x30] sm:$0xf] %v4005
      %4070 = vst [vmem:[%s298 + $0x34] sm:$0xf] %v4006
      %4071 = vst [vmem:[%s298 + $0x38] sm:$0xf] %v4007
      %4072 = vst [vmem:[%s298 + $0x3c] sm:$0xf] %v4008
      %4073 = vst [vmem:[%s298 + $0x40] sm:$0xf] %v4009
      %4074 = vst [vmem:[%s298 + $0x44] sm:$0xf] %v4010
      %4075 = vst [vmem:[%s298 + $0x48] sm:$0xf] %v4011
      %4076 = vst [vmem:[%s298 + $0x4c] sm:$0xf] %v4012
      %4077 = vst [vmem:[%s298 + $0x50] sm:$0xf] %v4013
      %4078 = vst [vmem:[%s298 + $0x54] sm:$0xf] %v4014
      %4079 = vst [vmem:[%s298 + $0x58] sm:$0xf] %v4015
      %4080 = vst [vmem:[%s298 + $0x5c] sm:$0xf] %v4016
      %4081 = vst [vmem:[%s298 + $0x60] sm:$0xf] %v4017
      %4082 = vst [vmem:[%s298 + $0x64] sm:$0xf] %v4018
      %4083 = vst [vmem:[%s298 + $0x68] sm:$0xf] %v4019
      %4084 = vst [vmem:[%s298 + $0x6c] sm:$0xf] %v4020
      %4085 = vst [vmem:[%s298 + $0x70] sm:$0xf] %v4021
      %4086 = vst [vmem:[%s298 + $0x74] sm:$0xf] %v4022
      %4087 = vst [vmem:[%s298 + $0x78] sm:$0xf] %v4023
      %4088 = vst [vmem:[%s298 + $0x7c] sm:$0xf] %v4024
      %p4089 = scmp.lt.s32.totalorder %s18, 1
      %s4090 = scalar_select %p4089, %s18, 1
      %s4091 = smul.addr %s4090, 32
      %s4092 = smul.addr %s4091, 4
      %s4093 = scalar_lea.vmem %s7, %s4092
      // Predicated region
      $region56: #{intermediate_conv_forward.2} parent=47 // pred_check
        %p4094 = pneg %p193
      $region57: #{intermediate_conv_forward.2} parent=47 // pred_check_branch
        %4096 = sbr.rel (%p4094) target = $region59
      $region58: #{intermediate_conv_forward.2} parent=47 // pred_region
        _
      $region59: #{intermediate_conv_forward.2} parent=47 // pred_fallthru
        _
    $region48: #{intermediate_conv_forward.2} parent=5 // pred_fallthru
      _
    %p4097 = scmp.le.s32.totalorder 2, %s13
    // Predicated region
    $region60: #{intermediate_conv_forward.2} parent=5 // pred_check
      %p4098 = pneg %p4097
    $region61: #{intermediate_conv_forward.2} parent=5 // pred_check_branch
      %4100 = sbr.rel (%p4098) target = $region63
    $region62: #{intermediate_conv_forward.2} parent=5 // pred_region
      %s4101 = ssub.s32 %s13, 2
      // Predicated region
      $region64: #{intermediate_conv_forward.2} parent=62 // pred_check
        %p4102 = pneg %p199
      $region65: #{intermediate_conv_forward.2} parent=62 // pred_check_branch
        %4104 = sbr.rel (%p4102) target = $region67
      $region66: #{intermediate_conv_forward.2} parent=62 // pred_region
        %p4105 = scmp.lt.s32.totalorder %s19, 1
        %s4106 = scalar_select %p4105, %s19, 1
        %s4107 = smul.addr %s4106, 32
        %s4108 = smul.addr %s4107, 4
        %s4109 = scalar_lea.vmem %s7, %s4108
      $region67: #{intermediate_conv_forward.2} parent=62 // pred_fallthru
        _
    $region63: #{intermediate_conv_forward.2} parent=5 // pred_fallthru
      _
  $region6: #{intermediate_conv_forward.2} parent=0 // loop_footer
    %s17 = sadd.s32 1, %s13
  $region7: #{intermediate_conv_forward.2} parent=0 // loop_footer_branch
    %12 = sbr.rel target = $region3
  $region8: #{intermediate_conv_forward.2} parent=0 // loop_exit
    _

</llo_original>
